<compile_context>
chip_gen: v6e
topology: v6e:2x2x1
jax: 0.10.0
libtpu: 0.0.40
codegen_flags: <defaults>
</compile_context>

<pallas_src>
import numpy as np
import jax
import jax.numpy as jnp
from jax.experimental import pallas as pl
from jax.experimental.pallas import tpu as pltpu

LRELU_SLOPE = 0.2
BN_EPS = 1e-5

C1, C1P = 112, 128        # conv1 out-channels, lane-padded
C2, C2P = 224, 256        # conv2 out-channels, lane-padded
K1 = 16                   # conv1 im2col depth = 4*4*1
R1 = 256                  # 2*2*8*8 parity-padded conv1 positions / sample (196 valid)
R2 = 64                   # 8*8 padded conv2 positions / sample (49 valid)

# kernel-tap offset (0..3) -> (parity plane, offset inside the padded plane)
_TAP = ((1, 0), (0, 0), (1, 1), (0, 1))

_VMEM_LIMIT = 32 * 1024 * 1024


def _leaky_relu(x):
    return jnp.where(x >= 0, x, LRELU_SLOPE * x)


# ---------------------------------------------------------------------------
# Pallas kernels
# ---------------------------------------------------------------------------

def _conv1_kernel(p_ref, w_ref, b_ref, m_ref, y_ref, s_ref, ss_ref):
    """conv1 (as matmul) + bias + LeakyReLU + BN1 partial statistics.

    p : (1, 256, 16) bf16   parity-ordered im2col patches of one sample
    w : (16, 128) bf16      conv1 weight, out-channels zero-padded 112->128
    b : (1, 128) f32        conv1 bias
    m : (256, 1) f32        1.0 at real positions, 0.0 at conv2-padding rows
    y : (1, 256, 128) bf16  activations, already in conv2-ready padded layout
    s/ss : (1, 1, 128) f32  per-sample sum / sum-of-squares (BN1 partials)
    """
    y = jnp.dot(p_ref[0], w_ref[...], preferred_element_type=jnp.float32)
    y = _leaky_relu(y + b_ref[...])
    y = y * m_ref[...]                     # keep conv2 zero-padding rows at 0
    y_ref[0] = y.astype(jnp.bfloat16)
    s_ref[0] = jnp.sum(y, axis=0, keepdims=True)
    ss_ref[0] = jnp.sum(y * y, axis=0, keepdims=True)


def _conv2_head_kernel(y1_ref, s1_ref, t1_ref, m1_ref, w2_ref, b2_ref,
                       w3_ref, m2_ref, s_ref, ss_ref, q_ref, zbuf, acc):
    """BN1-apply + conv2 + bias + LeakyReLU + BN2 partials + head partials.

    y1 : (1, 256, 128) bf16   padded space-to-depth conv1 activations
    s1/t1 : (1, 128) f32      BN1 scale / shift (train-mode batch statistics)
    m1 : (256, 1) f32         validity mask (keeps padding rows at 0 after BN1)
    w2 : (16, 128, 256) bf16  conv2 weight per tap (in/out channels zero-padded)
    b2 : (1, 256) f32         conv2 bias
    w3 : (64, 256) f32        conv3 weight in padded (ho*8+wo, c) layout
    m2 : (64, 1) f32          validity mask for the 49 real conv2 positions
    s/ss/q : (1, 1, 256) f32  BN2 sum / sum-of-squares / head partial
    zbuf : VMEM (256, 128) bf16 ; acc : VMEM (64, 256) f32
    """
    a = y1_ref[0].astype(jnp.float32)
    a = (a * s1_ref[...] + t1_ref[...]) * m1_ref[...]   # exact BN1 (train mode)
    zbuf[...] = a.astype(jnp.bfloat16)

    acc[...] = jnp.zeros_like(acc)
    for di in range(4):
        pr, ro = _TAP[di]
        for dj in range(4):
            pc, co = _TAP[dj]
            base = (pr * 2 + pc) * 64            # start of the (pr, pc) plane
            shift = ro * 8 + co
            r = jnp.dot(zbuf[base:base + 64, :], w2_ref[di * 4 + dj],
                        preferred_element_type=jnp.float32)      # (64, 256)
            # out[ho*8+wo] += r[(ho+ro)*8 + (wo+co)]; all valid rows are < 55
            acc[0:55, :] += r[shift:shift + 55, :]

    y2 = _leaky_relu(acc[...] + b2_ref[...])
    y2 = y2 * m2_ref[...]                        # zero the 15 junk rows
    s_ref[0] = jnp.sum(y2, axis=0, keepdims=True)
    ss_ref[0] = jnp.sum(y2 * y2, axis=0, keepdims=True)
    q_ref[0] = jnp.sum(y2 * w3_ref[...], axis=0, keepdims=True)


def _head_kernel(q_ref, s2_ref, c_ref, o_ref):
    """BN2 (folded into the linear conv3 head) + LeakyReLU + sigmoid."""
    z = jnp.sum(q_ref[...] * s2_ref[...], axis=1, keepdims=True) + c_ref[...]
    z = _leaky_relu(z)
    o_ref[...] = pl.reciprocal(1.0 + jnp.exp(-z), approx=True)


# ---------------------------------------------------------------------------
# pallas_call wrappers
# ---------------------------------------------------------------------------

def _conv1_stage(p1, w1, b1, mask1):
    n = p1.shape[0]
    return pl.pallas_call(
        _conv1_kernel,
        grid=(n,),
        in_specs=[
            pl.BlockSpec((1, R1, K1), lambda i: (i, 0, 0)),
            pl.BlockSpec((K1, C1P), lambda i: (0, 0)),
            pl.BlockSpec((1, C1P), lambda i: (0, 0)),
            pl.BlockSpec((R1, 1), lambda i: (0, 0)),
        ],
        out_specs=(
            pl.BlockSpec((1, R1, C1P), lambda i: (i, 0, 0)),
            pl.BlockSpec((1, 1, C1P), lambda i: (i, 0, 0)),
            pl.BlockSpec((1, 1, C1P), lambda i: (i, 0, 0)),
        ),
        out_shape=(
            jax.ShapeDtypeStruct((n, R1, C1P), jnp.bfloat16),
            jax.ShapeDtypeStruct((n, 1, C1P), jnp.float32),
            jax.ShapeDtypeStruct((n, 1, C1P), jnp.float32),
        ),
        compiler_params=pltpu.CompilerParams(
            dimension_semantics=("parallel",),
            vmem_limit_bytes=_VMEM_LIMIT),
    )(p1, w1, b1, mask1)


def _conv2_stage(y1z, s1, t1, mask1, w2r, b2, w3m, mask2):
    n = y1z.shape[0]
    return pl.pallas_call(
        _conv2_head_kernel,
        grid=(n,),
        in_specs=[
            pl.BlockSpec((1, R1, C1P), lambda i: (i, 0, 0)),
            pl.BlockSpec((1, C1P), lambda i: (0, 0)),
            pl.BlockSpec((1, C1P), lambda i: (0, 0)),
            pl.BlockSpec((R1, 1), lambda i: (0, 0)),
            pl.BlockSpec((16, C1P, C2P), lambda i: (0, 0, 0)),
            pl.BlockSpec((1, C2P), lambda i: (0, 0)),
            pl.BlockSpec((R2, C2P), lambda i: (0, 0)),
            pl.BlockSpec((R2, 1), lambda i: (0, 0)),
        ],
        out_specs=(
            pl.BlockSpec((1, 1, C2P), lambda i: (i, 0, 0)),
            pl.BlockSpec((1, 1, C2P), lambda i: (i, 0, 0)),
            pl.BlockSpec((1, 1, C2P), lambda i: (i, 0, 0)),
        ),
        out_shape=(
            jax.ShapeDtypeStruct((n, 1, C2P), jnp.float32),
            jax.ShapeDtypeStruct((n, 1, C2P), jnp.float32),
            jax.ShapeDtypeStruct((n, 1, C2P), jnp.float32),
        ),
        scratch_shapes=[
            pltpu.VMEM((R1, C1P), jnp.bfloat16),
            pltpu.VMEM((R2, C2P), jnp.float32),
        ],
        compiler_params=pltpu.CompilerParams(
            dimension_semantics=("parallel",),
            vmem_limit_bytes=_VMEM_LIMIT),
    )(y1z, s1, t1, mask1, w2r, b2, w3m, mask2)


def _head_stage(q, s2, const):
    n = q.shape[0]
    vmem = pl.BlockSpec(memory_space=pltpu.MemorySpace.VMEM)
    return pl.pallas_call(
        _head_kernel,
        in_specs=[vmem, vmem, vmem],
        out_specs=pl.BlockSpec(memory_space=pltpu.MemorySpace.VMEM),
        out_shape=jax.ShapeDtypeStruct((n, 1), jnp.float32),
    )(q, s2, const)


# ---------------------------------------------------------------------------
# Plain-JAX glue (layout prep only; all conv / BN / activation math is Pallas)
# ---------------------------------------------------------------------------

def _build_p1(x_nhwc):
    """conv1 im2col (k=4, s=2, p=1) with rows re-ordered into the parity-padded
    (pr, pc, j, k) layout: row ((pr*2+pc)*8 + j)*8 + k holds the patch of output
    position (h, w) = (2j - pr, 2k - pc); out-of-range positions are zero."""
    n = x_nhwc.shape[0]
    xp = jnp.pad(x_nhwc, ((0, 0), (1, 1), (1, 1), (0, 0)))
    cols = []
    for di in range(4):
        for dj in range(4):
            cols.append(xp[:, di:di + 27:2, dj:dj + 27:2, 0])
    pt = jnp.stack(cols, axis=-1)                                # (N,14,14,16)
    ep = jnp.pad(pt[:, 0::2], ((0, 0), (0, 1), (0, 0), (0, 0)))
    op = jnp.pad(pt[:, 1::2], ((0, 0), (1, 0), (0, 0), (0, 0)))
    rows = jnp.stack([ep, op], axis=1)                           # (N,2,8,14,16)
    ec = jnp.pad(rows[:, :, :, 0::2], ((0, 0),) * 3 + ((0, 1), (0, 0)))
    oc = jnp.pad(rows[:, :, :, 1::2], ((0, 0),) * 3 + ((1, 0), (0, 0)))
    full = jnp.stack([ec, oc], axis=2)                           # (N,2,2,8,8,16)
    return full.reshape(n, R1, K1)


def _masks():
    m1 = np.zeros((2, 2, 8, 8), np.float32)
    for pr in range(2):
        for pc in range(2):
            m1[pr, pc,
               slice(0, 7) if pr == 0 else slice(1, 8),
               slice(0, 7) if pc == 0 else slice(1, 8)] = 1.0
    m2 = np.zeros((8, 8), np.float32)
    m2[:7, :7] = 1.0
    return jnp.asarray(m1.reshape(R1, 1)), jnp.asarray(m2.reshape(R2, 1))


# ---------------------------------------------------------------------------
# Full discriminator forward
# ---------------------------------------------------------------------------

@jax.jit
def discriminator_forward(x_nchw, params):
    x = jnp.transpose(x_nchw, (0, 2, 3, 1)).astype(jnp.float32)  # NCHW -> NHWC
    n = x.shape[0]
    mask1, mask2 = _masks()

    # parameter prep: lane-pad channels (112->128, 224->256); bf16 MXU inputs
    w1 = jnp.zeros((K1, C1P), jnp.float32).at[:, :C1].set(
        params["w1"].reshape(K1, C1)).astype(jnp.bfloat16)
    b1 = jnp.zeros((1, C1P), jnp.float32).at[:, :C1].set(params["b1"][None])
    g1 = jnp.ones((C1P,), jnp.float32).at[:C1].set(params["g1"])
    be1 = jnp.zeros((C1P,), jnp.float32).at[:C1].set(params["be1"])
    w2 = jnp.zeros((4, 4, C1P, C2P), jnp.float32).at[:, :, :C1, :C2].set(
        params["w2"]).reshape(16, C1P, C2P).astype(jnp.bfloat16)
    b2 = jnp.zeros((1, C2P), jnp.float32).at[:, :C2].set(params["b2"][None])
    g2 = jnp.ones((C2P,), jnp.float32).at[:C2].set(params["g2"])
    be2 = jnp.zeros((C2P,), jnp.float32).at[:C2].set(params["be2"])
    w3m = jnp.zeros((8, 8, C2P), jnp.float32).at[:7, :7, :C2].set(
        params["w3"][:, :, :, 0]).reshape(R2, C2P)
    b3 = params["b3"][0]

    # stage 1: conv1 + LeakyReLU, BN1 partial statistics (per sample)
    p1 = _build_p1(x).astype(jnp.bfloat16)
    y1z, s1sum, s1sq = _conv1_stage(p1, w1, b1, mask1)
    cnt1 = jnp.float32(n * 14 * 14)
    mean1 = jnp.sum(s1sum[:, 0, :], axis=0) / cnt1
    var1 = jnp.sum(s1sq[:, 0, :], axis=0) / cnt1 - mean1 * mean1
    scale1 = g1 * jax.lax.rsqrt(var1 + BN_EPS)
    shift1 = be1 - mean1 * scale1

    # stage 2: BN1-apply + conv2 + LeakyReLU, BN2 partials + head partials
    s2sum, s2sq, qpart = _conv2_stage(
        y1z, scale1[None], shift1[None], mask1, w2, b2, w3m, mask2)
    cnt2 = jnp.float32(n * 7 * 7)
    mean2 = jnp.sum(s2sum[:, 0, :], axis=0) / cnt2
    var2 = jnp.sum(s2sq[:, 0, :], axis=0) / cnt2 - mean2 * mean2
    scale2 = g2 * jax.lax.rsqrt(var2 + BN_EPS)
    shift2 = be2 - mean2 * scale2

    # stage 3: BN2 folded into the (linear) conv3 head, LeakyReLU + sigmoid
    const = jnp.sum(shift2 * jnp.sum(w3m, axis=0)) + b3
    return _head_stage(qpart[:, 0, :], scale2[None], const.reshape(1, 1))


# ---------------------------------------------------------------------------
# Pure-JAX references (lax.conv) used to sanity-check the Pallas path
# ---------------------------------------------------------------------------

def reference_forward(x_nchw, params, match_kernel_precision=False):
    x = jnp.transpose(x_nchw, (0, 2, 3, 1)).astype(jnp.float32)
    lp = match_kernel_precision

    def rnd(a):  # emulate the kernel's bf16 storage of conv1 activations
        return a.astype(jnp.bfloat16).astype(jnp.float32) if lp else a

    def conv(h, w, b, s, p, low_prec):
        if low_prec:
            h = h.astype(jnp.bfloat16)
            w = w.astype(jnp.bfloat16)
        y = jax.lax.conv_general_dilated(
            h, w, (s, s), [(p, p), (p, p)],
            dimension_numbers=("NHWC", "HWIO", "NHWC"),
            preferred_element_type=jnp.float32)
        return y + b

    def bn(h, g, be):
        m = jnp.mean(h, axis=(0, 1, 2), keepdims=True)
        v = jnp.mean((h - m) ** 2, axis=(0, 1, 2), keepdims=True)
        return g * (h - m) * jax.lax.rsqrt(v + BN_EPS) + be

    h = _leaky_relu(conv(x, params["w1"], params["b1"], 2, 1, lp))
    h = bn(rnd(h), params["g1"], params["be1"])
    h = _leaky_relu(conv(h, params["w2"], params["b2"], 2, 1, lp))
    h = bn(h, params["g2"], params["be2"])
    h = _leaky_relu(conv(h, params["w3"], params["b3"], 1, 0, False))
    h = 1.0 / (1.0 + jnp.exp(-h))
    return h.reshape(h.shape[0], 1)


def make_params(key):
    k1, k2, k3, kb1, kb2, kb3 = jax.random.split(key, 6)
    std = 0.02
    return {
        "w1": std * jax.random.normal(k1, (4, 4, 1, C1), jnp.float32),
        "b1": 0.01 * jax.random.normal(kb1, (C1,), jnp.float32),
        "g1": jnp.ones((C1,), jnp.float32),
        "be1": jnp.zeros((C1,), jnp.float32),
        "w2": std * jax.random.normal(k2, (4, 4, C1, C2), jnp.float32),
        "b2": 0.01 * jax.random.normal(kb2, (C2,), jnp.float32),
        "g2": jnp.ones((C2,), jnp.float32),
        "be2": jnp.zeros((C2,), jnp.float32),
        "w3": std * jax.random.normal(k3, (7, 7, C2, 1), jnp.float32),
        "b3": 0.01 * jax.random.normal(kb3, (1,), jnp.float32),
    }


if __name__ == "__main__":
    key = jax.random.PRNGKey(0)
    kx, kp = jax.random.split(key)

    # 28x28 is required so conv3 (k=7, no pad) reduces 7x7 -> 1x1 (MNIST shape).
    x = jax.random.normal(kx, (2, 1, 28, 28), jnp.float32)   # NCHW input
    params = make_params(kp)

    out = jax.block_until_ready(discriminator_forward(x, params))
    assert out.shape == (2, 1), out.shape

    # tight check vs. a reference that mimics the kernel's bf16 matmul inputs
    ref_lp = jax.block_until_ready(reference_forward(x, params, True))
    assert jnp.allclose(out, ref_lp, rtol=1e-2, atol=1e-2), (out, ref_lp)
    # loose check vs. the pure-fp32 module semantics (bf16 MXU inputs only diff)
    ref_fp = jax.block_until_ready(reference_forward(x, params, False))
    assert jnp.allclose(out, ref_fp, rtol=6e-2, atol=6e-2), (out, ref_fp)

    print("KERNEL_OK")
</pallas_src>

<mosaic_0001>
module attributes {stable_mosaic.version = 11 : i64} {
  func.func @_conv1_kernel(%arg0: i32, %arg1: memref<1x256x16xbf16, #tpu.memory_space<vmem>>, %arg2: memref<16x128xbf16, #tpu.memory_space<vmem>>, %arg3: memref<1x128xf32, #tpu.memory_space<vmem>>, %arg4: memref<256x1xf32, #tpu.memory_space<vmem>>, %arg5: memref<1x256x128xbf16, #tpu.memory_space<vmem>>, %arg6: memref<1x1x128xf32, #tpu.memory_space<vmem>>, %arg7: memref<1x1x128xf32, #tpu.memory_space<vmem>>) attributes {dimension_semantics = [#tpu.dimension_semantics<parallel>], iteration_bounds = array<i64: 2>, scalar_prefetch = 0 : i64, scratch_operands = 0 : i64, tpu.core_type = #tpu.core_type<tc>, window_params = [{transform_indices = @transform_0, window_bounds = array<i64: 1, 256, 16>}, {pipeline_mode = #tpu.pipeline_mode<synchronous>, transform_indices = @transform_1, window_bounds = array<i64: 16, 128>}, {pipeline_mode = #tpu.pipeline_mode<synchronous>, transform_indices = @transform_2, window_bounds = array<i64: 1, 128>}, {pipeline_mode = #tpu.pipeline_mode<synchronous>, transform_indices = @transform_3, window_bounds = array<i64: 256, 1>}, {transform_indices = @transform_4, window_bounds = array<i64: 1, 256, 128>}, {transform_indices = @transform_5, window_bounds = array<i64: 1, 1, 128>}, {transform_indices = @transform_6, window_bounds = array<i64: 1, 1, 128>}]} {
    %c0 = arith.constant 0 : index
    %c0_0 = arith.constant 0 : index
    %c0_1 = arith.constant 0 : index
    %0 = vector.load %arg1[%c0, %c0_0, %c0_1] : memref<1x256x16xbf16, #tpu.memory_space<vmem>>, vector<1x256x16xbf16>
    %1 = vector.shape_cast %0 : vector<1x256x16xbf16> to vector<256x16xbf16>
    %c0_2 = arith.constant 0 : index
    %c0_3 = arith.constant 0 : index
    %2 = vector.load %arg2[%c0_2, %c0_3] : memref<16x128xbf16, #tpu.memory_space<vmem>>, vector<16x128xbf16>
    %cst = arith.constant dense<0.000000e+00> : vector<256x128xf32>
    %3 = tpu.matmul %1, %2, %cst {dimension_numbers = #tpu.dot_dimension_numbers<[1], [0], [0], [1], [0, 0, 1, 1], [], []>} : vector<256x16xbf16>, vector<16x128xbf16>, vector<256x128xf32> -> vector<256x128xf32>
    %c0_4 = arith.constant 0 : index
    %c0_5 = arith.constant 0 : index
    %4 = vector.load %arg3[%c0_4, %c0_5] : memref<1x128xf32, #tpu.memory_space<vmem>>, vector<1x128xf32>
    %5 = vector.broadcast %4 : vector<1x128xf32> to vector<256x128xf32>
    %6 = arith.addf %3, %5 : vector<256x128xf32>
    %cst_6 = arith.constant 0.000000e+00 : f32
    %7 = vector.broadcast %cst_6 : f32 to vector<256x128xf32>
    %8 = arith.cmpf oge, %6, %7 : vector<256x128xf32>
    %cst_7 = arith.constant 2.000000e-01 : f32
    %9 = vector.broadcast %cst_7 : f32 to vector<256x128xf32>
    %10 = arith.mulf %9, %6 : vector<256x128xf32>
    %11 = arith.select %8, %6, %10 : vector<256x128xi1>, vector<256x128xf32>
    %c0_8 = arith.constant 0 : index
    %c0_9 = arith.constant 0 : index
    %12 = vector.load %arg4[%c0_8, %c0_9] : memref<256x1xf32, #tpu.memory_space<vmem>>, vector<256x1xf32>
    %13 = vector.broadcast %12 : vector<256x1xf32> to vector<256x128xf32>
    %14 = arith.mulf %11, %13 : vector<256x128xf32>
    %15 = arith.truncf %14 : vector<256x128xf32> to vector<256x128xbf16>
    %c0_10 = arith.constant 0 : index
    %c0_11 = arith.constant 0 : index
    %c0_12 = arith.constant 0 : index
    %16 = vector.load %arg5[%c0_10, %c0_11, %c0_12] : memref<1x256x128xbf16, #tpu.memory_space<vmem>>, vector<1x256x128xbf16>
    %17 = vector.shape_cast %16 : vector<1x256x128xbf16> to vector<256x128xbf16>
    %18 = vector.shape_cast %15 : vector<256x128xbf16> to vector<1x256x128xbf16>
    tpu.vector_store %arg5[%c0_10, %c0_11, %c0_12], %18 {strides = array<i32>} : memref<1x256x128xbf16, #tpu.memory_space<vmem>>, vector<1x256x128xbf16>,
    %cst_13 = arith.constant dense<0.000000e+00> : vector<128xf32>
    %19 = vector.multi_reduction <add>, %14, %cst_13 [0] : vector<256x128xf32> to vector<128xf32>
    %20 = vector.shape_cast %19 : vector<128xf32> to vector<1x128xf32>
    %c0_14 = arith.constant 0 : index
    %c0_15 = arith.constant 0 : index
    %c0_16 = arith.constant 0 : index
    %21 = vector.load %arg6[%c0_14, %c0_15, %c0_16] : memref<1x1x128xf32, #tpu.memory_space<vmem>>, vector<1x1x128xf32>
    %22 = vector.shape_cast %21 : vector<1x1x128xf32> to vector<1x128xf32>
    %23 = vector.shape_cast %20 : vector<1x128xf32> to vector<1x1x128xf32>
    tpu.vector_store %arg6[%c0_14, %c0_15, %c0_16], %23 {strides = array<i32>} : memref<1x1x128xf32, #tpu.memory_space<vmem>>, vector<1x1x128xf32>,
    %24 = arith.mulf %14, %14 : vector<256x128xf32>
    %cst_17 = arith.constant dense<0.000000e+00> : vector<128xf32>
    %25 = vector.multi_reduction <add>, %24, %cst_17 [0] : vector<256x128xf32> to vector<128xf32>
    %26 = vector.shape_cast %25 : vector<128xf32> to vector<1x128xf32>
    %c0_18 = arith.constant 0 : index
    %c0_19 = arith.constant 0 : index
    %c0_20 = arith.constant 0 : index
    %27 = vector.load %arg7[%c0_18, %c0_19, %c0_20] : memref<1x1x128xf32, #tpu.memory_space<vmem>>, vector<1x1x128xf32>
    %28 = vector.shape_cast %27 : vector<1x1x128xf32> to vector<1x128xf32>
    %29 = vector.shape_cast %26 : vector<1x128xf32> to vector<1x1x128xf32>
    tpu.vector_store %arg7[%c0_18, %c0_19, %c0_20], %29 {strides = array<i32>} : memref<1x1x128xf32, #tpu.memory_space<vmem>>, vector<1x1x128xf32>,
    return
  }
  func.func @transform_0(%arg0: i32) -> (i32, i32, i32) {
    %c0_i32 = arith.constant 0 : i32
    %c0_i32_0 = arith.constant 0 : i32
    %c0_i32_1 = arith.constant 0 : i32
    return %arg0, %c0_i32, %c0_i32_0 : i32, i32, i32
  }
  func.func @transform_1(%arg0: i32) -> (i32, i32) {
    %c0_i32 = arith.constant 0 : i32
    %c0_i32_0 = arith.constant 0 : i32
    %c0_i32_1 = arith.constant 0 : i32
    return %c0_i32, %c0_i32_0 : i32, i32
  }
  func.func @transform_2(%arg0: i32) -> (i32, i32) {
    %c0_i32 = arith.constant 0 : i32
    %c0_i32_0 = arith.constant 0 : i32
    %c0_i32_1 = arith.constant 0 : i32
    return %c0_i32, %c0_i32_0 : i32, i32
  }
  func.func @transform_3(%arg0: i32) -> (i32, i32) {
    %c0_i32 = arith.constant 0 : i32
    %c0_i32_0 = arith.constant 0 : i32
    %c0_i32_1 = arith.constant 0 : i32
    return %c0_i32, %c0_i32_0 : i32, i32
  }
  func.func @transform_4(%arg0: i32) -> (i32, i32, i32) {
    %c0_i32 = arith.constant 0 : i32
    %c0_i32_0 = arith.constant 0 : i32
    %c0_i32_1 = arith.constant 0 : i32
    return %arg0, %c0_i32, %c0_i32_0 : i32, i32, i32
  }
  func.func @transform_5(%arg0: i32) -> (i32, i32, i32) {
    %c0_i32 = arith.constant 0 : i32
    %c0_i32_0 = arith.constant 0 : i32
    %c0_i32_1 = arith.constant 0 : i32
    return %arg0, %c0_i32, %c0_i32_0 : i32, i32, i32
  }
  func.func @transform_6(%arg0: i32) -> (i32, i32, i32) {
    %c0_i32 = arith.constant 0 : i32
    %c0_i32_0 = arith.constant 0 : i32
    %c0_i32_1 = arith.constant 0 : i32
    return %arg0, %c0_i32, %c0_i32_0 : i32, i32, i32
  }
}

module attributes {stable_mosaic.version = 11 : i64} {
  func.func @_conv2_head_kernel(%arg0: i32, %arg1: memref<1x256x128xbf16, #tpu.memory_space<vmem>>, %arg2: memref<1x128xf32, #tpu.memory_space<vmem>>, %arg3: memref<1x128xf32, #tpu.memory_space<vmem>>, %arg4: memref<256x1xf32, #tpu.memory_space<vmem>>, %arg5: memref<16x128x256xbf16, #tpu.memory_space<vmem>>, %arg6: memref<1x256xf32, #tpu.memory_space<vmem>>, %arg7: memref<64x256xf32, #tpu.memory_space<vmem>>, %arg8: memref<64x1xf32, #tpu.memory_space<vmem>>, %arg9: memref<1x1x256xf32, #tpu.memory_space<vmem>>, %arg10: memref<1x1x256xf32, #tpu.memory_space<vmem>>, %arg11: memref<1x1x256xf32, #tpu.memory_space<vmem>>, %arg12: memref<256x128xbf16, #tpu.memory_space<vmem>>, %arg13: memref<64x256xf32, #tpu.memory_space<vmem>>) attributes {dimension_semantics = [#tpu.dimension_semantics<parallel>], iteration_bounds = array<i64: 2>, scalar_prefetch = 0 : i64, scratch_operands = 2 : i64, tpu.core_type = #tpu.core_type<tc>, window_params = [{transform_indices = @transform_0, window_bounds = array<i64: 1, 256, 128>}, {pipeline_mode = #tpu.pipeline_mode<synchronous>, transform_indices = @transform_1, window_bounds = array<i64: 1, 128>}, {pipeline_mode = #tpu.pipeline_mode<synchronous>, transform_indices = @transform_2, window_bounds = array<i64: 1, 128>}, {pipeline_mode = #tpu.pipeline_mode<synchronous>, transform_indices = @transform_3, window_bounds = array<i64: 256, 1>}, {pipeline_mode = #tpu.pipeline_mode<synchronous>, transform_indices = @transform_4, window_bounds = array<i64: 16, 128, 256>}, {pipeline_mode = #tpu.pipeline_mode<synchronous>, transform_indices = @transform_5, window_bounds = array<i64: 1, 256>}, {pipeline_mode = #tpu.pipeline_mode<synchronous>, transform_indices = @transform_6, window_bounds = array<i64: 64, 256>}, {pipeline_mode = #tpu.pipeline_mode<synchronous>, transform_indices = @transform_7, window_bounds = array<i64: 64, 1>}, {transform_indices = @transform_8, window_bounds = array<i64: 1, 1, 256>}, {transform_indices = @transform_9, window_bounds = array<i64: 1, 1, 256>}, {transform_indices = @transform_10, window_bounds = array<i64: 1, 1, 256>}]} {
    %c0 = arith.constant 0 : index
    %c0_0 = arith.constant 0 : index
    %c0_1 = arith.constant 0 : index
    %0 = vector.load %arg1[%c0, %c0_0, %c0_1] : memref<1x256x128xbf16, #tpu.memory_space<vmem>>, vector<1x256x128xbf16>
    %1 = vector.shape_cast %0 : vector<1x256x128xbf16> to vector<256x128xbf16>
    %2 = arith.extf %1 : vector<256x128xbf16> to vector<256x128xf32>
    %c0_2 = arith.constant 0 : index
    %c0_3 = arith.constant 0 : index
    %3 = vector.load %arg2[%c0_2, %c0_3] : memref<1x128xf32, #tpu.memory_space<vmem>>, vector<1x128xf32>
    %4 = vector.broadcast %3 : vector<1x128xf32> to vector<256x128xf32>
    %5 = arith.mulf %2, %4 : vector<256x128xf32>
    %c0_4 = arith.constant 0 : index
    %c0_5 = arith.constant 0 : index
    %6 = vector.load %arg3[%c0_4, %c0_5] : memref<1x128xf32, #tpu.memory_space<vmem>>, vector<1x128xf32>
    %7 = vector.broadcast %6 : vector<1x128xf32> to vector<256x128xf32>
    %8 = arith.addf %5, %7 : vector<256x128xf32>
    %c0_6 = arith.constant 0 : index
    %c0_7 = arith.constant 0 : index
    %9 = vector.load %arg4[%c0_6, %c0_7] : memref<256x1xf32, #tpu.memory_space<vmem>>, vector<256x1xf32>
    %10 = vector.broadcast %9 : vector<256x1xf32> to vector<256x128xf32>
    %11 = arith.mulf %8, %10 : vector<256x128xf32>
    %12 = arith.truncf %11 : vector<256x128xf32> to vector<256x128xbf16>
    %c0_8 = arith.constant 0 : index
    %c0_9 = arith.constant 0 : index
    %13 = vector.load %arg12[%c0_8, %c0_9] : memref<256x128xbf16, #tpu.memory_space<vmem>>, vector<256x128xbf16>
    tpu.vector_store %arg12[%c0_8, %c0_9], %12 {strides = array<i32>} : memref<256x128xbf16, #tpu.memory_space<vmem>>, vector<256x128xbf16>,
    %cst = arith.constant 0.000000e+00 : f32
    %14 = vector.broadcast %cst : f32 to vector<64x256xf32>
    %c0_10 = arith.constant 0 : index
    %c0_11 = arith.constant 0 : index
    %15 = vector.load %arg13[%c0_10, %c0_11] : memref<64x256xf32, #tpu.memory_space<vmem>>, vector<64x256xf32>
    tpu.vector_store %arg13[%c0_10, %c0_11], %14 {strides = array<i32>} : memref<64x256xf32, #tpu.memory_space<vmem>>, vector<64x256xf32>,
    %c192 = arith.constant 192 : index
    %c0_12 = arith.constant 0 : index
    %16 = vector.load %arg12[%c192, %c0_12] : memref<256x128xbf16, #tpu.memory_space<vmem>>, vector<64x128xbf16>
    %c0_13 = arith.constant 0 : index
    %c0_14 = arith.constant 0 : index
    %c0_15 = arith.constant 0 : index
    %17 = vector.load %arg5[%c0_13, %c0_14, %c0_15] : memref<16x128x256xbf16, #tpu.memory_space<vmem>>, vector<1x128x256xbf16>
    %18 = vector.shape_cast %17 : vector<1x128x256xbf16> to vector<128x256xbf16>
    %cst_16 = arith.constant dense<0.000000e+00> : vector<64x256xf32>
    %19 = tpu.matmul %16, %18, %cst_16 {dimension_numbers = #tpu.dot_dimension_numbers<[1], [0], [0], [1], [0, 0, 1, 1], [], []>} : vector<64x128xbf16>, vector<128x256xbf16>, vector<64x256xf32> -> vector<64x256xf32>
    %c0_17 = arith.constant 0 : index
    %c0_18 = arith.constant 0 : index
    %20 = vector.load %arg13[%c0_17, %c0_18] : memref<64x256xf32, #tpu.memory_space<vmem>>, vector<55x256xf32>
    %21 = vector.extract_strided_slice %19 {offsets = [0, 0], sizes = [55, 256], strides = [1, 1]} : vector<64x256xf32> to vector<55x256xf32>
    %22 = arith.addf %20, %21 : vector<55x256xf32>
    %c0_19 = arith.constant 0 : index
    %c0_20 = arith.constant 0 : index
    %23 = vector.load %arg13[%c0_19, %c0_20] : memref<64x256xf32, #tpu.memory_space<vmem>>, vector<55x256xf32>
    tpu.vector_store %arg13[%c0_19, %c0_20], %22 {strides = array<i32>} : memref<64x256xf32, #tpu.memory_space<vmem>>, vector<55x256xf32>,
    %c128 = arith.constant 128 : index
    %c0_21 = arith.constant 0 : index
    %24 = vector.load %arg12[%c128, %c0_21] : memref<256x128xbf16, #tpu.memory_space<vmem>>, vector<64x128xbf16>
    %c1 = arith.constant 1 : index
    %c0_22 = arith.constant 0 : index
    %c0_23 = arith.constant 0 : index
    %25 = vector.load %arg5[%c1, %c0_22, %c0_23] : memref<16x128x256xbf16, #tpu.memory_space<vmem>>, vector<1x128x256xbf16>
    %26 = vector.shape_cast %25 : vector<1x128x256xbf16> to vector<128x256xbf16>
    %cst_24 = arith.constant dense<0.000000e+00> : vector<64x256xf32>
    %27 = tpu.matmul %24, %26, %cst_24 {dimension_numbers = #tpu.dot_dimension_numbers<[1], [0], [0], [1], [0, 0, 1, 1], [], []>} : vector<64x128xbf16>, vector<128x256xbf16>, vector<64x256xf32> -> vector<64x256xf32>
    %c0_25 = arith.constant 0 : index
    %c0_26 = arith.constant 0 : index
    %28 = vector.load %arg13[%c0_25, %c0_26] : memref<64x256xf32, #tpu.memory_space<vmem>>, vector<55x256xf32>
    %29 = vector.extract_strided_slice %27 {offsets = [0, 0], sizes = [55, 256], strides = [1, 1]} : vector<64x256xf32> to vector<55x256xf32>
    %30 = arith.addf %28, %29 : vector<55x256xf32>
    %c0_27 = arith.constant 0 : index
    %c0_28 = arith.constant 0 : index
    %31 = vector.load %arg13[%c0_27, %c0_28] : memref<64x256xf32, #tpu.memory_space<vmem>>, vector<55x256xf32>
    tpu.vector_store %arg13[%c0_27, %c0_28], %30 {strides = array<i32>} : memref<64x256xf32, #tpu.memory_space<vmem>>, vector<55x256xf32>,
    %c192_29 = arith.constant 192 : index
    %c0_30 = arith.constant 0 : index
    %32 = vector.load %arg12[%c192_29, %c0_30] : memref<256x128xbf16, #tpu.memory_space<vmem>>, vector<64x128xbf16>
    %c2 = arith.constant 2 : index
    %c0_31 = arith.constant 0 : index
    %c0_32 = arith.constant 0 : index
    %33 = vector.load %arg5[%c2, %c0_31, %c0_32] : memref<16x128x256xbf16, #tpu.memory_space<vmem>>, vector<1x128x256xbf16>
    %34 = vector.shape_cast %33 : vector<1x128x256xbf16> to vector<128x256xbf16>
    %cst_33 = arith.constant dense<0.000000e+00> : vector<64x256xf32>
    %35 = tpu.matmul %32, %34, %cst_33 {dimension_numbers = #tpu.dot_dimension_numbers<[1], [0], [0], [1], [0, 0, 1, 1], [], []>} : vector<64x128xbf16>, vector<128x256xbf16>, vector<64x256xf32> -> vector<64x256xf32>
    %c0_34 = arith.constant 0 : index
    %c0_35 = arith.constant 0 : index
    %36 = vector.load %arg13[%c0_34, %c0_35] : memref<64x256xf32, #tpu.memory_space<vmem>>, vector<55x256xf32>
    %37 = vector.extract_strided_slice %35 {offsets = [1, 0], sizes = [55, 256], strides = [1, 1]} : vector<64x256xf32> to vector<55x256xf32>
    %38 = arith.addf %36, %37 : vector<55x256xf32>
    %c0_36 = arith.constant 0 : index
    %c0_37 = arith.constant 0 : index
    %39 = vector.load %arg13[%c0_36, %c0_37] : memref<64x256xf32, #tpu.memory_space<vmem>>, vector<55x256xf32>
    tpu.vector_store %arg13[%c0_36, %c0_37], %38 {strides = array<i32>} : memref<64x256xf32, #tpu.memory_space<vmem>>, vector<55x256xf32>,
    %c128_38 = arith.constant 128 : index
    %c0_39 = arith.constant 0 : index
    %40 = vector.load %arg12[%c128_38, %c0_39] : memref<256x128xbf16, #tpu.memory_space<vmem>>, vector<64x128xbf16>
    %c3 = arith.constant 3 : index
    %c0_40 = arith.constant 0 : index
    %c0_41 = arith.constant 0 : index
    %41 = vector.load %arg5[%c3, %c0_40, %c0_41] : memref<16x128x256xbf16, #tpu.memory_space<vmem>>, vector<1x128x256xbf16>
    %42 = vector.shape_cast %41 : vector<1x128x256xbf16> to vector<128x256xbf16>
    %cst_42 = arith.constant dense<0.000000e+00> : vector<64x256xf32>
    %43 = tpu.matmul %40, %42, %cst_42 {dimension_numbers = #tpu.dot_dimension_numbers<[1], [0], [0], [1], [0, 0, 1, 1], [], []>} : vector<64x128xbf16>, vector<128x256xbf16>, vector<64x256xf32> -> vector<64x256xf32>
    %c0_43 = arith.constant 0 : index
    %c0_44 = arith.constant 0 : index
    %44 = vector.load %arg13[%c0_43, %c0_44] : memref<64x256xf32, #tpu.memory_space<vmem>>, vector<55x256xf32>
    %45 = vector.extract_strided_slice %43 {offsets = [1, 0], sizes = [55, 256], strides = [1, 1]} : vector<64x256xf32> to vector<55x256xf32>
    %46 = arith.addf %44, %45 : vector<55x256xf32>
    %c0_45 = arith.constant 0 : index
    %c0_46 = arith.constant 0 : index
    %47 = vector.load %arg13[%c0_45, %c0_46] : memref<64x256xf32, #tpu.memory_space<vmem>>, vector<55x256xf32>
    tpu.vector_store %arg13[%c0_45, %c0_46], %46 {strides = array<i32>} : memref<64x256xf32, #tpu.memory_space<vmem>>, vector<55x256xf32>,
    %c64 = arith.constant 64 : index
    %c0_47 = arith.constant 0 : index
    %48 = vector.load %arg12[%c64, %c0_47] : memref<256x128xbf16, #tpu.memory_space<vmem>>, vector<64x128xbf16>
    %c4 = arith.constant 4 : index
    %c0_48 = arith.constant 0 : index
    %c0_49 = arith.constant 0 : index
    %49 = vector.load %arg5[%c4, %c0_48, %c0_49] : memref<16x128x256xbf16, #tpu.memory_space<vmem>>, vector<1x128x256xbf16>
    %50 = vector.shape_cast %49 : vector<1x128x256xbf16> to vector<128x256xbf16>
    %cst_50 = arith.constant dense<0.000000e+00> : vector<64x256xf32>
    %51 = tpu.matmul %48, %50, %cst_50 {dimension_numbers = #tpu.dot_dimension_numbers<[1], [0], [0], [1], [0, 0, 1, 1], [], []>} : vector<64x128xbf16>, vector<128x256xbf16>, vector<64x256xf32> -> vector<64x256xf32>
    %c0_51 = arith.constant 0 : index
    %c0_52 = arith.constant 0 : index
    %52 = vector.load %arg13[%c0_51, %c0_52] : memref<64x256xf32, #tpu.memory_space<vmem>>, vector<55x256xf32>
    %53 = vector.extract_strided_slice %51 {offsets = [0, 0], sizes = [55, 256], strides = [1, 1]} : vector<64x256xf32> to vector<55x256xf32>
    %54 = arith.addf %52, %53 : vector<55x256xf32>
    %c0_53 = arith.constant 0 : index
    %c0_54 = arith.constant 0 : index
    %55 = vector.load %arg13[%c0_53, %c0_54] : memref<64x256xf32, #tpu.memory_space<vmem>>, vector<55x256xf32>
    tpu.vector_store %arg13[%c0_53, %c0_54], %54 {strides = array<i32>} : memref<64x256xf32, #tpu.memory_space<vmem>>, vector<55x256xf32>,
    %c0_55 = arith.constant 0 : index
    %c0_56 = arith.constant 0 : index
    %56 = vector.load %arg12[%c0_55, %c0_56] : memref<256x128xbf16, #tpu.memory_space<vmem>>, vector<64x128xbf16>
    %c5 = arith.constant 5 : index
    %c0_57 = arith.constant 0 : index
    %c0_58 = arith.constant 0 : index
    %57 = vector.load %arg5[%c5, %c0_57, %c0_58] : memref<16x128x256xbf16, #tpu.memory_space<vmem>>, vector<1x128x256xbf16>
    %58 = vector.shape_cast %57 : vector<1x128x256xbf16> to vector<128x256xbf16>
    %cst_59 = arith.constant dense<0.000000e+00> : vector<64x256xf32>
    %59 = tpu.matmul %56, %58, %cst_59 {dimension_numbers = #tpu.dot_dimension_numbers<[1], [0], [0], [1], [0, 0, 1, 1], [], []>} : vector<64x128xbf16>, vector<128x256xbf16>, vector<64x256xf32> -> vector<64x256xf32>
    %c0_60 = arith.constant 0 : index
    %c0_61 = arith.constant 0 : index
    %60 = vector.load %arg13[%c0_60, %c0_61] : memref<64x256xf32, #tpu.memory_space<vmem>>, vector<55x256xf32>
    %61 = vector.extract_strided_slice %59 {offsets = [0, 0], sizes = [55, 256], strides = [1, 1]} : vector<64x256xf32> to vector<55x256xf32>
    %62 = arith.addf %60, %61 : vector<55x256xf32>
    %c0_62 = arith.constant 0 : index
    %c0_63 = arith.constant 0 : index
    %63 = vector.load %arg13[%c0_62, %c0_63] : memref<64x256xf32, #tpu.memory_space<vmem>>, vector<55x256xf32>
    tpu.vector_store %arg13[%c0_62, %c0_63], %62 {strides = array<i32>} : memref<64x256xf32, #tpu.memory_space<vmem>>, vector<55x256xf32>,
    %c64_64 = arith.constant 64 : index
    %c0_65 = arith.constant 0 : index
    %64 = vector.load %arg12[%c64_64, %c0_65] : memref<256x128xbf16, #tpu.memory_space<vmem>>, vector<64x128xbf16>
    %c6 = arith.constant 6 : index
    %c0_66 = arith.constant 0 : index
    %c0_67 = arith.constant 0 : index
    %65 = vector.load %arg5[%c6, %c0_66, %c0_67] : memref<16x128x256xbf16, #tpu.memory_space<vmem>>, vector<1x128x256xbf16>
    %66 = vector.shape_cast %65 : vector<1x128x256xbf16> to vector<128x256xbf16>
    %cst_68 = arith.constant dense<0.000000e+00> : vector<64x256xf32>
    %67 = tpu.matmul %64, %66, %cst_68 {dimension_numbers = #tpu.dot_dimension_numbers<[1], [0], [0], [1], [0, 0, 1, 1], [], []>} : vector<64x128xbf16>, vector<128x256xbf16>, vector<64x256xf32> -> vector<64x256xf32>
    %c0_69 = arith.constant 0 : index
    %c0_70 = arith.constant 0 : index
    %68 = vector.load %arg13[%c0_69, %c0_70] : memref<64x256xf32, #tpu.memory_space<vmem>>, vector<55x256xf32>
    %69 = vector.extract_strided_slice %67 {offsets = [1, 0], sizes = [55, 256], strides = [1, 1]} : vector<64x256xf32> to vector<55x256xf32>
    %70 = arith.addf %68, %69 : vector<55x256xf32>
    %c0_71 = arith.constant 0 : index
    %c0_72 = arith.constant 0 : index
    %71 = vector.load %arg13[%c0_71, %c0_72] : memref<64x256xf32, #tpu.memory_space<vmem>>, vector<55x256xf32>
    tpu.vector_store %arg13[%c0_71, %c0_72], %70 {strides = array<i32>} : memref<64x256xf32, #tpu.memory_space<vmem>>, vector<55x256xf32>,
    %c0_73 = arith.constant 0 : index
    %c0_74 = arith.constant 0 : index
    %72 = vector.load %arg12[%c0_73, %c0_74] : memref<256x128xbf16, #tpu.memory_space<vmem>>, vector<64x128xbf16>
    %c7 = arith.constant 7 : index
    %c0_75 = arith.constant 0 : index
    %c0_76 = arith.constant 0 : index
    %73 = vector.load %arg5[%c7, %c0_75, %c0_76] : memref<16x128x256xbf16, #tpu.memory_space<vmem>>, vector<1x128x256xbf16>
    %74 = vector.shape_cast %73 : vector<1x128x256xbf16> to vector<128x256xbf16>
    %cst_77 = arith.constant dense<0.000000e+00> : vector<64x256xf32>
    %75 = tpu.matmul %72, %74, %cst_77 {dimension_numbers = #tpu.dot_dimension_numbers<[1], [0], [0], [1], [0, 0, 1, 1], [], []>} : vector<64x128xbf16>, vector<128x256xbf16>, vector<64x256xf32> -> vector<64x256xf32>
    %c0_78 = arith.constant 0 : index
    %c0_79 = arith.constant 0 : index
    %76 = vector.load %arg13[%c0_78, %c0_79] : memref<64x256xf32, #tpu.memory_space<vmem>>, vector<55x256xf32>
    %77 = vector.extract_strided_slice %75 {offsets = [1, 0], sizes = [55, 256], strides = [1, 1]} : vector<64x256xf32> to vector<55x256xf32>
    %78 = arith.addf %76, %77 : vector<55x256xf32>
    %c0_80 = arith.constant 0 : index
    %c0_81 = arith.constant 0 : index
    %79 = vector.load %arg13[%c0_80, %c0_81] : memref<64x256xf32, #tpu.memory_space<vmem>>, vector<55x256xf32>
    tpu.vector_store %arg13[%c0_80, %c0_81], %78 {strides = array<i32>} : memref<64x256xf32, #tpu.memory_space<vmem>>, vector<55x256xf32>,
    %c192_82 = arith.constant 192 : index
    %c0_83 = arith.constant 0 : index
    %80 = vector.load %arg12[%c192_82, %c0_83] : memref<256x128xbf16, #tpu.memory_space<vmem>>, vector<64x128xbf16>
    %c8 = arith.constant 8 : index
    %c0_84 = arith.constant 0 : index
    %c0_85 = arith.constant 0 : index
    %81 = vector.load %arg5[%c8, %c0_84, %c0_85] : memref<16x128x256xbf16, #tpu.memory_space<vmem>>, vector<1x128x256xbf16>
    %82 = vector.shape_cast %81 : vector<1x128x256xbf16> to vector<128x256xbf16>
    %cst_86 = arith.constant dense<0.000000e+00> : vector<64x256xf32>
    %83 = tpu.matmul %80, %82, %cst_86 {dimension_numbers = #tpu.dot_dimension_numbers<[1], [0], [0], [1], [0, 0, 1, 1], [], []>} : vector<64x128xbf16>, vector<128x256xbf16>, vector<64x256xf32> -> vector<64x256xf32>
    %c0_87 = arith.constant 0 : index
    %c0_88 = arith.constant 0 : index
    %84 = vector.load %arg13[%c0_87, %c0_88] : memref<64x256xf32, #tpu.memory_space<vmem>>, vector<55x256xf32>
    %85 = vector.extract_strided_slice %83 {offsets = [8, 0], sizes = [55, 256], strides = [1, 1]} : vector<64x256xf32> to vector<55x256xf32>
    %86 = arith.addf %84, %85 : vector<55x256xf32>
    %c0_89 = arith.constant 0 : index
    %c0_90 = arith.constant 0 : index
    %87 = vector.load %arg13[%c0_89, %c0_90] : memref<64x256xf32, #tpu.memory_space<vmem>>, vector<55x256xf32>
    tpu.vector_store %arg13[%c0_89, %c0_90], %86 {strides = array<i32>} : memref<64x256xf32, #tpu.memory_space<vmem>>, vector<55x256xf32>,
    %c128_91 = arith.constant 128 : index
    %c0_92 = arith.constant 0 : index
    %88 = vector.load %arg12[%c128_91, %c0_92] : memref<256x128xbf16, #tpu.memory_space<vmem>>, vector<64x128xbf16>
    %c9 = arith.constant 9 : index
    %c0_93 = arith.constant 0 : index
    %c0_94 = arith.constant 0 : index
    %89 = vector.load %arg5[%c9, %c0_93, %c0_94] : memref<16x128x256xbf16, #tpu.memory_space<vmem>>, vector<1x128x256xbf16>
    %90 = vector.shape_cast %89 : vector<1x128x256xbf16> to vector<128x256xbf16>
    %cst_95 = arith.constant dense<0.000000e+00> : vector<64x256xf32>
    %91 = tpu.matmul %88, %90, %cst_95 {dimension_numbers = #tpu.dot_dimension_numbers<[1], [0], [0], [1], [0, 0, 1, 1], [], []>} : vector<64x128xbf16>, vector<128x256xbf16>, vector<64x256xf32> -> vector<64x256xf32>
    %c0_96 = arith.constant 0 : index
    %c0_97 = arith.constant 0 : index
    %92 = vector.load %arg13[%c0_96, %c0_97] : memref<64x256xf32, #tpu.memory_space<vmem>>, vector<55x256xf32>
    %93 = vector.extract_strided_slice %91 {offsets = [8, 0], sizes = [55, 256], strides = [1, 1]} : vector<64x256xf32> to vector<55x256xf32>
    %94 = arith.addf %92, %93 : vector<55x256xf32>
    %c0_98 = arith.constant 0 : index
    %c0_99 = arith.constant 0 : index
    %95 = vector.load %arg13[%c0_98, %c0_99] : memref<64x256xf32, #tpu.memory_space<vmem>>, vector<55x256xf32>
    tpu.vector_store %arg13[%c0_98, %c0_99], %94 {strides = array<i32>} : memref<64x256xf32, #tpu.memory_space<vmem>>, vector<55x256xf32>,
    %c192_100 = arith.constant 192 : index
    %c0_101 = arith.constant 0 : index
    %96 = vector.load %arg12[%c192_100, %c0_101] : memref<256x128xbf16, #tpu.memory_space<vmem>>, vector<64x128xbf16>
    %c10 = arith.constant 10 : index
    %c0_102 = arith.constant 0 : index
    %c0_103 = arith.constant 0 : index
    %97 = vector.load %arg5[%c10, %c0_102, %c0_103] : memref<16x128x256xbf16, #tpu.memory_space<vmem>>, vector<1x128x256xbf16>
    %98 = vector.shape_cast %97 : vector<1x128x256xbf16> to vector<128x256xbf16>
    %cst_104 = arith.constant dense<0.000000e+00> : vector<64x256xf32>
    %99 = tpu.matmul %96, %98, %cst_104 {dimension_numbers = #tpu.dot_dimension_numbers<[1], [0], [0], [1], [0, 0, 1, 1], [], []>} : vector<64x128xbf16>, vector<128x256xbf16>, vector<64x256xf32> -> vector<64x256xf32>
    %c0_105 = arith.constant 0 : index
    %c0_106 = arith.constant 0 : index
    %100 = vector.load %arg13[%c0_105, %c0_106] : memref<64x256xf32, #tpu.memory_space<vmem>>, vector<55x256xf32>
    %101 = vector.extract_strided_slice %99 {offsets = [9, 0], sizes = [55, 256], strides = [1, 1]} : vector<64x256xf32> to vector<55x256xf32>
    %102 = arith.addf %100, %101 : vector<55x256xf32>
    %c0_107 = arith.constant 0 : index
    %c0_108 = arith.constant 0 : index
    %103 = vector.load %arg13[%c0_107, %c0_108] : memref<64x256xf32, #tpu.memory_space<vmem>>, vector<55x256xf32>
    tpu.vector_store %arg13[%c0_107, %c0_108], %102 {strides = array<i32>} : memref<64x256xf32, #tpu.memory_space<vmem>>, vector<55x256xf32>,
    %c128_109 = arith.constant 128 : index
    %c0_110 = arith.constant 0 : index
    %104 = vector.load %arg12[%c128_109, %c0_110] : memref<256x128xbf16, #tpu.memory_space<vmem>>, vector<64x128xbf16>
    %c11 = arith.constant 11 : index
    %c0_111 = arith.constant 0 : index
    %c0_112 = arith.constant 0 : index
    %105 = vector.load %arg5[%c11, %c0_111, %c0_112] : memref<16x128x256xbf16, #tpu.memory_space<vmem>>, vector<1x128x256xbf16>
    %106 = vector.shape_cast %105 : vector<1x128x256xbf16> to vector<128x256xbf16>
    %cst_113 = arith.constant dense<0.000000e+00> : vector<64x256xf32>
    %107 = tpu.matmul %104, %106, %cst_113 {dimension_numbers = #tpu.dot_dimension_numbers<[1], [0], [0], [1], [0, 0, 1, 1], [], []>} : vector<64x128xbf16>, vector<128x256xbf16>, vector<64x256xf32> -> vector<64x256xf32>
    %c0_114 = arith.constant 0 : index
    %c0_115 = arith.constant 0 : index
    %108 = vector.load %arg13[%c0_114, %c0_115] : memref<64x256xf32, #tpu.memory_space<vmem>>, vector<55x256xf32>
    %109 = vector.extract_strided_slice %107 {offsets = [9, 0], sizes = [55, 256], strides = [1, 1]} : vector<64x256xf32> to vector<55x256xf32>
    %110 = arith.addf %108, %109 : vector<55x256xf32>
    %c0_116 = arith.constant 0 : index
    %c0_117 = arith.constant 0 : index
    %111 = vector.load %arg13[%c0_116, %c0_117] : memref<64x256xf32, #tpu.memory_space<vmem>>, vector<55x256xf32>
    tpu.vector_store %arg13[%c0_116, %c0_117], %110 {strides = array<i32>} : memref<64x256xf32, #tpu.memory_space<vmem>>, vector<55x256xf32>,
    %c64_118 = arith.constant 64 : index
    %c0_119 = arith.constant 0 : index
    %112 = vector.load %arg12[%c64_118, %c0_119] : memref<256x128xbf16, #tpu.memory_space<vmem>>, vector<64x128xbf16>
    %c12 = arith.constant 12 : index
    %c0_120 = arith.constant 0 : index
    %c0_121 = arith.constant 0 : index
    %113 = vector.load %arg5[%c12, %c0_120, %c0_121] : memref<16x128x256xbf16, #tpu.memory_space<vmem>>, vector<1x128x256xbf16>
    %114 = vector.shape_cast %113 : vector<1x128x256xbf16> to vector<128x256xbf16>
    %cst_122 = arith.constant dense<0.000000e+00> : vector<64x256xf32>
    %115 = tpu.matmul %112, %114, %cst_122 {dimension_numbers = #tpu.dot_dimension_numbers<[1], [0], [0], [1], [0, 0, 1, 1], [], []>} : vector<64x128xbf16>, vector<128x256xbf16>, vector<64x256xf32> -> vector<64x256xf32>
    %c0_123 = arith.constant 0 : index
    %c0_124 = arith.constant 0 : index
    %116 = vector.load %arg13[%c0_123, %c0_124] : memref<64x256xf32, #tpu.memory_space<vmem>>, vector<55x256xf32>
    %117 = vector.extract_strided_slice %115 {offsets = [8, 0], sizes = [55, 256], strides = [1, 1]} : vector<64x256xf32> to vector<55x256xf32>
    %118 = arith.addf %116, %117 : vector<55x256xf32>
    %c0_125 = arith.constant 0 : index
    %c0_126 = arith.constant 0 : index
    %119 = vector.load %arg13[%c0_125, %c0_126] : memref<64x256xf32, #tpu.memory_space<vmem>>, vector<55x256xf32>
    tpu.vector_store %arg13[%c0_125, %c0_126], %118 {strides = array<i32>} : memref<64x256xf32, #tpu.memory_space<vmem>>, vector<55x256xf32>,
    %c0_127 = arith.constant 0 : index
    %c0_128 = arith.constant 0 : index
    %120 = vector.load %arg12[%c0_127, %c0_128] : memref<256x128xbf16, #tpu.memory_space<vmem>>, vector<64x128xbf16>
    %c13 = arith.constant 13 : index
    %c0_129 = arith.constant 0 : index
    %c0_130 = arith.constant 0 : index
    %121 = vector.load %arg5[%c13, %c0_129, %c0_130] : memref<16x128x256xbf16, #tpu.memory_space<vmem>>, vector<1x128x256xbf16>
    %122 = vector.shape_cast %121 : vector<1x128x256xbf16> to vector<128x256xbf16>
    %cst_131 = arith.constant dense<0.000000e+00> : vector<64x256xf32>
    %123 = tpu.matmul %120, %122, %cst_131 {dimension_numbers = #tpu.dot_dimension_numbers<[1], [0], [0], [1], [0, 0, 1, 1], [], []>} : vector<64x128xbf16>, vector<128x256xbf16>, vector<64x256xf32> -> vector<64x256xf32>
    %c0_132 = arith.constant 0 : index
    %c0_133 = arith.constant 0 : index
    %124 = vector.load %arg13[%c0_132, %c0_133] : memref<64x256xf32, #tpu.memory_space<vmem>>, vector<55x256xf32>
    %125 = vector.extract_strided_slice %123 {offsets = [8, 0], sizes = [55, 256], strides = [1, 1]} : vector<64x256xf32> to vector<55x256xf32>
    %126 = arith.addf %124, %125 : vector<55x256xf32>
    %c0_134 = arith.constant 0 : index
    %c0_135 = arith.constant 0 : index
    %127 = vector.load %arg13[%c0_134, %c0_135] : memref<64x256xf32, #tpu.memory_space<vmem>>, vector<55x256xf32>
    tpu.vector_store %arg13[%c0_134, %c0_135], %126 {strides = array<i32>} : memref<64x256xf32, #tpu.memory_space<vmem>>, vector<55x256xf32>,
    %c64_136 = arith.constant 64 : index
    %c0_137 = arith.constant 0 : index
    %128 = vector.load %arg12[%c64_136, %c0_137] : memref<256x128xbf16, #tpu.memory_space<vmem>>, vector<64x128xbf16>
    %c14 = arith.constant 14 : index
    %c0_138 = arith.constant 0 : index
    %c0_139 = arith.constant 0 : index
    %129 = vector.load %arg5[%c14, %c0_138, %c0_139] : memref<16x128x256xbf16, #tpu.memory_space<vmem>>, vector<1x128x256xbf16>
    %130 = vector.shape_cast %129 : vector<1x128x256xbf16> to vector<128x256xbf16>
    %cst_140 = arith.constant dense<0.000000e+00> : vector<64x256xf32>
    %131 = tpu.matmul %128, %130, %cst_140 {dimension_numbers = #tpu.dot_dimension_numbers<[1], [0], [0], [1], [0, 0, 1, 1], [], []>} : vector<64x128xbf16>, vector<128x256xbf16>, vector<64x256xf32> -> vector<64x256xf32>
    %c0_141 = arith.constant 0 : index
    %c0_142 = arith.constant 0 : index
    %132 = vector.load %arg13[%c0_141, %c0_142] : memref<64x256xf32, #tpu.memory_space<vmem>>, vector<55x256xf32>
    %133 = vector.extract_strided_slice %131 {offsets = [9, 0], sizes = [55, 256], strides = [1, 1]} : vector<64x256xf32> to vector<55x256xf32>
    %134 = arith.addf %132, %133 : vector<55x256xf32>
    %c0_143 = arith.constant 0 : index
    %c0_144 = arith.constant 0 : index
    %135 = vector.load %arg13[%c0_143, %c0_144] : memref<64x256xf32, #tpu.memory_space<vmem>>, vector<55x256xf32>
    tpu.vector_store %arg13[%c0_143, %c0_144], %134 {strides = array<i32>} : memref<64x256xf32, #tpu.memory_space<vmem>>, vector<55x256xf32>,
    %c0_145 = arith.constant 0 : index
    %c0_146 = arith.constant 0 : index
    %136 = vector.load %arg12[%c0_145, %c0_146] : memref<256x128xbf16, #tpu.memory_space<vmem>>, vector<64x128xbf16>
    %c15 = arith.constant 15 : index
    %c0_147 = arith.constant 0 : index
    %c0_148 = arith.constant 0 : index
    %137 = vector.load %arg5[%c15, %c0_147, %c0_148] : memref<16x128x256xbf16, #tpu.memory_space<vmem>>, vector<1x128x256xbf16>
    %138 = vector.shape_cast %137 : vector<1x128x256xbf16> to vector<128x256xbf16>
    %cst_149 = arith.constant dense<0.000000e+00> : vector<64x256xf32>
    %139 = tpu.matmul %136, %138, %cst_149 {dimension_numbers = #tpu.dot_dimension_numbers<[1], [0], [0], [1], [0, 0, 1, 1], [], []>} : vector<64x128xbf16>, vector<128x256xbf16>, vector<64x256xf32> -> vector<64x256xf32>
    %c0_150 = arith.constant 0 : index
    %c0_151 = arith.constant 0 : index
    %140 = vector.load %arg13[%c0_150, %c0_151] : memref<64x256xf32, #tpu.memory_space<vmem>>, vector<55x256xf32>
    %141 = vector.extract_strided_slice %139 {offsets = [9, 0], sizes = [55, 256], strides = [1, 1]} : vector<64x256xf32> to vector<55x256xf32>
    %142 = arith.addf %140, %141 : vector<55x256xf32>
    %c0_152 = arith.constant 0 : index
    %c0_153 = arith.constant 0 : index
    %143 = vector.load %arg13[%c0_152, %c0_153] : memref<64x256xf32, #tpu.memory_space<vmem>>, vector<55x256xf32>
    tpu.vector_store %arg13[%c0_152, %c0_153], %142 {strides = array<i32>} : memref<64x256xf32, #tpu.memory_space<vmem>>, vector<55x256xf32>,
    %c0_154 = arith.constant 0 : index
    %c0_155 = arith.constant 0 : index
    %144 = vector.load %arg13[%c0_154, %c0_155] : memref<64x256xf32, #tpu.memory_space<vmem>>, vector<64x256xf32>
    %c0_156 = arith.constant 0 : index
    %c0_157 = arith.constant 0 : index
    %145 = vector.load %arg6[%c0_156, %c0_157] : memref<1x256xf32, #tpu.memory_space<vmem>>, vector<1x256xf32>
    %146 = vector.broadcast %145 : vector<1x256xf32> to vector<64x256xf32>
    %147 = arith.addf %144, %146 : vector<64x256xf32>
    %cst_158 = arith.constant 0.000000e+00 : f32
    %148 = vector.broadcast %cst_158 : f32 to vector<64x256xf32>
    %149 = arith.cmpf oge, %147, %148 : vector<64x256xf32>
    %cst_159 = arith.constant 2.000000e-01 : f32
    %150 = vector.broadcast %cst_159 : f32 to vector<64x256xf32>
    %151 = arith.mulf %150, %147 : vector<64x256xf32>
    %152 = arith.select %149, %147, %151 : vector<64x256xi1>, vector<64x256xf32>
    %c0_160 = arith.constant 0 : index
    %c0_161 = arith.constant 0 : index
    %153 = vector.load %arg8[%c0_160, %c0_161] : memref<64x1xf32, #tpu.memory_space<vmem>>, vector<64x1xf32>
    %154 = vector.broadcast %153 : vector<64x1xf32> to vector<64x256xf32>
    %155 = arith.mulf %152, %154 : vector<64x256xf32>
    %cst_162 = arith.constant dense<0.000000e+00> : vector<256xf32>
    %156 = vector.multi_reduction <add>, %155, %cst_162 [0] : vector<64x256xf32> to vector<256xf32>
    %157 = vector.shape_cast %156 : vector<256xf32> to vector<1x256xf32>
    %c0_163 = arith.constant 0 : index
    %c0_164 = arith.constant 0 : index
    %c0_165 = arith.constant 0 : index
    %158 = vector.load %arg9[%c0_163, %c0_164, %c0_165] : memref<1x1x256xf32, #tpu.memory_space<vmem>>, vector<1x1x256xf32>
    %159 = vector.shape_cast %158 : vector<1x1x256xf32> to vector<1x256xf32>
    %160 = vector.shape_cast %157 : vector<1x256xf32> to vector<1x1x256xf32>
    tpu.vector_store %arg9[%c0_163, %c0_164, %c0_165], %160 {strides = array<i32>} : memref<1x1x256xf32, #tpu.memory_space<vmem>>, vector<1x1x256xf32>,
    %161 = arith.mulf %155, %155 : vector<64x256xf32>
    %cst_166 = arith.constant dense<0.000000e+00> : vector<256xf32>
    %162 = vector.multi_reduction <add>, %161, %cst_166 [0] : vector<64x256xf32> to vector<256xf32>
    %163 = vector.shape_cast %162 : vector<256xf32> to vector<1x256xf32>
    %c0_167 = arith.constant 0 : index
    %c0_168 = arith.constant 0 : index
    %c0_169 = arith.constant 0 : index
    %164 = vector.load %arg10[%c0_167, %c0_168, %c0_169] : memref<1x1x256xf32, #tpu.memory_space<vmem>>, vector<1x1x256xf32>
    %165 = vector.shape_cast %164 : vector<1x1x256xf32> to vector<1x256xf32>
    %166 = vector.shape_cast %163 : vector<1x256xf32> to vector<1x1x256xf32>
    tpu.vector_store %arg10[%c0_167, %c0_168, %c0_169], %166 {strides = array<i32>} : memref<1x1x256xf32, #tpu.memory_space<vmem>>, vector<1x1x256xf32>,
    %c0_170 = arith.constant 0 : index
    %c0_171 = arith.constant 0 : index
    %167 = vector.load %arg7[%c0_170, %c0_171] : memref<64x256xf32, #tpu.memory_space<vmem>>, vector<64x256xf32>
    %168 = arith.mulf %155, %167 : vector<64x256xf32>
    %cst_172 = arith.constant dense<0.000000e+00> : vector<256xf32>
    %169 = vector.multi_reduction <add>, %168, %cst_172 [0] : vector<64x256xf32> to vector<256xf32>
    %170 = vector.shape_cast %169 : vector<256xf32> to vector<1x256xf32>
    %c0_173 = arith.constant 0 : index
    %c0_174 = arith.constant 0 : index
    %c0_175 = arith.constant 0 : index
    %171 = vector.load %arg11[%c0_173, %c0_174, %c0_175] : memref<1x1x256xf32, #tpu.memory_space<vmem>>, vector<1x1x256xf32>
    %172 = vector.shape_cast %171 : vector<1x1x256xf32> to vector<1x256xf32>
    %173 = vector.shape_cast %170 : vector<1x256xf32> to vector<1x1x256xf32>
    tpu.vector_store %arg11[%c0_173, %c0_174, %c0_175], %173 {strides = array<i32>} : memref<1x1x256xf32, #tpu.memory_space<vmem>>, vector<1x1x256xf32>,
    return
  }
  func.func @transform_0(%arg0: i32) -> (i32, i32, i32) {
    %c0_i32 = arith.constant 0 : i32
    %c0_i32_0 = arith.constant 0 : i32
    %c0_i32_1 = arith.constant 0 : i32
    return %arg0, %c0_i32, %c0_i32_0 : i32, i32, i32
  }
  func.func @transform_1(%arg0: i32) -> (i32, i32) {
    %c0_i32 = arith.constant 0 : i32
    %c0_i32_0 = arith.constant 0 : i32
    %c0_i32_1 = arith.constant 0 : i32
    return %c0_i32, %c0_i32_0 : i32, i32
  }
  func.func @transform_2(%arg0: i32) -> (i32, i32) {
    %c0_i32 = arith.constant 0 : i32
    %c0_i32_0 = arith.constant 0 : i32
    %c0_i32_1 = arith.constant 0 : i32
    return %c0_i32, %c0_i32_0 : i32, i32
  }
  func.func @transform_3(%arg0: i32) -> (i32, i32) {
    %c0_i32 = arith.constant 0 : i32
    %c0_i32_0 = arith.constant 0 : i32
    %c0_i32_1 = arith.constant 0 : i32
    return %c0_i32, %c0_i32_0 : i32, i32
  }
  func.func @transform_4(%arg0: i32) -> (i32, i32, i32) {
    %c0_i32 = arith.constant 0 : i32
    %c0_i32_0 = arith.constant 0 : i32
    %c0_i32_1 = arith.constant 0 : i32
    %c0_i32_2 = arith.constant 0 : i32
    return %c0_i32, %c0_i32_0, %c0_i32_1 : i32, i32, i32
  }
  func.func @transform_5(%arg0: i32) -> (i32, i32) {
    %c0_i32 = arith.constant 0 : i32
    %c0_i32_0 = arith.constant 0 : i32
    %c0_i32_1 = arith.constant 0 : i32
    return %c0_i32, %c0_i32_0 : i32, i32
  }
  func.func @transform_6(%arg0: i32) -> (i32, i32) {
    %c0_i32 = arith.constant 0 : i32
    %c0_i32_0 = arith.constant 0 : i32
    %c0_i32_1 = arith.constant 0 : i32
    return %c0_i32, %c0_i32_0 : i32, i32
  }
  func.func @transform_7(%arg0: i32) -> (i32, i32) {
    %c0_i32 = arith.constant 0 : i32
    %c0_i32_0 = arith.constant 0 : i32
    %c0_i32_1 = arith.constant 0 : i32
    return %c0_i32, %c0_i32_0 : i32, i32
  }
  func.func @transform_8(%arg0: i32) -> (i32, i32, i32) {
    %c0_i32 = arith.constant 0 : i32
    %c0_i32_0 = arith.constant 0 : i32
    %c0_i32_1 = arith.constant 0 : i32
    return %arg0, %c0_i32, %c0_i32_0 : i32, i32, i32
  }
  func.func @transform_9(%arg0: i32) -> (i32, i32, i32) {
    %c0_i32 = arith.constant 0 : i32
    %c0_i32_0 = arith.constant 0 : i32
    %c0_i32_1 = arith.constant 0 : i32
    return %arg0, %c0_i32, %c0_i32_0 : i32, i32, i32
  }
  func.func @transform_10(%arg0: i32) -> (i32, i32, i32) {
    %c0_i32 = arith.constant 0 : i32
    %c0_i32_0 = arith.constant 0 : i32
    %c0_i32_1 = arith.constant 0 : i32
    return %arg0, %c0_i32, %c0_i32_0 : i32, i32, i32
  }
}

module attributes {stable_mosaic.version = 11 : i64} {
  func.func @_head_kernel(%arg0: memref<2x256xf32, #tpu.memory_space<vmem>>, %arg1: memref<1x256xf32, #tpu.memory_space<vmem>>, %arg2: memref<1x1xf32, #tpu.memory_space<vmem>>, %arg3: memref<2x1xf32, #tpu.memory_space<vmem>>) attributes {dimension_semantics = [], scalar_prefetch = 0 : i64, scratch_operands = 0 : i64, tpu.core_type = #tpu.core_type<tc>} {
    %c0 = arith.constant 0 : index
    %c0_0 = arith.constant 0 : index
    %0 = vector.load %arg0[%c0, %c0_0] : memref<2x256xf32, #tpu.memory_space<vmem>>, vector<2x256xf32>
    %c0_1 = arith.constant 0 : index
    %c0_2 = arith.constant 0 : index
    %1 = vector.load %arg1[%c0_1, %c0_2] : memref<1x256xf32, #tpu.memory_space<vmem>>, vector<1x256xf32>
    %2 = vector.broadcast %1 : vector<1x256xf32> to vector<2x256xf32>
    %3 = arith.mulf %0, %2 : vector<2x256xf32>
    %cst = arith.constant dense<0.000000e+00> : vector<2xf32>
    %4 = vector.multi_reduction <add>, %3, %cst [1] : vector<2x256xf32> to vector<2xf32>
    %5 = vector.shape_cast %4 : vector<2xf32> to vector<2x1xf32>
    %c0_3 = arith.constant 0 : index
    %c0_4 = arith.constant 0 : index
    %6 = vector.load %arg2[%c0_3, %c0_4] : memref<1x1xf32, #tpu.memory_space<vmem>>, vector<1x1xf32>
    %7 = vector.broadcast %6 : vector<1x1xf32> to vector<2x1xf32>
    %8 = arith.addf %5, %7 : vector<2x1xf32>
    %cst_5 = arith.constant 0.000000e+00 : f32
    %9 = vector.broadcast %cst_5 : f32 to vector<2x1xf32>
    %10 = arith.cmpf oge, %8, %9 : vector<2x1xf32>
    %cst_6 = arith.constant 2.000000e-01 : f32
    %11 = vector.broadcast %cst_6 : f32 to vector<2x1xf32>
    %12 = arith.mulf %11, %8 : vector<2x1xf32>
    %13 = arith.select %10, %8, %12 : vector<2x1xi1>, vector<2x1xf32>
    %cst_7 = arith.constant 0.000000e+00 : f32
    %14 = vector.broadcast %cst_7 : f32 to vector<2x1xf32>
    %15 = arith.subf %14, %13 : vector<2x1xf32>
    %16 = math.exp %15 : vector<2x1xf32>
    %cst_8 = arith.constant 1.000000e+00 : f32
    %17 = vector.broadcast %cst_8 : f32 to vector<2x1xf32>
    %18 = arith.addf %17, %16 : vector<2x1xf32>
    %19 = tpu.reciprocal %18 {approx = true} : vector<2x1xf32> -> vector<2x1xf32>
    %c0_9 = arith.constant 0 : index
    %c0_10 = arith.constant 0 : index
    %20 = vector.load %arg3[%c0_9, %c0_10] : memref<2x1xf32, #tpu.memory_space<vmem>>, vector<2x1xf32>
    tpu.vector_store %arg3[%c0_9, %c0_10], %19 {strides = array<i32>} : memref<2x1xf32, #tpu.memory_space<vmem>>, vector<2x1xf32>,
    return
  }
}

</mosaic_0001>

<llo_original>
// kernel: discriminator_forward.5
$region0: #{discriminator_forward.5}
  #allocation0 [shape = 'u32[]', space=smem, size = 0x4, offset = 0x4, fixed_abs, tag = 'smem constant byte address 0x4 - core index']
  #allocation1 [shape = 'u32[144,128]{1,0:T(1,128)}', space=vmem, size = 0x12000, scoped, tag = 'internal scratch']
  #allocation2 [shape = 'f32[1,1]{1,0:T(1,128)S(1)}', space=vmem, size = 0x200, scoped, tag = 'scoped memory for discriminator_forward.5']
  %s0 = inlined_call_operand.vmem [shape: f32[2,256], index: 0, kind: input, shape index: {}]
  %s1 = inlined_call_operand.vmem [shape: f32[1,256], index: 1, kind: input, shape index: {}]
  %s2 = inlined_call_operand.<no memory space> [shape: f32[1,1], index: 2, kind: input, shape index: {}]
  %s3 = inlined_call_operand.vmem [shape: f32[2,1], index: 3, kind: output, shape index: {}]
  %s4 = sld [smem:[#allocation0]]
  $region22: #{discriminator_forward.5} parent=0
    _
  %s6 = ssub.s32 1, %s4
  %s7 = scalar_select 0, %s6, %s4
  %v8 = vstv %s2
  %9 = vst [vmem:[#allocation2] sm:$0x1] %v8
  // Predicated region
  $region2: #{discriminator_forward.5} parent=0 // pred_check
    _
  $region3: #{discriminator_forward.5} parent=0 // pred_check_branch
    %11 = sbr.rel (0) target = $region5
  $region4: #{discriminator_forward.5} parent=0 // pred_region
    _
  $region5: #{discriminator_forward.5} parent=0 // pred_fallthru
    _
  // Predicated region
  $region6: #{discriminator_forward.5} parent=0 // pred_check
    _
  $region7: #{discriminator_forward.5} parent=0 // pred_check_branch
    %13 = sbr.rel (0) target = $region9
  $region8: #{discriminator_forward.5} parent=0 // pred_region
    _
  $region9: #{discriminator_forward.5} parent=0 // pred_fallthru
    _
  // Predicated region
  $region10: #{discriminator_forward.5} parent=0 // pred_check
    _
  $region11: #{discriminator_forward.5} parent=0 // pred_check_branch
    %15 = sbr.rel (0) target = $region13
  $region12: #{discriminator_forward.5} parent=0 // pred_region
    _
  $region13: #{discriminator_forward.5} parent=0 // pred_fallthru
    _
  %v16 = vld [vmem:[%s0] sm:$0xf]
  %v17 = vld [vmem:[%s1] sm:$0x3]
  %v19 = vlaneseq
  %v20 = vshrl.u32 %v19, 7
  %v21 = vsub.s32 0, %v20
  %v22 = vrot.slane %v17, %v21
  %v23 = vlaneseq
  %v24 = vshrl.u32 %v23, 7
  %v25 = vsub.s32 1, %v24
  %v26 = vrot.slane %v17, %v25
  %v27 = vcombine.low %v22, %v26
  %v29 = vunpack.c.l.s4 1983009808
  %v30 = vunpack.c.0.s8 %v29
  %v31 = vlaneseq
  %v32 = vshrl.u32 %v31, 7
  %v33 = vsub.s32 %v30, %v32
  %v34 = vrot.slane %v27, %v33
  %v36 = vmul.f32 %v16, %v34
  %v39 = vunpack.c.l.s4 1983009808
  %v40 = vunpack.c.0.s8 %v39
  %v41 = vlaneseq
  %v42 = vshrl.u32 %v41, 7
  %v43 = vsub.s32 %v40, %v42
  %v44 = vrot.slane %v36, %v43
  %v45 = vcombine.high %v44, %v44
  %vm48 = vcmask 1041408
  %v49 = vsel %vm48, %v44, 0.0
  %v50 = vsel %vm48, %v45, 0.0
  %v51 = vadd.f32 %v49, %v50
  %52 = vadd.xlane.f32.xlu0 %v51
  %v53 = vpop.xlane.xlu0 %52
  %v54 = vld [vmem:[#allocation2] sm:$0x1]
  %v56 = vlaneseq
  %v57 = vshrl.u32 %v56, 7
  %v58 = vsub.s32 0, %v57
  %v59 = vrot.slane %v54, %v58
  %v61 = vadd.f32 %v53, %v59
  %vm62 = vcmp.ge.f32.partialorder %v61, 0.0
  %v63 = vmul.f32 %v61, 0.2
  %v64 = vsel %vm62, %v61, %v63
  %v65 = vsub.f32 0.0, %v64
  %v66 = vmul.f32 %v65, 1.442695
  %v67 = vpow.pop %v66
  %v68 = vadd.f32 %v67, 1.0
  %v69 = vrcp.pop %v68
  %vm70 = vcmask 1024
  %71 = vst.msk [vmem:[%s3] sm:$0x3] %vm70, %v69
  // Predicated region
  $region14: #{discriminator_forward.5} parent=0 // pred_check
    _
  $region15: #{discriminator_forward.5} parent=0 // pred_check_branch
    %73 = sbr.rel (0) target = $region17
  $region16: #{discriminator_forward.5} parent=0 // pred_region
    _
  $region17: #{discriminator_forward.5} parent=0 // pred_fallthru
    _
  // Predicated region
  $region18: #{discriminator_forward.5} parent=0 // pred_check
    _
  $region19: #{discriminator_forward.5} parent=0 // pred_check_branch
    %75 = sbr.rel (0) target = $region21
  $region20: #{discriminator_forward.5} parent=0 // pred_region
    _
  $region21: #{discriminator_forward.5} parent=0 // pred_fallthru
    _

// kernel: discriminator_forward.3
$region0: #{discriminator_forward.3}
  #allocation0 [shape = 'u32[]', space=smem, size = 0x4, offset = 0x4, fixed_abs, tag = 'smem constant byte address 0x4 - core index']
  #allocation1 [shape = 'u32[144,128]{1,0:T(1,128)}', space=vmem, size = 0x12000, scoped, tag = 'internal scratch']
  %s0 = inlined_call_operand.vmem [shape: bf16[2,256,16], index: 0, kind: input, shape index: {}]
  %s1 = inlined_call_operand.vmem [shape: bf16[16,128], index: 1, kind: input, shape index: {}]
  %s2 = inlined_call_operand.vmem [shape: f32[1,128], index: 2, kind: input, shape index: {}]
  %s3 = inlined_call_operand.vmem [shape: f32[256,1], index: 3, kind: input, shape index: {}]
  %s4 = inlined_call_operand.vmem [shape: bf16[2,256,128], index: 4, kind: output, shape index: {0}]
  %s5 = inlined_call_operand.vmem [shape: f32[2,1,128], index: 5, kind: output, shape index: {1}]
  %s6 = inlined_call_operand.vmem [shape: f32[2,1,128], index: 6, kind: output, shape index: {2}]
  %7 = xla_tuple %s4, %s5, %s6
  %s8 = sld [smem:[#allocation0]]
  $region65: #{discriminator_forward.3} parent=0
    _
  %s10 = ssub.s32 1, %s8
  %s11 = scalar_select 0, %s10, %s8
  loop: start=0, step=1, limit=4
  $region2: #{discriminator_forward.3} parent=0 // loop_pre_header
    _
  $region3: #{discriminator_forward.3} parent=0 // loop_header
    %s13 = sphi 0, %s17
    %p14 = scmp.ge.s32.totalorder %s13, 4
    %s23 = sphi 0, %s25
    %s26 = sphi 0, %s23
    %s27 = sphi 0, %s26
    %s43 = sphi 0, %s27
    %s47 = sphi 0, %s47
    %s49 = sphi 0, %s47
    %s50 = sphi 0, %s49
    %s64 = sphi 0, %s50
    %s68 = sphi 0, %s68
    %s70 = sphi 0, %s68
    %s71 = sphi 0, %s70
    %s85 = sphi 0, %s71
    %s89 = sphi 0, %s89
    %s91 = sphi 0, %s89
    %s92 = sphi 0, %s91
    %s106 = sphi 0, %s92
    %s112 = sphi 0, %s114
    %s115 = sphi 0, %s112
    %s116 = sphi 0, %s115
    %s132 = sphi 0, %s116
    %s138 = sphi 0, %s140
    %s141 = sphi 0, %s138
    %s142 = sphi 0, %s141
    %s158 = sphi 0, %s142
    %s164 = sphi 0, %s166
    %s167 = sphi 0, %s164
    %s168 = sphi 0, %s167
    %s184 = sphi 0, %s168
  $region4: #{discriminator_forward.3} parent=0 // loop_header_branch
    %16 = sbr.rel (%p14) target = $region8
  $region5: #{discriminator_forward.3} parent=0 // loop_body
    %s18 = ssub.s32 %s13, 1
    %s19 = ssub.s32 %s13, 2
    %s20 = sadd.s32 %s13, 1
    %s21 = ssub.s32 %s13, %s20
    %p22 = scmp.eq.s32.totalorder %s21, 0
    %s24 = sadd.s32 %s23, 1
    %s25 = scalar_select %p22, %s23, %s24
    %p28 = pneg %p22
    %p29 = scmp.eq.s32.totalorder %s13, 1
    %p30 = por %p28, %p29
    %p31 = scmp.ne.s32.totalorder %s23, %s26
    %p32 = scmp.eq.s32.totalorder %s13, 0
    %p33 = por %p31, %p32
    %p34 = scmp.ne.s32.totalorder %s23, %s26
    %p35 = scmp.eq.s32.totalorder %s18, 1
    %p36 = por %p34, %p35
    %p37 = scmp.ne.s32.totalorder %s26, %s27
    %p38 = scmp.eq.s32.totalorder %s18, 0
    %p39 = por %p37, %p38
    %p40 = scmp.ne.s32.totalorder %s26, %s27
    %p41 = scmp.eq.s32.totalorder %s19, 1
    %p42 = por %p40, %p41
    %p44 = scmp.ne.s32.totalorder %s27, %s43
    %p45 = scmp.eq.s32.totalorder %s19, 0
    %p46 = por %p44, %p45
    %s48 = sadd.s32 %s47, 1
    %p51 = scmp.eq.s32.totalorder %s13, 1
    %p52 = scmp.ne.s32.totalorder %s47, %s49
    %p53 = scmp.eq.s32.totalorder %s13, 0
    %p54 = por %p52, %p53
    %p55 = scmp.ne.s32.totalorder %s47, %s49
    %p56 = scmp.eq.s32.totalorder %s18, 1
    %p57 = por %p55, %p56
    %p58 = scmp.ne.s32.totalorder %s49, %s50
    %p59 = scmp.eq.s32.totalorder %s18, 0
    %p60 = por %p58, %p59
    %p61 = scmp.ne.s32.totalorder %s49, %s50
    %p62 = scmp.eq.s32.totalorder %s19, 1
    %p63 = por %p61, %p62
    %p65 = scmp.ne.s32.totalorder %s50, %s64
    %p66 = scmp.eq.s32.totalorder %s19, 0
    %p67 = por %p65, %p66
    %s69 = sadd.s32 %s68, 1
    %p72 = scmp.eq.s32.totalorder %s13, 1
    %p73 = scmp.ne.s32.totalorder %s68, %s70
    %p74 = scmp.eq.s32.totalorder %s13, 0
    %p75 = por %p73, %p74
    %p76 = scmp.ne.s32.totalorder %s68, %s70
    %p77 = scmp.eq.s32.totalorder %s18, 1
    %p78 = por %p76, %p77
    %p79 = scmp.ne.s32.totalorder %s70, %s71
    %p80 = scmp.eq.s32.totalorder %s18, 0
    %p81 = por %p79, %p80
    %p82 = scmp.ne.s32.totalorder %s70, %s71
    %p83 = scmp.eq.s32.totalorder %s19, 1
    %p84 = por %p82, %p83
    %p86 = scmp.ne.s32.totalorder %s71, %s85
    %p87 = scmp.eq.s32.totalorder %s19, 0
    %p88 = por %p86, %p87
    %s90 = sadd.s32 %s89, 1
    %p93 = scmp.eq.s32.totalorder %s13, 1
    %p94 = scmp.ne.s32.totalorder %s89, %s91
    %p95 = scmp.eq.s32.totalorder %s13, 0
    %p96 = por %p94, %p95
    %p97 = scmp.ne.s32.totalorder %s89, %s91
    %p98 = scmp.eq.s32.totalorder %s18, 1
    %p99 = por %p97, %p98
    %p100 = scmp.ne.s32.totalorder %s91, %s92
    %p101 = scmp.eq.s32.totalorder %s18, 0
    %p102 = por %p100, %p101
    %p103 = scmp.ne.s32.totalorder %s91, %s92
    %p104 = scmp.eq.s32.totalorder %s19, 1
    %p105 = por %p103, %p104
    %p107 = scmp.ne.s32.totalorder %s92, %s106
    %p108 = scmp.eq.s32.totalorder %s19, 0
    %p109 = por %p107, %p108
    %s110 = ssub.s32 %s13, %s20
    %p111 = scmp.eq.s32.totalorder %s110, 0
    %s113 = sadd.s32 %s112, 1
    %s114 = scalar_select %p111, %s112, %s113
    %p117 = pneg %p111
    %p118 = scmp.eq.s32.totalorder %s13, 1
    %p119 = por %p117, %p118
    %p120 = scmp.ne.s32.totalorder %s112, %s115
    %p121 = scmp.eq.s32.totalorder %s13, 0
    %p122 = por %p120, %p121
    %p123 = scmp.ne.s32.totalorder %s112, %s115
    %p124 = scmp.eq.s32.totalorder %s18, 1
    %p125 = por %p123, %p124
    %p126 = scmp.ne.s32.totalorder %s115, %s116
    %p127 = scmp.eq.s32.totalorder %s18, 0
    %p128 = por %p126, %p127
    %p129 = scmp.ne.s32.totalorder %s115, %s116
    %p130 = scmp.eq.s32.totalorder %s19, 1
    %p131 = por %p129, %p130
    %p133 = scmp.ne.s32.totalorder %s116, %s132
    %p134 = scmp.eq.s32.totalorder %s19, 0
    %p135 = por %p133, %p134
    %s136 = ssub.s32 %s13, %s20
    %p137 = scmp.eq.s32.totalorder %s136, 0
    %s139 = sadd.s32 %s138, 1
    %s140 = scalar_select %p137, %s138, %s139
    %p143 = pneg %p137
    %p144 = scmp.eq.s32.totalorder %s13, 1
    %p145 = por %p143, %p144
    %p146 = scmp.ne.s32.totalorder %s138, %s141
    %p147 = scmp.eq.s32.totalorder %s13, 0
    %p148 = por %p146, %p147
    %p149 = scmp.ne.s32.totalorder %s138, %s141
    %p150 = scmp.eq.s32.totalorder %s18, 1
    %p151 = por %p149, %p150
    %p152 = scmp.ne.s32.totalorder %s141, %s142
    %p153 = scmp.eq.s32.totalorder %s18, 0
    %p154 = por %p152, %p153
    %p155 = scmp.ne.s32.totalorder %s141, %s142
    %p156 = scmp.eq.s32.totalorder %s19, 1
    %p157 = por %p155, %p156
    %p159 = scmp.ne.s32.totalorder %s142, %s158
    %p160 = scmp.eq.s32.totalorder %s19, 0
    %p161 = por %p159, %p160
    %s162 = ssub.s32 %s13, %s20
    %p163 = scmp.eq.s32.totalorder %s162, 0
    %s165 = sadd.s32 %s164, 1
    %s166 = scalar_select %p163, %s164, %s165
    %p169 = pneg %p163
    %p170 = scmp.eq.s32.totalorder %s13, 1
    %p171 = por %p169, %p170
    %p172 = scmp.ne.s32.totalorder %s164, %s167
    %p173 = scmp.eq.s32.totalorder %s13, 0
    %p174 = por %p172, %p173
    %p175 = scmp.ne.s32.totalorder %s164, %s167
    %p176 = scmp.eq.s32.totalorder %s18, 1
    %p177 = por %p175, %p176
    %p178 = scmp.ne.s32.totalorder %s167, %s168
    %p179 = scmp.eq.s32.totalorder %s18, 0
    %p180 = por %p178, %p179
    %p181 = scmp.ne.s32.totalorder %s167, %s168
    %p182 = scmp.eq.s32.totalorder %s19, 1
    %p183 = por %p181, %p182
    %p185 = scmp.ne.s32.totalorder %s168, %s184
    %p186 = scmp.eq.s32.totalorder %s19, 0
    %p187 = por %p185, %p186
    %p188 = scmp.le.s32.totalorder 1, %s13
    %p189 = scmp.lt.s32.totalorder %s13, 3
    %p190 = pnand %p188, %p189
    %p191 = pneg %p190
    // Predicated region
    $region9: #{discriminator_forward.3} parent=5 // pred_check
      _
    $region10: #{discriminator_forward.3} parent=5 // pred_check_branch
      %193 = sbr.rel (%p190) target = $region12
    $region11: #{discriminator_forward.3} parent=5 // pred_region
      %s194 = ssub.s32 %s13, 1
      // Predicated region
      $region13: #{discriminator_forward.3} parent=11 // pred_check
        %p195 = pneg %p60
      $region14: #{discriminator_forward.3} parent=11 // pred_check_branch
        %197 = sbr.rel (%p195) target = $region16
      $region15: #{discriminator_forward.3} parent=11 // pred_region
        _
      $region16: #{discriminator_forward.3} parent=11 // pred_fallthru
        _
      // Predicated region
      $region17: #{discriminator_forward.3} parent=11 // pred_check
        %p198 = pneg %p81
      $region18: #{discriminator_forward.3} parent=11 // pred_check_branch
        %200 = sbr.rel (%p198) target = $region20
      $region19: #{discriminator_forward.3} parent=11 // pred_region
        _
      $region20: #{discriminator_forward.3} parent=11 // pred_fallthru
        _
      // Predicated region
      $region21: #{discriminator_forward.3} parent=11 // pred_check
        %p201 = pneg %p102
      $region22: #{discriminator_forward.3} parent=11 // pred_check_branch
        %203 = sbr.rel (%p201) target = $region24
      $region23: #{discriminator_forward.3} parent=11 // pred_region
        _
      $region24: #{discriminator_forward.3} parent=11 // pred_fallthru
        _
    $region12: #{discriminator_forward.3} parent=5 // pred_fallthru
      _
    %p204 = scmp.lt.s32.totalorder %s13, 2
    // Predicated region
    $region25: #{discriminator_forward.3} parent=5 // pred_check
      %p205 = pneg %p204
    $region26: #{discriminator_forward.3} parent=5 // pred_check_branch
      %207 = sbr.rel (%p205) target = $region28
    $region27: #{discriminator_forward.3} parent=5 // pred_region
      // Predicated region
      $region29: #{discriminator_forward.3} parent=27 // pred_check
        %p208 = pneg %p33
      $region30: #{discriminator_forward.3} parent=27 // pred_check_branch
        %210 = sbr.rel (%p208) target = $region32
      $region31: #{discriminator_forward.3} parent=27 // pred_region
        %p211 = scmp.lt.s32.totalorder %s13, 1
        %s212 = scalar_select %p211, %s13, 1
        %s213 = smul.addr %s212, 32
        %s214 = smul.addr %s213, 4
        %s215 = scalar_lea.vmem %s0, %s214
      $region32: #{discriminator_forward.3} parent=27 // pred_fallthru
        _
    $region28: #{discriminator_forward.3} parent=5 // pred_fallthru
      _
    %p216 = scmp.le.s32.totalorder 1, %s13
    %p217 = scmp.lt.s32.totalorder %s13, 3
    %p218 = pnand %p216, %p217
    %p219 = pneg %p218
    // Predicated region
    $region33: #{discriminator_forward.3} parent=5 // pred_check
      _
    $region34: #{discriminator_forward.3} parent=5 // pred_check_branch
      %221 = sbr.rel (%p218) target = $region36
    $region35: #{discriminator_forward.3} parent=5 // pred_region
      %s222 = ssub.s32 %s13, 1
      %p223 = scmp.lt.s32.totalorder %s18, 1
      %s224 = scalar_select %p223, %s18, 1
      %s225 = smul.addr %s224, 32
      %s226 = smul.addr %s225, 4
      %s227 = scalar_lea.vmem %s0, %s226
      %p228 = pneg %p39
      %p229 = pneg %p36
      %p230 = pneg %p60
      %p231 = pneg %p57
      %p232 = pneg %p81
      %p233 = pneg %p78
      %p234 = pneg %p102
      %p235 = pneg %p99
      %p236 = pneg %p128
      %p237 = pneg %p125
      %p238 = scmp.lt.s32.totalorder %s18, 1
      %s239 = scalar_select %p238, %s18, 1
      %s240 = smul.addr %s239, 32
      %s241 = smul.addr %s240, 4
      %s242 = scalar_lea.vmem %s4, %s241
      %p243 = pneg %p154
      %p244 = pneg %p151
      %p245 = scmp.lt.s32.totalorder %s18, 1
      %s246 = scalar_select %p245, %s18, 1
      %s247 = scalar_lea.vmem %s5, %s246
      %p248 = pneg %p180
      %p249 = pneg %p177
      %p250 = scmp.lt.s32.totalorder %s18, 1
      %s251 = scalar_select %p250, %s18, 1
      %s252 = scalar_lea.vmem %s6, %s251
      %p253 = scmp.lt.s32.totalorder %s18, 1
      %s254 = scalar_select %p253, %s18, 1
      %s255 = smul.addr %s254, 32
      %s256 = smul.addr %s255, 4
      %s257 = scalar_lea.vmem %s0, %s256
      %p258 = scmp.lt.s32.totalorder %s18, 1
      %s259 = scalar_select %p258, %s18, 1
      %s260 = smul.addr %s259, 32
      %s261 = smul.addr %s260, 4
      %s262 = scalar_lea.vmem %s4, %s261
      %p263 = scmp.lt.s32.totalorder %s18, 1
      %s264 = scalar_select %p263, %s18, 1
      %s265 = scalar_lea.vmem %s5, %s264
      %p266 = scmp.lt.s32.totalorder %s18, 1
      %s267 = scalar_select %p266, %s18, 1
      %s268 = scalar_lea.vmem %s6, %s267
      %v270 = vld [vmem:[%s257] sm:$0xf]
      %v271 = vld [vmem:[%s257 + $0x4] sm:$0xf]
      %v272 = vld [vmem:[%s257 + $0x8] sm:$0xf]
      %v273 = vld [vmem:[%s257 + $0xc] sm:$0xf]
      %v274 = vld [vmem:[%s257 + $0x10] sm:$0xf]
      %v275 = vld [vmem:[%s257 + $0x14] sm:$0xf]
      %v276 = vld [vmem:[%s257 + $0x18] sm:$0xf]
      %v277 = vld [vmem:[%s257 + $0x1c] sm:$0xf]
      %v278 = vld [vmem:[%s257 + $0x20] sm:$0xf]
      %v279 = vld [vmem:[%s257 + $0x24] sm:$0xf]
      %v280 = vld [vmem:[%s257 + $0x28] sm:$0xf]
      %v281 = vld [vmem:[%s257 + $0x2c] sm:$0xf]
      %v282 = vld [vmem:[%s257 + $0x30] sm:$0xf]
      %v283 = vld [vmem:[%s257 + $0x34] sm:$0xf]
      %v284 = vld [vmem:[%s257 + $0x38] sm:$0xf]
      %v285 = vld [vmem:[%s257 + $0x3c] sm:$0xf]
      %v286 = vld [vmem:[%s257 + $0x40] sm:$0xf]
      %v287 = vld [vmem:[%s257 + $0x44] sm:$0xf]
      %v288 = vld [vmem:[%s257 + $0x48] sm:$0xf]
      %v289 = vld [vmem:[%s257 + $0x4c] sm:$0xf]
      %v290 = vld [vmem:[%s257 + $0x50] sm:$0xf]
      %v291 = vld [vmem:[%s257 + $0x54] sm:$0xf]
      %v292 = vld [vmem:[%s257 + $0x58] sm:$0xf]
      %v293 = vld [vmem:[%s257 + $0x5c] sm:$0xf]
      %v294 = vld [vmem:[%s257 + $0x60] sm:$0xf]
      %v295 = vld [vmem:[%s257 + $0x64] sm:$0xf]
      %v296 = vld [vmem:[%s257 + $0x68] sm:$0xf]
      %v297 = vld [vmem:[%s257 + $0x6c] sm:$0xf]
      %v298 = vld [vmem:[%s257 + $0x70] sm:$0xf]
      %v299 = vld [vmem:[%s257 + $0x74] sm:$0xf]
      %v300 = vld [vmem:[%s257 + $0x78] sm:$0xf]
      %v301 = vld [vmem:[%s257 + $0x7c] sm:$0xf]
      %v302 = vld [vmem:[%s1] sm:$0xf]
      %v303 = vld [vmem:[%s1 + $0x4] sm:$0xf]
      %v304 = vld [vmem:[%s2] sm:$0x1]
      %v306 = vlaneseq
      %v307 = vshrl.u32 %v306, 7
      %v308 = vsub.s32 0, %v307
      %v309 = vrot.slane %v304, %v308
      %v343 = vunpack.c.l.b16 %v270
      %v344 = vunpack.c.l.b16 %v271
      %v345 = vunpack.c.l.b16 %v272
      %v346 = vunpack.c.l.b16 %v273
      %v347 = vunpack.c.l.b16 %v274
      %v348 = vunpack.c.l.b16 %v275
      %v349 = vunpack.c.l.b16 %v276
      %v350 = vunpack.c.l.b16 %v277
      %v351 = vunpack.c.l.b16 %v278
      %v352 = vunpack.c.l.b16 %v279
      %v353 = vunpack.c.l.b16 %v280
      %v354 = vunpack.c.l.b16 %v281
      %v355 = vunpack.c.l.b16 %v282
      %v356 = vunpack.c.l.b16 %v283
      %v357 = vunpack.c.l.b16 %v284
      %v358 = vunpack.c.l.b16 %v285
      %v359 = vunpack.c.l.b16 %v286
      %v360 = vunpack.c.l.b16 %v287
      %v361 = vunpack.c.l.b16 %v288
      %v362 = vunpack.c.l.b16 %v289
      %v363 = vunpack.c.l.b16 %v290
      %v364 = vunpack.c.l.b16 %v291
      %v365 = vunpack.c.l.b16 %v292
      %v366 = vunpack.c.l.b16 %v293
      %v367 = vunpack.c.l.b16 %v294
      %v368 = vunpack.c.l.b16 %v295
      %v369 = vunpack.c.l.b16 %v296
      %v370 = vunpack.c.l.b16 %v297
      %v371 = vunpack.c.l.b16 %v298
      %v372 = vunpack.c.l.b16 %v299
      %v373 = vunpack.c.l.b16 %v300
      %v374 = vunpack.c.l.b16 %v301
      %v375 = vpack.c.b16 %v344, %v343
      %v376 = vpack.c.b16 %v346, %v345
      %v377 = vpack.c.b16 %v348, %v347
      %v378 = vpack.c.b16 %v350, %v349
      %v379 = vpack.c.b16 %v352, %v351
      %v380 = vpack.c.b16 %v354, %v353
      %v381 = vpack.c.b16 %v356, %v355
      %v382 = vpack.c.b16 %v358, %v357
      %v383 = vpack.c.b16 %v360, %v359
      %v384 = vpack.c.b16 %v362, %v361
      %v385 = vpack.c.b16 %v364, %v363
      %v386 = vpack.c.b16 %v366, %v365
      %v387 = vpack.c.b16 %v368, %v367
      %v388 = vpack.c.b16 %v370, %v369
      %v389 = vpack.c.b16 %v372, %v371
      %v390 = vpack.c.b16 %v374, %v373
      %v393 = vunpack.c.l.b16 %v302
      %v394 = vunpack.c.l.b16 %v303
      %v395 = vpack.c.b16 %v394, %v393
      %vm397 = vcmask 130048
      %v399 = vsel %vm397, %v375, 0
      %v402 = vsel %vm397, %v376, 0
      %v405 = vsel %vm397, %v377, 0
      %v408 = vsel %vm397, %v378, 0
      %v411 = vsel %vm397, %v379, 0
      %v414 = vsel %vm397, %v380, 0
      %v417 = vsel %vm397, %v381, 0
      %v420 = vsel %vm397, %v382, 0
      %v423 = vsel %vm397, %v383, 0
      %v426 = vsel %vm397, %v384, 0
      %v429 = vsel %vm397, %v385, 0
      %v432 = vsel %vm397, %v386, 0
      %v435 = vsel %vm397, %v387, 0
      %v438 = vsel %vm397, %v388, 0
      %v441 = vsel %vm397, %v389, 0
      %v444 = vsel %vm397, %v390, 0
      %446 = vmatprep.subr.bf16.mxu0 0
      %447 = vmatpush1.bf16.msra.mxu0 0
      %448 = vmatprep.subr.bf16.mxu0 0
      %449 = vmatpush1.bf16.msra.mxu0 0
      %450 = vmatprep.subr.bf16.mxu0 0
      %451 = vmatpush1.bf16.msra.mxu0 0
      %452 = vmatprep.subr.bf16.mxu0 0
      %453 = vmatpush1.bf16.msra.mxu0 0
      %454 = vmatprep.subr.bf16.mxu0 0
      %455 = vmatpush1.bf16.msra.mxu0 0
      %456 = vmatprep.subr.bf16.mxu0 0
      %457 = vmatpush1.bf16.msra.mxu0 0
      %458 = vmatprep.subr.bf16.mxu0 0
      %459 = vmatpush1.bf16.msra.mxu0 0
      %460 = vmatprep.subr.bf16.mxu0 0
      %461 = vmatpush1.bf16.msra.mxu0 %v395
      %462 = vmatprep.subr.bf16.mxu0 0
      %463 = vmatpush2.bf16.msra.mxu0 0
      %464 = vmatprep.subr.bf16.mxu0 0
      %465 = vmatpush2.bf16.msra.mxu0 0
      %466 = vmatprep.subr.bf16.mxu0 0
      %467 = vmatpush2.bf16.msra.mxu0 0
      %468 = vmatprep.subr.bf16.mxu0 0
      %469 = vmatpush2.bf16.msra.mxu0 0
      %470 = vmatprep.subr.bf16.mxu0 0
      %471 = vmatpush2.bf16.msra.mxu0 0
      %472 = vmatprep.subr.bf16.mxu0 0
      %473 = vmatpush2.bf16.msra.mxu0 0
      %474 = vmatprep.subr.bf16.mxu0 0
      %475 = vmatpush2.bf16.msra.mxu0 0
      %476 = vmatprep.subr.bf16.mxu0 0
      %477 = vmatpush2.bf16.msra.mxu0 0
      %478 = vmatprep.mubr.bf16.mxu0 0
      %479 = vmatmul.mubr.bf16.gmra.mxu0 %v399
      %v480 = vpop.f32.mrf.mxu0
      %v481 = vadd.f32 %v309, %v480
      %v482 = vpop.f32.mrf.mxu0
      %v483 = vpop.f32.mrf.mxu0
      %v484 = vadd.f32 %v309, %v483
      %v485 = vpop.f32.mrf.mxu0
      %486 = vmatprep.mubr.bf16.mxu0 0
      %487 = vmatmul.mubr.bf16.gmra.mxu0 %v402
      %v488 = vpop.f32.mrf.mxu0
      %v489 = vadd.f32 %v309, %v488
      %v490 = vpop.f32.mrf.mxu0
      %v491 = vpop.f32.mrf.mxu0
      %v492 = vadd.f32 %v309, %v491
      %v493 = vpop.f32.mrf.mxu0
      %494 = vmatprep.mubr.bf16.mxu0 0
      %495 = vmatmul.mubr.bf16.gmra.mxu0 %v405
      %v496 = vpop.f32.mrf.mxu0
      %v497 = vadd.f32 %v309, %v496
      %v498 = vpop.f32.mrf.mxu0
      %v499 = vpop.f32.mrf.mxu0
      %v500 = vadd.f32 %v309, %v499
      %v501 = vpop.f32.mrf.mxu0
      %502 = vmatprep.mubr.bf16.mxu0 0
      %503 = vmatmul.mubr.bf16.gmra.mxu0 %v408
      %v504 = vpop.f32.mrf.mxu0
      %v505 = vadd.f32 %v309, %v504
      %v506 = vpop.f32.mrf.mxu0
      %v507 = vpop.f32.mrf.mxu0
      %v508 = vadd.f32 %v309, %v507
      %v509 = vpop.f32.mrf.mxu0
      %510 = vmatprep.mubr.bf16.mxu0 0
      %511 = vmatmul.mubr.bf16.gmra.mxu0 %v411
      %v512 = vpop.f32.mrf.mxu0
      %v513 = vadd.f32 %v309, %v512
      %v514 = vpop.f32.mrf.mxu0
      %v515 = vpop.f32.mrf.mxu0
      %v516 = vadd.f32 %v309, %v515
      %v517 = vpop.f32.mrf.mxu0
      %518 = vmatprep.mubr.bf16.mxu0 0
      %519 = vmatmul.mubr.bf16.gmra.mxu0 %v414
      %v520 = vpop.f32.mrf.mxu0
      %v521 = vadd.f32 %v309, %v520
      %v522 = vpop.f32.mrf.mxu0
      %v523 = vpop.f32.mrf.mxu0
      %v524 = vadd.f32 %v309, %v523
      %v525 = vpop.f32.mrf.mxu0
      %526 = vmatprep.mubr.bf16.mxu0 0
      %527 = vmatmul.mubr.bf16.gmra.mxu0 %v417
      %v528 = vpop.f32.mrf.mxu0
      %v529 = vadd.f32 %v309, %v528
      %v530 = vpop.f32.mrf.mxu0
      %v531 = vpop.f32.mrf.mxu0
      %v532 = vadd.f32 %v309, %v531
      %v533 = vpop.f32.mrf.mxu0
      %534 = vmatprep.mubr.bf16.mxu0 0
      %535 = vmatmul.mubr.bf16.gmra.mxu0 %v420
      %v536 = vpop.f32.mrf.mxu0
      %v537 = vadd.f32 %v309, %v536
      %v538 = vpop.f32.mrf.mxu0
      %v539 = vpop.f32.mrf.mxu0
      %v540 = vadd.f32 %v309, %v539
      %v541 = vpop.f32.mrf.mxu0
      %542 = vmatprep.mubr.bf16.mxu0 0
      %543 = vmatmul.mubr.bf16.gmra.mxu0 %v423
      %v544 = vpop.f32.mrf.mxu0
      %v545 = vadd.f32 %v309, %v544
      %v546 = vpop.f32.mrf.mxu0
      %v547 = vpop.f32.mrf.mxu0
      %v548 = vadd.f32 %v309, %v547
      %v549 = vpop.f32.mrf.mxu0
      %550 = vmatprep.mubr.bf16.mxu0 0
      %551 = vmatmul.mubr.bf16.gmra.mxu0 %v426
      %v552 = vpop.f32.mrf.mxu0
      %v553 = vadd.f32 %v309, %v552
      %v554 = vpop.f32.mrf.mxu0
      %v555 = vpop.f32.mrf.mxu0
      %v556 = vadd.f32 %v309, %v555
      %v557 = vpop.f32.mrf.mxu0
      %558 = vmatprep.mubr.bf16.mxu0 0
      %559 = vmatmul.mubr.bf16.gmra.mxu0 %v429
      %v560 = vpop.f32.mrf.mxu0
      %v561 = vadd.f32 %v309, %v560
      %v562 = vpop.f32.mrf.mxu0
      %v563 = vpop.f32.mrf.mxu0
      %v564 = vadd.f32 %v309, %v563
      %v565 = vpop.f32.mrf.mxu0
      %566 = vmatprep.mubr.bf16.mxu0 0
      %567 = vmatmul.mubr.bf16.gmra.mxu0 %v432
      %v568 = vpop.f32.mrf.mxu0
      %v569 = vadd.f32 %v309, %v568
      %v570 = vpop.f32.mrf.mxu0
      %v571 = vpop.f32.mrf.mxu0
      %v572 = vadd.f32 %v309, %v571
      %v573 = vpop.f32.mrf.mxu0
      %574 = vmatprep.mubr.bf16.mxu0 0
      %575 = vmatmul.mubr.bf16.gmra.mxu0 %v435
      %v576 = vpop.f32.mrf.mxu0
      %v577 = vadd.f32 %v309, %v576
      %v578 = vpop.f32.mrf.mxu0
      %v579 = vpop.f32.mrf.mxu0
      %v580 = vadd.f32 %v309, %v579
      %v581 = vpop.f32.mrf.mxu0
      %582 = vmatprep.mubr.bf16.mxu0 0
      %583 = vmatmul.mubr.bf16.gmra.mxu0 %v438
      %v584 = vpop.f32.mrf.mxu0
      %v585 = vadd.f32 %v309, %v584
      %v586 = vpop.f32.mrf.mxu0
      %v587 = vpop.f32.mrf.mxu0
      %v588 = vadd.f32 %v309, %v587
      %v589 = vpop.f32.mrf.mxu0
      %590 = vmatprep.mubr.bf16.mxu0 0
      %591 = vmatmul.mubr.bf16.gmra.mxu0 %v441
      %v592 = vpop.f32.mrf.mxu0
      %v593 = vadd.f32 %v309, %v592
      %v594 = vpop.f32.mrf.mxu0
      %v595 = vpop.f32.mrf.mxu0
      %v596 = vadd.f32 %v309, %v595
      %v597 = vpop.f32.mrf.mxu0
      %598 = vmatprep.mubr.bf16.mxu0 0
      %599 = vmatmul.mubr.bf16.gmra.mxu0 %v444
      %v600 = vpop.f32.mrf.mxu0
      %v601 = vadd.f32 %v309, %v600
      %v602 = vpop.f32.mrf.mxu0
      %v603 = vpop.f32.mrf.mxu0
      %v604 = vadd.f32 %v309, %v603
      %v605 = vpop.f32.mrf.mxu0
      %606 = vdwg.mxu0
      %vm607 = vcmp.ge.f32.partialorder %v481, 0.0
      %vm608 = vcmp.ge.f32.partialorder %v484, 0.0
      %vm609 = vcmp.ge.f32.partialorder %v489, 0.0
      %vm610 = vcmp.ge.f32.partialorder %v492, 0.0
      %vm611 = vcmp.ge.f32.partialorder %v497, 0.0
      %vm612 = vcmp.ge.f32.partialorder %v500, 0.0
      %vm613 = vcmp.ge.f32.partialorder %v505, 0.0
      %vm614 = vcmp.ge.f32.partialorder %v508, 0.0
      %vm615 = vcmp.ge.f32.partialorder %v513, 0.0
      %vm616 = vcmp.ge.f32.partialorder %v516, 0.0
      %vm617 = vcmp.ge.f32.partialorder %v521, 0.0
      %vm618 = vcmp.ge.f32.partialorder %v524, 0.0
      %vm619 = vcmp.ge.f32.partialorder %v529, 0.0
      %vm620 = vcmp.ge.f32.partialorder %v532, 0.0
      %vm621 = vcmp.ge.f32.partialorder %v537, 0.0
      %vm622 = vcmp.ge.f32.partialorder %v540, 0.0
      %vm623 = vcmp.ge.f32.partialorder %v545, 0.0
      %vm624 = vcmp.ge.f32.partialorder %v548, 0.0
      %vm625 = vcmp.ge.f32.partialorder %v553, 0.0
      %vm626 = vcmp.ge.f32.partialorder %v556, 0.0
      %vm627 = vcmp.ge.f32.partialorder %v561, 0.0
      %vm628 = vcmp.ge.f32.partialorder %v564, 0.0
      %vm629 = vcmp.ge.f32.partialorder %v569, 0.0
      %vm630 = vcmp.ge.f32.partialorder %v572, 0.0
      %vm631 = vcmp.ge.f32.partialorder %v577, 0.0
      %vm632 = vcmp.ge.f32.partialorder %v580, 0.0
      %vm633 = vcmp.ge.f32.partialorder %v585, 0.0
      %vm634 = vcmp.ge.f32.partialorder %v588, 0.0
      %vm635 = vcmp.ge.f32.partialorder %v593, 0.0
      %vm636 = vcmp.ge.f32.partialorder %v596, 0.0
      %vm637 = vcmp.ge.f32.partialorder %v601, 0.0
      %vm638 = vcmp.ge.f32.partialorder %v604, 0.0
      %v639 = vmul.f32 %v481, 0.2
      %v640 = vmul.f32 %v484, 0.2
      %v641 = vmul.f32 %v489, 0.2
      %v642 = vmul.f32 %v492, 0.2
      %v643 = vmul.f32 %v497, 0.2
      %v644 = vmul.f32 %v500, 0.2
      %v645 = vmul.f32 %v505, 0.2
      %v646 = vmul.f32 %v508, 0.2
      %v647 = vmul.f32 %v513, 0.2
      %v648 = vmul.f32 %v516, 0.2
      %v649 = vmul.f32 %v521, 0.2
      %v650 = vmul.f32 %v524, 0.2
      %v651 = vmul.f32 %v529, 0.2
      %v652 = vmul.f32 %v532, 0.2
      %v653 = vmul.f32 %v537, 0.2
      %v654 = vmul.f32 %v540, 0.2
      %v655 = vmul.f32 %v545, 0.2
      %v656 = vmul.f32 %v548, 0.2
      %v657 = vmul.f32 %v553, 0.2
      %v658 = vmul.f32 %v556, 0.2
      %v659 = vmul.f32 %v561, 0.2
      %v660 = vmul.f32 %v564, 0.2
      %v661 = vmul.f32 %v569, 0.2
      %v662 = vmul.f32 %v572, 0.2
      %v663 = vmul.f32 %v577, 0.2
      %v664 = vmul.f32 %v580, 0.2
      %v665 = vmul.f32 %v585, 0.2
      %v666 = vmul.f32 %v588, 0.2
      %v667 = vmul.f32 %v593, 0.2
      %v668 = vmul.f32 %v596, 0.2
      %v669 = vmul.f32 %v601, 0.2
      %v670 = vmul.f32 %v604, 0.2
      %v671 = vsel %vm607, %v481, %v639
      %v672 = vsel %vm608, %v484, %v640
      %v673 = vsel %vm609, %v489, %v641
      %v674 = vsel %vm610, %v492, %v642
      %v675 = vsel %vm611, %v497, %v643
      %v676 = vsel %vm612, %v500, %v644
      %v677 = vsel %vm613, %v505, %v645
      %v678 = vsel %vm614, %v508, %v646
      %v679 = vsel %vm615, %v513, %v647
      %v680 = vsel %vm616, %v516, %v648
      %v681 = vsel %vm617, %v521, %v649
      %v682 = vsel %vm618, %v524, %v650
      %v683 = vsel %vm619, %v529, %v651
      %v684 = vsel %vm620, %v532, %v652
      %v685 = vsel %vm621, %v537, %v653
      %v686 = vsel %vm622, %v540, %v654
      %v687 = vsel %vm623, %v545, %v655
      %v688 = vsel %vm624, %v548, %v656
      %v689 = vsel %vm625, %v553, %v657
      %v690 = vsel %vm626, %v556, %v658
      %v691 = vsel %vm627, %v561, %v659
      %v692 = vsel %vm628, %v564, %v660
      %v693 = vsel %vm629, %v569, %v661
      %v694 = vsel %vm630, %v572, %v662
      %v695 = vsel %vm631, %v577, %v663
      %v696 = vsel %vm632, %v580, %v664
      %v697 = vsel %vm633, %v585, %v665
      %v698 = vsel %vm634, %v588, %v666
      %v699 = vsel %vm635, %v593, %v667
      %v700 = vsel %vm636, %v596, %v668
      %v701 = vsel %vm637, %v601, %v669
      %v702 = vsel %vm638, %v604, %v670
      %v703 = vld [vmem:[%s3] sm:$0xff]
      %v704 = vld [vmem:[%s3 + $0x8] sm:$0xff]
      %v705 = vld [vmem:[%s3 + $0x10] sm:$0xff]
      %v706 = vld [vmem:[%s3 + $0x18] sm:$0xff]
      %v707 = vld [vmem:[%s3 + $0x20] sm:$0xff]
      %v708 = vld [vmem:[%s3 + $0x28] sm:$0xff]
      %v709 = vld [vmem:[%s3 + $0x30] sm:$0xff]
      %v710 = vld [vmem:[%s3 + $0x38] sm:$0xff]
      %v711 = vld [vmem:[%s3 + $0x40] sm:$0xff]
      %v712 = vld [vmem:[%s3 + $0x48] sm:$0xff]
      %v713 = vld [vmem:[%s3 + $0x50] sm:$0xff]
      %v714 = vld [vmem:[%s3 + $0x58] sm:$0xff]
      %v715 = vld [vmem:[%s3 + $0x60] sm:$0xff]
      %v716 = vld [vmem:[%s3 + $0x68] sm:$0xff]
      %v717 = vld [vmem:[%s3 + $0x70] sm:$0xff]
      %v718 = vld [vmem:[%s3 + $0x78] sm:$0xff]
      %v719 = vld [vmem:[%s3 + $0x80] sm:$0xff]
      %v720 = vld [vmem:[%s3 + $0x88] sm:$0xff]
      %v721 = vld [vmem:[%s3 + $0x90] sm:$0xff]
      %v722 = vld [vmem:[%s3 + $0x98] sm:$0xff]
      %v723 = vld [vmem:[%s3 + $0xa0] sm:$0xff]
      %v724 = vld [vmem:[%s3 + $0xa8] sm:$0xff]
      %v725 = vld [vmem:[%s3 + $0xb0] sm:$0xff]
      %v726 = vld [vmem:[%s3 + $0xb8] sm:$0xff]
      %v727 = vld [vmem:[%s3 + $0xc0] sm:$0xff]
      %v728 = vld [vmem:[%s3 + $0xc8] sm:$0xff]
      %v729 = vld [vmem:[%s3 + $0xd0] sm:$0xff]
      %v730 = vld [vmem:[%s3 + $0xd8] sm:$0xff]
      %v731 = vld [vmem:[%s3 + $0xe0] sm:$0xff]
      %v732 = vld [vmem:[%s3 + $0xe8] sm:$0xff]
      %v733 = vld [vmem:[%s3 + $0xf0] sm:$0xff]
      %v734 = vld [vmem:[%s3 + $0xf8] sm:$0xff]
      %736 = vset.pattern.permute.xlu0 0
      %737 = vperm.xlu0 %736, %v703
      %v738 = vpop.permute.xlu0 %737
      %741 = vset.pattern.permute.xlu0 0
      %742 = vperm.xlu0 %741, %v704
      %v743 = vpop.permute.xlu0 %742
      %746 = vset.pattern.permute.xlu0 0
      %747 = vperm.xlu0 %746, %v705
      %v748 = vpop.permute.xlu0 %747
      %751 = vset.pattern.permute.xlu0 0
      %752 = vperm.xlu0 %751, %v706
      %v753 = vpop.permute.xlu0 %752
      %756 = vset.pattern.permute.xlu0 0
      %757 = vperm.xlu0 %756, %v707
      %v758 = vpop.permute.xlu0 %757
      %761 = vset.pattern.permute.xlu0 0
      %762 = vperm.xlu0 %761, %v708
      %v763 = vpop.permute.xlu0 %762
      %766 = vset.pattern.permute.xlu0 0
      %767 = vperm.xlu0 %766, %v709
      %v768 = vpop.permute.xlu0 %767
      %771 = vset.pattern.permute.xlu0 0
      %772 = vperm.xlu0 %771, %v710
      %v773 = vpop.permute.xlu0 %772
      %776 = vset.pattern.permute.xlu0 0
      %777 = vperm.xlu0 %776, %v711
      %v778 = vpop.permute.xlu0 %777
      %781 = vset.pattern.permute.xlu0 0
      %782 = vperm.xlu0 %781, %v712
      %v783 = vpop.permute.xlu0 %782
      %786 = vset.pattern.permute.xlu0 0
      %787 = vperm.xlu0 %786, %v713
      %v788 = vpop.permute.xlu0 %787
      %791 = vset.pattern.permute.xlu0 0
      %792 = vperm.xlu0 %791, %v714
      %v793 = vpop.permute.xlu0 %792
      %796 = vset.pattern.permute.xlu0 0
      %797 = vperm.xlu0 %796, %v715
      %v798 = vpop.permute.xlu0 %797
      %801 = vset.pattern.permute.xlu0 0
      %802 = vperm.xlu0 %801, %v716
      %v803 = vpop.permute.xlu0 %802
      %806 = vset.pattern.permute.xlu0 0
      %807 = vperm.xlu0 %806, %v717
      %v808 = vpop.permute.xlu0 %807
      %811 = vset.pattern.permute.xlu0 0
      %812 = vperm.xlu0 %811, %v718
      %v813 = vpop.permute.xlu0 %812
      %816 = vset.pattern.permute.xlu0 0
      %817 = vperm.xlu0 %816, %v719
      %v818 = vpop.permute.xlu0 %817
      %821 = vset.pattern.permute.xlu0 0
      %822 = vperm.xlu0 %821, %v720
      %v823 = vpop.permute.xlu0 %822
      %826 = vset.pattern.permute.xlu0 0
      %827 = vperm.xlu0 %826, %v721
      %v828 = vpop.permute.xlu0 %827
      %831 = vset.pattern.permute.xlu0 0
      %832 = vperm.xlu0 %831, %v722
      %v833 = vpop.permute.xlu0 %832
      %836 = vset.pattern.permute.xlu0 0
      %837 = vperm.xlu0 %836, %v723
      %v838 = vpop.permute.xlu0 %837
      %841 = vset.pattern.permute.xlu0 0
      %842 = vperm.xlu0 %841, %v724
      %v843 = vpop.permute.xlu0 %842
      %846 = vset.pattern.permute.xlu0 0
      %847 = vperm.xlu0 %846, %v725
      %v848 = vpop.permute.xlu0 %847
      %851 = vset.pattern.permute.xlu0 0
      %852 = vperm.xlu0 %851, %v726
      %v853 = vpop.permute.xlu0 %852
      %856 = vset.pattern.permute.xlu0 0
      %857 = vperm.xlu0 %856, %v727
      %v858 = vpop.permute.xlu0 %857
      %861 = vset.pattern.permute.xlu0 0
      %862 = vperm.xlu0 %861, %v728
      %v863 = vpop.permute.xlu0 %862
      %866 = vset.pattern.permute.xlu0 0
      %867 = vperm.xlu0 %866, %v729
      %v868 = vpop.permute.xlu0 %867
      %871 = vset.pattern.permute.xlu0 0
      %872 = vperm.xlu0 %871, %v730
      %v873 = vpop.permute.xlu0 %872
      %876 = vset.pattern.permute.xlu0 0
      %877 = vperm.xlu0 %876, %v731
      %v878 = vpop.permute.xlu0 %877
      %881 = vset.pattern.permute.xlu0 0
      %882 = vperm.xlu0 %881, %v732
      %v883 = vpop.permute.xlu0 %882
      %886 = vset.pattern.permute.xlu0 0
      %887 = vperm.xlu0 %886, %v733
      %v888 = vpop.permute.xlu0 %887
      %891 = vset.pattern.permute.xlu0 0
      %892 = vperm.xlu0 %891, %v734
      %v893 = vpop.permute.xlu0 %892
      %v895 = vmul.f32 %v671, %v738
      %v896 = vmul.f32 %v672, %v743
      %v897 = vmul.f32 %v673, %v748
      %v898 = vmul.f32 %v674, %v753
      %v899 = vmul.f32 %v675, %v758
      %v900 = vmul.f32 %v676, %v763
      %v901 = vmul.f32 %v677, %v768
      %v902 = vmul.f32 %v678, %v773
      %v903 = vmul.f32 %v679, %v778
      %v904 = vmul.f32 %v680, %v783
      %v905 = vmul.f32 %v681, %v788
      %v906 = vmul.f32 %v682, %v793
      %v907 = vmul.f32 %v683, %v798
      %v908 = vmul.f32 %v684, %v803
      %v909 = vmul.f32 %v685, %v808
      %v910 = vmul.f32 %v686, %v813
      %v911 = vmul.f32 %v687, %v818
      %v912 = vmul.f32 %v688, %v823
      %v913 = vmul.f32 %v689, %v828
      %v914 = vmul.f32 %v690, %v833
      %v915 = vmul.f32 %v691, %v838
      %v916 = vmul.f32 %v692, %v843
      %v917 = vmul.f32 %v693, %v848
      %v918 = vmul.f32 %v694, %v853
      %v919 = vmul.f32 %v695, %v858
      %v920 = vmul.f32 %v696, %v863
      %v921 = vmul.f32 %v697, %v868
      %v922 = vmul.f32 %v698, %v873
      %v923 = vmul.f32 %v699, %v878
      %v924 = vmul.f32 %v700, %v883
      %v925 = vmul.f32 %v701, %v888
      %v926 = vmul.f32 %v702, %v893
      %v927 = vpack.c.bf16 %v896, %v895
      %v928 = vpack.c.bf16 %v898, %v897
      %v929 = vpack.c.bf16 %v900, %v899
      %v930 = vpack.c.bf16 %v902, %v901
      %v931 = vpack.c.bf16 %v904, %v903
      %v932 = vpack.c.bf16 %v906, %v905
      %v933 = vpack.c.bf16 %v908, %v907
      %v934 = vpack.c.bf16 %v910, %v909
      %v935 = vpack.c.bf16 %v912, %v911
      %v936 = vpack.c.bf16 %v914, %v913
      %v937 = vpack.c.bf16 %v916, %v915
      %v938 = vpack.c.bf16 %v918, %v917
      %v939 = vpack.c.bf16 %v920, %v919
      %v940 = vpack.c.bf16 %v922, %v921
      %v941 = vpack.c.bf16 %v924, %v923
      %v942 = vpack.c.bf16 %v926, %v925
      %v959 = vunpack.c.l.b16 %v927
      %v960 = vunpack.c.h.b16 %v927
      %v961 = vunpack.c.l.b16 %v928
      %v962 = vunpack.c.h.b16 %v928
      %v963 = vunpack.c.l.b16 %v929
      %v964 = vunpack.c.h.b16 %v929
      %v965 = vunpack.c.l.b16 %v930
      %v966 = vunpack.c.h.b16 %v930
      %v967 = vunpack.c.l.b16 %v931
      %v968 = vunpack.c.h.b16 %v931
      %v969 = vunpack.c.l.b16 %v932
      %v970 = vunpack.c.h.b16 %v932
      %v971 = vunpack.c.l.b16 %v933
      %v972 = vunpack.c.h.b16 %v933
      %v973 = vunpack.c.l.b16 %v934
      %v974 = vunpack.c.h.b16 %v934
      %v975 = vunpack.c.l.b16 %v935
      %v976 = vunpack.c.h.b16 %v935
      %v977 = vunpack.c.l.b16 %v936
      %v978 = vunpack.c.h.b16 %v936
      %v979 = vunpack.c.l.b16 %v937
      %v980 = vunpack.c.h.b16 %v937
      %v981 = vunpack.c.l.b16 %v938
      %v982 = vunpack.c.h.b16 %v938
      %v983 = vunpack.c.l.b16 %v939
      %v984 = vunpack.c.h.b16 %v939
      %v985 = vunpack.c.l.b16 %v940
      %v986 = vunpack.c.h.b16 %v940
      %v987 = vunpack.c.l.b16 %v941
      %v988 = vunpack.c.h.b16 %v941
      %v989 = vunpack.c.l.b16 %v942
      %v990 = vunpack.c.h.b16 %v942
      %v991 = vpack.c.b16 %v959, %v959
      %v992 = vpack.c.b16 %v960, %v960
      %v993 = vpack.c.b16 %v961, %v961
      %v994 = vpack.c.b16 %v962, %v962
      %v995 = vpack.c.b16 %v963, %v963
      %v996 = vpack.c.b16 %v964, %v964
      %v997 = vpack.c.b16 %v965, %v965
      %v998 = vpack.c.b16 %v966, %v966
      %v999 = vpack.c.b16 %v967, %v967
      %v1000 = vpack.c.b16 %v968, %v968
      %v1001 = vpack.c.b16 %v969, %v969
      %v1002 = vpack.c.b16 %v970, %v970
      %v1003 = vpack.c.b16 %v971, %v971
      %v1004 = vpack.c.b16 %v972, %v972
      %v1005 = vpack.c.b16 %v973, %v973
      %v1006 = vpack.c.b16 %v974, %v974
      %v1007 = vpack.c.b16 %v975, %v975
      %v1008 = vpack.c.b16 %v976, %v976
      %v1009 = vpack.c.b16 %v977, %v977
      %v1010 = vpack.c.b16 %v978, %v978
      %v1011 = vpack.c.b16 %v979, %v979
      %v1012 = vpack.c.b16 %v980, %v980
      %v1013 = vpack.c.b16 %v981, %v981
      %v1014 = vpack.c.b16 %v982, %v982
      %v1015 = vpack.c.b16 %v983, %v983
      %v1016 = vpack.c.b16 %v984, %v984
      %v1017 = vpack.c.b16 %v985, %v985
      %v1018 = vpack.c.b16 %v986, %v986
      %v1019 = vpack.c.b16 %v987, %v987
      %v1020 = vpack.c.b16 %v988, %v988
      %v1021 = vpack.c.b16 %v989, %v989
      %v1022 = vpack.c.b16 %v990, %v990
      %1055 = vst [vmem:[%s262] sm:$0xf] %v991
      %1056 = vst [vmem:[%s262 + $0x4] sm:$0xf] %v992
      %1057 = vst [vmem:[%s262 + $0x8] sm:$0xf] %v993
      %1058 = vst [vmem:[%s262 + $0xc] sm:$0xf] %v994
      %1059 = vst [vmem:[%s262 + $0x10] sm:$0xf] %v995
      %1060 = vst [vmem:[%s262 + $0x14] sm:$0xf] %v996
      %1061 = vst [vmem:[%s262 + $0x18] sm:$0xf] %v997
      %1062 = vst [vmem:[%s262 + $0x1c] sm:$0xf] %v998
      %1063 = vst [vmem:[%s262 + $0x20] sm:$0xf] %v999
      %1064 = vst [vmem:[%s262 + $0x24] sm:$0xf] %v1000
      %1065 = vst [vmem:[%s262 + $0x28] sm:$0xf] %v1001
      %1066 = vst [vmem:[%s262 + $0x2c] sm:$0xf] %v1002
      %1067 = vst [vmem:[%s262 + $0x30] sm:$0xf] %v1003
      %1068 = vst [vmem:[%s262 + $0x34] sm:$0xf] %v1004
      %1069 = vst [vmem:[%s262 + $0x38] sm:$0xf] %v1005
      %1070 = vst [vmem:[%s262 + $0x3c] sm:$0xf] %v1006
      %1071 = vst [vmem:[%s262 + $0x40] sm:$0xf] %v1007
      %1072 = vst [vmem:[%s262 + $0x44] sm:$0xf] %v1008
      %1073 = vst [vmem:[%s262 + $0x48] sm:$0xf] %v1009
      %1074 = vst [vmem:[%s262 + $0x4c] sm:$0xf] %v1010
      %1075 = vst [vmem:[%s262 + $0x50] sm:$0xf] %v1011
      %1076 = vst [vmem:[%s262 + $0x54] sm:$0xf] %v1012
      %1077 = vst [vmem:[%s262 + $0x58] sm:$0xf] %v1013
      %1078 = vst [vmem:[%s262 + $0x5c] sm:$0xf] %v1014
      %1079 = vst [vmem:[%s262 + $0x60] sm:$0xf] %v1015
      %1080 = vst [vmem:[%s262 + $0x64] sm:$0xf] %v1016
      %1081 = vst [vmem:[%s262 + $0x68] sm:$0xf] %v1017
      %1082 = vst [vmem:[%s262 + $0x6c] sm:$0xf] %v1018
      %1083 = vst [vmem:[%s262 + $0x70] sm:$0xf] %v1019
      %1084 = vst [vmem:[%s262 + $0x74] sm:$0xf] %v1020
      %1085 = vst [vmem:[%s262 + $0x78] sm:$0xf] %v1021
      %1086 = vst [vmem:[%s262 + $0x7c] sm:$0xf] %v1022
      %v1087 = vadd.f32 %v895, %v896
      %v1088 = vadd.f32 %v1087, %v897
      %v1089 = vadd.f32 %v1088, %v898
      %v1090 = vadd.f32 %v1089, %v899
      %v1091 = vadd.f32 %v1090, %v900
      %v1092 = vadd.f32 %v1091, %v901
      %v1093 = vadd.f32 %v1092, %v902
      %v1094 = vadd.f32 %v1093, %v903
      %v1095 = vadd.f32 %v1094, %v904
      %v1096 = vadd.f32 %v1095, %v905
      %v1097 = vadd.f32 %v1096, %v906
      %v1098 = vadd.f32 %v1097, %v907
      %v1099 = vadd.f32 %v1098, %v908
      %v1100 = vadd.f32 %v1099, %v909
      %v1101 = vadd.f32 %v1100, %v910
      %v1102 = vadd.f32 %v1101, %v911
      %v1103 = vadd.f32 %v1102, %v912
      %v1104 = vadd.f32 %v1103, %v913
      %v1105 = vadd.f32 %v1104, %v914
      %v1106 = vadd.f32 %v1105, %v915
      %v1107 = vadd.f32 %v1106, %v916
      %v1108 = vadd.f32 %v1107, %v917
      %v1109 = vadd.f32 %v1108, %v918
      %v1110 = vadd.f32 %v1109, %v919
      %v1111 = vadd.f32 %v1110, %v920
      %v1112 = vadd.f32 %v1111, %v921
      %v1113 = vadd.f32 %v1112, %v922
      %v1114 = vadd.f32 %v1113, %v923
      %v1115 = vadd.f32 %v1114, %v924
      %v1116 = vadd.f32 %v1115, %v925
      %v1117 = vadd.f32 %v1116, %v926
      %v1118 = vrot.slane %v1117, 4
      %v1119 = vadd.f32 %v1117, %v1118
      %v1120 = vrot.slane %v1119, 2
      %v1121 = vadd.f32 %v1119, %v1120
      %v1122 = vrot.slane %v1121, 1
      %v1123 = vadd.f32 %v1121, %v1122
      %1124 = vst [vmem:[%s265] sm:$0x1] %v1123
      %v1125 = vmul.f32 %v895, %v895
      %v1126 = vmul.f32 %v896, %v896
      %v1127 = vmul.f32 %v897, %v897
      %v1128 = vmul.f32 %v898, %v898
      %v1129 = vmul.f32 %v899, %v899
      %v1130 = vmul.f32 %v900, %v900
      %v1131 = vmul.f32 %v901, %v901
      %v1132 = vmul.f32 %v902, %v902
      %v1133 = vmul.f32 %v903, %v903
      %v1134 = vmul.f32 %v904, %v904
      %v1135 = vmul.f32 %v905, %v905
      %v1136 = vmul.f32 %v906, %v906
      %v1137 = vmul.f32 %v907, %v907
      %v1138 = vmul.f32 %v908, %v908
      %v1139 = vmul.f32 %v909, %v909
      %v1140 = vmul.f32 %v910, %v910
      %v1141 = vmul.f32 %v911, %v911
      %v1142 = vmul.f32 %v912, %v912
      %v1143 = vmul.f32 %v913, %v913
      %v1144 = vmul.f32 %v914, %v914
      %v1145 = vmul.f32 %v915, %v915
      %v1146 = vmul.f32 %v916, %v916
      %v1147 = vmul.f32 %v917, %v917
      %v1148 = vmul.f32 %v918, %v918
      %v1149 = vmul.f32 %v919, %v919
      %v1150 = vmul.f32 %v920, %v920
      %v1151 = vmul.f32 %v921, %v921
      %v1152 = vmul.f32 %v922, %v922
      %v1153 = vmul.f32 %v923, %v923
      %v1154 = vmul.f32 %v924, %v924
      %v1155 = vmul.f32 %v925, %v925
      %v1156 = vmul.f32 %v926, %v926
      %v1157 = vadd.f32 %v1125, %v1126
      %v1158 = vadd.f32 %v1157, %v1127
      %v1159 = vadd.f32 %v1158, %v1128
      %v1160 = vadd.f32 %v1159, %v1129
      %v1161 = vadd.f32 %v1160, %v1130
      %v1162 = vadd.f32 %v1161, %v1131
      %v1163 = vadd.f32 %v1162, %v1132
      %v1164 = vadd.f32 %v1163, %v1133
      %v1165 = vadd.f32 %v1164, %v1134
      %v1166 = vadd.f32 %v1165, %v1135
      %v1167 = vadd.f32 %v1166, %v1136
      %v1168 = vadd.f32 %v1167, %v1137
      %v1169 = vadd.f32 %v1168, %v1138
      %v1170 = vadd.f32 %v1169, %v1139
      %v1171 = vadd.f32 %v1170, %v1140
      %v1172 = vadd.f32 %v1171, %v1141
      %v1173 = vadd.f32 %v1172, %v1142
      %v1174 = vadd.f32 %v1173, %v1143
      %v1175 = vadd.f32 %v1174, %v1144
      %v1176 = vadd.f32 %v1175, %v1145
      %v1177 = vadd.f32 %v1176, %v1146
      %v1178 = vadd.f32 %v1177, %v1147
      %v1179 = vadd.f32 %v1178, %v1148
      %v1180 = vadd.f32 %v1179, %v1149
      %v1181 = vadd.f32 %v1180, %v1150
      %v1182 = vadd.f32 %v1181, %v1151
      %v1183 = vadd.f32 %v1182, %v1152
      %v1184 = vadd.f32 %v1183, %v1153
      %v1185 = vadd.f32 %v1184, %v1154
      %v1186 = vadd.f32 %v1185, %v1155
      %v1187 = vadd.f32 %v1186, %v1156
      %v1188 = vrot.slane %v1187, 4
      %v1189 = vadd.f32 %v1187, %v1188
      %v1190 = vrot.slane %v1189, 2
      %v1191 = vadd.f32 %v1189, %v1190
      %v1192 = vrot.slane %v1191, 1
      %v1193 = vadd.f32 %v1191, %v1192
      %1194 = vst [vmem:[%s268] sm:$0x1] %v1193
      %p1195 = scmp.lt.s32.totalorder %s18, 1
      %s1196 = scalar_select %p1195, %s18, 1
      %s1197 = smul.addr %s1196, 32
      %s1198 = smul.addr %s1197, 4
      %s1199 = scalar_lea.vmem %s4, %s1198
      %p1200 = scmp.lt.s32.totalorder %s18, 1
      %s1201 = scalar_select %p1200, %s18, 1
      %s1202 = scalar_lea.vmem %s5, %s1201
      %p1203 = scmp.lt.s32.totalorder %s18, 1
      %s1204 = scalar_select %p1203, %s18, 1
      %s1205 = scalar_lea.vmem %s6, %s1204
      // Predicated region
      $region37: #{discriminator_forward.3} parent=35 // pred_check
        %p1206 = pneg %p125
      $region38: #{discriminator_forward.3} parent=35 // pred_check_branch
        %1208 = sbr.rel (%p1206) target = $region40
      $region39: #{discriminator_forward.3} parent=35 // pred_region
        _
      $region40: #{discriminator_forward.3} parent=35 // pred_fallthru
        _
      // Predicated region
      $region41: #{discriminator_forward.3} parent=35 // pred_check
        %p1209 = pneg %p151
      $region42: #{discriminator_forward.3} parent=35 // pred_check_branch
        %1211 = sbr.rel (%p1209) target = $region44
      $region43: #{discriminator_forward.3} parent=35 // pred_region
        _
      $region44: #{discriminator_forward.3} parent=35 // pred_fallthru
        _
      // Predicated region
      $region45: #{discriminator_forward.3} parent=35 // pred_check
        %p1212 = pneg %p177
      $region46: #{discriminator_forward.3} parent=35 // pred_check_branch
        %1214 = sbr.rel (%p1212) target = $region48
      $region47: #{discriminator_forward.3} parent=35 // pred_region
        _
      $region48: #{discriminator_forward.3} parent=35 // pred_fallthru
        _
    $region36: #{discriminator_forward.3} parent=5 // pred_fallthru
      _
    %p1215 = scmp.le.s32.totalorder 2, %s13
    // Predicated region
    $region49: #{discriminator_forward.3} parent=5 // pred_check
      %p1216 = pneg %p1215
    $region50: #{discriminator_forward.3} parent=5 // pred_check_branch
      %1218 = sbr.rel (%p1216) target = $region52
    $region51: #{discriminator_forward.3} parent=5 // pred_region
      %s1219 = ssub.s32 %s13, 2
      // Predicated region
      $region53: #{discriminator_forward.3} parent=51 // pred_check
        %p1220 = pneg %p131
      $region54: #{discriminator_forward.3} parent=51 // pred_check_branch
        %1222 = sbr.rel (%p1220) target = $region56
      $region55: #{discriminator_forward.3} parent=51 // pred_region
        %p1223 = scmp.lt.s32.totalorder %s19, 1
        %s1224 = scalar_select %p1223, %s19, 1
        %s1225 = smul.addr %s1224, 32
        %s1226 = smul.addr %s1225, 4
        %s1227 = scalar_lea.vmem %s4, %s1226
      $region56: #{discriminator_forward.3} parent=51 // pred_fallthru
        _
      // Predicated region
      $region57: #{discriminator_forward.3} parent=51 // pred_check
        %p1228 = pneg %p157
      $region58: #{discriminator_forward.3} parent=51 // pred_check_branch
        %1230 = sbr.rel (%p1228) target = $region60
      $region59: #{discriminator_forward.3} parent=51 // pred_region
        %p1231 = scmp.lt.s32.totalorder %s19, 1
        %s1232 = scalar_select %p1231, %s19, 1
        %s1233 = scalar_lea.vmem %s5, %s1232
      $region60: #{discriminator_forward.3} parent=51 // pred_fallthru
        _
      // Predicated region
      $region61: #{discriminator_forward.3} parent=51 // pred_check
        %p1234 = pneg %p183
      $region62: #{discriminator_forward.3} parent=51 // pred_check_branch
        %1236 = sbr.rel (%p1234) target = $region64
      $region63: #{discriminator_forward.3} parent=51 // pred_region
        %p1237 = scmp.lt.s32.totalorder %s19, 1
        %s1238 = scalar_select %p1237, %s19, 1
        %s1239 = scalar_lea.vmem %s6, %s1238
      $region64: #{discriminator_forward.3} parent=51 // pred_fallthru
        _
    $region52: #{discriminator_forward.3} parent=5 // pred_fallthru
      _
  $region6: #{discriminator_forward.3} parent=0 // loop_footer
    %s17 = sadd.s32 1, %s13
  $region7: #{discriminator_forward.3} parent=0 // loop_footer_branch
    %12 = sbr.rel target = $region3
  $region8: #{discriminator_forward.3} parent=0 // loop_exit
    _

// kernel: discriminator_forward.4
$region0: #{discriminator_forward.4}
  #allocation0 [shape = 'u32[]', space=smem, size = 0x4, offset = 0x4, fixed_abs, tag = 'smem constant byte address 0x4 - core index']
  #allocation1 [shape = 'u32[144,128]{1,0:T(1,128)}', space=vmem, size = 0x12000, scoped, tag = 'internal scratch']
  #allocation2 [shape = 'bf16[256,128]{1,0:T(8,128)(2,1)}', space=vmem, size = 0x10000, scoped, tag = 'scratch operand']
  #allocation3 [shape = 'f32[64,256]{1,0:T(8,128)}', space=vmem, size = 0x10000, scoped, tag = 'scratch operand']
  %s0 = inlined_call_operand.vmem [shape: bf16[2,256,128], index: 0, kind: input, shape index: {}]
  %s1 = inlined_call_operand.vmem [shape: f32[1,128], index: 1, kind: input, shape index: {}]
  %s2 = inlined_call_operand.vmem [shape: f32[1,128], index: 2, kind: input, shape index: {}]
  %s3 = inlined_call_operand.vmem [shape: f32[256,1], index: 3, kind: input, shape index: {}]
  %s4 = inlined_call_operand.vmem [shape: bf16[16,128,256], index: 4, kind: input, shape index: {}]
  %s5 = inlined_call_operand.vmem [shape: f32[1,256], index: 5, kind: input, shape index: {}]
  %s6 = inlined_call_operand.vmem [shape: f32[64,256], index: 6, kind: input, shape index: {}]
  %s7 = inlined_call_operand.vmem [shape: f32[64,1], index: 7, kind: input, shape index: {}]
  %s8 = inlined_call_operand.vmem [shape: f32[2,1,256], index: 8, kind: output, shape index: {0}]
  %s9 = inlined_call_operand.vmem [shape: f32[2,1,256], index: 9, kind: output, shape index: {1}]
  %s10 = inlined_call_operand.vmem [shape: f32[2,1,256], index: 10, kind: output, shape index: {2}]
  %11 = xla_tuple %s8, %s9, %s10
  %s12 = sld [smem:[#allocation0]]
  $region81: #{discriminator_forward.4} parent=0
    _
  %s14 = ssub.s32 1, %s12
  %s15 = scalar_select 0, %s14, %s12
  loop: start=0, step=1, limit=4
  $region2: #{discriminator_forward.4} parent=0 // loop_pre_header
    _
  $region3: #{discriminator_forward.4} parent=0 // loop_header
    %s17 = sphi 0, %s21
    %p18 = scmp.ge.s32.totalorder %s17, 4
    %s27 = sphi 0, %s29
    %s30 = sphi 0, %s27
    %s31 = sphi 0, %s30
    %s47 = sphi 0, %s31
    %s51 = sphi 0, %s51
    %s53 = sphi 0, %s51
    %s54 = sphi 0, %s53
    %s68 = sphi 0, %s54
    %s72 = sphi 0, %s72
    %s74 = sphi 0, %s72
    %s75 = sphi 0, %s74
    %s89 = sphi 0, %s75
    %s93 = sphi 0, %s93
    %s95 = sphi 0, %s93
    %s96 = sphi 0, %s95
    %s110 = sphi 0, %s96
    %s114 = sphi 0, %s114
    %s116 = sphi 0, %s114
    %s117 = sphi 0, %s116
    %s131 = sphi 0, %s117
    %s135 = sphi 0, %s135
    %s137 = sphi 0, %s135
    %s138 = sphi 0, %s137
    %s152 = sphi 0, %s138
    %s156 = sphi 0, %s156
    %s158 = sphi 0, %s156
    %s159 = sphi 0, %s158
    %s173 = sphi 0, %s159
    %s177 = sphi 0, %s177
    %s179 = sphi 0, %s177
    %s180 = sphi 0, %s179
    %s194 = sphi 0, %s180
    %s200 = sphi 0, %s202
    %s203 = sphi 0, %s200
    %s204 = sphi 0, %s203
    %s220 = sphi 0, %s204
    %s226 = sphi 0, %s228
    %s229 = sphi 0, %s226
    %s230 = sphi 0, %s229
    %s246 = sphi 0, %s230
    %s252 = sphi 0, %s254
    %s255 = sphi 0, %s252
    %s256 = sphi 0, %s255
    %s272 = sphi 0, %s256
  $region4: #{discriminator_forward.4} parent=0 // loop_header_branch
    %20 = sbr.rel (%p18) target = $region8
  $region5: #{discriminator_forward.4} parent=0 // loop_body
    %s22 = ssub.s32 %s17, 1
    %s23 = ssub.s32 %s17, 2
    %s24 = sadd.s32 %s17, 1
    %s25 = ssub.s32 %s17, %s24
    %p26 = scmp.eq.s32.totalorder %s25, 0
    %s28 = sadd.s32 %s27, 1
    %s29 = scalar_select %p26, %s27, %s28
    %p32 = pneg %p26
    %p33 = scmp.eq.s32.totalorder %s17, 1
    %p34 = por %p32, %p33
    %p35 = scmp.ne.s32.totalorder %s27, %s30
    %p36 = scmp.eq.s32.totalorder %s17, 0
    %p37 = por %p35, %p36
    %p38 = scmp.ne.s32.totalorder %s27, %s30
    %p39 = scmp.eq.s32.totalorder %s22, 1
    %p40 = por %p38, %p39
    %p41 = scmp.ne.s32.totalorder %s30, %s31
    %p42 = scmp.eq.s32.totalorder %s22, 0
    %p43 = por %p41, %p42
    %p44 = scmp.ne.s32.totalorder %s30, %s31
    %p45 = scmp.eq.s32.totalorder %s23, 1
    %p46 = por %p44, %p45
    %p48 = scmp.ne.s32.totalorder %s31, %s47
    %p49 = scmp.eq.s32.totalorder %s23, 0
    %p50 = por %p48, %p49
    %s52 = sadd.s32 %s51, 1
    %p55 = scmp.eq.s32.totalorder %s17, 1
    %p56 = scmp.ne.s32.totalorder %s51, %s53
    %p57 = scmp.eq.s32.totalorder %s17, 0
    %p58 = por %p56, %p57
    %p59 = scmp.ne.s32.totalorder %s51, %s53
    %p60 = scmp.eq.s32.totalorder %s22, 1
    %p61 = por %p59, %p60
    %p62 = scmp.ne.s32.totalorder %s53, %s54
    %p63 = scmp.eq.s32.totalorder %s22, 0
    %p64 = por %p62, %p63
    %p65 = scmp.ne.s32.totalorder %s53, %s54
    %p66 = scmp.eq.s32.totalorder %s23, 1
    %p67 = por %p65, %p66
    %p69 = scmp.ne.s32.totalorder %s54, %s68
    %p70 = scmp.eq.s32.totalorder %s23, 0
    %p71 = por %p69, %p70
    %s73 = sadd.s32 %s72, 1
    %p76 = scmp.eq.s32.totalorder %s17, 1
    %p77 = scmp.ne.s32.totalorder %s72, %s74
    %p78 = scmp.eq.s32.totalorder %s17, 0
    %p79 = por %p77, %p78
    %p80 = scmp.ne.s32.totalorder %s72, %s74
    %p81 = scmp.eq.s32.totalorder %s22, 1
    %p82 = por %p80, %p81
    %p83 = scmp.ne.s32.totalorder %s74, %s75
    %p84 = scmp.eq.s32.totalorder %s22, 0
    %p85 = por %p83, %p84
    %p86 = scmp.ne.s32.totalorder %s74, %s75
    %p87 = scmp.eq.s32.totalorder %s23, 1
    %p88 = por %p86, %p87
    %p90 = scmp.ne.s32.totalorder %s75, %s89
    %p91 = scmp.eq.s32.totalorder %s23, 0
    %p92 = por %p90, %p91
    %s94 = sadd.s32 %s93, 1
    %p97 = scmp.eq.s32.totalorder %s17, 1
    %p98 = scmp.ne.s32.totalorder %s93, %s95
    %p99 = scmp.eq.s32.totalorder %s17, 0
    %p100 = por %p98, %p99
    %p101 = scmp.ne.s32.totalorder %s93, %s95
    %p102 = scmp.eq.s32.totalorder %s22, 1
    %p103 = por %p101, %p102
    %p104 = scmp.ne.s32.totalorder %s95, %s96
    %p105 = scmp.eq.s32.totalorder %s22, 0
    %p106 = por %p104, %p105
    %p107 = scmp.ne.s32.totalorder %s95, %s96
    %p108 = scmp.eq.s32.totalorder %s23, 1
    %p109 = por %p107, %p108
    %p111 = scmp.ne.s32.totalorder %s96, %s110
    %p112 = scmp.eq.s32.totalorder %s23, 0
    %p113 = por %p111, %p112
    %s115 = sadd.s32 %s114, 1
    %p118 = scmp.eq.s32.totalorder %s17, 1
    %p119 = scmp.ne.s32.totalorder %s114, %s116
    %p120 = scmp.eq.s32.totalorder %s17, 0
    %p121 = por %p119, %p120
    %p122 = scmp.ne.s32.totalorder %s114, %s116
    %p123 = scmp.eq.s32.totalorder %s22, 1
    %p124 = por %p122, %p123
    %p125 = scmp.ne.s32.totalorder %s116, %s117
    %p126 = scmp.eq.s32.totalorder %s22, 0
    %p127 = por %p125, %p126
    %p128 = scmp.ne.s32.totalorder %s116, %s117
    %p129 = scmp.eq.s32.totalorder %s23, 1
    %p130 = por %p128, %p129
    %p132 = scmp.ne.s32.totalorder %s117, %s131
    %p133 = scmp.eq.s32.totalorder %s23, 0
    %p134 = por %p132, %p133
    %s136 = sadd.s32 %s135, 1
    %p139 = scmp.eq.s32.totalorder %s17, 1
    %p140 = scmp.ne.s32.totalorder %s135, %s137
    %p141 = scmp.eq.s32.totalorder %s17, 0
    %p142 = por %p140, %p141
    %p143 = scmp.ne.s32.totalorder %s135, %s137
    %p144 = scmp.eq.s32.totalorder %s22, 1
    %p145 = por %p143, %p144
    %p146 = scmp.ne.s32.totalorder %s137, %s138
    %p147 = scmp.eq.s32.totalorder %s22, 0
    %p148 = por %p146, %p147
    %p149 = scmp.ne.s32.totalorder %s137, %s138
    %p150 = scmp.eq.s32.totalorder %s23, 1
    %p151 = por %p149, %p150
    %p153 = scmp.ne.s32.totalorder %s138, %s152
    %p154 = scmp.eq.s32.totalorder %s23, 0
    %p155 = por %p153, %p154
    %s157 = sadd.s32 %s156, 1
    %p160 = scmp.eq.s32.totalorder %s17, 1
    %p161 = scmp.ne.s32.totalorder %s156, %s158
    %p162 = scmp.eq.s32.totalorder %s17, 0
    %p163 = por %p161, %p162
    %p164 = scmp.ne.s32.totalorder %s156, %s158
    %p165 = scmp.eq.s32.totalorder %s22, 1
    %p166 = por %p164, %p165
    %p167 = scmp.ne.s32.totalorder %s158, %s159
    %p168 = scmp.eq.s32.totalorder %s22, 0
    %p169 = por %p167, %p168
    %p170 = scmp.ne.s32.totalorder %s158, %s159
    %p171 = scmp.eq.s32.totalorder %s23, 1
    %p172 = por %p170, %p171
    %p174 = scmp.ne.s32.totalorder %s159, %s173
    %p175 = scmp.eq.s32.totalorder %s23, 0
    %p176 = por %p174, %p175
    %s178 = sadd.s32 %s177, 1
    %p181 = scmp.eq.s32.totalorder %s17, 1
    %p182 = scmp.ne.s32.totalorder %s177, %s179
    %p183 = scmp.eq.s32.totalorder %s17, 0
    %p184 = por %p182, %p183
    %p185 = scmp.ne.s32.totalorder %s177, %s179
    %p186 = scmp.eq.s32.totalorder %s22, 1
    %p187 = por %p185, %p186
    %p188 = scmp.ne.s32.totalorder %s179, %s180
    %p189 = scmp.eq.s32.totalorder %s22, 0
    %p190 = por %p188, %p189
    %p191 = scmp.ne.s32.totalorder %s179, %s180
    %p192 = scmp.eq.s32.totalorder %s23, 1
    %p193 = por %p191, %p192
    %p195 = scmp.ne.s32.totalorder %s180, %s194
    %p196 = scmp.eq.s32.totalorder %s23, 0
    %p197 = por %p195, %p196
    %s198 = ssub.s32 %s17, %s24
    %p199 = scmp.eq.s32.totalorder %s198, 0
    %s201 = sadd.s32 %s200, 1
    %s202 = scalar_select %p199, %s200, %s201
    %p205 = pneg %p199
    %p206 = scmp.eq.s32.totalorder %s17, 1
    %p207 = por %p205, %p206
    %p208 = scmp.ne.s32.totalorder %s200, %s203
    %p209 = scmp.eq.s32.totalorder %s17, 0
    %p210 = por %p208, %p209
    %p211 = scmp.ne.s32.totalorder %s200, %s203
    %p212 = scmp.eq.s32.totalorder %s22, 1
    %p213 = por %p211, %p212
    %p214 = scmp.ne.s32.totalorder %s203, %s204
    %p215 = scmp.eq.s32.totalorder %s22, 0
    %p216 = por %p214, %p215
    %p217 = scmp.ne.s32.totalorder %s203, %s204
    %p218 = scmp.eq.s32.totalorder %s23, 1
    %p219 = por %p217, %p218
    %p221 = scmp.ne.s32.totalorder %s204, %s220
    %p222 = scmp.eq.s32.totalorder %s23, 0
    %p223 = por %p221, %p222
    %s224 = ssub.s32 %s17, %s24
    %p225 = scmp.eq.s32.totalorder %s224, 0
    %s227 = sadd.s32 %s226, 1
    %s228 = scalar_select %p225, %s226, %s227
    %p231 = pneg %p225
    %p232 = scmp.eq.s32.totalorder %s17, 1
    %p233 = por %p231, %p232
    %p234 = scmp.ne.s32.totalorder %s226, %s229
    %p235 = scmp.eq.s32.totalorder %s17, 0
    %p236 = por %p234, %p235
    %p237 = scmp.ne.s32.totalorder %s226, %s229
    %p238 = scmp.eq.s32.totalorder %s22, 1
    %p239 = por %p237, %p238
    %p240 = scmp.ne.s32.totalorder %s229, %s230
    %p241 = scmp.eq.s32.totalorder %s22, 0
    %p242 = por %p240, %p241
    %p243 = scmp.ne.s32.totalorder %s229, %s230
    %p244 = scmp.eq.s32.totalorder %s23, 1
    %p245 = por %p243, %p244
    %p247 = scmp.ne.s32.totalorder %s230, %s246
    %p248 = scmp.eq.s32.totalorder %s23, 0
    %p249 = por %p247, %p248
    %s250 = ssub.s32 %s17, %s24
    %p251 = scmp.eq.s32.totalorder %s250, 0
    %s253 = sadd.s32 %s252, 1
    %s254 = scalar_select %p251, %s252, %s253
    %p257 = pneg %p251
    %p258 = scmp.eq.s32.totalorder %s17, 1
    %p259 = por %p257, %p258
    %p260 = scmp.ne.s32.totalorder %s252, %s255
    %p261 = scmp.eq.s32.totalorder %s17, 0
    %p262 = por %p260, %p261
    %p263 = scmp.ne.s32.totalorder %s252, %s255
    %p264 = scmp.eq.s32.totalorder %s22, 1
    %p265 = por %p263, %p264
    %p266 = scmp.ne.s32.totalorder %s255, %s256
    %p267 = scmp.eq.s32.totalorder %s22, 0
    %p268 = por %p266, %p267
    %p269 = scmp.ne.s32.totalorder %s255, %s256
    %p270 = scmp.eq.s32.totalorder %s23, 1
    %p271 = por %p269, %p270
    %p273 = scmp.ne.s32.totalorder %s256, %s272
    %p274 = scmp.eq.s32.totalorder %s23, 0
    %p275 = por %p273, %p274
    %p276 = scmp.le.s32.totalorder 1, %s17
    %p277 = scmp.lt.s32.totalorder %s17, 3
    %p278 = pnand %p276, %p277
    %p279 = pneg %p278
    // Predicated region
    $region9: #{discriminator_forward.4} parent=5 // pred_check
      _
    $region10: #{discriminator_forward.4} parent=5 // pred_check_branch
      %281 = sbr.rel (%p278) target = $region12
    $region11: #{discriminator_forward.4} parent=5 // pred_region
      %s282 = ssub.s32 %s17, 1
      // Predicated region
      $region13: #{discriminator_forward.4} parent=11 // pred_check
        %p283 = pneg %p64
      $region14: #{discriminator_forward.4} parent=11 // pred_check_branch
        %285 = sbr.rel (%p283) target = $region16
      $region15: #{discriminator_forward.4} parent=11 // pred_region
        _
      $region16: #{discriminator_forward.4} parent=11 // pred_fallthru
        _
      // Predicated region
      $region17: #{discriminator_forward.4} parent=11 // pred_check
        %p286 = pneg %p85
      $region18: #{discriminator_forward.4} parent=11 // pred_check_branch
        %288 = sbr.rel (%p286) target = $region20
      $region19: #{discriminator_forward.4} parent=11 // pred_region
        _
      $region20: #{discriminator_forward.4} parent=11 // pred_fallthru
        _
      // Predicated region
      $region21: #{discriminator_forward.4} parent=11 // pred_check
        %p289 = pneg %p106
      $region22: #{discriminator_forward.4} parent=11 // pred_check_branch
        %291 = sbr.rel (%p289) target = $region24
      $region23: #{discriminator_forward.4} parent=11 // pred_region
        _
      $region24: #{discriminator_forward.4} parent=11 // pred_fallthru
        _
      // Predicated region
      $region25: #{discriminator_forward.4} parent=11 // pred_check
        %p292 = pneg %p127
      $region26: #{discriminator_forward.4} parent=11 // pred_check_branch
        %294 = sbr.rel (%p292) target = $region28
      $region27: #{discriminator_forward.4} parent=11 // pred_region
        _
      $region28: #{discriminator_forward.4} parent=11 // pred_fallthru
        _
      // Predicated region
      $region29: #{discriminator_forward.4} parent=11 // pred_check
        %p295 = pneg %p148
      $region30: #{discriminator_forward.4} parent=11 // pred_check_branch
        %297 = sbr.rel (%p295) target = $region32
      $region31: #{discriminator_forward.4} parent=11 // pred_region
        _
      $region32: #{discriminator_forward.4} parent=11 // pred_fallthru
        _
      // Predicated region
      $region33: #{discriminator_forward.4} parent=11 // pred_check
        %p298 = pneg %p169
      $region34: #{discriminator_forward.4} parent=11 // pred_check_branch
        %300 = sbr.rel (%p298) target = $region36
      $region35: #{discriminator_forward.4} parent=11 // pred_region
        _
      $region36: #{discriminator_forward.4} parent=11 // pred_fallthru
        _
      // Predicated region
      $region37: #{discriminator_forward.4} parent=11 // pred_check
        %p301 = pneg %p190
      $region38: #{discriminator_forward.4} parent=11 // pred_check_branch
        %303 = sbr.rel (%p301) target = $region40
      $region39: #{discriminator_forward.4} parent=11 // pred_region
        _
      $region40: #{discriminator_forward.4} parent=11 // pred_fallthru
        _
    $region12: #{discriminator_forward.4} parent=5 // pred_fallthru
      _
    %p304 = scmp.lt.s32.totalorder %s17, 2
    // Predicated region
    $region41: #{discriminator_forward.4} parent=5 // pred_check
      %p305 = pneg %p304
    $region42: #{discriminator_forward.4} parent=5 // pred_check_branch
      %307 = sbr.rel (%p305) target = $region44
    $region43: #{discriminator_forward.4} parent=5 // pred_region
      // Predicated region
      $region45: #{discriminator_forward.4} parent=43 // pred_check
        %p308 = pneg %p37
      $region46: #{discriminator_forward.4} parent=43 // pred_check_branch
        %310 = sbr.rel (%p308) target = $region48
      $region47: #{discriminator_forward.4} parent=43 // pred_region
        %p311 = scmp.lt.s32.totalorder %s17, 1
        %s312 = scalar_select %p311, %s17, 1
        %s313 = smul.addr %s312, 32
        %s314 = smul.addr %s313, 4
        %s315 = scalar_lea.vmem %s0, %s314
      $region48: #{discriminator_forward.4} parent=43 // pred_fallthru
        _
    $region44: #{discriminator_forward.4} parent=5 // pred_fallthru
      _
    %p316 = scmp.le.s32.totalorder 1, %s17
    %p317 = scmp.lt.s32.totalorder %s17, 3
    %p318 = pnand %p316, %p317
    %p319 = pneg %p318
    // Predicated region
    $region49: #{discriminator_forward.4} parent=5 // pred_check
      _
    $region50: #{discriminator_forward.4} parent=5 // pred_check_branch
      %321 = sbr.rel (%p318) target = $region52
    $region51: #{discriminator_forward.4} parent=5 // pred_region
      %s322 = ssub.s32 %s17, 1
      %p323 = scmp.lt.s32.totalorder %s22, 1
      %s324 = scalar_select %p323, %s22, 1
      %s325 = smul.addr %s324, 32
      %s326 = smul.addr %s325, 4
      %s327 = scalar_lea.vmem %s0, %s326
      %p328 = pneg %p43
      %p329 = pneg %p40
      %p330 = pneg %p64
      %p331 = pneg %p61
      %p332 = pneg %p85
      %p333 = pneg %p82
      %p334 = pneg %p106
      %p335 = pneg %p103
      %p336 = pneg %p127
      %p337 = pneg %p124
      %p338 = pneg %p148
      %p339 = pneg %p145
      %p340 = pneg %p169
      %p341 = pneg %p166
      %p342 = pneg %p190
      %p343 = pneg %p187
      %p344 = pneg %p216
      %p345 = pneg %p213
      %p346 = scmp.lt.s32.totalorder %s22, 1
      %s347 = scalar_select %p346, %s22, 1
      %s348 = smul.addr %s347, 2
      %s349 = scalar_lea.vmem %s8, %s348
      %p350 = pneg %p242
      %p351 = pneg %p239
      %p352 = scmp.lt.s32.totalorder %s22, 1
      %s353 = scalar_select %p352, %s22, 1
      %s354 = smul.addr %s353, 2
      %s355 = scalar_lea.vmem %s9, %s354
      %p356 = pneg %p268
      %p357 = pneg %p265
      %p358 = scmp.lt.s32.totalorder %s22, 1
      %s359 = scalar_select %p358, %s22, 1
      %s360 = smul.addr %s359, 2
      %s361 = scalar_lea.vmem %s10, %s360
      %p362 = scmp.lt.s32.totalorder %s22, 1
      %s363 = scalar_select %p362, %s22, 1
      %s364 = smul.addr %s363, 32
      %s365 = smul.addr %s364, 4
      %s366 = scalar_lea.vmem %s0, %s365
      %p367 = scmp.lt.s32.totalorder %s22, 1
      %s368 = scalar_select %p367, %s22, 1
      %s369 = smul.addr %s368, 2
      %s370 = scalar_lea.vmem %s8, %s369
      %p371 = scmp.lt.s32.totalorder %s22, 1
      %s372 = scalar_select %p371, %s22, 1
      %s373 = smul.addr %s372, 2
      %s374 = scalar_lea.vmem %s9, %s373
      %p375 = scmp.lt.s32.totalorder %s22, 1
      %s376 = scalar_select %p375, %s22, 1
      %s377 = smul.addr %s376, 2
      %s378 = scalar_lea.vmem %s10, %s377
      %v380 = vld [vmem:[%s366] sm:$0xf]
      %v381 = vld [vmem:[%s366 + $0x4] sm:$0xf]
      %v382 = vld [vmem:[%s366 + $0x8] sm:$0xf]
      %v383 = vld [vmem:[%s366 + $0xc] sm:$0xf]
      %v384 = vld [vmem:[%s366 + $0x10] sm:$0xf]
      %v385 = vld [vmem:[%s366 + $0x14] sm:$0xf]
      %v386 = vld [vmem:[%s366 + $0x18] sm:$0xf]
      %v387 = vld [vmem:[%s366 + $0x1c] sm:$0xf]
      %v388 = vld [vmem:[%s366 + $0x20] sm:$0xf]
      %v389 = vld [vmem:[%s366 + $0x24] sm:$0xf]
      %v390 = vld [vmem:[%s366 + $0x28] sm:$0xf]
      %v391 = vld [vmem:[%s366 + $0x2c] sm:$0xf]
      %v392 = vld [vmem:[%s366 + $0x30] sm:$0xf]
      %v393 = vld [vmem:[%s366 + $0x34] sm:$0xf]
      %v394 = vld [vmem:[%s366 + $0x38] sm:$0xf]
      %v395 = vld [vmem:[%s366 + $0x3c] sm:$0xf]
      %v396 = vld [vmem:[%s366 + $0x40] sm:$0xf]
      %v397 = vld [vmem:[%s366 + $0x44] sm:$0xf]
      %v398 = vld [vmem:[%s366 + $0x48] sm:$0xf]
      %v399 = vld [vmem:[%s366 + $0x4c] sm:$0xf]
      %v400 = vld [vmem:[%s366 + $0x50] sm:$0xf]
      %v401 = vld [vmem:[%s366 + $0x54] sm:$0xf]
      %v402 = vld [vmem:[%s366 + $0x58] sm:$0xf]
      %v403 = vld [vmem:[%s366 + $0x5c] sm:$0xf]
      %v404 = vld [vmem:[%s366 + $0x60] sm:$0xf]
      %v405 = vld [vmem:[%s366 + $0x64] sm:$0xf]
      %v406 = vld [vmem:[%s366 + $0x68] sm:$0xf]
      %v407 = vld [vmem:[%s366 + $0x6c] sm:$0xf]
      %v408 = vld [vmem:[%s366 + $0x70] sm:$0xf]
      %v409 = vld [vmem:[%s366 + $0x74] sm:$0xf]
      %v410 = vld [vmem:[%s366 + $0x78] sm:$0xf]
      %v411 = vld [vmem:[%s366 + $0x7c] sm:$0xf]
      %v412 = vunpack.c.l.bf16 %v380
      %v413 = vunpack.c.l.bf16 %v381
      %v414 = vunpack.c.l.bf16 %v382
      %v415 = vunpack.c.l.bf16 %v383
      %v416 = vunpack.c.l.bf16 %v384
      %v417 = vunpack.c.l.bf16 %v385
      %v418 = vunpack.c.l.bf16 %v386
      %v419 = vunpack.c.l.bf16 %v387
      %v420 = vunpack.c.l.bf16 %v388
      %v421 = vunpack.c.l.bf16 %v389
      %v422 = vunpack.c.l.bf16 %v390
      %v423 = vunpack.c.l.bf16 %v391
      %v424 = vunpack.c.l.bf16 %v392
      %v425 = vunpack.c.l.bf16 %v393
      %v426 = vunpack.c.l.bf16 %v394
      %v427 = vunpack.c.l.bf16 %v395
      %v428 = vunpack.c.l.bf16 %v396
      %v429 = vunpack.c.l.bf16 %v397
      %v430 = vunpack.c.l.bf16 %v398
      %v431 = vunpack.c.l.bf16 %v399
      %v432 = vunpack.c.l.bf16 %v400
      %v433 = vunpack.c.l.bf16 %v401
      %v434 = vunpack.c.l.bf16 %v402
      %v435 = vunpack.c.l.bf16 %v403
      %v436 = vunpack.c.l.bf16 %v404
      %v437 = vunpack.c.l.bf16 %v405
      %v438 = vunpack.c.l.bf16 %v406
      %v439 = vunpack.c.l.bf16 %v407
      %v440 = vunpack.c.l.bf16 %v408
      %v441 = vunpack.c.l.bf16 %v409
      %v442 = vunpack.c.l.bf16 %v410
      %v443 = vunpack.c.l.bf16 %v411
      %v444 = vld [vmem:[%s1] sm:$0x1]
      %v446 = vlaneseq
      %v447 = vshrl.u32 %v446, 7
      %v448 = vsub.s32 0, %v447
      %v449 = vrot.slane %v444, %v448
      %v451 = vmul.f32 %v412, %v449
      %v452 = vmul.f32 %v413, %v449
      %v453 = vmul.f32 %v414, %v449
      %v454 = vmul.f32 %v415, %v449
      %v455 = vmul.f32 %v416, %v449
      %v456 = vmul.f32 %v417, %v449
      %v457 = vmul.f32 %v418, %v449
      %v458 = vmul.f32 %v419, %v449
      %v459 = vmul.f32 %v420, %v449
      %v460 = vmul.f32 %v421, %v449
      %v461 = vmul.f32 %v422, %v449
      %v462 = vmul.f32 %v423, %v449
      %v463 = vmul.f32 %v424, %v449
      %v464 = vmul.f32 %v425, %v449
      %v465 = vmul.f32 %v426, %v449
      %v466 = vmul.f32 %v427, %v449
      %v467 = vmul.f32 %v428, %v449
      %v468 = vmul.f32 %v429, %v449
      %v469 = vmul.f32 %v430, %v449
      %v470 = vmul.f32 %v431, %v449
      %v471 = vmul.f32 %v432, %v449
      %v472 = vmul.f32 %v433, %v449
      %v473 = vmul.f32 %v434, %v449
      %v474 = vmul.f32 %v435, %v449
      %v475 = vmul.f32 %v436, %v449
      %v476 = vmul.f32 %v437, %v449
      %v477 = vmul.f32 %v438, %v449
      %v478 = vmul.f32 %v439, %v449
      %v479 = vmul.f32 %v440, %v449
      %v480 = vmul.f32 %v441, %v449
      %v481 = vmul.f32 %v442, %v449
      %v482 = vmul.f32 %v443, %v449
      %v483 = vld [vmem:[%s2] sm:$0x1]
      %v485 = vlaneseq
      %v486 = vshrl.u32 %v485, 7
      %v487 = vsub.s32 0, %v486
      %v488 = vrot.slane %v483, %v487
      %v490 = vadd.f32 %v451, %v488
      %v491 = vadd.f32 %v452, %v488
      %v492 = vadd.f32 %v453, %v488
      %v493 = vadd.f32 %v454, %v488
      %v494 = vadd.f32 %v455, %v488
      %v495 = vadd.f32 %v456, %v488
      %v496 = vadd.f32 %v457, %v488
      %v497 = vadd.f32 %v458, %v488
      %v498 = vadd.f32 %v459, %v488
      %v499 = vadd.f32 %v460, %v488
      %v500 = vadd.f32 %v461, %v488
      %v501 = vadd.f32 %v462, %v488
      %v502 = vadd.f32 %v463, %v488
      %v503 = vadd.f32 %v464, %v488
      %v504 = vadd.f32 %v465, %v488
      %v505 = vadd.f32 %v466, %v488
      %v506 = vadd.f32 %v467, %v488
      %v507 = vadd.f32 %v468, %v488
      %v508 = vadd.f32 %v469, %v488
      %v509 = vadd.f32 %v470, %v488
      %v510 = vadd.f32 %v471, %v488
      %v511 = vadd.f32 %v472, %v488
      %v512 = vadd.f32 %v473, %v488
      %v513 = vadd.f32 %v474, %v488
      %v514 = vadd.f32 %v475, %v488
      %v515 = vadd.f32 %v476, %v488
      %v516 = vadd.f32 %v477, %v488
      %v517 = vadd.f32 %v478, %v488
      %v518 = vadd.f32 %v479, %v488
      %v519 = vadd.f32 %v480, %v488
      %v520 = vadd.f32 %v481, %v488
      %v521 = vadd.f32 %v482, %v488
      %v522 = vld [vmem:[%s3] sm:$0xff]
      %v523 = vld [vmem:[%s3 + $0x8] sm:$0xff]
      %v524 = vld [vmem:[%s3 + $0x10] sm:$0xff]
      %v525 = vld [vmem:[%s3 + $0x18] sm:$0xff]
      %v526 = vld [vmem:[%s3 + $0x20] sm:$0xff]
      %v527 = vld [vmem:[%s3 + $0x28] sm:$0xff]
      %v528 = vld [vmem:[%s3 + $0x30] sm:$0xff]
      %v529 = vld [vmem:[%s3 + $0x38] sm:$0xff]
      %v530 = vld [vmem:[%s3 + $0x40] sm:$0xff]
      %v531 = vld [vmem:[%s3 + $0x48] sm:$0xff]
      %v532 = vld [vmem:[%s3 + $0x50] sm:$0xff]
      %v533 = vld [vmem:[%s3 + $0x58] sm:$0xff]
      %v534 = vld [vmem:[%s3 + $0x60] sm:$0xff]
      %v535 = vld [vmem:[%s3 + $0x68] sm:$0xff]
      %v536 = vld [vmem:[%s3 + $0x70] sm:$0xff]
      %v537 = vld [vmem:[%s3 + $0x78] sm:$0xff]
      %v538 = vld [vmem:[%s3 + $0x80] sm:$0xff]
      %v539 = vld [vmem:[%s3 + $0x88] sm:$0xff]
      %v540 = vld [vmem:[%s3 + $0x90] sm:$0xff]
      %v541 = vld [vmem:[%s3 + $0x98] sm:$0xff]
      %v542 = vld [vmem:[%s3 + $0xa0] sm:$0xff]
      %v543 = vld [vmem:[%s3 + $0xa8] sm:$0xff]
      %v544 = vld [vmem:[%s3 + $0xb0] sm:$0xff]
      %v545 = vld [vmem:[%s3 + $0xb8] sm:$0xff]
      %v546 = vld [vmem:[%s3 + $0xc0] sm:$0xff]
      %v547 = vld [vmem:[%s3 + $0xc8] sm:$0xff]
      %v548 = vld [vmem:[%s3 + $0xd0] sm:$0xff]
      %v549 = vld [vmem:[%s3 + $0xd8] sm:$0xff]
      %v550 = vld [vmem:[%s3 + $0xe0] sm:$0xff]
      %v551 = vld [vmem:[%s3 + $0xe8] sm:$0xff]
      %v552 = vld [vmem:[%s3 + $0xf0] sm:$0xff]
      %v553 = vld [vmem:[%s3 + $0xf8] sm:$0xff]
      %555 = vset.pattern.permute.xlu0 0
      %556 = vperm.xlu0 %555, %v522
      %v557 = vpop.permute.xlu0 %556
      %560 = vset.pattern.permute.xlu0 0
      %561 = vperm.xlu0 %560, %v523
      %v562 = vpop.permute.xlu0 %561
      %565 = vset.pattern.permute.xlu0 0
      %566 = vperm.xlu0 %565, %v524
      %v567 = vpop.permute.xlu0 %566
      %570 = vset.pattern.permute.xlu0 0
      %571 = vperm.xlu0 %570, %v525
      %v572 = vpop.permute.xlu0 %571
      %575 = vset.pattern.permute.xlu0 0
      %576 = vperm.xlu0 %575, %v526
      %v577 = vpop.permute.xlu0 %576
      %580 = vset.pattern.permute.xlu0 0
      %581 = vperm.xlu0 %580, %v527
      %v582 = vpop.permute.xlu0 %581
      %585 = vset.pattern.permute.xlu0 0
      %586 = vperm.xlu0 %585, %v528
      %v587 = vpop.permute.xlu0 %586
      %590 = vset.pattern.permute.xlu0 0
      %591 = vperm.xlu0 %590, %v529
      %v592 = vpop.permute.xlu0 %591
      %595 = vset.pattern.permute.xlu0 0
      %596 = vperm.xlu0 %595, %v530
      %v597 = vpop.permute.xlu0 %596
      %600 = vset.pattern.permute.xlu0 0
      %601 = vperm.xlu0 %600, %v531
      %v602 = vpop.permute.xlu0 %601
      %605 = vset.pattern.permute.xlu0 0
      %606 = vperm.xlu0 %605, %v532
      %v607 = vpop.permute.xlu0 %606
      %610 = vset.pattern.permute.xlu0 0
      %611 = vperm.xlu0 %610, %v533
      %v612 = vpop.permute.xlu0 %611
      %615 = vset.pattern.permute.xlu0 0
      %616 = vperm.xlu0 %615, %v534
      %v617 = vpop.permute.xlu0 %616
      %620 = vset.pattern.permute.xlu0 0
      %621 = vperm.xlu0 %620, %v535
      %v622 = vpop.permute.xlu0 %621
      %625 = vset.pattern.permute.xlu0 0
      %626 = vperm.xlu0 %625, %v536
      %v627 = vpop.permute.xlu0 %626
      %630 = vset.pattern.permute.xlu0 0
      %631 = vperm.xlu0 %630, %v537
      %v632 = vpop.permute.xlu0 %631
      %635 = vset.pattern.permute.xlu0 0
      %636 = vperm.xlu0 %635, %v538
      %v637 = vpop.permute.xlu0 %636
      %640 = vset.pattern.permute.xlu0 0
      %641 = vperm.xlu0 %640, %v539
      %v642 = vpop.permute.xlu0 %641
      %645 = vset.pattern.permute.xlu0 0
      %646 = vperm.xlu0 %645, %v540
      %v647 = vpop.permute.xlu0 %646
      %650 = vset.pattern.permute.xlu0 0
      %651 = vperm.xlu0 %650, %v541
      %v652 = vpop.permute.xlu0 %651
      %655 = vset.pattern.permute.xlu0 0
      %656 = vperm.xlu0 %655, %v542
      %v657 = vpop.permute.xlu0 %656
      %660 = vset.pattern.permute.xlu0 0
      %661 = vperm.xlu0 %660, %v543
      %v662 = vpop.permute.xlu0 %661
      %665 = vset.pattern.permute.xlu0 0
      %666 = vperm.xlu0 %665, %v544
      %v667 = vpop.permute.xlu0 %666
      %670 = vset.pattern.permute.xlu0 0
      %671 = vperm.xlu0 %670, %v545
      %v672 = vpop.permute.xlu0 %671
      %675 = vset.pattern.permute.xlu0 0
      %676 = vperm.xlu0 %675, %v546
      %v677 = vpop.permute.xlu0 %676
      %680 = vset.pattern.permute.xlu0 0
      %681 = vperm.xlu0 %680, %v547
      %v682 = vpop.permute.xlu0 %681
      %685 = vset.pattern.permute.xlu0 0
      %686 = vperm.xlu0 %685, %v548
      %v687 = vpop.permute.xlu0 %686
      %690 = vset.pattern.permute.xlu0 0
      %691 = vperm.xlu0 %690, %v549
      %v692 = vpop.permute.xlu0 %691
      %695 = vset.pattern.permute.xlu0 0
      %696 = vperm.xlu0 %695, %v550
      %v697 = vpop.permute.xlu0 %696
      %700 = vset.pattern.permute.xlu0 0
      %701 = vperm.xlu0 %700, %v551
      %v702 = vpop.permute.xlu0 %701
      %705 = vset.pattern.permute.xlu0 0
      %706 = vperm.xlu0 %705, %v552
      %v707 = vpop.permute.xlu0 %706
      %710 = vset.pattern.permute.xlu0 0
      %711 = vperm.xlu0 %710, %v553
      %v712 = vpop.permute.xlu0 %711
      %v714 = vmul.f32 %v490, %v557
      %v715 = vmul.f32 %v491, %v562
      %v716 = vmul.f32 %v492, %v567
      %v717 = vmul.f32 %v493, %v572
      %v718 = vmul.f32 %v494, %v577
      %v719 = vmul.f32 %v495, %v582
      %v720 = vmul.f32 %v496, %v587
      %v721 = vmul.f32 %v497, %v592
      %v722 = vmul.f32 %v498, %v597
      %v723 = vmul.f32 %v499, %v602
      %v724 = vmul.f32 %v500, %v607
      %v725 = vmul.f32 %v501, %v612
      %v726 = vmul.f32 %v502, %v617
      %v727 = vmul.f32 %v503, %v622
      %v728 = vmul.f32 %v504, %v627
      %v729 = vmul.f32 %v505, %v632
      %v730 = vmul.f32 %v506, %v637
      %v731 = vmul.f32 %v507, %v642
      %v732 = vmul.f32 %v508, %v647
      %v733 = vmul.f32 %v509, %v652
      %v734 = vmul.f32 %v510, %v657
      %v735 = vmul.f32 %v511, %v662
      %v736 = vmul.f32 %v512, %v667
      %v737 = vmul.f32 %v513, %v672
      %v738 = vmul.f32 %v514, %v677
      %v739 = vmul.f32 %v515, %v682
      %v740 = vmul.f32 %v516, %v687
      %v741 = vmul.f32 %v517, %v692
      %v742 = vmul.f32 %v518, %v697
      %v743 = vmul.f32 %v519, %v702
      %v744 = vmul.f32 %v520, %v707
      %v745 = vmul.f32 %v521, %v712
      %v746 = vpack.c.bf16 %v715, %v714
      %v747 = vpack.c.bf16 %v717, %v716
      %v748 = vpack.c.bf16 %v719, %v718
      %v749 = vpack.c.bf16 %v721, %v720
      %v750 = vpack.c.bf16 %v723, %v722
      %v751 = vpack.c.bf16 %v725, %v724
      %v752 = vpack.c.bf16 %v727, %v726
      %v753 = vpack.c.bf16 %v729, %v728
      %v754 = vpack.c.bf16 %v731, %v730
      %v755 = vpack.c.bf16 %v733, %v732
      %v756 = vpack.c.bf16 %v735, %v734
      %v757 = vpack.c.bf16 %v737, %v736
      %v758 = vpack.c.bf16 %v739, %v738
      %v759 = vpack.c.bf16 %v741, %v740
      %v760 = vpack.c.bf16 %v743, %v742
      %v761 = vpack.c.bf16 %v745, %v744
      %v778 = vunpack.c.l.b16 %v746
      %v779 = vunpack.c.h.b16 %v746
      %v780 = vunpack.c.l.b16 %v747
      %v781 = vunpack.c.h.b16 %v747
      %v782 = vunpack.c.l.b16 %v748
      %v783 = vunpack.c.h.b16 %v748
      %v784 = vunpack.c.l.b16 %v749
      %v785 = vunpack.c.h.b16 %v749
      %v786 = vunpack.c.l.b16 %v750
      %v787 = vunpack.c.h.b16 %v750
      %v788 = vunpack.c.l.b16 %v751
      %v789 = vunpack.c.h.b16 %v751
      %v790 = vunpack.c.l.b16 %v752
      %v791 = vunpack.c.h.b16 %v752
      %v792 = vunpack.c.l.b16 %v753
      %v793 = vunpack.c.h.b16 %v753
      %v794 = vunpack.c.l.b16 %v754
      %v795 = vunpack.c.h.b16 %v754
      %v796 = vunpack.c.l.b16 %v755
      %v797 = vunpack.c.h.b16 %v755
      %v798 = vunpack.c.l.b16 %v756
      %v799 = vunpack.c.h.b16 %v756
      %v800 = vunpack.c.l.b16 %v757
      %v801 = vunpack.c.h.b16 %v757
      %v802 = vunpack.c.l.b16 %v758
      %v803 = vunpack.c.h.b16 %v758
      %v804 = vunpack.c.l.b16 %v759
      %v805 = vunpack.c.h.b16 %v759
      %v806 = vunpack.c.l.b16 %v760
      %v807 = vunpack.c.h.b16 %v760
      %v808 = vunpack.c.l.b16 %v761
      %v809 = vunpack.c.h.b16 %v761
      %v810 = vpack.c.b16 %v778, %v778
      %v811 = vpack.c.b16 %v779, %v779
      %v812 = vpack.c.b16 %v780, %v780
      %v813 = vpack.c.b16 %v781, %v781
      %v814 = vpack.c.b16 %v782, %v782
      %v815 = vpack.c.b16 %v783, %v783
      %v816 = vpack.c.b16 %v784, %v784
      %v817 = vpack.c.b16 %v785, %v785
      %v818 = vpack.c.b16 %v786, %v786
      %v819 = vpack.c.b16 %v787, %v787
      %v820 = vpack.c.b16 %v788, %v788
      %v821 = vpack.c.b16 %v789, %v789
      %v822 = vpack.c.b16 %v790, %v790
      %v823 = vpack.c.b16 %v791, %v791
      %v824 = vpack.c.b16 %v792, %v792
      %v825 = vpack.c.b16 %v793, %v793
      %v826 = vpack.c.b16 %v794, %v794
      %v827 = vpack.c.b16 %v795, %v795
      %v828 = vpack.c.b16 %v796, %v796
      %v829 = vpack.c.b16 %v797, %v797
      %v830 = vpack.c.b16 %v798, %v798
      %v831 = vpack.c.b16 %v799, %v799
      %v832 = vpack.c.b16 %v800, %v800
      %v833 = vpack.c.b16 %v801, %v801
      %v834 = vpack.c.b16 %v802, %v802
      %v835 = vpack.c.b16 %v803, %v803
      %v836 = vpack.c.b16 %v804, %v804
      %v837 = vpack.c.b16 %v805, %v805
      %v838 = vpack.c.b16 %v806, %v806
      %v839 = vpack.c.b16 %v807, %v807
      %v840 = vpack.c.b16 %v808, %v808
      %v841 = vpack.c.b16 %v809, %v809
      %874 = vst [vmem:[#allocation2] sm:$0xf] %v810
      %875 = vst [vmem:[#allocation2 + $0x4] sm:$0xf] %v811
      %876 = vst [vmem:[#allocation2 + $0x8] sm:$0xf] %v812
      %877 = vst [vmem:[#allocation2 + $0xc] sm:$0xf] %v813
      %878 = vst [vmem:[#allocation2 + $0x10] sm:$0xf] %v814
      %879 = vst [vmem:[#allocation2 + $0x14] sm:$0xf] %v815
      %880 = vst [vmem:[#allocation2 + $0x18] sm:$0xf] %v816
      %881 = vst [vmem:[#allocation2 + $0x1c] sm:$0xf] %v817
      %882 = vst [vmem:[#allocation2 + $0x20] sm:$0xf] %v818
      %883 = vst [vmem:[#allocation2 + $0x24] sm:$0xf] %v819
      %884 = vst [vmem:[#allocation2 + $0x28] sm:$0xf] %v820
      %885 = vst [vmem:[#allocation2 + $0x2c] sm:$0xf] %v821
      %886 = vst [vmem:[#allocation2 + $0x30] sm:$0xf] %v822
      %887 = vst [vmem:[#allocation2 + $0x34] sm:$0xf] %v823
      %888 = vst [vmem:[#allocation2 + $0x38] sm:$0xf] %v824
      %889 = vst [vmem:[#allocation2 + $0x3c] sm:$0xf] %v825
      %890 = vst [vmem:[#allocation2 + $0x40] sm:$0xf] %v826
      %891 = vst [vmem:[#allocation2 + $0x44] sm:$0xf] %v827
      %892 = vst [vmem:[#allocation2 + $0x48] sm:$0xf] %v828
      %893 = vst [vmem:[#allocation2 + $0x4c] sm:$0xf] %v829
      %894 = vst [vmem:[#allocation2 + $0x50] sm:$0xf] %v830
      %895 = vst [vmem:[#allocation2 + $0x54] sm:$0xf] %v831
      %896 = vst [vmem:[#allocation2 + $0x58] sm:$0xf] %v832
      %897 = vst [vmem:[#allocation2 + $0x5c] sm:$0xf] %v833
      %898 = vst [vmem:[#allocation2 + $0x60] sm:$0xf] %v834
      %899 = vst [vmem:[#allocation2 + $0x64] sm:$0xf] %v835
      %900 = vst [vmem:[#allocation2 + $0x68] sm:$0xf] %v836
      %901 = vst [vmem:[#allocation2 + $0x6c] sm:$0xf] %v837
      %902 = vst [vmem:[#allocation2 + $0x70] sm:$0xf] %v838
      %903 = vst [vmem:[#allocation2 + $0x74] sm:$0xf] %v839
      %904 = vst [vmem:[#allocation2 + $0x78] sm:$0xf] %v840
      %905 = vst [vmem:[#allocation2 + $0x7c] sm:$0xf] %v841
      %906 = vst [vmem:[#allocation3] sm:$0xff] 0.0
      %907 = vst [vmem:[#allocation3 + $0x8] sm:$0xff] 0.0
      %908 = vst [vmem:[#allocation3 + $0x10] sm:$0xff] 0.0
      %909 = vst [vmem:[#allocation3 + $0x18] sm:$0xff] 0.0
      %910 = vst [vmem:[#allocation3 + $0x20] sm:$0xff] 0.0
      %911 = vst [vmem:[#allocation3 + $0x28] sm:$0xff] 0.0
      %912 = vst [vmem:[#allocation3 + $0x30] sm:$0xff] 0.0
      %913 = vst [vmem:[#allocation3 + $0x38] sm:$0xff] 0.0
      %914 = vst [vmem:[#allocation3 + $0x40] sm:$0xff] 0.0
      %915 = vst [vmem:[#allocation3 + $0x48] sm:$0xff] 0.0
      %916 = vst [vmem:[#allocation3 + $0x50] sm:$0xff] 0.0
      %917 = vst [vmem:[#allocation3 + $0x58] sm:$0xff] 0.0
      %918 = vst [vmem:[#allocation3 + $0x60] sm:$0xff] 0.0
      %919 = vst [vmem:[#allocation3 + $0x68] sm:$0xff] 0.0
      %920 = vst [vmem:[#allocation3 + $0x70] sm:$0xff] 0.0
      %921 = vst [vmem:[#allocation3 + $0x78] sm:$0xff] 0.0
      %v922 = vld [vmem:[#allocation2 + $0x60] sm:$0xf]
      %v923 = vld [vmem:[#allocation2 + $0x64] sm:$0xf]
      %v924 = vld [vmem:[#allocation2 + $0x68] sm:$0xf]
      %v925 = vld [vmem:[#allocation2 + $0x6c] sm:$0xf]
      %v926 = vld [vmem:[#allocation2 + $0x70] sm:$0xf]
      %v927 = vld [vmem:[#allocation2 + $0x74] sm:$0xf]
      %v928 = vld [vmem:[#allocation2 + $0x78] sm:$0xf]
      %v929 = vld [vmem:[#allocation2 + $0x7c] sm:$0xf]
      %v930 = vld [vmem:[%s4] sm:$0xff]
      %v931 = vld [vmem:[%s4 + $0x8] sm:$0xff]
      %v932 = vld [vmem:[%s4 + $0x10] sm:$0xff]
      %v933 = vld [vmem:[%s4 + $0x18] sm:$0xff]
      %v934 = vld [vmem:[%s4 + $0x20] sm:$0xff]
      %v935 = vld [vmem:[%s4 + $0x28] sm:$0xff]
      %v936 = vld [vmem:[%s4 + $0x30] sm:$0xff]
      %v937 = vld [vmem:[%s4 + $0x38] sm:$0xff]
      %v938 = vld [vmem:[%s4 + $0x40] sm:$0xff]
      %v939 = vld [vmem:[%s4 + $0x48] sm:$0xff]
      %v940 = vld [vmem:[%s4 + $0x50] sm:$0xff]
      %v941 = vld [vmem:[%s4 + $0x58] sm:$0xff]
      %v942 = vld [vmem:[%s4 + $0x60] sm:$0xff]
      %v943 = vld [vmem:[%s4 + $0x68] sm:$0xff]
      %v944 = vld [vmem:[%s4 + $0x70] sm:$0xff]
      %v945 = vld [vmem:[%s4 + $0x78] sm:$0xff]
      %v954 = vunpack.c.l.b16 %v922
      %v955 = vunpack.c.l.b16 %v923
      %v956 = vunpack.c.l.b16 %v924
      %v957 = vunpack.c.l.b16 %v925
      %v958 = vunpack.c.l.b16 %v926
      %v959 = vunpack.c.l.b16 %v927
      %v960 = vunpack.c.l.b16 %v928
      %v961 = vunpack.c.l.b16 %v929
      %v962 = vpack.c.b16 %v955, %v954
      %v963 = vpack.c.b16 %v957, %v956
      %v964 = vpack.c.b16 %v959, %v958
      %v965 = vpack.c.b16 %v961, %v960
      %v986 = vunpack.c.l.b16 %v930
      %v987 = vunpack.c.h.b16 %v930
      %v988 = vunpack.c.l.b16 %v931
      %v989 = vunpack.c.h.b16 %v931
      %v990 = vunpack.c.l.b16 %v932
      %v991 = vunpack.c.h.b16 %v932
      %v992 = vunpack.c.l.b16 %v933
      %v993 = vunpack.c.h.b16 %v933
      %v994 = vunpack.c.l.b16 %v934
      %v995 = vunpack.c.h.b16 %v934
      %v996 = vunpack.c.l.b16 %v935
      %v997 = vunpack.c.h.b16 %v935
      %v998 = vunpack.c.l.b16 %v936
      %v999 = vunpack.c.h.b16 %v936
      %v1000 = vunpack.c.l.b16 %v937
      %v1001 = vunpack.c.h.b16 %v937
      %v1002 = vunpack.c.l.b16 %v938
      %v1003 = vunpack.c.h.b16 %v938
      %v1004 = vunpack.c.l.b16 %v939
      %v1005 = vunpack.c.h.b16 %v939
      %v1006 = vunpack.c.l.b16 %v940
      %v1007 = vunpack.c.h.b16 %v940
      %v1008 = vunpack.c.l.b16 %v941
      %v1009 = vunpack.c.h.b16 %v941
      %v1010 = vunpack.c.l.b16 %v942
      %v1011 = vunpack.c.h.b16 %v942
      %v1012 = vunpack.c.l.b16 %v943
      %v1013 = vunpack.c.h.b16 %v943
      %v1014 = vunpack.c.l.b16 %v944
      %v1015 = vunpack.c.h.b16 %v944
      %v1016 = vunpack.c.l.b16 %v945
      %v1017 = vunpack.c.h.b16 %v945
      %v1018 = vpack.c.b16 %v988, %v986
      %v1019 = vpack.c.b16 %v989, %v987
      %v1020 = vpack.c.b16 %v992, %v990
      %v1021 = vpack.c.b16 %v993, %v991
      %v1022 = vpack.c.b16 %v996, %v994
      %v1023 = vpack.c.b16 %v997, %v995
      %v1024 = vpack.c.b16 %v1000, %v998
      %v1025 = vpack.c.b16 %v1001, %v999
      %v1026 = vpack.c.b16 %v1004, %v1002
      %v1027 = vpack.c.b16 %v1005, %v1003
      %v1028 = vpack.c.b16 %v1008, %v1006
      %v1029 = vpack.c.b16 %v1009, %v1007
      %v1030 = vpack.c.b16 %v1012, %v1010
      %v1031 = vpack.c.b16 %v1013, %v1011
      %v1032 = vpack.c.b16 %v1016, %v1014
      %v1033 = vpack.c.b16 %v1017, %v1015
      %1050 = vmatprep.subr.bf16.mxu0 %v1033
      %1051 = vmatpush1.bf16.msra.mxu0 %v1032
      %1052 = vmatprep.subr.bf16.mxu0 %v1031
      %1053 = vmatpush1.bf16.msra.mxu0 %v1030
      %1054 = vmatprep.subr.bf16.mxu0 %v1029
      %1055 = vmatpush1.bf16.msra.mxu0 %v1028
      %1056 = vmatprep.subr.bf16.mxu0 %v1027
      %1057 = vmatpush1.bf16.msra.mxu0 %v1026
      %1058 = vmatprep.subr.bf16.mxu0 %v1025
      %1059 = vmatpush1.bf16.msra.mxu0 %v1024
      %1060 = vmatprep.subr.bf16.mxu0 %v1023
      %1061 = vmatpush1.bf16.msra.mxu0 %v1022
      %1062 = vmatprep.subr.bf16.mxu0 %v1021
      %1063 = vmatpush1.bf16.msra.mxu0 %v1020
      %1064 = vmatprep.subr.bf16.mxu0 %v1019
      %1065 = vmatpush1.bf16.msra.mxu0 %v1018
      %1066 = vmatprep.subr.bf16.mxu0 0
      %1067 = vmatpush2.bf16.msra.mxu0 0
      %1068 = vmatprep.subr.bf16.mxu0 0
      %1069 = vmatpush2.bf16.msra.mxu0 0
      %1070 = vmatprep.subr.bf16.mxu0 0
      %1071 = vmatpush2.bf16.msra.mxu0 0
      %1072 = vmatprep.subr.bf16.mxu0 0
      %1073 = vmatpush2.bf16.msra.mxu0 0
      %1074 = vmatprep.subr.bf16.mxu0 0
      %1075 = vmatpush2.bf16.msra.mxu0 0
      %1076 = vmatprep.subr.bf16.mxu0 0
      %1077 = vmatpush2.bf16.msra.mxu0 0
      %1078 = vmatprep.subr.bf16.mxu0 0
      %1079 = vmatpush2.bf16.msra.mxu0 0
      %1080 = vmatprep.subr.bf16.mxu0 0
      %1081 = vmatpush2.bf16.msra.mxu0 0
      %1082 = vmatprep.mubr.bf16.mxu0 0
      %1083 = vmatmul.mubr.bf16.gmra.mxu0 %v962
      %v1084 = vpop.f32.mrf.mxu0
      %v1085 = vadd.f32 0.0, %v1084
      %v1086 = vpop.f32.mrf.mxu0
      %v1087 = vadd.f32 0.0, %v1086
      %v1088 = vpop.f32.mrf.mxu0
      %v1089 = vadd.f32 0.0, %v1088
      %v1090 = vpop.f32.mrf.mxu0
      %v1091 = vadd.f32 0.0, %v1090
      %1092 = vmatprep.mubr.bf16.mxu0 0
      %1093 = vmatmul.mubr.bf16.gmra.mxu0 %v963
      %v1094 = vpop.f32.mrf.mxu0
      %v1095 = vadd.f32 0.0, %v1094
      %v1096 = vpop.f32.mrf.mxu0
      %v1097 = vadd.f32 0.0, %v1096
      %v1098 = vpop.f32.mrf.mxu0
      %v1099 = vadd.f32 0.0, %v1098
      %v1100 = vpop.f32.mrf.mxu0
      %v1101 = vadd.f32 0.0, %v1100
      %1102 = vmatprep.mubr.bf16.mxu0 0
      %1103 = vmatmul.mubr.bf16.gmra.mxu0 %v964
      %v1104 = vpop.f32.mrf.mxu0
      %v1105 = vadd.f32 0.0, %v1104
      %v1106 = vpop.f32.mrf.mxu0
      %v1107 = vadd.f32 0.0, %v1106
      %v1108 = vpop.f32.mrf.mxu0
      %v1109 = vadd.f32 0.0, %v1108
      %v1110 = vpop.f32.mrf.mxu0
      %v1111 = vadd.f32 0.0, %v1110
      %1112 = vmatprep.mubr.bf16.mxu0 0
      %1113 = vmatmul.mubr.bf16.gmra.mxu0 %v965
      %v1114 = vpop.f32.mrf.mxu0
      %v1115 = vadd.f32 0.0, %v1114
      %v1116 = vpop.f32.mrf.mxu0
      %v1117 = vadd.f32 0.0, %v1116
      %v1118 = vpop.f32.mrf.mxu0
      %v1119 = vpop.f32.mrf.mxu0
      %1120 = vdwg.mxu0
      %v1121 = vld [vmem:[#allocation3] sm:$0xff]
      %v1122 = vld [vmem:[#allocation3 + $0x8] sm:$0xff]
      %v1123 = vld [vmem:[#allocation3 + $0x10] sm:$0xff]
      %v1124 = vld [vmem:[#allocation3 + $0x18] sm:$0xff]
      %v1125 = vld [vmem:[#allocation3 + $0x20] sm:$0xff]
      %v1126 = vld [vmem:[#allocation3 + $0x28] sm:$0xff]
      %v1127 = vld [vmem:[#allocation3 + $0x30] sm:$0xff]
      %v1128 = vld [vmem:[#allocation3 + $0x38] sm:$0xff]
      %v1129 = vld [vmem:[#allocation3 + $0x40] sm:$0xff]
      %v1130 = vld [vmem:[#allocation3 + $0x48] sm:$0xff]
      %v1131 = vld [vmem:[#allocation3 + $0x50] sm:$0xff]
      %v1132 = vld [vmem:[#allocation3 + $0x58] sm:$0xff]
      %v1133 = vld [vmem:[#allocation3 + $0x60] sm:$0x7f]
      %v1134 = vld [vmem:[#allocation3 + $0x68] sm:$0x7f]
      %v1135 = vadd.f32 %v1121, %v1085
      %v1136 = vadd.f32 %v1122, %v1087
      %v1137 = vadd.f32 %v1123, %v1089
      %v1138 = vadd.f32 %v1124, %v1091
      %v1139 = vadd.f32 %v1125, %v1095
      %v1140 = vadd.f32 %v1126, %v1097
      %v1141 = vadd.f32 %v1127, %v1099
      %v1142 = vadd.f32 %v1128, %v1101
      %v1143 = vadd.f32 %v1129, %v1105
      %v1144 = vadd.f32 %v1130, %v1107
      %v1145 = vadd.f32 %v1131, %v1109
      %v1146 = vadd.f32 %v1132, %v1111
      %v1147 = vadd.f32 %v1133, %v1115
      %v1148 = vadd.f32 %v1134, %v1117
      %1149 = vst [vmem:[#allocation3] sm:$0xff] %v1135
      %1150 = vst [vmem:[#allocation3 + $0x8] sm:$0xff] %v1136
      %1151 = vst [vmem:[#allocation3 + $0x10] sm:$0xff] %v1137
      %1152 = vst [vmem:[#allocation3 + $0x18] sm:$0xff] %v1138
      %1153 = vst [vmem:[#allocation3 + $0x20] sm:$0xff] %v1139
      %1154 = vst [vmem:[#allocation3 + $0x28] sm:$0xff] %v1140
      %1155 = vst [vmem:[#allocation3 + $0x30] sm:$0xff] %v1141
      %1156 = vst [vmem:[#allocation3 + $0x38] sm:$0xff] %v1142
      %1157 = vst [vmem:[#allocation3 + $0x40] sm:$0xff] %v1143
      %1158 = vst [vmem:[#allocation3 + $0x48] sm:$0xff] %v1144
      %1159 = vst [vmem:[#allocation3 + $0x50] sm:$0xff] %v1145
      %1160 = vst [vmem:[#allocation3 + $0x58] sm:$0xff] %v1146
      %1161 = vst [vmem:[#allocation3 + $0x60] sm:$0x7f] %v1147
      %1162 = vst [vmem:[#allocation3 + $0x68] sm:$0x7f] %v1148
      %v1163 = vld [vmem:[#allocation2 + $0x40] sm:$0xf]
      %v1164 = vld [vmem:[#allocation2 + $0x44] sm:$0xf]
      %v1165 = vld [vmem:[#allocation2 + $0x48] sm:$0xf]
      %v1166 = vld [vmem:[#allocation2 + $0x4c] sm:$0xf]
      %v1167 = vld [vmem:[#allocation2 + $0x50] sm:$0xf]
      %v1168 = vld [vmem:[#allocation2 + $0x54] sm:$0xf]
      %v1169 = vld [vmem:[#allocation2 + $0x58] sm:$0xf]
      %v1170 = vld [vmem:[#allocation2 + $0x5c] sm:$0xf]
      %s1171 = scalar_lea.vmem %s4, 128
      %v1172 = vld [vmem:[%s1171] sm:$0xff]
      %v1173 = vld [vmem:[%s1171 + $0x8] sm:$0xff]
      %v1174 = vld [vmem:[%s1171 + $0x10] sm:$0xff]
      %v1175 = vld [vmem:[%s1171 + $0x18] sm:$0xff]
      %v1176 = vld [vmem:[%s1171 + $0x20] sm:$0xff]
      %v1177 = vld [vmem:[%s1171 + $0x28] sm:$0xff]
      %v1178 = vld [vmem:[%s1171 + $0x30] sm:$0xff]
      %v1179 = vld [vmem:[%s1171 + $0x38] sm:$0xff]
      %v1180 = vld [vmem:[%s1171 + $0x40] sm:$0xff]
      %v1181 = vld [vmem:[%s1171 + $0x48] sm:$0xff]
      %v1182 = vld [vmem:[%s1171 + $0x50] sm:$0xff]
      %v1183 = vld [vmem:[%s1171 + $0x58] sm:$0xff]
      %v1184 = vld [vmem:[%s1171 + $0x60] sm:$0xff]
      %v1185 = vld [vmem:[%s1171 + $0x68] sm:$0xff]
      %v1186 = vld [vmem:[%s1171 + $0x70] sm:$0xff]
      %v1187 = vld [vmem:[%s1171 + $0x78] sm:$0xff]
      %v1196 = vunpack.c.l.b16 %v1163
      %v1197 = vunpack.c.l.b16 %v1164
      %v1198 = vunpack.c.l.b16 %v1165
      %v1199 = vunpack.c.l.b16 %v1166
      %v1200 = vunpack.c.l.b16 %v1167
      %v1201 = vunpack.c.l.b16 %v1168
      %v1202 = vunpack.c.l.b16 %v1169
      %v1203 = vunpack.c.l.b16 %v1170
      %v1204 = vpack.c.b16 %v1197, %v1196
      %v1205 = vpack.c.b16 %v1199, %v1198
      %v1206 = vpack.c.b16 %v1201, %v1200
      %v1207 = vpack.c.b16 %v1203, %v1202
      %v1228 = vunpack.c.l.b16 %v1172
      %v1229 = vunpack.c.h.b16 %v1172
      %v1230 = vunpack.c.l.b16 %v1173
      %v1231 = vunpack.c.h.b16 %v1173
      %v1232 = vunpack.c.l.b16 %v1174
      %v1233 = vunpack.c.h.b16 %v1174
      %v1234 = vunpack.c.l.b16 %v1175
      %v1235 = vunpack.c.h.b16 %v1175
      %v1236 = vunpack.c.l.b16 %v1176
      %v1237 = vunpack.c.h.b16 %v1176
      %v1238 = vunpack.c.l.b16 %v1177
      %v1239 = vunpack.c.h.b16 %v1177
      %v1240 = vunpack.c.l.b16 %v1178
      %v1241 = vunpack.c.h.b16 %v1178
      %v1242 = vunpack.c.l.b16 %v1179
      %v1243 = vunpack.c.h.b16 %v1179
      %v1244 = vunpack.c.l.b16 %v1180
      %v1245 = vunpack.c.h.b16 %v1180
      %v1246 = vunpack.c.l.b16 %v1181
      %v1247 = vunpack.c.h.b16 %v1181
      %v1248 = vunpack.c.l.b16 %v1182
      %v1249 = vunpack.c.h.b16 %v1182
      %v1250 = vunpack.c.l.b16 %v1183
      %v1251 = vunpack.c.h.b16 %v1183
      %v1252 = vunpack.c.l.b16 %v1184
      %v1253 = vunpack.c.h.b16 %v1184
      %v1254 = vunpack.c.l.b16 %v1185
      %v1255 = vunpack.c.h.b16 %v1185
      %v1256 = vunpack.c.l.b16 %v1186
      %v1257 = vunpack.c.h.b16 %v1186
      %v1258 = vunpack.c.l.b16 %v1187
      %v1259 = vunpack.c.h.b16 %v1187
      %v1260 = vpack.c.b16 %v1230, %v1228
      %v1261 = vpack.c.b16 %v1231, %v1229
      %v1262 = vpack.c.b16 %v1234, %v1232
      %v1263 = vpack.c.b16 %v1235, %v1233
      %v1264 = vpack.c.b16 %v1238, %v1236
      %v1265 = vpack.c.b16 %v1239, %v1237
      %v1266 = vpack.c.b16 %v1242, %v1240
      %v1267 = vpack.c.b16 %v1243, %v1241
      %v1268 = vpack.c.b16 %v1246, %v1244
      %v1269 = vpack.c.b16 %v1247, %v1245
      %v1270 = vpack.c.b16 %v1250, %v1248
      %v1271 = vpack.c.b16 %v1251, %v1249
      %v1272 = vpack.c.b16 %v1254, %v1252
      %v1273 = vpack.c.b16 %v1255, %v1253
      %v1274 = vpack.c.b16 %v1258, %v1256
      %v1275 = vpack.c.b16 %v1259, %v1257
      %1292 = vmatprep.subr.bf16.mxu0 %v1275
      %1293 = vmatpush1.bf16.msra.mxu0 %v1274
      %1294 = vmatprep.subr.bf16.mxu0 %v1273
      %1295 = vmatpush1.bf16.msra.mxu0 %v1272
      %1296 = vmatprep.subr.bf16.mxu0 %v1271
      %1297 = vmatpush1.bf16.msra.mxu0 %v1270
      %1298 = vmatprep.subr.bf16.mxu0 %v1269
      %1299 = vmatpush1.bf16.msra.mxu0 %v1268
      %1300 = vmatprep.subr.bf16.mxu0 %v1267
      %1301 = vmatpush1.bf16.msra.mxu0 %v1266
      %1302 = vmatprep.subr.bf16.mxu0 %v1265
      %1303 = vmatpush1.bf16.msra.mxu0 %v1264
      %1304 = vmatprep.subr.bf16.mxu0 %v1263
      %1305 = vmatpush1.bf16.msra.mxu0 %v1262
      %1306 = vmatprep.subr.bf16.mxu0 %v1261
      %1307 = vmatpush1.bf16.msra.mxu0 %v1260
      %1308 = vmatprep.subr.bf16.mxu0 0
      %1309 = vmatpush2.bf16.msra.mxu0 0
      %1310 = vmatprep.subr.bf16.mxu0 0
      %1311 = vmatpush2.bf16.msra.mxu0 0
      %1312 = vmatprep.subr.bf16.mxu0 0
      %1313 = vmatpush2.bf16.msra.mxu0 0
      %1314 = vmatprep.subr.bf16.mxu0 0
      %1315 = vmatpush2.bf16.msra.mxu0 0
      %1316 = vmatprep.subr.bf16.mxu0 0
      %1317 = vmatpush2.bf16.msra.mxu0 0
      %1318 = vmatprep.subr.bf16.mxu0 0
      %1319 = vmatpush2.bf16.msra.mxu0 0
      %1320 = vmatprep.subr.bf16.mxu0 0
      %1321 = vmatpush2.bf16.msra.mxu0 0
      %1322 = vmatprep.subr.bf16.mxu0 0
      %1323 = vmatpush2.bf16.msra.mxu0 0
      %1324 = vmatprep.mubr.bf16.mxu0 0
      %1325 = vmatmul.mubr.bf16.gmra.mxu0 %v1204
      %v1326 = vpop.f32.mrf.mxu0
      %v1327 = vadd.f32 0.0, %v1326
      %v1328 = vpop.f32.mrf.mxu0
      %v1329 = vadd.f32 0.0, %v1328
      %v1330 = vpop.f32.mrf.mxu0
      %v1331 = vadd.f32 0.0, %v1330
      %v1332 = vpop.f32.mrf.mxu0
      %v1333 = vadd.f32 0.0, %v1332
      %1334 = vmatprep.mubr.bf16.mxu0 0
      %1335 = vmatmul.mubr.bf16.gmra.mxu0 %v1205
      %v1336 = vpop.f32.mrf.mxu0
      %v1337 = vadd.f32 0.0, %v1336
      %v1338 = vpop.f32.mrf.mxu0
      %v1339 = vadd.f32 0.0, %v1338
      %v1340 = vpop.f32.mrf.mxu0
      %v1341 = vadd.f32 0.0, %v1340
      %v1342 = vpop.f32.mrf.mxu0
      %v1343 = vadd.f32 0.0, %v1342
      %1344 = vmatprep.mubr.bf16.mxu0 0
      %1345 = vmatmul.mubr.bf16.gmra.mxu0 %v1206
      %v1346 = vpop.f32.mrf.mxu0
      %v1347 = vadd.f32 0.0, %v1346
      %v1348 = vpop.f32.mrf.mxu0
      %v1349 = vadd.f32 0.0, %v1348
      %v1350 = vpop.f32.mrf.mxu0
      %v1351 = vadd.f32 0.0, %v1350
      %v1352 = vpop.f32.mrf.mxu0
      %v1353 = vadd.f32 0.0, %v1352
      %1354 = vmatprep.mubr.bf16.mxu0 0
      %1355 = vmatmul.mubr.bf16.gmra.mxu0 %v1207
      %v1356 = vpop.f32.mrf.mxu0
      %v1357 = vadd.f32 0.0, %v1356
      %v1358 = vpop.f32.mrf.mxu0
      %v1359 = vadd.f32 0.0, %v1358
      %v1360 = vpop.f32.mrf.mxu0
      %v1361 = vpop.f32.mrf.mxu0
      %1362 = vdwg.mxu0
      %v1363 = vld [vmem:[#allocation3] sm:$0xff]
      %v1364 = vld [vmem:[#allocation3 + $0x8] sm:$0xff]
      %v1365 = vld [vmem:[#allocation3 + $0x10] sm:$0xff]
      %v1366 = vld [vmem:[#allocation3 + $0x18] sm:$0xff]
      %v1367 = vld [vmem:[#allocation3 + $0x20] sm:$0xff]
      %v1368 = vld [vmem:[#allocation3 + $0x28] sm:$0xff]
      %v1369 = vld [vmem:[#allocation3 + $0x30] sm:$0xff]
      %v1370 = vld [vmem:[#allocation3 + $0x38] sm:$0xff]
      %v1371 = vld [vmem:[#allocation3 + $0x40] sm:$0xff]
      %v1372 = vld [vmem:[#allocation3 + $0x48] sm:$0xff]
      %v1373 = vld [vmem:[#allocation3 + $0x50] sm:$0xff]
      %v1374 = vld [vmem:[#allocation3 + $0x58] sm:$0xff]
      %v1375 = vld [vmem:[#allocation3 + $0x60] sm:$0x7f]
      %v1376 = vld [vmem:[#allocation3 + $0x68] sm:$0x7f]
      %v1377 = vadd.f32 %v1363, %v1327
      %v1378 = vadd.f32 %v1364, %v1329
      %v1379 = vadd.f32 %v1365, %v1331
      %v1380 = vadd.f32 %v1366, %v1333
      %v1381 = vadd.f32 %v1367, %v1337
      %v1382 = vadd.f32 %v1368, %v1339
      %v1383 = vadd.f32 %v1369, %v1341
      %v1384 = vadd.f32 %v1370, %v1343
      %v1385 = vadd.f32 %v1371, %v1347
      %v1386 = vadd.f32 %v1372, %v1349
      %v1387 = vadd.f32 %v1373, %v1351
      %v1388 = vadd.f32 %v1374, %v1353
      %v1389 = vadd.f32 %v1375, %v1357
      %v1390 = vadd.f32 %v1376, %v1359
      %1391 = vst [vmem:[#allocation3] sm:$0xff] %v1377
      %1392 = vst [vmem:[#allocation3 + $0x8] sm:$0xff] %v1378
      %1393 = vst [vmem:[#allocation3 + $0x10] sm:$0xff] %v1379
      %1394 = vst [vmem:[#allocation3 + $0x18] sm:$0xff] %v1380
      %1395 = vst [vmem:[#allocation3 + $0x20] sm:$0xff] %v1381
      %1396 = vst [vmem:[#allocation3 + $0x28] sm:$0xff] %v1382
      %1397 = vst [vmem:[#allocation3 + $0x30] sm:$0xff] %v1383
      %1398 = vst [vmem:[#allocation3 + $0x38] sm:$0xff] %v1384
      %1399 = vst [vmem:[#allocation3 + $0x40] sm:$0xff] %v1385
      %1400 = vst [vmem:[#allocation3 + $0x48] sm:$0xff] %v1386
      %1401 = vst [vmem:[#allocation3 + $0x50] sm:$0xff] %v1387
      %1402 = vst [vmem:[#allocation3 + $0x58] sm:$0xff] %v1388
      %1403 = vst [vmem:[#allocation3 + $0x60] sm:$0x7f] %v1389
      %1404 = vst [vmem:[#allocation3 + $0x68] sm:$0x7f] %v1390
      %v1405 = vld [vmem:[#allocation2 + $0x60] sm:$0xf]
      %v1406 = vld [vmem:[#allocation2 + $0x64] sm:$0xf]
      %v1407 = vld [vmem:[#allocation2 + $0x68] sm:$0xf]
      %v1408 = vld [vmem:[#allocation2 + $0x6c] sm:$0xf]
      %v1409 = vld [vmem:[#allocation2 + $0x70] sm:$0xf]
      %v1410 = vld [vmem:[#allocation2 + $0x74] sm:$0xf]
      %v1411 = vld [vmem:[#allocation2 + $0x78] sm:$0xf]
      %v1412 = vld [vmem:[#allocation2 + $0x7c] sm:$0xf]
      %s1413 = scalar_lea.vmem %s4, 256
      %v1414 = vld [vmem:[%s1413] sm:$0xff]
      %v1415 = vld [vmem:[%s1413 + $0x8] sm:$0xff]
      %v1416 = vld [vmem:[%s1413 + $0x10] sm:$0xff]
      %v1417 = vld [vmem:[%s1413 + $0x18] sm:$0xff]
      %v1418 = vld [vmem:[%s1413 + $0x20] sm:$0xff]
      %v1419 = vld [vmem:[%s1413 + $0x28] sm:$0xff]
      %v1420 = vld [vmem:[%s1413 + $0x30] sm:$0xff]
      %v1421 = vld [vmem:[%s1413 + $0x38] sm:$0xff]
      %v1422 = vld [vmem:[%s1413 + $0x40] sm:$0xff]
      %v1423 = vld [vmem:[%s1413 + $0x48] sm:$0xff]
      %v1424 = vld [vmem:[%s1413 + $0x50] sm:$0xff]
      %v1425 = vld [vmem:[%s1413 + $0x58] sm:$0xff]
      %v1426 = vld [vmem:[%s1413 + $0x60] sm:$0xff]
      %v1427 = vld [vmem:[%s1413 + $0x68] sm:$0xff]
      %v1428 = vld [vmem:[%s1413 + $0x70] sm:$0xff]
      %v1429 = vld [vmem:[%s1413 + $0x78] sm:$0xff]
      %v1438 = vunpack.c.l.b16 %v1405
      %v1439 = vunpack.c.l.b16 %v1406
      %v1440 = vunpack.c.l.b16 %v1407
      %v1441 = vunpack.c.l.b16 %v1408
      %v1442 = vunpack.c.l.b16 %v1409
      %v1443 = vunpack.c.l.b16 %v1410
      %v1444 = vunpack.c.l.b16 %v1411
      %v1445 = vunpack.c.l.b16 %v1412
      %v1446 = vpack.c.b16 %v1439, %v1438
      %v1447 = vpack.c.b16 %v1441, %v1440
      %v1448 = vpack.c.b16 %v1443, %v1442
      %v1449 = vpack.c.b16 %v1445, %v1444
      %v1470 = vunpack.c.l.b16 %v1414
      %v1471 = vunpack.c.h.b16 %v1414
      %v1472 = vunpack.c.l.b16 %v1415
      %v1473 = vunpack.c.h.b16 %v1415
      %v1474 = vunpack.c.l.b16 %v1416
      %v1475 = vunpack.c.h.b16 %v1416
      %v1476 = vunpack.c.l.b16 %v1417
      %v1477 = vunpack.c.h.b16 %v1417
      %v1478 = vunpack.c.l.b16 %v1418
      %v1479 = vunpack.c.h.b16 %v1418
      %v1480 = vunpack.c.l.b16 %v1419
      %v1481 = vunpack.c.h.b16 %v1419
      %v1482 = vunpack.c.l.b16 %v1420
      %v1483 = vunpack.c.h.b16 %v1420
      %v1484 = vunpack.c.l.b16 %v1421
      %v1485 = vunpack.c.h.b16 %v1421
      %v1486 = vunpack.c.l.b16 %v1422
      %v1487 = vunpack.c.h.b16 %v1422
      %v1488 = vunpack.c.l.b16 %v1423
      %v1489 = vunpack.c.h.b16 %v1423
      %v1490 = vunpack.c.l.b16 %v1424
      %v1491 = vunpack.c.h.b16 %v1424
      %v1492 = vunpack.c.l.b16 %v1425
      %v1493 = vunpack.c.h.b16 %v1425
      %v1494 = vunpack.c.l.b16 %v1426
      %v1495 = vunpack.c.h.b16 %v1426
      %v1496 = vunpack.c.l.b16 %v1427
      %v1497 = vunpack.c.h.b16 %v1427
      %v1498 = vunpack.c.l.b16 %v1428
      %v1499 = vunpack.c.h.b16 %v1428
      %v1500 = vunpack.c.l.b16 %v1429
      %v1501 = vunpack.c.h.b16 %v1429
      %v1502 = vpack.c.b16 %v1472, %v1470
      %v1503 = vpack.c.b16 %v1473, %v1471
      %v1504 = vpack.c.b16 %v1476, %v1474
      %v1505 = vpack.c.b16 %v1477, %v1475
      %v1506 = vpack.c.b16 %v1480, %v1478
      %v1507 = vpack.c.b16 %v1481, %v1479
      %v1508 = vpack.c.b16 %v1484, %v1482
      %v1509 = vpack.c.b16 %v1485, %v1483
      %v1510 = vpack.c.b16 %v1488, %v1486
      %v1511 = vpack.c.b16 %v1489, %v1487
      %v1512 = vpack.c.b16 %v1492, %v1490
      %v1513 = vpack.c.b16 %v1493, %v1491
      %v1514 = vpack.c.b16 %v1496, %v1494
      %v1515 = vpack.c.b16 %v1497, %v1495
      %v1516 = vpack.c.b16 %v1500, %v1498
      %v1517 = vpack.c.b16 %v1501, %v1499
      %1534 = vmatprep.subr.bf16.mxu0 %v1517
      %1535 = vmatpush1.bf16.msra.mxu0 %v1516
      %1536 = vmatprep.subr.bf16.mxu0 %v1515
      %1537 = vmatpush1.bf16.msra.mxu0 %v1514
      %1538 = vmatprep.subr.bf16.mxu0 %v1513
      %1539 = vmatpush1.bf16.msra.mxu0 %v1512
      %1540 = vmatprep.subr.bf16.mxu0 %v1511
      %1541 = vmatpush1.bf16.msra.mxu0 %v1510
      %1542 = vmatprep.subr.bf16.mxu0 %v1509
      %1543 = vmatpush1.bf16.msra.mxu0 %v1508
      %1544 = vmatprep.subr.bf16.mxu0 %v1507
      %1545 = vmatpush1.bf16.msra.mxu0 %v1506
      %1546 = vmatprep.subr.bf16.mxu0 %v1505
      %1547 = vmatpush1.bf16.msra.mxu0 %v1504
      %1548 = vmatprep.subr.bf16.mxu0 %v1503
      %1549 = vmatpush1.bf16.msra.mxu0 %v1502
      %1550 = vmatprep.subr.bf16.mxu0 0
      %1551 = vmatpush2.bf16.msra.mxu0 0
      %1552 = vmatprep.subr.bf16.mxu0 0
      %1553 = vmatpush2.bf16.msra.mxu0 0
      %1554 = vmatprep.subr.bf16.mxu0 0
      %1555 = vmatpush2.bf16.msra.mxu0 0
      %1556 = vmatprep.subr.bf16.mxu0 0
      %1557 = vmatpush2.bf16.msra.mxu0 0
      %1558 = vmatprep.subr.bf16.mxu0 0
      %1559 = vmatpush2.bf16.msra.mxu0 0
      %1560 = vmatprep.subr.bf16.mxu0 0
      %1561 = vmatpush2.bf16.msra.mxu0 0
      %1562 = vmatprep.subr.bf16.mxu0 0
      %1563 = vmatpush2.bf16.msra.mxu0 0
      %1564 = vmatprep.subr.bf16.mxu0 0
      %1565 = vmatpush2.bf16.msra.mxu0 0
      %1566 = vmatprep.mubr.bf16.mxu0 0
      %1567 = vmatmul.mubr.bf16.gmra.mxu0 %v1446
      %v1568 = vpop.f32.mrf.mxu0
      %v1569 = vadd.f32 0.0, %v1568
      %v1570 = vpop.f32.mrf.mxu0
      %v1571 = vadd.f32 0.0, %v1570
      %v1572 = vpop.f32.mrf.mxu0
      %v1573 = vadd.f32 0.0, %v1572
      %v1574 = vpop.f32.mrf.mxu0
      %v1575 = vadd.f32 0.0, %v1574
      %1576 = vmatprep.mubr.bf16.mxu0 0
      %1577 = vmatmul.mubr.bf16.gmra.mxu0 %v1447
      %v1578 = vpop.f32.mrf.mxu0
      %v1579 = vadd.f32 0.0, %v1578
      %v1580 = vpop.f32.mrf.mxu0
      %v1581 = vadd.f32 0.0, %v1580
      %v1582 = vpop.f32.mrf.mxu0
      %v1583 = vadd.f32 0.0, %v1582
      %v1584 = vpop.f32.mrf.mxu0
      %v1585 = vadd.f32 0.0, %v1584
      %1586 = vmatprep.mubr.bf16.mxu0 0
      %1587 = vmatmul.mubr.bf16.gmra.mxu0 %v1448
      %v1588 = vpop.f32.mrf.mxu0
      %v1589 = vadd.f32 0.0, %v1588
      %v1590 = vpop.f32.mrf.mxu0
      %v1591 = vadd.f32 0.0, %v1590
      %v1592 = vpop.f32.mrf.mxu0
      %v1593 = vadd.f32 0.0, %v1592
      %v1594 = vpop.f32.mrf.mxu0
      %v1595 = vadd.f32 0.0, %v1594
      %1596 = vmatprep.mubr.bf16.mxu0 0
      %1597 = vmatmul.mubr.bf16.gmra.mxu0 %v1449
      %v1598 = vpop.f32.mrf.mxu0
      %v1599 = vadd.f32 0.0, %v1598
      %v1600 = vpop.f32.mrf.mxu0
      %v1601 = vadd.f32 0.0, %v1600
      %v1602 = vpop.f32.mrf.mxu0
      %v1603 = vpop.f32.mrf.mxu0
      %1604 = vdwg.mxu0
      %v1605 = vld [vmem:[#allocation3] sm:$0xff]
      %v1606 = vld [vmem:[#allocation3 + $0x8] sm:$0xff]
      %v1607 = vld [vmem:[#allocation3 + $0x10] sm:$0xff]
      %v1608 = vld [vmem:[#allocation3 + $0x18] sm:$0xff]
      %v1609 = vld [vmem:[#allocation3 + $0x20] sm:$0xff]
      %v1610 = vld [vmem:[#allocation3 + $0x28] sm:$0xff]
      %v1611 = vld [vmem:[#allocation3 + $0x30] sm:$0xff]
      %v1612 = vld [vmem:[#allocation3 + $0x38] sm:$0xff]
      %v1613 = vld [vmem:[#allocation3 + $0x40] sm:$0xff]
      %v1614 = vld [vmem:[#allocation3 + $0x48] sm:$0xff]
      %v1615 = vld [vmem:[#allocation3 + $0x50] sm:$0xff]
      %v1616 = vld [vmem:[#allocation3 + $0x58] sm:$0xff]
      %v1617 = vld [vmem:[#allocation3 + $0x60] sm:$0x7f]
      %v1618 = vld [vmem:[#allocation3 + $0x68] sm:$0x7f]
      %vm1633 = vcmask 1046528
      %v1634 = vrot.slane %v1569, 1
      %v1635 = vrot.slane %v1573, 1
      %v1636 = vsel %vm1633, %v1634, %v1635
      %v1637 = vrot.slane %v1571, 1
      %v1638 = vrot.slane %v1575, 1
      %v1639 = vsel %vm1633, %v1637, %v1638
      %v1640 = vrot.slane %v1579, 1
      %v1641 = vsel %vm1633, %v1635, %v1640
      %v1642 = vrot.slane %v1581, 1
      %v1643 = vsel %vm1633, %v1638, %v1642
      %v1644 = vrot.slane %v1583, 1
      %v1645 = vsel %vm1633, %v1640, %v1644
      %v1646 = vrot.slane %v1585, 1
      %v1647 = vsel %vm1633, %v1642, %v1646
      %v1648 = vrot.slane %v1589, 1
      %v1649 = vsel %vm1633, %v1644, %v1648
      %v1650 = vrot.slane %v1591, 1
      %v1651 = vsel %vm1633, %v1646, %v1650
      %v1652 = vrot.slane %v1593, 1
      %v1653 = vsel %vm1633, %v1648, %v1652
      %v1654 = vrot.slane %v1595, 1
      %v1655 = vsel %vm1633, %v1650, %v1654
      %v1656 = vrot.slane %v1599, 1
      %v1657 = vsel %vm1633, %v1652, %v1656
      %v1658 = vrot.slane %v1601, 1
      %v1659 = vsel %vm1633, %v1654, %v1658
      %v1674 = vadd.f32 %v1605, %v1636
      %v1675 = vadd.f32 %v1606, %v1639
      %v1676 = vadd.f32 %v1607, %v1641
      %v1677 = vadd.f32 %v1608, %v1643
      %v1678 = vadd.f32 %v1609, %v1645
      %v1679 = vadd.f32 %v1610, %v1647
      %v1680 = vadd.f32 %v1611, %v1649
      %v1681 = vadd.f32 %v1612, %v1651
      %v1682 = vadd.f32 %v1613, %v1653
      %v1683 = vadd.f32 %v1614, %v1655
      %v1684 = vadd.f32 %v1615, %v1657
      %v1685 = vadd.f32 %v1616, %v1659
      %v1686 = vadd.f32 %v1617, %v1656
      %v1687 = vadd.f32 %v1618, %v1658
      %1688 = vst [vmem:[#allocation3] sm:$0xff] %v1674
      %1689 = vst [vmem:[#allocation3 + $0x8] sm:$0xff] %v1675
      %1690 = vst [vmem:[#allocation3 + $0x10] sm:$0xff] %v1676
      %1691 = vst [vmem:[#allocation3 + $0x18] sm:$0xff] %v1677
      %1692 = vst [vmem:[#allocation3 + $0x20] sm:$0xff] %v1678
      %1693 = vst [vmem:[#allocation3 + $0x28] sm:$0xff] %v1679
      %1694 = vst [vmem:[#allocation3 + $0x30] sm:$0xff] %v1680
      %1695 = vst [vmem:[#allocation3 + $0x38] sm:$0xff] %v1681
      %1696 = vst [vmem:[#allocation3 + $0x40] sm:$0xff] %v1682
      %1697 = vst [vmem:[#allocation3 + $0x48] sm:$0xff] %v1683
      %1698 = vst [vmem:[#allocation3 + $0x50] sm:$0xff] %v1684
      %1699 = vst [vmem:[#allocation3 + $0x58] sm:$0xff] %v1685
      %1700 = vst [vmem:[#allocation3 + $0x60] sm:$0x7f] %v1686
      %1701 = vst [vmem:[#allocation3 + $0x68] sm:$0x7f] %v1687
      %v1702 = vld [vmem:[#allocation2 + $0x40] sm:$0xf]
      %v1703 = vld [vmem:[#allocation2 + $0x44] sm:$0xf]
      %v1704 = vld [vmem:[#allocation2 + $0x48] sm:$0xf]
      %v1705 = vld [vmem:[#allocation2 + $0x4c] sm:$0xf]
      %v1706 = vld [vmem:[#allocation2 + $0x50] sm:$0xf]
      %v1707 = vld [vmem:[#allocation2 + $0x54] sm:$0xf]
      %v1708 = vld [vmem:[#allocation2 + $0x58] sm:$0xf]
      %v1709 = vld [vmem:[#allocation2 + $0x5c] sm:$0xf]
      %s1710 = scalar_lea.vmem %s4, 384
      %v1711 = vld [vmem:[%s1710] sm:$0xff]
      %v1712 = vld [vmem:[%s1710 + $0x8] sm:$0xff]
      %v1713 = vld [vmem:[%s1710 + $0x10] sm:$0xff]
      %v1714 = vld [vmem:[%s1710 + $0x18] sm:$0xff]
      %v1715 = vld [vmem:[%s1710 + $0x20] sm:$0xff]
      %v1716 = vld [vmem:[%s1710 + $0x28] sm:$0xff]
      %v1717 = vld [vmem:[%s1710 + $0x30] sm:$0xff]
      %v1718 = vld [vmem:[%s1710 + $0x38] sm:$0xff]
      %v1719 = vld [vmem:[%s1710 + $0x40] sm:$0xff]
      %v1720 = vld [vmem:[%s1710 + $0x48] sm:$0xff]
      %v1721 = vld [vmem:[%s1710 + $0x50] sm:$0xff]
      %v1722 = vld [vmem:[%s1710 + $0x58] sm:$0xff]
      %v1723 = vld [vmem:[%s1710 + $0x60] sm:$0xff]
      %v1724 = vld [vmem:[%s1710 + $0x68] sm:$0xff]
      %v1725 = vld [vmem:[%s1710 + $0x70] sm:$0xff]
      %v1726 = vld [vmem:[%s1710 + $0x78] sm:$0xff]
      %v1735 = vunpack.c.l.b16 %v1702
      %v1736 = vunpack.c.l.b16 %v1703
      %v1737 = vunpack.c.l.b16 %v1704
      %v1738 = vunpack.c.l.b16 %v1705
      %v1739 = vunpack.c.l.b16 %v1706
      %v1740 = vunpack.c.l.b16 %v1707
      %v1741 = vunpack.c.l.b16 %v1708
      %v1742 = vunpack.c.l.b16 %v1709
      %v1743 = vpack.c.b16 %v1736, %v1735
      %v1744 = vpack.c.b16 %v1738, %v1737
      %v1745 = vpack.c.b16 %v1740, %v1739
      %v1746 = vpack.c.b16 %v1742, %v1741
      %v1767 = vunpack.c.l.b16 %v1711
      %v1768 = vunpack.c.h.b16 %v1711
      %v1769 = vunpack.c.l.b16 %v1712
      %v1770 = vunpack.c.h.b16 %v1712
      %v1771 = vunpack.c.l.b16 %v1713
      %v1772 = vunpack.c.h.b16 %v1713
      %v1773 = vunpack.c.l.b16 %v1714
      %v1774 = vunpack.c.h.b16 %v1714
      %v1775 = vunpack.c.l.b16 %v1715
      %v1776 = vunpack.c.h.b16 %v1715
      %v1777 = vunpack.c.l.b16 %v1716
      %v1778 = vunpack.c.h.b16 %v1716
      %v1779 = vunpack.c.l.b16 %v1717
      %v1780 = vunpack.c.h.b16 %v1717
      %v1781 = vunpack.c.l.b16 %v1718
      %v1782 = vunpack.c.h.b16 %v1718
      %v1783 = vunpack.c.l.b16 %v1719
      %v1784 = vunpack.c.h.b16 %v1719
      %v1785 = vunpack.c.l.b16 %v1720
      %v1786 = vunpack.c.h.b16 %v1720
      %v1787 = vunpack.c.l.b16 %v1721
      %v1788 = vunpack.c.h.b16 %v1721
      %v1789 = vunpack.c.l.b16 %v1722
      %v1790 = vunpack.c.h.b16 %v1722
      %v1791 = vunpack.c.l.b16 %v1723
      %v1792 = vunpack.c.h.b16 %v1723
      %v1793 = vunpack.c.l.b16 %v1724
      %v1794 = vunpack.c.h.b16 %v1724
      %v1795 = vunpack.c.l.b16 %v1725
      %v1796 = vunpack.c.h.b16 %v1725
      %v1797 = vunpack.c.l.b16 %v1726
      %v1798 = vunpack.c.h.b16 %v1726
      %v1799 = vpack.c.b16 %v1769, %v1767
      %v1800 = vpack.c.b16 %v1770, %v1768
      %v1801 = vpack.c.b16 %v1773, %v1771
      %v1802 = vpack.c.b16 %v1774, %v1772
      %v1803 = vpack.c.b16 %v1777, %v1775
      %v1804 = vpack.c.b16 %v1778, %v1776
      %v1805 = vpack.c.b16 %v1781, %v1779
      %v1806 = vpack.c.b16 %v1782, %v1780
      %v1807 = vpack.c.b16 %v1785, %v1783
      %v1808 = vpack.c.b16 %v1786, %v1784
      %v1809 = vpack.c.b16 %v1789, %v1787
      %v1810 = vpack.c.b16 %v1790, %v1788
      %v1811 = vpack.c.b16 %v1793, %v1791
      %v1812 = vpack.c.b16 %v1794, %v1792
      %v1813 = vpack.c.b16 %v1797, %v1795
      %v1814 = vpack.c.b16 %v1798, %v1796
      %1831 = vmatprep.subr.bf16.mxu0 %v1814
      %1832 = vmatpush1.bf16.msra.mxu0 %v1813
      %1833 = vmatprep.subr.bf16.mxu0 %v1812
      %1834 = vmatpush1.bf16.msra.mxu0 %v1811
      %1835 = vmatprep.subr.bf16.mxu0 %v1810
      %1836 = vmatpush1.bf16.msra.mxu0 %v1809
      %1837 = vmatprep.subr.bf16.mxu0 %v1808
      %1838 = vmatpush1.bf16.msra.mxu0 %v1807
      %1839 = vmatprep.subr.bf16.mxu0 %v1806
      %1840 = vmatpush1.bf16.msra.mxu0 %v1805
      %1841 = vmatprep.subr.bf16.mxu0 %v1804
      %1842 = vmatpush1.bf16.msra.mxu0 %v1803
      %1843 = vmatprep.subr.bf16.mxu0 %v1802
      %1844 = vmatpush1.bf16.msra.mxu0 %v1801
      %1845 = vmatprep.subr.bf16.mxu0 %v1800
      %1846 = vmatpush1.bf16.msra.mxu0 %v1799
      %1847 = vmatprep.subr.bf16.mxu0 0
      %1848 = vmatpush2.bf16.msra.mxu0 0
      %1849 = vmatprep.subr.bf16.mxu0 0
      %1850 = vmatpush2.bf16.msra.mxu0 0
      %1851 = vmatprep.subr.bf16.mxu0 0
      %1852 = vmatpush2.bf16.msra.mxu0 0
      %1853 = vmatprep.subr.bf16.mxu0 0
      %1854 = vmatpush2.bf16.msra.mxu0 0
      %1855 = vmatprep.subr.bf16.mxu0 0
      %1856 = vmatpush2.bf16.msra.mxu0 0
      %1857 = vmatprep.subr.bf16.mxu0 0
      %1858 = vmatpush2.bf16.msra.mxu0 0
      %1859 = vmatprep.subr.bf16.mxu0 0
      %1860 = vmatpush2.bf16.msra.mxu0 0
      %1861 = vmatprep.subr.bf16.mxu0 0
      %1862 = vmatpush2.bf16.msra.mxu0 0
      %1863 = vmatprep.mubr.bf16.mxu0 0
      %1864 = vmatmul.mubr.bf16.gmra.mxu0 %v1743
      %v1865 = vpop.f32.mrf.mxu0
      %v1866 = vadd.f32 0.0, %v1865
      %v1867 = vpop.f32.mrf.mxu0
      %v1868 = vadd.f32 0.0, %v1867
      %v1869 = vpop.f32.mrf.mxu0
      %v1870 = vadd.f32 0.0, %v1869
      %v1871 = vpop.f32.mrf.mxu0
      %v1872 = vadd.f32 0.0, %v1871
      %1873 = vmatprep.mubr.bf16.mxu0 0
      %1874 = vmatmul.mubr.bf16.gmra.mxu0 %v1744
      %v1875 = vpop.f32.mrf.mxu0
      %v1876 = vadd.f32 0.0, %v1875
      %v1877 = vpop.f32.mrf.mxu0
      %v1878 = vadd.f32 0.0, %v1877
      %v1879 = vpop.f32.mrf.mxu0
      %v1880 = vadd.f32 0.0, %v1879
      %v1881 = vpop.f32.mrf.mxu0
      %v1882 = vadd.f32 0.0, %v1881
      %1883 = vmatprep.mubr.bf16.mxu0 0
      %1884 = vmatmul.mubr.bf16.gmra.mxu0 %v1745
      %v1885 = vpop.f32.mrf.mxu0
      %v1886 = vadd.f32 0.0, %v1885
      %v1887 = vpop.f32.mrf.mxu0
      %v1888 = vadd.f32 0.0, %v1887
      %v1889 = vpop.f32.mrf.mxu0
      %v1890 = vadd.f32 0.0, %v1889
      %v1891 = vpop.f32.mrf.mxu0
      %v1892 = vadd.f32 0.0, %v1891
      %1893 = vmatprep.mubr.bf16.mxu0 0
      %1894 = vmatmul.mubr.bf16.gmra.mxu0 %v1746
      %v1895 = vpop.f32.mrf.mxu0
      %v1896 = vadd.f32 0.0, %v1895
      %v1897 = vpop.f32.mrf.mxu0
      %v1898 = vadd.f32 0.0, %v1897
      %v1899 = vpop.f32.mrf.mxu0
      %v1900 = vpop.f32.mrf.mxu0
      %1901 = vdwg.mxu0
      %v1902 = vld [vmem:[#allocation3] sm:$0xff]
      %v1903 = vld [vmem:[#allocation3 + $0x8] sm:$0xff]
      %v1904 = vld [vmem:[#allocation3 + $0x10] sm:$0xff]
      %v1905 = vld [vmem:[#allocation3 + $0x18] sm:$0xff]
      %v1906 = vld [vmem:[#allocation3 + $0x20] sm:$0xff]
      %v1907 = vld [vmem:[#allocation3 + $0x28] sm:$0xff]
      %v1908 = vld [vmem:[#allocation3 + $0x30] sm:$0xff]
      %v1909 = vld [vmem:[#allocation3 + $0x38] sm:$0xff]
      %v1910 = vld [vmem:[#allocation3 + $0x40] sm:$0xff]
      %v1911 = vld [vmem:[#allocation3 + $0x48] sm:$0xff]
      %v1912 = vld [vmem:[#allocation3 + $0x50] sm:$0xff]
      %v1913 = vld [vmem:[#allocation3 + $0x58] sm:$0xff]
      %v1914 = vld [vmem:[#allocation3 + $0x60] sm:$0x7f]
      %v1915 = vld [vmem:[#allocation3 + $0x68] sm:$0x7f]
      %v1930 = vrot.slane %v1866, 1
      %v1931 = vrot.slane %v1870, 1
      %v1932 = vsel %vm1633, %v1930, %v1931
      %v1933 = vrot.slane %v1868, 1
      %v1934 = vrot.slane %v1872, 1
      %v1935 = vsel %vm1633, %v1933, %v1934
      %v1936 = vrot.slane %v1876, 1
      %v1937 = vsel %vm1633, %v1931, %v1936
      %v1938 = vrot.slane %v1878, 1
      %v1939 = vsel %vm1633, %v1934, %v1938
      %v1940 = vrot.slane %v1880, 1
      %v1941 = vsel %vm1633, %v1936, %v1940
      %v1942 = vrot.slane %v1882, 1
      %v1943 = vsel %vm1633, %v1938, %v1942
      %v1944 = vrot.slane %v1886, 1
      %v1945 = vsel %vm1633, %v1940, %v1944
      %v1946 = vrot.slane %v1888, 1
      %v1947 = vsel %vm1633, %v1942, %v1946
      %v1948 = vrot.slane %v1890, 1
      %v1949 = vsel %vm1633, %v1944, %v1948
      %v1950 = vrot.slane %v1892, 1
      %v1951 = vsel %vm1633, %v1946, %v1950
      %v1952 = vrot.slane %v1896, 1
      %v1953 = vsel %vm1633, %v1948, %v1952
      %v1954 = vrot.slane %v1898, 1
      %v1955 = vsel %vm1633, %v1950, %v1954
      %v1970 = vadd.f32 %v1902, %v1932
      %v1971 = vadd.f32 %v1903, %v1935
      %v1972 = vadd.f32 %v1904, %v1937
      %v1973 = vadd.f32 %v1905, %v1939
      %v1974 = vadd.f32 %v1906, %v1941
      %v1975 = vadd.f32 %v1907, %v1943
      %v1976 = vadd.f32 %v1908, %v1945
      %v1977 = vadd.f32 %v1909, %v1947
      %v1978 = vadd.f32 %v1910, %v1949
      %v1979 = vadd.f32 %v1911, %v1951
      %v1980 = vadd.f32 %v1912, %v1953
      %v1981 = vadd.f32 %v1913, %v1955
      %v1982 = vadd.f32 %v1914, %v1952
      %v1983 = vadd.f32 %v1915, %v1954
      %1984 = vst [vmem:[#allocation3] sm:$0xff] %v1970
      %1985 = vst [vmem:[#allocation3 + $0x8] sm:$0xff] %v1971
      %1986 = vst [vmem:[#allocation3 + $0x10] sm:$0xff] %v1972
      %1987 = vst [vmem:[#allocation3 + $0x18] sm:$0xff] %v1973
      %1988 = vst [vmem:[#allocation3 + $0x20] sm:$0xff] %v1974
      %1989 = vst [vmem:[#allocation3 + $0x28] sm:$0xff] %v1975
      %1990 = vst [vmem:[#allocation3 + $0x30] sm:$0xff] %v1976
      %1991 = vst [vmem:[#allocation3 + $0x38] sm:$0xff] %v1977
      %1992 = vst [vmem:[#allocation3 + $0x40] sm:$0xff] %v1978
      %1993 = vst [vmem:[#allocation3 + $0x48] sm:$0xff] %v1979
      %1994 = vst [vmem:[#allocation3 + $0x50] sm:$0xff] %v1980
      %1995 = vst [vmem:[#allocation3 + $0x58] sm:$0xff] %v1981
      %1996 = vst [vmem:[#allocation3 + $0x60] sm:$0x7f] %v1982
      %1997 = vst [vmem:[#allocation3 + $0x68] sm:$0x7f] %v1983
      %v1998 = vld [vmem:[#allocation2 + $0x20] sm:$0xf]
      %v1999 = vld [vmem:[#allocation2 + $0x24] sm:$0xf]
      %v2000 = vld [vmem:[#allocation2 + $0x28] sm:$0xf]
      %v2001 = vld [vmem:[#allocation2 + $0x2c] sm:$0xf]
      %v2002 = vld [vmem:[#allocation2 + $0x30] sm:$0xf]
      %v2003 = vld [vmem:[#allocation2 + $0x34] sm:$0xf]
      %v2004 = vld [vmem:[#allocation2 + $0x38] sm:$0xf]
      %v2005 = vld [vmem:[#allocation2 + $0x3c] sm:$0xf]
      %s2006 = scalar_lea.vmem %s4, 512
      %v2007 = vld [vmem:[%s2006] sm:$0xff]
      %v2008 = vld [vmem:[%s2006 + $0x8] sm:$0xff]
      %v2009 = vld [vmem:[%s2006 + $0x10] sm:$0xff]
      %v2010 = vld [vmem:[%s2006 + $0x18] sm:$0xff]
      %v2011 = vld [vmem:[%s2006 + $0x20] sm:$0xff]
      %v2012 = vld [vmem:[%s2006 + $0x28] sm:$0xff]
      %v2013 = vld [vmem:[%s2006 + $0x30] sm:$0xff]
      %v2014 = vld [vmem:[%s2006 + $0x38] sm:$0xff]
      %v2015 = vld [vmem:[%s2006 + $0x40] sm:$0xff]
      %v2016 = vld [vmem:[%s2006 + $0x48] sm:$0xff]
      %v2017 = vld [vmem:[%s2006 + $0x50] sm:$0xff]
      %v2018 = vld [vmem:[%s2006 + $0x58] sm:$0xff]
      %v2019 = vld [vmem:[%s2006 + $0x60] sm:$0xff]
      %v2020 = vld [vmem:[%s2006 + $0x68] sm:$0xff]
      %v2021 = vld [vmem:[%s2006 + $0x70] sm:$0xff]
      %v2022 = vld [vmem:[%s2006 + $0x78] sm:$0xff]
      %v2031 = vunpack.c.l.b16 %v1998
      %v2032 = vunpack.c.l.b16 %v1999
      %v2033 = vunpack.c.l.b16 %v2000
      %v2034 = vunpack.c.l.b16 %v2001
      %v2035 = vunpack.c.l.b16 %v2002
      %v2036 = vunpack.c.l.b16 %v2003
      %v2037 = vunpack.c.l.b16 %v2004
      %v2038 = vunpack.c.l.b16 %v2005
      %v2039 = vpack.c.b16 %v2032, %v2031
      %v2040 = vpack.c.b16 %v2034, %v2033
      %v2041 = vpack.c.b16 %v2036, %v2035
      %v2042 = vpack.c.b16 %v2038, %v2037
      %v2063 = vunpack.c.l.b16 %v2007
      %v2064 = vunpack.c.h.b16 %v2007
      %v2065 = vunpack.c.l.b16 %v2008
      %v2066 = vunpack.c.h.b16 %v2008
      %v2067 = vunpack.c.l.b16 %v2009
      %v2068 = vunpack.c.h.b16 %v2009
      %v2069 = vunpack.c.l.b16 %v2010
      %v2070 = vunpack.c.h.b16 %v2010
      %v2071 = vunpack.c.l.b16 %v2011
      %v2072 = vunpack.c.h.b16 %v2011
      %v2073 = vunpack.c.l.b16 %v2012
      %v2074 = vunpack.c.h.b16 %v2012
      %v2075 = vunpack.c.l.b16 %v2013
      %v2076 = vunpack.c.h.b16 %v2013
      %v2077 = vunpack.c.l.b16 %v2014
      %v2078 = vunpack.c.h.b16 %v2014
      %v2079 = vunpack.c.l.b16 %v2015
      %v2080 = vunpack.c.h.b16 %v2015
      %v2081 = vunpack.c.l.b16 %v2016
      %v2082 = vunpack.c.h.b16 %v2016
      %v2083 = vunpack.c.l.b16 %v2017
      %v2084 = vunpack.c.h.b16 %v2017
      %v2085 = vunpack.c.l.b16 %v2018
      %v2086 = vunpack.c.h.b16 %v2018
      %v2087 = vunpack.c.l.b16 %v2019
      %v2088 = vunpack.c.h.b16 %v2019
      %v2089 = vunpack.c.l.b16 %v2020
      %v2090 = vunpack.c.h.b16 %v2020
      %v2091 = vunpack.c.l.b16 %v2021
      %v2092 = vunpack.c.h.b16 %v2021
      %v2093 = vunpack.c.l.b16 %v2022
      %v2094 = vunpack.c.h.b16 %v2022
      %v2095 = vpack.c.b16 %v2065, %v2063
      %v2096 = vpack.c.b16 %v2066, %v2064
      %v2097 = vpack.c.b16 %v2069, %v2067
      %v2098 = vpack.c.b16 %v2070, %v2068
      %v2099 = vpack.c.b16 %v2073, %v2071
      %v2100 = vpack.c.b16 %v2074, %v2072
      %v2101 = vpack.c.b16 %v2077, %v2075
      %v2102 = vpack.c.b16 %v2078, %v2076
      %v2103 = vpack.c.b16 %v2081, %v2079
      %v2104 = vpack.c.b16 %v2082, %v2080
      %v2105 = vpack.c.b16 %v2085, %v2083
      %v2106 = vpack.c.b16 %v2086, %v2084
      %v2107 = vpack.c.b16 %v2089, %v2087
      %v2108 = vpack.c.b16 %v2090, %v2088
      %v2109 = vpack.c.b16 %v2093, %v2091
      %v2110 = vpack.c.b16 %v2094, %v2092
      %2127 = vmatprep.subr.bf16.mxu0 %v2110
      %2128 = vmatpush1.bf16.msra.mxu0 %v2109
      %2129 = vmatprep.subr.bf16.mxu0 %v2108
      %2130 = vmatpush1.bf16.msra.mxu0 %v2107
      %2131 = vmatprep.subr.bf16.mxu0 %v2106
      %2132 = vmatpush1.bf16.msra.mxu0 %v2105
      %2133 = vmatprep.subr.bf16.mxu0 %v2104
      %2134 = vmatpush1.bf16.msra.mxu0 %v2103
      %2135 = vmatprep.subr.bf16.mxu0 %v2102
      %2136 = vmatpush1.bf16.msra.mxu0 %v2101
      %2137 = vmatprep.subr.bf16.mxu0 %v2100
      %2138 = vmatpush1.bf16.msra.mxu0 %v2099
      %2139 = vmatprep.subr.bf16.mxu0 %v2098
      %2140 = vmatpush1.bf16.msra.mxu0 %v2097
      %2141 = vmatprep.subr.bf16.mxu0 %v2096
      %2142 = vmatpush1.bf16.msra.mxu0 %v2095
      %2143 = vmatprep.subr.bf16.mxu0 0
      %2144 = vmatpush2.bf16.msra.mxu0 0
      %2145 = vmatprep.subr.bf16.mxu0 0
      %2146 = vmatpush2.bf16.msra.mxu0 0
      %2147 = vmatprep.subr.bf16.mxu0 0
      %2148 = vmatpush2.bf16.msra.mxu0 0
      %2149 = vmatprep.subr.bf16.mxu0 0
      %2150 = vmatpush2.bf16.msra.mxu0 0
      %2151 = vmatprep.subr.bf16.mxu0 0
      %2152 = vmatpush2.bf16.msra.mxu0 0
      %2153 = vmatprep.subr.bf16.mxu0 0
      %2154 = vmatpush2.bf16.msra.mxu0 0
      %2155 = vmatprep.subr.bf16.mxu0 0
      %2156 = vmatpush2.bf16.msra.mxu0 0
      %2157 = vmatprep.subr.bf16.mxu0 0
      %2158 = vmatpush2.bf16.msra.mxu0 0
      %2159 = vmatprep.mubr.bf16.mxu0 0
      %2160 = vmatmul.mubr.bf16.gmra.mxu0 %v2039
      %v2161 = vpop.f32.mrf.mxu0
      %v2162 = vadd.f32 0.0, %v2161
      %v2163 = vpop.f32.mrf.mxu0
      %v2164 = vadd.f32 0.0, %v2163
      %v2165 = vpop.f32.mrf.mxu0
      %v2166 = vadd.f32 0.0, %v2165
      %v2167 = vpop.f32.mrf.mxu0
      %v2168 = vadd.f32 0.0, %v2167
      %2169 = vmatprep.mubr.bf16.mxu0 0
      %2170 = vmatmul.mubr.bf16.gmra.mxu0 %v2040
      %v2171 = vpop.f32.mrf.mxu0
      %v2172 = vadd.f32 0.0, %v2171
      %v2173 = vpop.f32.mrf.mxu0
      %v2174 = vadd.f32 0.0, %v2173
      %v2175 = vpop.f32.mrf.mxu0
      %v2176 = vadd.f32 0.0, %v2175
      %v2177 = vpop.f32.mrf.mxu0
      %v2178 = vadd.f32 0.0, %v2177
      %2179 = vmatprep.mubr.bf16.mxu0 0
      %2180 = vmatmul.mubr.bf16.gmra.mxu0 %v2041
      %v2181 = vpop.f32.mrf.mxu0
      %v2182 = vadd.f32 0.0, %v2181
      %v2183 = vpop.f32.mrf.mxu0
      %v2184 = vadd.f32 0.0, %v2183
      %v2185 = vpop.f32.mrf.mxu0
      %v2186 = vadd.f32 0.0, %v2185
      %v2187 = vpop.f32.mrf.mxu0
      %v2188 = vadd.f32 0.0, %v2187
      %2189 = vmatprep.mubr.bf16.mxu0 0
      %2190 = vmatmul.mubr.bf16.gmra.mxu0 %v2042
      %v2191 = vpop.f32.mrf.mxu0
      %v2192 = vadd.f32 0.0, %v2191
      %v2193 = vpop.f32.mrf.mxu0
      %v2194 = vadd.f32 0.0, %v2193
      %v2195 = vpop.f32.mrf.mxu0
      %v2196 = vpop.f32.mrf.mxu0
      %2197 = vdwg.mxu0
      %v2198 = vld [vmem:[#allocation3] sm:$0xff]
      %v2199 = vld [vmem:[#allocation3 + $0x8] sm:$0xff]
      %v2200 = vld [vmem:[#allocation3 + $0x10] sm:$0xff]
      %v2201 = vld [vmem:[#allocation3 + $0x18] sm:$0xff]
      %v2202 = vld [vmem:[#allocation3 + $0x20] sm:$0xff]
      %v2203 = vld [vmem:[#allocation3 + $0x28] sm:$0xff]
      %v2204 = vld [vmem:[#allocation3 + $0x30] sm:$0xff]
      %v2205 = vld [vmem:[#allocation3 + $0x38] sm:$0xff]
      %v2206 = vld [vmem:[#allocation3 + $0x40] sm:$0xff]
      %v2207 = vld [vmem:[#allocation3 + $0x48] sm:$0xff]
      %v2208 = vld [vmem:[#allocation3 + $0x50] sm:$0xff]
      %v2209 = vld [vmem:[#allocation3 + $0x58] sm:$0xff]
      %v2210 = vld [vmem:[#allocation3 + $0x60] sm:$0x7f]
      %v2211 = vld [vmem:[#allocation3 + $0x68] sm:$0x7f]
      %v2212 = vadd.f32 %v2198, %v2162
      %v2213 = vadd.f32 %v2199, %v2164
      %v2214 = vadd.f32 %v2200, %v2166
      %v2215 = vadd.f32 %v2201, %v2168
      %v2216 = vadd.f32 %v2202, %v2172
      %v2217 = vadd.f32 %v2203, %v2174
      %v2218 = vadd.f32 %v2204, %v2176
      %v2219 = vadd.f32 %v2205, %v2178
      %v2220 = vadd.f32 %v2206, %v2182
      %v2221 = vadd.f32 %v2207, %v2184
      %v2222 = vadd.f32 %v2208, %v2186
      %v2223 = vadd.f32 %v2209, %v2188
      %v2224 = vadd.f32 %v2210, %v2192
      %v2225 = vadd.f32 %v2211, %v2194
      %2226 = vst [vmem:[#allocation3] sm:$0xff] %v2212
      %2227 = vst [vmem:[#allocation3 + $0x8] sm:$0xff] %v2213
      %2228 = vst [vmem:[#allocation3 + $0x10] sm:$0xff] %v2214
      %2229 = vst [vmem:[#allocation3 + $0x18] sm:$0xff] %v2215
      %2230 = vst [vmem:[#allocation3 + $0x20] sm:$0xff] %v2216
      %2231 = vst [vmem:[#allocation3 + $0x28] sm:$0xff] %v2217
      %2232 = vst [vmem:[#allocation3 + $0x30] sm:$0xff] %v2218
      %2233 = vst [vmem:[#allocation3 + $0x38] sm:$0xff] %v2219
      %2234 = vst [vmem:[#allocation3 + $0x40] sm:$0xff] %v2220
      %2235 = vst [vmem:[#allocation3 + $0x48] sm:$0xff] %v2221
      %2236 = vst [vmem:[#allocation3 + $0x50] sm:$0xff] %v2222
      %2237 = vst [vmem:[#allocation3 + $0x58] sm:$0xff] %v2223
      %2238 = vst [vmem:[#allocation3 + $0x60] sm:$0x7f] %v2224
      %2239 = vst [vmem:[#allocation3 + $0x68] sm:$0x7f] %v2225
      %v2240 = vld [vmem:[#allocation2] sm:$0xf]
      %v2241 = vld [vmem:[#allocation2 + $0x4] sm:$0xf]
      %v2242 = vld [vmem:[#allocation2 + $0x8] sm:$0xf]
      %v2243 = vld [vmem:[#allocation2 + $0xc] sm:$0xf]
      %v2244 = vld [vmem:[#allocation2 + $0x10] sm:$0xf]
      %v2245 = vld [vmem:[#allocation2 + $0x14] sm:$0xf]
      %v2246 = vld [vmem:[#allocation2 + $0x18] sm:$0xf]
      %v2247 = vld [vmem:[#allocation2 + $0x1c] sm:$0xf]
      %s2248 = scalar_lea.vmem %s4, 640
      %v2249 = vld [vmem:[%s2248] sm:$0xff]
      %v2250 = vld [vmem:[%s2248 + $0x8] sm:$0xff]
      %v2251 = vld [vmem:[%s2248 + $0x10] sm:$0xff]
      %v2252 = vld [vmem:[%s2248 + $0x18] sm:$0xff]
      %v2253 = vld [vmem:[%s2248 + $0x20] sm:$0xff]
      %v2254 = vld [vmem:[%s2248 + $0x28] sm:$0xff]
      %v2255 = vld [vmem:[%s2248 + $0x30] sm:$0xff]
      %v2256 = vld [vmem:[%s2248 + $0x38] sm:$0xff]
      %v2257 = vld [vmem:[%s2248 + $0x40] sm:$0xff]
      %v2258 = vld [vmem:[%s2248 + $0x48] sm:$0xff]
      %v2259 = vld [vmem:[%s2248 + $0x50] sm:$0xff]
      %v2260 = vld [vmem:[%s2248 + $0x58] sm:$0xff]
      %v2261 = vld [vmem:[%s2248 + $0x60] sm:$0xff]
      %v2262 = vld [vmem:[%s2248 + $0x68] sm:$0xff]
      %v2263 = vld [vmem:[%s2248 + $0x70] sm:$0xff]
      %v2264 = vld [vmem:[%s2248 + $0x78] sm:$0xff]
      %v2273 = vunpack.c.l.b16 %v2240
      %v2274 = vunpack.c.l.b16 %v2241
      %v2275 = vunpack.c.l.b16 %v2242
      %v2276 = vunpack.c.l.b16 %v2243
      %v2277 = vunpack.c.l.b16 %v2244
      %v2278 = vunpack.c.l.b16 %v2245
      %v2279 = vunpack.c.l.b16 %v2246
      %v2280 = vunpack.c.l.b16 %v2247
      %v2281 = vpack.c.b16 %v2274, %v2273
      %v2282 = vpack.c.b16 %v2276, %v2275
      %v2283 = vpack.c.b16 %v2278, %v2277
      %v2284 = vpack.c.b16 %v2280, %v2279
      %v2305 = vunpack.c.l.b16 %v2249
      %v2306 = vunpack.c.h.b16 %v2249
      %v2307 = vunpack.c.l.b16 %v2250
      %v2308 = vunpack.c.h.b16 %v2250
      %v2309 = vunpack.c.l.b16 %v2251
      %v2310 = vunpack.c.h.b16 %v2251
      %v2311 = vunpack.c.l.b16 %v2252
      %v2312 = vunpack.c.h.b16 %v2252
      %v2313 = vunpack.c.l.b16 %v2253
      %v2314 = vunpack.c.h.b16 %v2253
      %v2315 = vunpack.c.l.b16 %v2254
      %v2316 = vunpack.c.h.b16 %v2254
      %v2317 = vunpack.c.l.b16 %v2255
      %v2318 = vunpack.c.h.b16 %v2255
      %v2319 = vunpack.c.l.b16 %v2256
      %v2320 = vunpack.c.h.b16 %v2256
      %v2321 = vunpack.c.l.b16 %v2257
      %v2322 = vunpack.c.h.b16 %v2257
      %v2323 = vunpack.c.l.b16 %v2258
      %v2324 = vunpack.c.h.b16 %v2258
      %v2325 = vunpack.c.l.b16 %v2259
      %v2326 = vunpack.c.h.b16 %v2259
      %v2327 = vunpack.c.l.b16 %v2260
      %v2328 = vunpack.c.h.b16 %v2260
      %v2329 = vunpack.c.l.b16 %v2261
      %v2330 = vunpack.c.h.b16 %v2261
      %v2331 = vunpack.c.l.b16 %v2262
      %v2332 = vunpack.c.h.b16 %v2262
      %v2333 = vunpack.c.l.b16 %v2263
      %v2334 = vunpack.c.h.b16 %v2263
      %v2335 = vunpack.c.l.b16 %v2264
      %v2336 = vunpack.c.h.b16 %v2264
      %v2337 = vpack.c.b16 %v2307, %v2305
      %v2338 = vpack.c.b16 %v2308, %v2306
      %v2339 = vpack.c.b16 %v2311, %v2309
      %v2340 = vpack.c.b16 %v2312, %v2310
      %v2341 = vpack.c.b16 %v2315, %v2313
      %v2342 = vpack.c.b16 %v2316, %v2314
      %v2343 = vpack.c.b16 %v2319, %v2317
      %v2344 = vpack.c.b16 %v2320, %v2318
      %v2345 = vpack.c.b16 %v2323, %v2321
      %v2346 = vpack.c.b16 %v2324, %v2322
      %v2347 = vpack.c.b16 %v2327, %v2325
      %v2348 = vpack.c.b16 %v2328, %v2326
      %v2349 = vpack.c.b16 %v2331, %v2329
      %v2350 = vpack.c.b16 %v2332, %v2330
      %v2351 = vpack.c.b16 %v2335, %v2333
      %v2352 = vpack.c.b16 %v2336, %v2334
      %2369 = vmatprep.subr.bf16.mxu0 %v2352
      %2370 = vmatpush1.bf16.msra.mxu0 %v2351
      %2371 = vmatprep.subr.bf16.mxu0 %v2350
      %2372 = vmatpush1.bf16.msra.mxu0 %v2349
      %2373 = vmatprep.subr.bf16.mxu0 %v2348
      %2374 = vmatpush1.bf16.msra.mxu0 %v2347
      %2375 = vmatprep.subr.bf16.mxu0 %v2346
      %2376 = vmatpush1.bf16.msra.mxu0 %v2345
      %2377 = vmatprep.subr.bf16.mxu0 %v2344
      %2378 = vmatpush1.bf16.msra.mxu0 %v2343
      %2379 = vmatprep.subr.bf16.mxu0 %v2342
      %2380 = vmatpush1.bf16.msra.mxu0 %v2341
      %2381 = vmatprep.subr.bf16.mxu0 %v2340
      %2382 = vmatpush1.bf16.msra.mxu0 %v2339
      %2383 = vmatprep.subr.bf16.mxu0 %v2338
      %2384 = vmatpush1.bf16.msra.mxu0 %v2337
      %2385 = vmatprep.subr.bf16.mxu0 0
      %2386 = vmatpush2.bf16.msra.mxu0 0
      %2387 = vmatprep.subr.bf16.mxu0 0
      %2388 = vmatpush2.bf16.msra.mxu0 0
      %2389 = vmatprep.subr.bf16.mxu0 0
      %2390 = vmatpush2.bf16.msra.mxu0 0
      %2391 = vmatprep.subr.bf16.mxu0 0
      %2392 = vmatpush2.bf16.msra.mxu0 0
      %2393 = vmatprep.subr.bf16.mxu0 0
      %2394 = vmatpush2.bf16.msra.mxu0 0
      %2395 = vmatprep.subr.bf16.mxu0 0
      %2396 = vmatpush2.bf16.msra.mxu0 0
      %2397 = vmatprep.subr.bf16.mxu0 0
      %2398 = vmatpush2.bf16.msra.mxu0 0
      %2399 = vmatprep.subr.bf16.mxu0 0
      %2400 = vmatpush2.bf16.msra.mxu0 0
      %2401 = vmatprep.mubr.bf16.mxu0 0
      %2402 = vmatmul.mubr.bf16.gmra.mxu0 %v2281
      %v2403 = vpop.f32.mrf.mxu0
      %v2404 = vadd.f32 0.0, %v2403
      %v2405 = vpop.f32.mrf.mxu0
      %v2406 = vadd.f32 0.0, %v2405
      %v2407 = vpop.f32.mrf.mxu0
      %v2408 = vadd.f32 0.0, %v2407
      %v2409 = vpop.f32.mrf.mxu0
      %v2410 = vadd.f32 0.0, %v2409
      %2411 = vmatprep.mubr.bf16.mxu0 0
      %2412 = vmatmul.mubr.bf16.gmra.mxu0 %v2282
      %v2413 = vpop.f32.mrf.mxu0
      %v2414 = vadd.f32 0.0, %v2413
      %v2415 = vpop.f32.mrf.mxu0
      %v2416 = vadd.f32 0.0, %v2415
      %v2417 = vpop.f32.mrf.mxu0
      %v2418 = vadd.f32 0.0, %v2417
      %v2419 = vpop.f32.mrf.mxu0
      %v2420 = vadd.f32 0.0, %v2419
      %2421 = vmatprep.mubr.bf16.mxu0 0
      %2422 = vmatmul.mubr.bf16.gmra.mxu0 %v2283
      %v2423 = vpop.f32.mrf.mxu0
      %v2424 = vadd.f32 0.0, %v2423
      %v2425 = vpop.f32.mrf.mxu0
      %v2426 = vadd.f32 0.0, %v2425
      %v2427 = vpop.f32.mrf.mxu0
      %v2428 = vadd.f32 0.0, %v2427
      %v2429 = vpop.f32.mrf.mxu0
      %v2430 = vadd.f32 0.0, %v2429
      %2431 = vmatprep.mubr.bf16.mxu0 0
      %2432 = vmatmul.mubr.bf16.gmra.mxu0 %v2284
      %v2433 = vpop.f32.mrf.mxu0
      %v2434 = vadd.f32 0.0, %v2433
      %v2435 = vpop.f32.mrf.mxu0
      %v2436 = vadd.f32 0.0, %v2435
      %v2437 = vpop.f32.mrf.mxu0
      %v2438 = vpop.f32.mrf.mxu0
      %2439 = vdwg.mxu0
      %v2440 = vld [vmem:[#allocation3] sm:$0xff]
      %v2441 = vld [vmem:[#allocation3 + $0x8] sm:$0xff]
      %v2442 = vld [vmem:[#allocation3 + $0x10] sm:$0xff]
      %v2443 = vld [vmem:[#allocation3 + $0x18] sm:$0xff]
      %v2444 = vld [vmem:[#allocation3 + $0x20] sm:$0xff]
      %v2445 = vld [vmem:[#allocation3 + $0x28] sm:$0xff]
      %v2446 = vld [vmem:[#allocation3 + $0x30] sm:$0xff]
      %v2447 = vld [vmem:[#allocation3 + $0x38] sm:$0xff]
      %v2448 = vld [vmem:[#allocation3 + $0x40] sm:$0xff]
      %v2449 = vld [vmem:[#allocation3 + $0x48] sm:$0xff]
      %v2450 = vld [vmem:[#allocation3 + $0x50] sm:$0xff]
      %v2451 = vld [vmem:[#allocation3 + $0x58] sm:$0xff]
      %v2452 = vld [vmem:[#allocation3 + $0x60] sm:$0x7f]
      %v2453 = vld [vmem:[#allocation3 + $0x68] sm:$0x7f]
      %v2454 = vadd.f32 %v2440, %v2404
      %v2455 = vadd.f32 %v2441, %v2406
      %v2456 = vadd.f32 %v2442, %v2408
      %v2457 = vadd.f32 %v2443, %v2410
      %v2458 = vadd.f32 %v2444, %v2414
      %v2459 = vadd.f32 %v2445, %v2416
      %v2460 = vadd.f32 %v2446, %v2418
      %v2461 = vadd.f32 %v2447, %v2420
      %v2462 = vadd.f32 %v2448, %v2424
      %v2463 = vadd.f32 %v2449, %v2426
      %v2464 = vadd.f32 %v2450, %v2428
      %v2465 = vadd.f32 %v2451, %v2430
      %v2466 = vadd.f32 %v2452, %v2434
      %v2467 = vadd.f32 %v2453, %v2436
      %2468 = vst [vmem:[#allocation3] sm:$0xff] %v2454
      %2469 = vst [vmem:[#allocation3 + $0x8] sm:$0xff] %v2455
      %2470 = vst [vmem:[#allocation3 + $0x10] sm:$0xff] %v2456
      %2471 = vst [vmem:[#allocation3 + $0x18] sm:$0xff] %v2457
      %2472 = vst [vmem:[#allocation3 + $0x20] sm:$0xff] %v2458
      %2473 = vst [vmem:[#allocation3 + $0x28] sm:$0xff] %v2459
      %2474 = vst [vmem:[#allocation3 + $0x30] sm:$0xff] %v2460
      %2475 = vst [vmem:[#allocation3 + $0x38] sm:$0xff] %v2461
      %2476 = vst [vmem:[#allocation3 + $0x40] sm:$0xff] %v2462
      %2477 = vst [vmem:[#allocation3 + $0x48] sm:$0xff] %v2463
      %2478 = vst [vmem:[#allocation3 + $0x50] sm:$0xff] %v2464
      %2479 = vst [vmem:[#allocation3 + $0x58] sm:$0xff] %v2465
      %2480 = vst [vmem:[#allocation3 + $0x60] sm:$0x7f] %v2466
      %2481 = vst [vmem:[#allocation3 + $0x68] sm:$0x7f] %v2467
      %v2482 = vld [vmem:[#allocation2 + $0x20] sm:$0xf]
      %v2483 = vld [vmem:[#allocation2 + $0x24] sm:$0xf]
      %v2484 = vld [vmem:[#allocation2 + $0x28] sm:$0xf]
      %v2485 = vld [vmem:[#allocation2 + $0x2c] sm:$0xf]
      %v2486 = vld [vmem:[#allocation2 + $0x30] sm:$0xf]
      %v2487 = vld [vmem:[#allocation2 + $0x34] sm:$0xf]
      %v2488 = vld [vmem:[#allocation2 + $0x38] sm:$0xf]
      %v2489 = vld [vmem:[#allocation2 + $0x3c] sm:$0xf]
      %s2490 = scalar_lea.vmem %s4, 768
      %v2491 = vld [vmem:[%s2490] sm:$0xff]
      %v2492 = vld [vmem:[%s2490 + $0x8] sm:$0xff]
      %v2493 = vld [vmem:[%s2490 + $0x10] sm:$0xff]
      %v2494 = vld [vmem:[%s2490 + $0x18] sm:$0xff]
      %v2495 = vld [vmem:[%s2490 + $0x20] sm:$0xff]
      %v2496 = vld [vmem:[%s2490 + $0x28] sm:$0xff]
      %v2497 = vld [vmem:[%s2490 + $0x30] sm:$0xff]
      %v2498 = vld [vmem:[%s2490 + $0x38] sm:$0xff]
      %v2499 = vld [vmem:[%s2490 + $0x40] sm:$0xff]
      %v2500 = vld [vmem:[%s2490 + $0x48] sm:$0xff]
      %v2501 = vld [vmem:[%s2490 + $0x50] sm:$0xff]
      %v2502 = vld [vmem:[%s2490 + $0x58] sm:$0xff]
      %v2503 = vld [vmem:[%s2490 + $0x60] sm:$0xff]
      %v2504 = vld [vmem:[%s2490 + $0x68] sm:$0xff]
      %v2505 = vld [vmem:[%s2490 + $0x70] sm:$0xff]
      %v2506 = vld [vmem:[%s2490 + $0x78] sm:$0xff]
      %v2515 = vunpack.c.l.b16 %v2482
      %v2516 = vunpack.c.l.b16 %v2483
      %v2517 = vunpack.c.l.b16 %v2484
      %v2518 = vunpack.c.l.b16 %v2485
      %v2519 = vunpack.c.l.b16 %v2486
      %v2520 = vunpack.c.l.b16 %v2487
      %v2521 = vunpack.c.l.b16 %v2488
      %v2522 = vunpack.c.l.b16 %v2489
      %v2523 = vpack.c.b16 %v2516, %v2515
      %v2524 = vpack.c.b16 %v2518, %v2517
      %v2525 = vpack.c.b16 %v2520, %v2519
      %v2526 = vpack.c.b16 %v2522, %v2521
      %v2547 = vunpack.c.l.b16 %v2491
      %v2548 = vunpack.c.h.b16 %v2491
      %v2549 = vunpack.c.l.b16 %v2492
      %v2550 = vunpack.c.h.b16 %v2492
      %v2551 = vunpack.c.l.b16 %v2493
      %v2552 = vunpack.c.h.b16 %v2493
      %v2553 = vunpack.c.l.b16 %v2494
      %v2554 = vunpack.c.h.b16 %v2494
      %v2555 = vunpack.c.l.b16 %v2495
      %v2556 = vunpack.c.h.b16 %v2495
      %v2557 = vunpack.c.l.b16 %v2496
      %v2558 = vunpack.c.h.b16 %v2496
      %v2559 = vunpack.c.l.b16 %v2497
      %v2560 = vunpack.c.h.b16 %v2497
      %v2561 = vunpack.c.l.b16 %v2498
      %v2562 = vunpack.c.h.b16 %v2498
      %v2563 = vunpack.c.l.b16 %v2499
      %v2564 = vunpack.c.h.b16 %v2499
      %v2565 = vunpack.c.l.b16 %v2500
      %v2566 = vunpack.c.h.b16 %v2500
      %v2567 = vunpack.c.l.b16 %v2501
      %v2568 = vunpack.c.h.b16 %v2501
      %v2569 = vunpack.c.l.b16 %v2502
      %v2570 = vunpack.c.h.b16 %v2502
      %v2571 = vunpack.c.l.b16 %v2503
      %v2572 = vunpack.c.h.b16 %v2503
      %v2573 = vunpack.c.l.b16 %v2504
      %v2574 = vunpack.c.h.b16 %v2504
      %v2575 = vunpack.c.l.b16 %v2505
      %v2576 = vunpack.c.h.b16 %v2505
      %v2577 = vunpack.c.l.b16 %v2506
      %v2578 = vunpack.c.h.b16 %v2506
      %v2579 = vpack.c.b16 %v2549, %v2547
      %v2580 = vpack.c.b16 %v2550, %v2548
      %v2581 = vpack.c.b16 %v2553, %v2551
      %v2582 = vpack.c.b16 %v2554, %v2552
      %v2583 = vpack.c.b16 %v2557, %v2555
      %v2584 = vpack.c.b16 %v2558, %v2556
      %v2585 = vpack.c.b16 %v2561, %v2559
      %v2586 = vpack.c.b16 %v2562, %v2560
      %v2587 = vpack.c.b16 %v2565, %v2563
      %v2588 = vpack.c.b16 %v2566, %v2564
      %v2589 = vpack.c.b16 %v2569, %v2567
      %v2590 = vpack.c.b16 %v2570, %v2568
      %v2591 = vpack.c.b16 %v2573, %v2571
      %v2592 = vpack.c.b16 %v2574, %v2572
      %v2593 = vpack.c.b16 %v2577, %v2575
      %v2594 = vpack.c.b16 %v2578, %v2576
      %2611 = vmatprep.subr.bf16.mxu0 %v2594
      %2612 = vmatpush1.bf16.msra.mxu0 %v2593
      %2613 = vmatprep.subr.bf16.mxu0 %v2592
      %2614 = vmatpush1.bf16.msra.mxu0 %v2591
      %2615 = vmatprep.subr.bf16.mxu0 %v2590
      %2616 = vmatpush1.bf16.msra.mxu0 %v2589
      %2617 = vmatprep.subr.bf16.mxu0 %v2588
      %2618 = vmatpush1.bf16.msra.mxu0 %v2587
      %2619 = vmatprep.subr.bf16.mxu0 %v2586
      %2620 = vmatpush1.bf16.msra.mxu0 %v2585
      %2621 = vmatprep.subr.bf16.mxu0 %v2584
      %2622 = vmatpush1.bf16.msra.mxu0 %v2583
      %2623 = vmatprep.subr.bf16.mxu0 %v2582
      %2624 = vmatpush1.bf16.msra.mxu0 %v2581
      %2625 = vmatprep.subr.bf16.mxu0 %v2580
      %2626 = vmatpush1.bf16.msra.mxu0 %v2579
      %2627 = vmatprep.subr.bf16.mxu0 0
      %2628 = vmatpush2.bf16.msra.mxu0 0
      %2629 = vmatprep.subr.bf16.mxu0 0
      %2630 = vmatpush2.bf16.msra.mxu0 0
      %2631 = vmatprep.subr.bf16.mxu0 0
      %2632 = vmatpush2.bf16.msra.mxu0 0
      %2633 = vmatprep.subr.bf16.mxu0 0
      %2634 = vmatpush2.bf16.msra.mxu0 0
      %2635 = vmatprep.subr.bf16.mxu0 0
      %2636 = vmatpush2.bf16.msra.mxu0 0
      %2637 = vmatprep.subr.bf16.mxu0 0
      %2638 = vmatpush2.bf16.msra.mxu0 0
      %2639 = vmatprep.subr.bf16.mxu0 0
      %2640 = vmatpush2.bf16.msra.mxu0 0
      %2641 = vmatprep.subr.bf16.mxu0 0
      %2642 = vmatpush2.bf16.msra.mxu0 0
      %2643 = vmatprep.mubr.bf16.mxu0 0
      %2644 = vmatmul.mubr.bf16.gmra.mxu0 %v2523
      %v2645 = vpop.f32.mrf.mxu0
      %v2646 = vadd.f32 0.0, %v2645
      %v2647 = vpop.f32.mrf.mxu0
      %v2648 = vadd.f32 0.0, %v2647
      %v2649 = vpop.f32.mrf.mxu0
      %v2650 = vadd.f32 0.0, %v2649
      %v2651 = vpop.f32.mrf.mxu0
      %v2652 = vadd.f32 0.0, %v2651
      %2653 = vmatprep.mubr.bf16.mxu0 0
      %2654 = vmatmul.mubr.bf16.gmra.mxu0 %v2524
      %v2655 = vpop.f32.mrf.mxu0
      %v2656 = vadd.f32 0.0, %v2655
      %v2657 = vpop.f32.mrf.mxu0
      %v2658 = vadd.f32 0.0, %v2657
      %v2659 = vpop.f32.mrf.mxu0
      %v2660 = vadd.f32 0.0, %v2659
      %v2661 = vpop.f32.mrf.mxu0
      %v2662 = vadd.f32 0.0, %v2661
      %2663 = vmatprep.mubr.bf16.mxu0 0
      %2664 = vmatmul.mubr.bf16.gmra.mxu0 %v2525
      %v2665 = vpop.f32.mrf.mxu0
      %v2666 = vadd.f32 0.0, %v2665
      %v2667 = vpop.f32.mrf.mxu0
      %v2668 = vadd.f32 0.0, %v2667
      %v2669 = vpop.f32.mrf.mxu0
      %v2670 = vadd.f32 0.0, %v2669
      %v2671 = vpop.f32.mrf.mxu0
      %v2672 = vadd.f32 0.0, %v2671
      %2673 = vmatprep.mubr.bf16.mxu0 0
      %2674 = vmatmul.mubr.bf16.gmra.mxu0 %v2526
      %v2675 = vpop.f32.mrf.mxu0
      %v2676 = vadd.f32 0.0, %v2675
      %v2677 = vpop.f32.mrf.mxu0
      %v2678 = vadd.f32 0.0, %v2677
      %v2679 = vpop.f32.mrf.mxu0
      %v2680 = vpop.f32.mrf.mxu0
      %2681 = vdwg.mxu0
      %v2682 = vld [vmem:[#allocation3] sm:$0xff]
      %v2683 = vld [vmem:[#allocation3 + $0x8] sm:$0xff]
      %v2684 = vld [vmem:[#allocation3 + $0x10] sm:$0xff]
      %v2685 = vld [vmem:[#allocation3 + $0x18] sm:$0xff]
      %v2686 = vld [vmem:[#allocation3 + $0x20] sm:$0xff]
      %v2687 = vld [vmem:[#allocation3 + $0x28] sm:$0xff]
      %v2688 = vld [vmem:[#allocation3 + $0x30] sm:$0xff]
      %v2689 = vld [vmem:[#allocation3 + $0x38] sm:$0xff]
      %v2690 = vld [vmem:[#allocation3 + $0x40] sm:$0xff]
      %v2691 = vld [vmem:[#allocation3 + $0x48] sm:$0xff]
      %v2692 = vld [vmem:[#allocation3 + $0x50] sm:$0xff]
      %v2693 = vld [vmem:[#allocation3 + $0x58] sm:$0xff]
      %v2694 = vld [vmem:[#allocation3 + $0x60] sm:$0x7f]
      %v2695 = vld [vmem:[#allocation3 + $0x68] sm:$0x7f]
      %v2710 = vrot.slane %v2646, 1
      %v2711 = vrot.slane %v2650, 1
      %v2712 = vsel %vm1633, %v2710, %v2711
      %v2713 = vrot.slane %v2648, 1
      %v2714 = vrot.slane %v2652, 1
      %v2715 = vsel %vm1633, %v2713, %v2714
      %v2716 = vrot.slane %v2656, 1
      %v2717 = vsel %vm1633, %v2711, %v2716
      %v2718 = vrot.slane %v2658, 1
      %v2719 = vsel %vm1633, %v2714, %v2718
      %v2720 = vrot.slane %v2660, 1
      %v2721 = vsel %vm1633, %v2716, %v2720
      %v2722 = vrot.slane %v2662, 1
      %v2723 = vsel %vm1633, %v2718, %v2722
      %v2724 = vrot.slane %v2666, 1
      %v2725 = vsel %vm1633, %v2720, %v2724
      %v2726 = vrot.slane %v2668, 1
      %v2727 = vsel %vm1633, %v2722, %v2726
      %v2728 = vrot.slane %v2670, 1
      %v2729 = vsel %vm1633, %v2724, %v2728
      %v2730 = vrot.slane %v2672, 1
      %v2731 = vsel %vm1633, %v2726, %v2730
      %v2732 = vrot.slane %v2676, 1
      %v2733 = vsel %vm1633, %v2728, %v2732
      %v2734 = vrot.slane %v2678, 1
      %v2735 = vsel %vm1633, %v2730, %v2734
      %v2750 = vadd.f32 %v2682, %v2712
      %v2751 = vadd.f32 %v2683, %v2715
      %v2752 = vadd.f32 %v2684, %v2717
      %v2753 = vadd.f32 %v2685, %v2719
      %v2754 = vadd.f32 %v2686, %v2721
      %v2755 = vadd.f32 %v2687, %v2723
      %v2756 = vadd.f32 %v2688, %v2725
      %v2757 = vadd.f32 %v2689, %v2727
      %v2758 = vadd.f32 %v2690, %v2729
      %v2759 = vadd.f32 %v2691, %v2731
      %v2760 = vadd.f32 %v2692, %v2733
      %v2761 = vadd.f32 %v2693, %v2735
      %v2762 = vadd.f32 %v2694, %v2732
      %v2763 = vadd.f32 %v2695, %v2734
      %2764 = vst [vmem:[#allocation3] sm:$0xff] %v2750
      %2765 = vst [vmem:[#allocation3 + $0x8] sm:$0xff] %v2751
      %2766 = vst [vmem:[#allocation3 + $0x10] sm:$0xff] %v2752
      %2767 = vst [vmem:[#allocation3 + $0x18] sm:$0xff] %v2753
      %2768 = vst [vmem:[#allocation3 + $0x20] sm:$0xff] %v2754
      %2769 = vst [vmem:[#allocation3 + $0x28] sm:$0xff] %v2755
      %2770 = vst [vmem:[#allocation3 + $0x30] sm:$0xff] %v2756
      %2771 = vst [vmem:[#allocation3 + $0x38] sm:$0xff] %v2757
      %2772 = vst [vmem:[#allocation3 + $0x40] sm:$0xff] %v2758
      %2773 = vst [vmem:[#allocation3 + $0x48] sm:$0xff] %v2759
      %2774 = vst [vmem:[#allocation3 + $0x50] sm:$0xff] %v2760
      %2775 = vst [vmem:[#allocation3 + $0x58] sm:$0xff] %v2761
      %2776 = vst [vmem:[#allocation3 + $0x60] sm:$0x7f] %v2762
      %2777 = vst [vmem:[#allocation3 + $0x68] sm:$0x7f] %v2763
      %v2778 = vld [vmem:[#allocation2] sm:$0xf]
      %v2779 = vld [vmem:[#allocation2 + $0x4] sm:$0xf]
      %v2780 = vld [vmem:[#allocation2 + $0x8] sm:$0xf]
      %v2781 = vld [vmem:[#allocation2 + $0xc] sm:$0xf]
      %v2782 = vld [vmem:[#allocation2 + $0x10] sm:$0xf]
      %v2783 = vld [vmem:[#allocation2 + $0x14] sm:$0xf]
      %v2784 = vld [vmem:[#allocation2 + $0x18] sm:$0xf]
      %v2785 = vld [vmem:[#allocation2 + $0x1c] sm:$0xf]
      %s2786 = scalar_lea.vmem %s4, 896
      %v2787 = vld [vmem:[%s2786] sm:$0xff]
      %v2788 = vld [vmem:[%s2786 + $0x8] sm:$0xff]
      %v2789 = vld [vmem:[%s2786 + $0x10] sm:$0xff]
      %v2790 = vld [vmem:[%s2786 + $0x18] sm:$0xff]
      %v2791 = vld [vmem:[%s2786 + $0x20] sm:$0xff]
      %v2792 = vld [vmem:[%s2786 + $0x28] sm:$0xff]
      %v2793 = vld [vmem:[%s2786 + $0x30] sm:$0xff]
      %v2794 = vld [vmem:[%s2786 + $0x38] sm:$0xff]
      %v2795 = vld [vmem:[%s2786 + $0x40] sm:$0xff]
      %v2796 = vld [vmem:[%s2786 + $0x48] sm:$0xff]
      %v2797 = vld [vmem:[%s2786 + $0x50] sm:$0xff]
      %v2798 = vld [vmem:[%s2786 + $0x58] sm:$0xff]
      %v2799 = vld [vmem:[%s2786 + $0x60] sm:$0xff]
      %v2800 = vld [vmem:[%s2786 + $0x68] sm:$0xff]
      %v2801 = vld [vmem:[%s2786 + $0x70] sm:$0xff]
      %v2802 = vld [vmem:[%s2786 + $0x78] sm:$0xff]
      %v2811 = vunpack.c.l.b16 %v2778
      %v2812 = vunpack.c.l.b16 %v2779
      %v2813 = vunpack.c.l.b16 %v2780
      %v2814 = vunpack.c.l.b16 %v2781
      %v2815 = vunpack.c.l.b16 %v2782
      %v2816 = vunpack.c.l.b16 %v2783
      %v2817 = vunpack.c.l.b16 %v2784
      %v2818 = vunpack.c.l.b16 %v2785
      %v2819 = vpack.c.b16 %v2812, %v2811
      %v2820 = vpack.c.b16 %v2814, %v2813
      %v2821 = vpack.c.b16 %v2816, %v2815
      %v2822 = vpack.c.b16 %v2818, %v2817
      %v2843 = vunpack.c.l.b16 %v2787
      %v2844 = vunpack.c.h.b16 %v2787
      %v2845 = vunpack.c.l.b16 %v2788
      %v2846 = vunpack.c.h.b16 %v2788
      %v2847 = vunpack.c.l.b16 %v2789
      %v2848 = vunpack.c.h.b16 %v2789
      %v2849 = vunpack.c.l.b16 %v2790
      %v2850 = vunpack.c.h.b16 %v2790
      %v2851 = vunpack.c.l.b16 %v2791
      %v2852 = vunpack.c.h.b16 %v2791
      %v2853 = vunpack.c.l.b16 %v2792
      %v2854 = vunpack.c.h.b16 %v2792
      %v2855 = vunpack.c.l.b16 %v2793
      %v2856 = vunpack.c.h.b16 %v2793
      %v2857 = vunpack.c.l.b16 %v2794
      %v2858 = vunpack.c.h.b16 %v2794
      %v2859 = vunpack.c.l.b16 %v2795
      %v2860 = vunpack.c.h.b16 %v2795
      %v2861 = vunpack.c.l.b16 %v2796
      %v2862 = vunpack.c.h.b16 %v2796
      %v2863 = vunpack.c.l.b16 %v2797
      %v2864 = vunpack.c.h.b16 %v2797
      %v2865 = vunpack.c.l.b16 %v2798
      %v2866 = vunpack.c.h.b16 %v2798
      %v2867 = vunpack.c.l.b16 %v2799
      %v2868 = vunpack.c.h.b16 %v2799
      %v2869 = vunpack.c.l.b16 %v2800
      %v2870 = vunpack.c.h.b16 %v2800
      %v2871 = vunpack.c.l.b16 %v2801
      %v2872 = vunpack.c.h.b16 %v2801
      %v2873 = vunpack.c.l.b16 %v2802
      %v2874 = vunpack.c.h.b16 %v2802
      %v2875 = vpack.c.b16 %v2845, %v2843
      %v2876 = vpack.c.b16 %v2846, %v2844
      %v2877 = vpack.c.b16 %v2849, %v2847
      %v2878 = vpack.c.b16 %v2850, %v2848
      %v2879 = vpack.c.b16 %v2853, %v2851
      %v2880 = vpack.c.b16 %v2854, %v2852
      %v2881 = vpack.c.b16 %v2857, %v2855
      %v2882 = vpack.c.b16 %v2858, %v2856
      %v2883 = vpack.c.b16 %v2861, %v2859
      %v2884 = vpack.c.b16 %v2862, %v2860
      %v2885 = vpack.c.b16 %v2865, %v2863
      %v2886 = vpack.c.b16 %v2866, %v2864
      %v2887 = vpack.c.b16 %v2869, %v2867
      %v2888 = vpack.c.b16 %v2870, %v2868
      %v2889 = vpack.c.b16 %v2873, %v2871
      %v2890 = vpack.c.b16 %v2874, %v2872
      %2907 = vmatprep.subr.bf16.mxu0 %v2890
      %2908 = vmatpush1.bf16.msra.mxu0 %v2889
      %2909 = vmatprep.subr.bf16.mxu0 %v2888
      %2910 = vmatpush1.bf16.msra.mxu0 %v2887
      %2911 = vmatprep.subr.bf16.mxu0 %v2886
      %2912 = vmatpush1.bf16.msra.mxu0 %v2885
      %2913 = vmatprep.subr.bf16.mxu0 %v2884
      %2914 = vmatpush1.bf16.msra.mxu0 %v2883
      %2915 = vmatprep.subr.bf16.mxu0 %v2882
      %2916 = vmatpush1.bf16.msra.mxu0 %v2881
      %2917 = vmatprep.subr.bf16.mxu0 %v2880
      %2918 = vmatpush1.bf16.msra.mxu0 %v2879
      %2919 = vmatprep.subr.bf16.mxu0 %v2878
      %2920 = vmatpush1.bf16.msra.mxu0 %v2877
      %2921 = vmatprep.subr.bf16.mxu0 %v2876
      %2922 = vmatpush1.bf16.msra.mxu0 %v2875
      %2923 = vmatprep.subr.bf16.mxu0 0
      %2924 = vmatpush2.bf16.msra.mxu0 0
      %2925 = vmatprep.subr.bf16.mxu0 0
      %2926 = vmatpush2.bf16.msra.mxu0 0
      %2927 = vmatprep.subr.bf16.mxu0 0
      %2928 = vmatpush2.bf16.msra.mxu0 0
      %2929 = vmatprep.subr.bf16.mxu0 0
      %2930 = vmatpush2.bf16.msra.mxu0 0
      %2931 = vmatprep.subr.bf16.mxu0 0
      %2932 = vmatpush2.bf16.msra.mxu0 0
      %2933 = vmatprep.subr.bf16.mxu0 0
      %2934 = vmatpush2.bf16.msra.mxu0 0
      %2935 = vmatprep.subr.bf16.mxu0 0
      %2936 = vmatpush2.bf16.msra.mxu0 0
      %2937 = vmatprep.subr.bf16.mxu0 0
      %2938 = vmatpush2.bf16.msra.mxu0 0
      %2939 = vmatprep.mubr.bf16.mxu0 0
      %2940 = vmatmul.mubr.bf16.gmra.mxu0 %v2819
      %v2941 = vpop.f32.mrf.mxu0
      %v2942 = vadd.f32 0.0, %v2941
      %v2943 = vpop.f32.mrf.mxu0
      %v2944 = vadd.f32 0.0, %v2943
      %v2945 = vpop.f32.mrf.mxu0
      %v2946 = vadd.f32 0.0, %v2945
      %v2947 = vpop.f32.mrf.mxu0
      %v2948 = vadd.f32 0.0, %v2947
      %2949 = vmatprep.mubr.bf16.mxu0 0
      %2950 = vmatmul.mubr.bf16.gmra.mxu0 %v2820
      %v2951 = vpop.f32.mrf.mxu0
      %v2952 = vadd.f32 0.0, %v2951
      %v2953 = vpop.f32.mrf.mxu0
      %v2954 = vadd.f32 0.0, %v2953
      %v2955 = vpop.f32.mrf.mxu0
      %v2956 = vadd.f32 0.0, %v2955
      %v2957 = vpop.f32.mrf.mxu0
      %v2958 = vadd.f32 0.0, %v2957
      %2959 = vmatprep.mubr.bf16.mxu0 0
      %2960 = vmatmul.mubr.bf16.gmra.mxu0 %v2821
      %v2961 = vpop.f32.mrf.mxu0
      %v2962 = vadd.f32 0.0, %v2961
      %v2963 = vpop.f32.mrf.mxu0
      %v2964 = vadd.f32 0.0, %v2963
      %v2965 = vpop.f32.mrf.mxu0
      %v2966 = vadd.f32 0.0, %v2965
      %v2967 = vpop.f32.mrf.mxu0
      %v2968 = vadd.f32 0.0, %v2967
      %2969 = vmatprep.mubr.bf16.mxu0 0
      %2970 = vmatmul.mubr.bf16.gmra.mxu0 %v2822
      %v2971 = vpop.f32.mrf.mxu0
      %v2972 = vadd.f32 0.0, %v2971
      %v2973 = vpop.f32.mrf.mxu0
      %v2974 = vadd.f32 0.0, %v2973
      %v2975 = vpop.f32.mrf.mxu0
      %v2976 = vpop.f32.mrf.mxu0
      %2977 = vdwg.mxu0
      %v2978 = vld [vmem:[#allocation3] sm:$0xff]
      %v2979 = vld [vmem:[#allocation3 + $0x8] sm:$0xff]
      %v2980 = vld [vmem:[#allocation3 + $0x10] sm:$0xff]
      %v2981 = vld [vmem:[#allocation3 + $0x18] sm:$0xff]
      %v2982 = vld [vmem:[#allocation3 + $0x20] sm:$0xff]
      %v2983 = vld [vmem:[#allocation3 + $0x28] sm:$0xff]
      %v2984 = vld [vmem:[#allocation3 + $0x30] sm:$0xff]
      %v2985 = vld [vmem:[#allocation3 + $0x38] sm:$0xff]
      %v2986 = vld [vmem:[#allocation3 + $0x40] sm:$0xff]
      %v2987 = vld [vmem:[#allocation3 + $0x48] sm:$0xff]
      %v2988 = vld [vmem:[#allocation3 + $0x50] sm:$0xff]
      %v2989 = vld [vmem:[#allocation3 + $0x58] sm:$0xff]
      %v2990 = vld [vmem:[#allocation3 + $0x60] sm:$0x7f]
      %v2991 = vld [vmem:[#allocation3 + $0x68] sm:$0x7f]
      %v3006 = vrot.slane %v2942, 1
      %v3007 = vrot.slane %v2946, 1
      %v3008 = vsel %vm1633, %v3006, %v3007
      %v3009 = vrot.slane %v2944, 1
      %v3010 = vrot.slane %v2948, 1
      %v3011 = vsel %vm1633, %v3009, %v3010
      %v3012 = vrot.slane %v2952, 1
      %v3013 = vsel %vm1633, %v3007, %v3012
      %v3014 = vrot.slane %v2954, 1
      %v3015 = vsel %vm1633, %v3010, %v3014
      %v3016 = vrot.slane %v2956, 1
      %v3017 = vsel %vm1633, %v3012, %v3016
      %v3018 = vrot.slane %v2958, 1
      %v3019 = vsel %vm1633, %v3014, %v3018
      %v3020 = vrot.slane %v2962, 1
      %v3021 = vsel %vm1633, %v3016, %v3020
      %v3022 = vrot.slane %v2964, 1
      %v3023 = vsel %vm1633, %v3018, %v3022
      %v3024 = vrot.slane %v2966, 1
      %v3025 = vsel %vm1633, %v3020, %v3024
      %v3026 = vrot.slane %v2968, 1
      %v3027 = vsel %vm1633, %v3022, %v3026
      %v3028 = vrot.slane %v2972, 1
      %v3029 = vsel %vm1633, %v3024, %v3028
      %v3030 = vrot.slane %v2974, 1
      %v3031 = vsel %vm1633, %v3026, %v3030
      %v3046 = vadd.f32 %v2978, %v3008
      %v3047 = vadd.f32 %v2979, %v3011
      %v3048 = vadd.f32 %v2980, %v3013
      %v3049 = vadd.f32 %v2981, %v3015
      %v3050 = vadd.f32 %v2982, %v3017
      %v3051 = vadd.f32 %v2983, %v3019
      %v3052 = vadd.f32 %v2984, %v3021
      %v3053 = vadd.f32 %v2985, %v3023
      %v3054 = vadd.f32 %v2986, %v3025
      %v3055 = vadd.f32 %v2987, %v3027
      %v3056 = vadd.f32 %v2988, %v3029
      %v3057 = vadd.f32 %v2989, %v3031
      %v3058 = vadd.f32 %v2990, %v3028
      %v3059 = vadd.f32 %v2991, %v3030
      %3060 = vst [vmem:[#allocation3] sm:$0xff] %v3046
      %3061 = vst [vmem:[#allocation3 + $0x8] sm:$0xff] %v3047
      %3062 = vst [vmem:[#allocation3 + $0x10] sm:$0xff] %v3048
      %3063 = vst [vmem:[#allocation3 + $0x18] sm:$0xff] %v3049
      %3064 = vst [vmem:[#allocation3 + $0x20] sm:$0xff] %v3050
      %3065 = vst [vmem:[#allocation3 + $0x28] sm:$0xff] %v3051
      %3066 = vst [vmem:[#allocation3 + $0x30] sm:$0xff] %v3052
      %3067 = vst [vmem:[#allocation3 + $0x38] sm:$0xff] %v3053
      %3068 = vst [vmem:[#allocation3 + $0x40] sm:$0xff] %v3054
      %3069 = vst [vmem:[#allocation3 + $0x48] sm:$0xff] %v3055
      %3070 = vst [vmem:[#allocation3 + $0x50] sm:$0xff] %v3056
      %3071 = vst [vmem:[#allocation3 + $0x58] sm:$0xff] %v3057
      %3072 = vst [vmem:[#allocation3 + $0x60] sm:$0x7f] %v3058
      %3073 = vst [vmem:[#allocation3 + $0x68] sm:$0x7f] %v3059
      %v3074 = vld [vmem:[#allocation2 + $0x60] sm:$0xf]
      %v3075 = vld [vmem:[#allocation2 + $0x64] sm:$0xf]
      %v3076 = vld [vmem:[#allocation2 + $0x68] sm:$0xf]
      %v3077 = vld [vmem:[#allocation2 + $0x6c] sm:$0xf]
      %v3078 = vld [vmem:[#allocation2 + $0x70] sm:$0xf]
      %v3079 = vld [vmem:[#allocation2 + $0x74] sm:$0xf]
      %v3080 = vld [vmem:[#allocation2 + $0x78] sm:$0xf]
      %v3081 = vld [vmem:[#allocation2 + $0x7c] sm:$0xf]
      %s3082 = scalar_lea.vmem %s4, 1024
      %v3083 = vld [vmem:[%s3082] sm:$0xff]
      %v3084 = vld [vmem:[%s3082 + $0x8] sm:$0xff]
      %v3085 = vld [vmem:[%s3082 + $0x10] sm:$0xff]
      %v3086 = vld [vmem:[%s3082 + $0x18] sm:$0xff]
      %v3087 = vld [vmem:[%s3082 + $0x20] sm:$0xff]
      %v3088 = vld [vmem:[%s3082 + $0x28] sm:$0xff]
      %v3089 = vld [vmem:[%s3082 + $0x30] sm:$0xff]
      %v3090 = vld [vmem:[%s3082 + $0x38] sm:$0xff]
      %v3091 = vld [vmem:[%s3082 + $0x40] sm:$0xff]
      %v3092 = vld [vmem:[%s3082 + $0x48] sm:$0xff]
      %v3093 = vld [vmem:[%s3082 + $0x50] sm:$0xff]
      %v3094 = vld [vmem:[%s3082 + $0x58] sm:$0xff]
      %v3095 = vld [vmem:[%s3082 + $0x60] sm:$0xff]
      %v3096 = vld [vmem:[%s3082 + $0x68] sm:$0xff]
      %v3097 = vld [vmem:[%s3082 + $0x70] sm:$0xff]
      %v3098 = vld [vmem:[%s3082 + $0x78] sm:$0xff]
      %v3107 = vunpack.c.l.b16 %v3074
      %v3108 = vunpack.c.l.b16 %v3075
      %v3109 = vunpack.c.l.b16 %v3076
      %v3110 = vunpack.c.l.b16 %v3077
      %v3111 = vunpack.c.l.b16 %v3078
      %v3112 = vunpack.c.l.b16 %v3079
      %v3113 = vunpack.c.l.b16 %v3080
      %v3114 = vunpack.c.l.b16 %v3081
      %v3115 = vpack.c.b16 %v3108, %v3107
      %v3116 = vpack.c.b16 %v3110, %v3109
      %v3117 = vpack.c.b16 %v3112, %v3111
      %v3118 = vpack.c.b16 %v3114, %v3113
      %v3139 = vunpack.c.l.b16 %v3083
      %v3140 = vunpack.c.h.b16 %v3083
      %v3141 = vunpack.c.l.b16 %v3084
      %v3142 = vunpack.c.h.b16 %v3084
      %v3143 = vunpack.c.l.b16 %v3085
      %v3144 = vunpack.c.h.b16 %v3085
      %v3145 = vunpack.c.l.b16 %v3086
      %v3146 = vunpack.c.h.b16 %v3086
      %v3147 = vunpack.c.l.b16 %v3087
      %v3148 = vunpack.c.h.b16 %v3087
      %v3149 = vunpack.c.l.b16 %v3088
      %v3150 = vunpack.c.h.b16 %v3088
      %v3151 = vunpack.c.l.b16 %v3089
      %v3152 = vunpack.c.h.b16 %v3089
      %v3153 = vunpack.c.l.b16 %v3090
      %v3154 = vunpack.c.h.b16 %v3090
      %v3155 = vunpack.c.l.b16 %v3091
      %v3156 = vunpack.c.h.b16 %v3091
      %v3157 = vunpack.c.l.b16 %v3092
      %v3158 = vunpack.c.h.b16 %v3092
      %v3159 = vunpack.c.l.b16 %v3093
      %v3160 = vunpack.c.h.b16 %v3093
      %v3161 = vunpack.c.l.b16 %v3094
      %v3162 = vunpack.c.h.b16 %v3094
      %v3163 = vunpack.c.l.b16 %v3095
      %v3164 = vunpack.c.h.b16 %v3095
      %v3165 = vunpack.c.l.b16 %v3096
      %v3166 = vunpack.c.h.b16 %v3096
      %v3167 = vunpack.c.l.b16 %v3097
      %v3168 = vunpack.c.h.b16 %v3097
      %v3169 = vunpack.c.l.b16 %v3098
      %v3170 = vunpack.c.h.b16 %v3098
      %v3171 = vpack.c.b16 %v3141, %v3139
      %v3172 = vpack.c.b16 %v3142, %v3140
      %v3173 = vpack.c.b16 %v3145, %v3143
      %v3174 = vpack.c.b16 %v3146, %v3144
      %v3175 = vpack.c.b16 %v3149, %v3147
      %v3176 = vpack.c.b16 %v3150, %v3148
      %v3177 = vpack.c.b16 %v3153, %v3151
      %v3178 = vpack.c.b16 %v3154, %v3152
      %v3179 = vpack.c.b16 %v3157, %v3155
      %v3180 = vpack.c.b16 %v3158, %v3156
      %v3181 = vpack.c.b16 %v3161, %v3159
      %v3182 = vpack.c.b16 %v3162, %v3160
      %v3183 = vpack.c.b16 %v3165, %v3163
      %v3184 = vpack.c.b16 %v3166, %v3164
      %v3185 = vpack.c.b16 %v3169, %v3167
      %v3186 = vpack.c.b16 %v3170, %v3168
      %3203 = vmatprep.subr.bf16.mxu0 %v3186
      %3204 = vmatpush1.bf16.msra.mxu0 %v3185
      %3205 = vmatprep.subr.bf16.mxu0 %v3184
      %3206 = vmatpush1.bf16.msra.mxu0 %v3183
      %3207 = vmatprep.subr.bf16.mxu0 %v3182
      %3208 = vmatpush1.bf16.msra.mxu0 %v3181
      %3209 = vmatprep.subr.bf16.mxu0 %v3180
      %3210 = vmatpush1.bf16.msra.mxu0 %v3179
      %3211 = vmatprep.subr.bf16.mxu0 %v3178
      %3212 = vmatpush1.bf16.msra.mxu0 %v3177
      %3213 = vmatprep.subr.bf16.mxu0 %v3176
      %3214 = vmatpush1.bf16.msra.mxu0 %v3175
      %3215 = vmatprep.subr.bf16.mxu0 %v3174
      %3216 = vmatpush1.bf16.msra.mxu0 %v3173
      %3217 = vmatprep.subr.bf16.mxu0 %v3172
      %3218 = vmatpush1.bf16.msra.mxu0 %v3171
      %3219 = vmatprep.subr.bf16.mxu0 0
      %3220 = vmatpush2.bf16.msra.mxu0 0
      %3221 = vmatprep.subr.bf16.mxu0 0
      %3222 = vmatpush2.bf16.msra.mxu0 0
      %3223 = vmatprep.subr.bf16.mxu0 0
      %3224 = vmatpush2.bf16.msra.mxu0 0
      %3225 = vmatprep.subr.bf16.mxu0 0
      %3226 = vmatpush2.bf16.msra.mxu0 0
      %3227 = vmatprep.subr.bf16.mxu0 0
      %3228 = vmatpush2.bf16.msra.mxu0 0
      %3229 = vmatprep.subr.bf16.mxu0 0
      %3230 = vmatpush2.bf16.msra.mxu0 0
      %3231 = vmatprep.subr.bf16.mxu0 0
      %3232 = vmatpush2.bf16.msra.mxu0 0
      %3233 = vmatprep.subr.bf16.mxu0 0
      %3234 = vmatpush2.bf16.msra.mxu0 0
      %3235 = vmatprep.mubr.bf16.mxu0 0
      %3236 = vmatmul.mubr.bf16.gmra.mxu0 %v3115
      %v3237 = vpop.f32.mrf.mxu0
      %v3238 = vpop.f32.mrf.mxu0
      %v3239 = vpop.f32.mrf.mxu0
      %v3240 = vadd.f32 0.0, %v3239
      %v3241 = vpop.f32.mrf.mxu0
      %v3242 = vadd.f32 0.0, %v3241
      %3243 = vmatprep.mubr.bf16.mxu0 0
      %3244 = vmatmul.mubr.bf16.gmra.mxu0 %v3116
      %v3245 = vpop.f32.mrf.mxu0
      %v3246 = vadd.f32 0.0, %v3245
      %v3247 = vpop.f32.mrf.mxu0
      %v3248 = vadd.f32 0.0, %v3247
      %v3249 = vpop.f32.mrf.mxu0
      %v3250 = vadd.f32 0.0, %v3249
      %v3251 = vpop.f32.mrf.mxu0
      %v3252 = vadd.f32 0.0, %v3251
      %3253 = vmatprep.mubr.bf16.mxu0 0
      %3254 = vmatmul.mubr.bf16.gmra.mxu0 %v3117
      %v3255 = vpop.f32.mrf.mxu0
      %v3256 = vadd.f32 0.0, %v3255
      %v3257 = vpop.f32.mrf.mxu0
      %v3258 = vadd.f32 0.0, %v3257
      %v3259 = vpop.f32.mrf.mxu0
      %v3260 = vadd.f32 0.0, %v3259
      %v3261 = vpop.f32.mrf.mxu0
      %v3262 = vadd.f32 0.0, %v3261
      %3263 = vmatprep.mubr.bf16.mxu0 0
      %3264 = vmatmul.mubr.bf16.gmra.mxu0 %v3118
      %v3265 = vpop.f32.mrf.mxu0
      %v3266 = vadd.f32 0.0, %v3265
      %v3267 = vpop.f32.mrf.mxu0
      %v3268 = vadd.f32 0.0, %v3267
      %v3269 = vpop.f32.mrf.mxu0
      %v3270 = vadd.f32 0.0, %v3269
      %v3271 = vpop.f32.mrf.mxu0
      %v3272 = vadd.f32 0.0, %v3271
      %3273 = vdwg.mxu0
      %v3274 = vld [vmem:[#allocation3] sm:$0xff]
      %v3275 = vld [vmem:[#allocation3 + $0x8] sm:$0xff]
      %v3276 = vld [vmem:[#allocation3 + $0x10] sm:$0xff]
      %v3277 = vld [vmem:[#allocation3 + $0x18] sm:$0xff]
      %v3278 = vld [vmem:[#allocation3 + $0x20] sm:$0xff]
      %v3279 = vld [vmem:[#allocation3 + $0x28] sm:$0xff]
      %v3280 = vld [vmem:[#allocation3 + $0x30] sm:$0xff]
      %v3281 = vld [vmem:[#allocation3 + $0x38] sm:$0xff]
      %v3282 = vld [vmem:[#allocation3 + $0x40] sm:$0xff]
      %v3283 = vld [vmem:[#allocation3 + $0x48] sm:$0xff]
      %v3284 = vld [vmem:[#allocation3 + $0x50] sm:$0xff]
      %v3285 = vld [vmem:[#allocation3 + $0x58] sm:$0xff]
      %v3286 = vld [vmem:[#allocation3 + $0x60] sm:$0x7f]
      %v3287 = vld [vmem:[#allocation3 + $0x68] sm:$0x7f]
      %v3288 = vadd.f32 %v3274, %v3240
      %v3289 = vadd.f32 %v3275, %v3242
      %v3290 = vadd.f32 %v3276, %v3246
      %v3291 = vadd.f32 %v3277, %v3248
      %v3292 = vadd.f32 %v3278, %v3250
      %v3293 = vadd.f32 %v3279, %v3252
      %v3294 = vadd.f32 %v3280, %v3256
      %v3295 = vadd.f32 %v3281, %v3258
      %v3296 = vadd.f32 %v3282, %v3260
      %v3297 = vadd.f32 %v3283, %v3262
      %v3298 = vadd.f32 %v3284, %v3266
      %v3299 = vadd.f32 %v3285, %v3268
      %v3300 = vadd.f32 %v3286, %v3270
      %v3301 = vadd.f32 %v3287, %v3272
      %3302 = vst [vmem:[#allocation3] sm:$0xff] %v3288
      %3303 = vst [vmem:[#allocation3 + $0x8] sm:$0xff] %v3289
      %3304 = vst [vmem:[#allocation3 + $0x10] sm:$0xff] %v3290
      %3305 = vst [vmem:[#allocation3 + $0x18] sm:$0xff] %v3291
      %3306 = vst [vmem:[#allocation3 + $0x20] sm:$0xff] %v3292
      %3307 = vst [vmem:[#allocation3 + $0x28] sm:$0xff] %v3293
      %3308 = vst [vmem:[#allocation3 + $0x30] sm:$0xff] %v3294
      %3309 = vst [vmem:[#allocation3 + $0x38] sm:$0xff] %v3295
      %3310 = vst [vmem:[#allocation3 + $0x40] sm:$0xff] %v3296
      %3311 = vst [vmem:[#allocation3 + $0x48] sm:$0xff] %v3297
      %3312 = vst [vmem:[#allocation3 + $0x50] sm:$0xff] %v3298
      %3313 = vst [vmem:[#allocation3 + $0x58] sm:$0xff] %v3299
      %3314 = vst [vmem:[#allocation3 + $0x60] sm:$0x7f] %v3300
      %3315 = vst [vmem:[#allocation3 + $0x68] sm:$0x7f] %v3301
      %v3316 = vld [vmem:[#allocation2 + $0x40] sm:$0xf]
      %v3317 = vld [vmem:[#allocation2 + $0x44] sm:$0xf]
      %v3318 = vld [vmem:[#allocation2 + $0x48] sm:$0xf]
      %v3319 = vld [vmem:[#allocation2 + $0x4c] sm:$0xf]
      %v3320 = vld [vmem:[#allocation2 + $0x50] sm:$0xf]
      %v3321 = vld [vmem:[#allocation2 + $0x54] sm:$0xf]
      %v3322 = vld [vmem:[#allocation2 + $0x58] sm:$0xf]
      %v3323 = vld [vmem:[#allocation2 + $0x5c] sm:$0xf]
      %s3324 = scalar_lea.vmem %s4, 1152
      %v3325 = vld [vmem:[%s3324] sm:$0xff]
      %v3326 = vld [vmem:[%s3324 + $0x8] sm:$0xff]
      %v3327 = vld [vmem:[%s3324 + $0x10] sm:$0xff]
      %v3328 = vld [vmem:[%s3324 + $0x18] sm:$0xff]
      %v3329 = vld [vmem:[%s3324 + $0x20] sm:$0xff]
      %v3330 = vld [vmem:[%s3324 + $0x28] sm:$0xff]
      %v3331 = vld [vmem:[%s3324 + $0x30] sm:$0xff]
      %v3332 = vld [vmem:[%s3324 + $0x38] sm:$0xff]
      %v3333 = vld [vmem:[%s3324 + $0x40] sm:$0xff]
      %v3334 = vld [vmem:[%s3324 + $0x48] sm:$0xff]
      %v3335 = vld [vmem:[%s3324 + $0x50] sm:$0xff]
      %v3336 = vld [vmem:[%s3324 + $0x58] sm:$0xff]
      %v3337 = vld [vmem:[%s3324 + $0x60] sm:$0xff]
      %v3338 = vld [vmem:[%s3324 + $0x68] sm:$0xff]
      %v3339 = vld [vmem:[%s3324 + $0x70] sm:$0xff]
      %v3340 = vld [vmem:[%s3324 + $0x78] sm:$0xff]
      %v3349 = vunpack.c.l.b16 %v3316
      %v3350 = vunpack.c.l.b16 %v3317
      %v3351 = vunpack.c.l.b16 %v3318
      %v3352 = vunpack.c.l.b16 %v3319
      %v3353 = vunpack.c.l.b16 %v3320
      %v3354 = vunpack.c.l.b16 %v3321
      %v3355 = vunpack.c.l.b16 %v3322
      %v3356 = vunpack.c.l.b16 %v3323
      %v3357 = vpack.c.b16 %v3350, %v3349
      %v3358 = vpack.c.b16 %v3352, %v3351
      %v3359 = vpack.c.b16 %v3354, %v3353
      %v3360 = vpack.c.b16 %v3356, %v3355
      %v3381 = vunpack.c.l.b16 %v3325
      %v3382 = vunpack.c.h.b16 %v3325
      %v3383 = vunpack.c.l.b16 %v3326
      %v3384 = vunpack.c.h.b16 %v3326
      %v3385 = vunpack.c.l.b16 %v3327
      %v3386 = vunpack.c.h.b16 %v3327
      %v3387 = vunpack.c.l.b16 %v3328
      %v3388 = vunpack.c.h.b16 %v3328
      %v3389 = vunpack.c.l.b16 %v3329
      %v3390 = vunpack.c.h.b16 %v3329
      %v3391 = vunpack.c.l.b16 %v3330
      %v3392 = vunpack.c.h.b16 %v3330
      %v3393 = vunpack.c.l.b16 %v3331
      %v3394 = vunpack.c.h.b16 %v3331
      %v3395 = vunpack.c.l.b16 %v3332
      %v3396 = vunpack.c.h.b16 %v3332
      %v3397 = vunpack.c.l.b16 %v3333
      %v3398 = vunpack.c.h.b16 %v3333
      %v3399 = vunpack.c.l.b16 %v3334
      %v3400 = vunpack.c.h.b16 %v3334
      %v3401 = vunpack.c.l.b16 %v3335
      %v3402 = vunpack.c.h.b16 %v3335
      %v3403 = vunpack.c.l.b16 %v3336
      %v3404 = vunpack.c.h.b16 %v3336
      %v3405 = vunpack.c.l.b16 %v3337
      %v3406 = vunpack.c.h.b16 %v3337
      %v3407 = vunpack.c.l.b16 %v3338
      %v3408 = vunpack.c.h.b16 %v3338
      %v3409 = vunpack.c.l.b16 %v3339
      %v3410 = vunpack.c.h.b16 %v3339
      %v3411 = vunpack.c.l.b16 %v3340
      %v3412 = vunpack.c.h.b16 %v3340
      %v3413 = vpack.c.b16 %v3383, %v3381
      %v3414 = vpack.c.b16 %v3384, %v3382
      %v3415 = vpack.c.b16 %v3387, %v3385
      %v3416 = vpack.c.b16 %v3388, %v3386
      %v3417 = vpack.c.b16 %v3391, %v3389
      %v3418 = vpack.c.b16 %v3392, %v3390
      %v3419 = vpack.c.b16 %v3395, %v3393
      %v3420 = vpack.c.b16 %v3396, %v3394
      %v3421 = vpack.c.b16 %v3399, %v3397
      %v3422 = vpack.c.b16 %v3400, %v3398
      %v3423 = vpack.c.b16 %v3403, %v3401
      %v3424 = vpack.c.b16 %v3404, %v3402
      %v3425 = vpack.c.b16 %v3407, %v3405
      %v3426 = vpack.c.b16 %v3408, %v3406
      %v3427 = vpack.c.b16 %v3411, %v3409
      %v3428 = vpack.c.b16 %v3412, %v3410
      %3445 = vmatprep.subr.bf16.mxu0 %v3428
      %3446 = vmatpush1.bf16.msra.mxu0 %v3427
      %3447 = vmatprep.subr.bf16.mxu0 %v3426
      %3448 = vmatpush1.bf16.msra.mxu0 %v3425
      %3449 = vmatprep.subr.bf16.mxu0 %v3424
      %3450 = vmatpush1.bf16.msra.mxu0 %v3423
      %3451 = vmatprep.subr.bf16.mxu0 %v3422
      %3452 = vmatpush1.bf16.msra.mxu0 %v3421
      %3453 = vmatprep.subr.bf16.mxu0 %v3420
      %3454 = vmatpush1.bf16.msra.mxu0 %v3419
      %3455 = vmatprep.subr.bf16.mxu0 %v3418
      %3456 = vmatpush1.bf16.msra.mxu0 %v3417
      %3457 = vmatprep.subr.bf16.mxu0 %v3416
      %3458 = vmatpush1.bf16.msra.mxu0 %v3415
      %3459 = vmatprep.subr.bf16.mxu0 %v3414
      %3460 = vmatpush1.bf16.msra.mxu0 %v3413
      %3461 = vmatprep.subr.bf16.mxu0 0
      %3462 = vmatpush2.bf16.msra.mxu0 0
      %3463 = vmatprep.subr.bf16.mxu0 0
      %3464 = vmatpush2.bf16.msra.mxu0 0
      %3465 = vmatprep.subr.bf16.mxu0 0
      %3466 = vmatpush2.bf16.msra.mxu0 0
      %3467 = vmatprep.subr.bf16.mxu0 0
      %3468 = vmatpush2.bf16.msra.mxu0 0
      %3469 = vmatprep.subr.bf16.mxu0 0
      %3470 = vmatpush2.bf16.msra.mxu0 0
      %3471 = vmatprep.subr.bf16.mxu0 0
      %3472 = vmatpush2.bf16.msra.mxu0 0
      %3473 = vmatprep.subr.bf16.mxu0 0
      %3474 = vmatpush2.bf16.msra.mxu0 0
      %3475 = vmatprep.subr.bf16.mxu0 0
      %3476 = vmatpush2.bf16.msra.mxu0 0
      %3477 = vmatprep.mubr.bf16.mxu0 0
      %3478 = vmatmul.mubr.bf16.gmra.mxu0 %v3357
      %v3479 = vpop.f32.mrf.mxu0
      %v3480 = vpop.f32.mrf.mxu0
      %v3481 = vpop.f32.mrf.mxu0
      %v3482 = vadd.f32 0.0, %v3481
      %v3483 = vpop.f32.mrf.mxu0
      %v3484 = vadd.f32 0.0, %v3483
      %3485 = vmatprep.mubr.bf16.mxu0 0
      %3486 = vmatmul.mubr.bf16.gmra.mxu0 %v3358
      %v3487 = vpop.f32.mrf.mxu0
      %v3488 = vadd.f32 0.0, %v3487
      %v3489 = vpop.f32.mrf.mxu0
      %v3490 = vadd.f32 0.0, %v3489
      %v3491 = vpop.f32.mrf.mxu0
      %v3492 = vadd.f32 0.0, %v3491
      %v3493 = vpop.f32.mrf.mxu0
      %v3494 = vadd.f32 0.0, %v3493
      %3495 = vmatprep.mubr.bf16.mxu0 0
      %3496 = vmatmul.mubr.bf16.gmra.mxu0 %v3359
      %v3497 = vpop.f32.mrf.mxu0
      %v3498 = vadd.f32 0.0, %v3497
      %v3499 = vpop.f32.mrf.mxu0
      %v3500 = vadd.f32 0.0, %v3499
      %v3501 = vpop.f32.mrf.mxu0
      %v3502 = vadd.f32 0.0, %v3501
      %v3503 = vpop.f32.mrf.mxu0
      %v3504 = vadd.f32 0.0, %v3503
      %3505 = vmatprep.mubr.bf16.mxu0 0
      %3506 = vmatmul.mubr.bf16.gmra.mxu0 %v3360
      %v3507 = vpop.f32.mrf.mxu0
      %v3508 = vadd.f32 0.0, %v3507
      %v3509 = vpop.f32.mrf.mxu0
      %v3510 = vadd.f32 0.0, %v3509
      %v3511 = vpop.f32.mrf.mxu0
      %v3512 = vadd.f32 0.0, %v3511
      %v3513 = vpop.f32.mrf.mxu0
      %v3514 = vadd.f32 0.0, %v3513
      %3515 = vdwg.mxu0
      %v3516 = vld [vmem:[#allocation3] sm:$0xff]
      %v3517 = vld [vmem:[#allocation3 + $0x8] sm:$0xff]
      %v3518 = vld [vmem:[#allocation3 + $0x10] sm:$0xff]
      %v3519 = vld [vmem:[#allocation3 + $0x18] sm:$0xff]
      %v3520 = vld [vmem:[#allocation3 + $0x20] sm:$0xff]
      %v3521 = vld [vmem:[#allocation3 + $0x28] sm:$0xff]
      %v3522 = vld [vmem:[#allocation3 + $0x30] sm:$0xff]
      %v3523 = vld [vmem:[#allocation3 + $0x38] sm:$0xff]
      %v3524 = vld [vmem:[#allocation3 + $0x40] sm:$0xff]
      %v3525 = vld [vmem:[#allocation3 + $0x48] sm:$0xff]
      %v3526 = vld [vmem:[#allocation3 + $0x50] sm:$0xff]
      %v3527 = vld [vmem:[#allocation3 + $0x58] sm:$0xff]
      %v3528 = vld [vmem:[#allocation3 + $0x60] sm:$0x7f]
      %v3529 = vld [vmem:[#allocation3 + $0x68] sm:$0x7f]
      %v3530 = vadd.f32 %v3516, %v3482
      %v3531 = vadd.f32 %v3517, %v3484
      %v3532 = vadd.f32 %v3518, %v3488
      %v3533 = vadd.f32 %v3519, %v3490
      %v3534 = vadd.f32 %v3520, %v3492
      %v3535 = vadd.f32 %v3521, %v3494
      %v3536 = vadd.f32 %v3522, %v3498
      %v3537 = vadd.f32 %v3523, %v3500
      %v3538 = vadd.f32 %v3524, %v3502
      %v3539 = vadd.f32 %v3525, %v3504
      %v3540 = vadd.f32 %v3526, %v3508
      %v3541 = vadd.f32 %v3527, %v3510
      %v3542 = vadd.f32 %v3528, %v3512
      %v3543 = vadd.f32 %v3529, %v3514
      %3544 = vst [vmem:[#allocation3] sm:$0xff] %v3530
      %3545 = vst [vmem:[#allocation3 + $0x8] sm:$0xff] %v3531
      %3546 = vst [vmem:[#allocation3 + $0x10] sm:$0xff] %v3532
      %3547 = vst [vmem:[#allocation3 + $0x18] sm:$0xff] %v3533
      %3548 = vst [vmem:[#allocation3 + $0x20] sm:$0xff] %v3534
      %3549 = vst [vmem:[#allocation3 + $0x28] sm:$0xff] %v3535
      %3550 = vst [vmem:[#allocation3 + $0x30] sm:$0xff] %v3536
      %3551 = vst [vmem:[#allocation3 + $0x38] sm:$0xff] %v3537
      %3552 = vst [vmem:[#allocation3 + $0x40] sm:$0xff] %v3538
      %3553 = vst [vmem:[#allocation3 + $0x48] sm:$0xff] %v3539
      %3554 = vst [vmem:[#allocation3 + $0x50] sm:$0xff] %v3540
      %3555 = vst [vmem:[#allocation3 + $0x58] sm:$0xff] %v3541
      %3556 = vst [vmem:[#allocation3 + $0x60] sm:$0x7f] %v3542
      %3557 = vst [vmem:[#allocation3 + $0x68] sm:$0x7f] %v3543
      %v3558 = vld [vmem:[#allocation2 + $0x60] sm:$0xf]
      %v3559 = vld [vmem:[#allocation2 + $0x64] sm:$0xf]
      %v3560 = vld [vmem:[#allocation2 + $0x68] sm:$0xf]
      %v3561 = vld [vmem:[#allocation2 + $0x6c] sm:$0xf]
      %v3562 = vld [vmem:[#allocation2 + $0x70] sm:$0xf]
      %v3563 = vld [vmem:[#allocation2 + $0x74] sm:$0xf]
      %v3564 = vld [vmem:[#allocation2 + $0x78] sm:$0xf]
      %v3565 = vld [vmem:[#allocation2 + $0x7c] sm:$0xf]
      %s3566 = scalar_lea.vmem %s4, 1280
      %v3567 = vld [vmem:[%s3566] sm:$0xff]
      %v3568 = vld [vmem:[%s3566 + $0x8] sm:$0xff]
      %v3569 = vld [vmem:[%s3566 + $0x10] sm:$0xff]
      %v3570 = vld [vmem:[%s3566 + $0x18] sm:$0xff]
      %v3571 = vld [vmem:[%s3566 + $0x20] sm:$0xff]
      %v3572 = vld [vmem:[%s3566 + $0x28] sm:$0xff]
      %v3573 = vld [vmem:[%s3566 + $0x30] sm:$0xff]
      %v3574 = vld [vmem:[%s3566 + $0x38] sm:$0xff]
      %v3575 = vld [vmem:[%s3566 + $0x40] sm:$0xff]
      %v3576 = vld [vmem:[%s3566 + $0x48] sm:$0xff]
      %v3577 = vld [vmem:[%s3566 + $0x50] sm:$0xff]
      %v3578 = vld [vmem:[%s3566 + $0x58] sm:$0xff]
      %v3579 = vld [vmem:[%s3566 + $0x60] sm:$0xff]
      %v3580 = vld [vmem:[%s3566 + $0x68] sm:$0xff]
      %v3581 = vld [vmem:[%s3566 + $0x70] sm:$0xff]
      %v3582 = vld [vmem:[%s3566 + $0x78] sm:$0xff]
      %v3591 = vunpack.c.l.b16 %v3558
      %v3592 = vunpack.c.l.b16 %v3559
      %v3593 = vunpack.c.l.b16 %v3560
      %v3594 = vunpack.c.l.b16 %v3561
      %v3595 = vunpack.c.l.b16 %v3562
      %v3596 = vunpack.c.l.b16 %v3563
      %v3597 = vunpack.c.l.b16 %v3564
      %v3598 = vunpack.c.l.b16 %v3565
      %v3599 = vpack.c.b16 %v3592, %v3591
      %v3600 = vpack.c.b16 %v3594, %v3593
      %v3601 = vpack.c.b16 %v3596, %v3595
      %v3602 = vpack.c.b16 %v3598, %v3597
      %v3623 = vunpack.c.l.b16 %v3567
      %v3624 = vunpack.c.h.b16 %v3567
      %v3625 = vunpack.c.l.b16 %v3568
      %v3626 = vunpack.c.h.b16 %v3568
      %v3627 = vunpack.c.l.b16 %v3569
      %v3628 = vunpack.c.h.b16 %v3569
      %v3629 = vunpack.c.l.b16 %v3570
      %v3630 = vunpack.c.h.b16 %v3570
      %v3631 = vunpack.c.l.b16 %v3571
      %v3632 = vunpack.c.h.b16 %v3571
      %v3633 = vunpack.c.l.b16 %v3572
      %v3634 = vunpack.c.h.b16 %v3572
      %v3635 = vunpack.c.l.b16 %v3573
      %v3636 = vunpack.c.h.b16 %v3573
      %v3637 = vunpack.c.l.b16 %v3574
      %v3638 = vunpack.c.h.b16 %v3574
      %v3639 = vunpack.c.l.b16 %v3575
      %v3640 = vunpack.c.h.b16 %v3575
      %v3641 = vunpack.c.l.b16 %v3576
      %v3642 = vunpack.c.h.b16 %v3576
      %v3643 = vunpack.c.l.b16 %v3577
      %v3644 = vunpack.c.h.b16 %v3577
      %v3645 = vunpack.c.l.b16 %v3578
      %v3646 = vunpack.c.h.b16 %v3578
      %v3647 = vunpack.c.l.b16 %v3579
      %v3648 = vunpack.c.h.b16 %v3579
      %v3649 = vunpack.c.l.b16 %v3580
      %v3650 = vunpack.c.h.b16 %v3580
      %v3651 = vunpack.c.l.b16 %v3581
      %v3652 = vunpack.c.h.b16 %v3581
      %v3653 = vunpack.c.l.b16 %v3582
      %v3654 = vunpack.c.h.b16 %v3582
      %v3655 = vpack.c.b16 %v3625, %v3623
      %v3656 = vpack.c.b16 %v3626, %v3624
      %v3657 = vpack.c.b16 %v3629, %v3627
      %v3658 = vpack.c.b16 %v3630, %v3628
      %v3659 = vpack.c.b16 %v3633, %v3631
      %v3660 = vpack.c.b16 %v3634, %v3632
      %v3661 = vpack.c.b16 %v3637, %v3635
      %v3662 = vpack.c.b16 %v3638, %v3636
      %v3663 = vpack.c.b16 %v3641, %v3639
      %v3664 = vpack.c.b16 %v3642, %v3640
      %v3665 = vpack.c.b16 %v3645, %v3643
      %v3666 = vpack.c.b16 %v3646, %v3644
      %v3667 = vpack.c.b16 %v3649, %v3647
      %v3668 = vpack.c.b16 %v3650, %v3648
      %v3669 = vpack.c.b16 %v3653, %v3651
      %v3670 = vpack.c.b16 %v3654, %v3652
      %3687 = vmatprep.subr.bf16.mxu0 %v3670
      %3688 = vmatpush1.bf16.msra.mxu0 %v3669
      %3689 = vmatprep.subr.bf16.mxu0 %v3668
      %3690 = vmatpush1.bf16.msra.mxu0 %v3667
      %3691 = vmatprep.subr.bf16.mxu0 %v3666
      %3692 = vmatpush1.bf16.msra.mxu0 %v3665
      %3693 = vmatprep.subr.bf16.mxu0 %v3664
      %3694 = vmatpush1.bf16.msra.mxu0 %v3663
      %3695 = vmatprep.subr.bf16.mxu0 %v3662
      %3696 = vmatpush1.bf16.msra.mxu0 %v3661
      %3697 = vmatprep.subr.bf16.mxu0 %v3660
      %3698 = vmatpush1.bf16.msra.mxu0 %v3659
      %3699 = vmatprep.subr.bf16.mxu0 %v3658
      %3700 = vmatpush1.bf16.msra.mxu0 %v3657
      %3701 = vmatprep.subr.bf16.mxu0 %v3656
      %3702 = vmatpush1.bf16.msra.mxu0 %v3655
      %3703 = vmatprep.subr.bf16.mxu0 0
      %3704 = vmatpush2.bf16.msra.mxu0 0
      %3705 = vmatprep.subr.bf16.mxu0 0
      %3706 = vmatpush2.bf16.msra.mxu0 0
      %3707 = vmatprep.subr.bf16.mxu0 0
      %3708 = vmatpush2.bf16.msra.mxu0 0
      %3709 = vmatprep.subr.bf16.mxu0 0
      %3710 = vmatpush2.bf16.msra.mxu0 0
      %3711 = vmatprep.subr.bf16.mxu0 0
      %3712 = vmatpush2.bf16.msra.mxu0 0
      %3713 = vmatprep.subr.bf16.mxu0 0
      %3714 = vmatpush2.bf16.msra.mxu0 0
      %3715 = vmatprep.subr.bf16.mxu0 0
      %3716 = vmatpush2.bf16.msra.mxu0 0
      %3717 = vmatprep.subr.bf16.mxu0 0
      %3718 = vmatpush2.bf16.msra.mxu0 0
      %3719 = vmatprep.mubr.bf16.mxu0 0
      %3720 = vmatmul.mubr.bf16.gmra.mxu0 %v3599
      %v3721 = vpop.f32.mrf.mxu0
      %v3722 = vpop.f32.mrf.mxu0
      %v3723 = vpop.f32.mrf.mxu0
      %v3724 = vadd.f32 0.0, %v3723
      %v3725 = vpop.f32.mrf.mxu0
      %v3726 = vadd.f32 0.0, %v3725
      %3727 = vmatprep.mubr.bf16.mxu0 0
      %3728 = vmatmul.mubr.bf16.gmra.mxu0 %v3600
      %v3729 = vpop.f32.mrf.mxu0
      %v3730 = vadd.f32 0.0, %v3729
      %v3731 = vpop.f32.mrf.mxu0
      %v3732 = vadd.f32 0.0, %v3731
      %v3733 = vpop.f32.mrf.mxu0
      %v3734 = vadd.f32 0.0, %v3733
      %v3735 = vpop.f32.mrf.mxu0
      %v3736 = vadd.f32 0.0, %v3735
      %3737 = vmatprep.mubr.bf16.mxu0 0
      %3738 = vmatmul.mubr.bf16.gmra.mxu0 %v3601
      %v3739 = vpop.f32.mrf.mxu0
      %v3740 = vadd.f32 0.0, %v3739
      %v3741 = vpop.f32.mrf.mxu0
      %v3742 = vadd.f32 0.0, %v3741
      %v3743 = vpop.f32.mrf.mxu0
      %v3744 = vadd.f32 0.0, %v3743
      %v3745 = vpop.f32.mrf.mxu0
      %v3746 = vadd.f32 0.0, %v3745
      %3747 = vmatprep.mubr.bf16.mxu0 0
      %3748 = vmatmul.mubr.bf16.gmra.mxu0 %v3602
      %v3749 = vpop.f32.mrf.mxu0
      %v3750 = vadd.f32 0.0, %v3749
      %v3751 = vpop.f32.mrf.mxu0
      %v3752 = vadd.f32 0.0, %v3751
      %v3753 = vpop.f32.mrf.mxu0
      %v3754 = vadd.f32 0.0, %v3753
      %v3755 = vpop.f32.mrf.mxu0
      %v3756 = vadd.f32 0.0, %v3755
      %3757 = vdwg.mxu0
      %v3758 = vld [vmem:[#allocation3] sm:$0xff]
      %v3759 = vld [vmem:[#allocation3 + $0x8] sm:$0xff]
      %v3760 = vld [vmem:[#allocation3 + $0x10] sm:$0xff]
      %v3761 = vld [vmem:[#allocation3 + $0x18] sm:$0xff]
      %v3762 = vld [vmem:[#allocation3 + $0x20] sm:$0xff]
      %v3763 = vld [vmem:[#allocation3 + $0x28] sm:$0xff]
      %v3764 = vld [vmem:[#allocation3 + $0x30] sm:$0xff]
      %v3765 = vld [vmem:[#allocation3 + $0x38] sm:$0xff]
      %v3766 = vld [vmem:[#allocation3 + $0x40] sm:$0xff]
      %v3767 = vld [vmem:[#allocation3 + $0x48] sm:$0xff]
      %v3768 = vld [vmem:[#allocation3 + $0x50] sm:$0xff]
      %v3769 = vld [vmem:[#allocation3 + $0x58] sm:$0xff]
      %v3770 = vld [vmem:[#allocation3 + $0x60] sm:$0x7f]
      %v3771 = vld [vmem:[#allocation3 + $0x68] sm:$0x7f]
      %v3786 = vrot.slane %v3724, 1
      %v3787 = vrot.slane %v3730, 1
      %v3788 = vsel %vm1633, %v3786, %v3787
      %v3789 = vrot.slane %v3726, 1
      %v3790 = vrot.slane %v3732, 1
      %v3791 = vsel %vm1633, %v3789, %v3790
      %v3792 = vrot.slane %v3734, 1
      %v3793 = vsel %vm1633, %v3787, %v3792
      %v3794 = vrot.slane %v3736, 1
      %v3795 = vsel %vm1633, %v3790, %v3794
      %v3796 = vrot.slane %v3740, 1
      %v3797 = vsel %vm1633, %v3792, %v3796
      %v3798 = vrot.slane %v3742, 1
      %v3799 = vsel %vm1633, %v3794, %v3798
      %v3800 = vrot.slane %v3744, 1
      %v3801 = vsel %vm1633, %v3796, %v3800
      %v3802 = vrot.slane %v3746, 1
      %v3803 = vsel %vm1633, %v3798, %v3802
      %v3804 = vrot.slane %v3750, 1
      %v3805 = vsel %vm1633, %v3800, %v3804
      %v3806 = vrot.slane %v3752, 1
      %v3807 = vsel %vm1633, %v3802, %v3806
      %v3808 = vrot.slane %v3754, 1
      %v3809 = vsel %vm1633, %v3804, %v3808
      %v3810 = vrot.slane %v3756, 1
      %v3811 = vsel %vm1633, %v3806, %v3810
      %v3826 = vadd.f32 %v3758, %v3788
      %v3827 = vadd.f32 %v3759, %v3791
      %v3828 = vadd.f32 %v3760, %v3793
      %v3829 = vadd.f32 %v3761, %v3795
      %v3830 = vadd.f32 %v3762, %v3797
      %v3831 = vadd.f32 %v3763, %v3799
      %v3832 = vadd.f32 %v3764, %v3801
      %v3833 = vadd.f32 %v3765, %v3803
      %v3834 = vadd.f32 %v3766, %v3805
      %v3835 = vadd.f32 %v3767, %v3807
      %v3836 = vadd.f32 %v3768, %v3809
      %v3837 = vadd.f32 %v3769, %v3811
      %v3838 = vadd.f32 %v3770, %v3808
      %v3839 = vadd.f32 %v3771, %v3810
      %3840 = vst [vmem:[#allocation3] sm:$0xff] %v3826
      %3841 = vst [vmem:[#allocation3 + $0x8] sm:$0xff] %v3827
      %3842 = vst [vmem:[#allocation3 + $0x10] sm:$0xff] %v3828
      %3843 = vst [vmem:[#allocation3 + $0x18] sm:$0xff] %v3829
      %3844 = vst [vmem:[#allocation3 + $0x20] sm:$0xff] %v3830
      %3845 = vst [vmem:[#allocation3 + $0x28] sm:$0xff] %v3831
      %3846 = vst [vmem:[#allocation3 + $0x30] sm:$0xff] %v3832
      %3847 = vst [vmem:[#allocation3 + $0x38] sm:$0xff] %v3833
      %3848 = vst [vmem:[#allocation3 + $0x40] sm:$0xff] %v3834
      %3849 = vst [vmem:[#allocation3 + $0x48] sm:$0xff] %v3835
      %3850 = vst [vmem:[#allocation3 + $0x50] sm:$0xff] %v3836
      %3851 = vst [vmem:[#allocation3 + $0x58] sm:$0xff] %v3837
      %3852 = vst [vmem:[#allocation3 + $0x60] sm:$0x7f] %v3838
      %3853 = vst [vmem:[#allocation3 + $0x68] sm:$0x7f] %v3839
      %v3854 = vld [vmem:[#allocation2 + $0x40] sm:$0xf]
      %v3855 = vld [vmem:[#allocation2 + $0x44] sm:$0xf]
      %v3856 = vld [vmem:[#allocation2 + $0x48] sm:$0xf]
      %v3857 = vld [vmem:[#allocation2 + $0x4c] sm:$0xf]
      %v3858 = vld [vmem:[#allocation2 + $0x50] sm:$0xf]
      %v3859 = vld [vmem:[#allocation2 + $0x54] sm:$0xf]
      %v3860 = vld [vmem:[#allocation2 + $0x58] sm:$0xf]
      %v3861 = vld [vmem:[#allocation2 + $0x5c] sm:$0xf]
      %s3862 = scalar_lea.vmem %s4, 1408
      %v3863 = vld [vmem:[%s3862] sm:$0xff]
      %v3864 = vld [vmem:[%s3862 + $0x8] sm:$0xff]
      %v3865 = vld [vmem:[%s3862 + $0x10] sm:$0xff]
      %v3866 = vld [vmem:[%s3862 + $0x18] sm:$0xff]
      %v3867 = vld [vmem:[%s3862 + $0x20] sm:$0xff]
      %v3868 = vld [vmem:[%s3862 + $0x28] sm:$0xff]
      %v3869 = vld [vmem:[%s3862 + $0x30] sm:$0xff]
      %v3870 = vld [vmem:[%s3862 + $0x38] sm:$0xff]
      %v3871 = vld [vmem:[%s3862 + $0x40] sm:$0xff]
      %v3872 = vld [vmem:[%s3862 + $0x48] sm:$0xff]
      %v3873 = vld [vmem:[%s3862 + $0x50] sm:$0xff]
      %v3874 = vld [vmem:[%s3862 + $0x58] sm:$0xff]
      %v3875 = vld [vmem:[%s3862 + $0x60] sm:$0xff]
      %v3876 = vld [vmem:[%s3862 + $0x68] sm:$0xff]
      %v3877 = vld [vmem:[%s3862 + $0x70] sm:$0xff]
      %v3878 = vld [vmem:[%s3862 + $0x78] sm:$0xff]
      %v3887 = vunpack.c.l.b16 %v3854
      %v3888 = vunpack.c.l.b16 %v3855
      %v3889 = vunpack.c.l.b16 %v3856
      %v3890 = vunpack.c.l.b16 %v3857
      %v3891 = vunpack.c.l.b16 %v3858
      %v3892 = vunpack.c.l.b16 %v3859
      %v3893 = vunpack.c.l.b16 %v3860
      %v3894 = vunpack.c.l.b16 %v3861
      %v3895 = vpack.c.b16 %v3888, %v3887
      %v3896 = vpack.c.b16 %v3890, %v3889
      %v3897 = vpack.c.b16 %v3892, %v3891
      %v3898 = vpack.c.b16 %v3894, %v3893
      %v3919 = vunpack.c.l.b16 %v3863
      %v3920 = vunpack.c.h.b16 %v3863
      %v3921 = vunpack.c.l.b16 %v3864
      %v3922 = vunpack.c.h.b16 %v3864
      %v3923 = vunpack.c.l.b16 %v3865
      %v3924 = vunpack.c.h.b16 %v3865
      %v3925 = vunpack.c.l.b16 %v3866
      %v3926 = vunpack.c.h.b16 %v3866
      %v3927 = vunpack.c.l.b16 %v3867
      %v3928 = vunpack.c.h.b16 %v3867
      %v3929 = vunpack.c.l.b16 %v3868
      %v3930 = vunpack.c.h.b16 %v3868
      %v3931 = vunpack.c.l.b16 %v3869
      %v3932 = vunpack.c.h.b16 %v3869
      %v3933 = vunpack.c.l.b16 %v3870
      %v3934 = vunpack.c.h.b16 %v3870
      %v3935 = vunpack.c.l.b16 %v3871
      %v3936 = vunpack.c.h.b16 %v3871
      %v3937 = vunpack.c.l.b16 %v3872
      %v3938 = vunpack.c.h.b16 %v3872
      %v3939 = vunpack.c.l.b16 %v3873
      %v3940 = vunpack.c.h.b16 %v3873
      %v3941 = vunpack.c.l.b16 %v3874
      %v3942 = vunpack.c.h.b16 %v3874
      %v3943 = vunpack.c.l.b16 %v3875
      %v3944 = vunpack.c.h.b16 %v3875
      %v3945 = vunpack.c.l.b16 %v3876
      %v3946 = vunpack.c.h.b16 %v3876
      %v3947 = vunpack.c.l.b16 %v3877
      %v3948 = vunpack.c.h.b16 %v3877
      %v3949 = vunpack.c.l.b16 %v3878
      %v3950 = vunpack.c.h.b16 %v3878
      %v3951 = vpack.c.b16 %v3921, %v3919
      %v3952 = vpack.c.b16 %v3922, %v3920
      %v3953 = vpack.c.b16 %v3925, %v3923
      %v3954 = vpack.c.b16 %v3926, %v3924
      %v3955 = vpack.c.b16 %v3929, %v3927
      %v3956 = vpack.c.b16 %v3930, %v3928
      %v3957 = vpack.c.b16 %v3933, %v3931
      %v3958 = vpack.c.b16 %v3934, %v3932
      %v3959 = vpack.c.b16 %v3937, %v3935
      %v3960 = vpack.c.b16 %v3938, %v3936
      %v3961 = vpack.c.b16 %v3941, %v3939
      %v3962 = vpack.c.b16 %v3942, %v3940
      %v3963 = vpack.c.b16 %v3945, %v3943
      %v3964 = vpack.c.b16 %v3946, %v3944
      %v3965 = vpack.c.b16 %v3949, %v3947
      %v3966 = vpack.c.b16 %v3950, %v3948
      %3983 = vmatprep.subr.bf16.mxu0 %v3966
      %3984 = vmatpush1.bf16.msra.mxu0 %v3965
      %3985 = vmatprep.subr.bf16.mxu0 %v3964
      %3986 = vmatpush1.bf16.msra.mxu0 %v3963
      %3987 = vmatprep.subr.bf16.mxu0 %v3962
      %3988 = vmatpush1.bf16.msra.mxu0 %v3961
      %3989 = vmatprep.subr.bf16.mxu0 %v3960
      %3990 = vmatpush1.bf16.msra.mxu0 %v3959
      %3991 = vmatprep.subr.bf16.mxu0 %v3958
      %3992 = vmatpush1.bf16.msra.mxu0 %v3957
      %3993 = vmatprep.subr.bf16.mxu0 %v3956
      %3994 = vmatpush1.bf16.msra.mxu0 %v3955
      %3995 = vmatprep.subr.bf16.mxu0 %v3954
      %3996 = vmatpush1.bf16.msra.mxu0 %v3953
      %3997 = vmatprep.subr.bf16.mxu0 %v3952
      %3998 = vmatpush1.bf16.msra.mxu0 %v3951
      %3999 = vmatprep.subr.bf16.mxu0 0
      %4000 = vmatpush2.bf16.msra.mxu0 0
      %4001 = vmatprep.subr.bf16.mxu0 0
      %4002 = vmatpush2.bf16.msra.mxu0 0
      %4003 = vmatprep.subr.bf16.mxu0 0
      %4004 = vmatpush2.bf16.msra.mxu0 0
      %4005 = vmatprep.subr.bf16.mxu0 0
      %4006 = vmatpush2.bf16.msra.mxu0 0
      %4007 = vmatprep.subr.bf16.mxu0 0
      %4008 = vmatpush2.bf16.msra.mxu0 0
      %4009 = vmatprep.subr.bf16.mxu0 0
      %4010 = vmatpush2.bf16.msra.mxu0 0
      %4011 = vmatprep.subr.bf16.mxu0 0
      %4012 = vmatpush2.bf16.msra.mxu0 0
      %4013 = vmatprep.subr.bf16.mxu0 0
      %4014 = vmatpush2.bf16.msra.mxu0 0
      %4015 = vmatprep.mubr.bf16.mxu0 0
      %4016 = vmatmul.mubr.bf16.gmra.mxu0 %v3895
      %v4017 = vpop.f32.mrf.mxu0
      %v4018 = vpop.f32.mrf.mxu0
      %v4019 = vpop.f32.mrf.mxu0
      %v4020 = vadd.f32 0.0, %v4019
      %v4021 = vpop.f32.mrf.mxu0
      %v4022 = vadd.f32 0.0, %v4021
      %4023 = vmatprep.mubr.bf16.mxu0 0
      %4024 = vmatmul.mubr.bf16.gmra.mxu0 %v3896
      %v4025 = vpop.f32.mrf.mxu0
      %v4026 = vadd.f32 0.0, %v4025
      %v4027 = vpop.f32.mrf.mxu0
      %v4028 = vadd.f32 0.0, %v4027
      %v4029 = vpop.f32.mrf.mxu0
      %v4030 = vadd.f32 0.0, %v4029
      %v4031 = vpop.f32.mrf.mxu0
      %v4032 = vadd.f32 0.0, %v4031
      %4033 = vmatprep.mubr.bf16.mxu0 0
      %4034 = vmatmul.mubr.bf16.gmra.mxu0 %v3897
      %v4035 = vpop.f32.mrf.mxu0
      %v4036 = vadd.f32 0.0, %v4035
      %v4037 = vpop.f32.mrf.mxu0
      %v4038 = vadd.f32 0.0, %v4037
      %v4039 = vpop.f32.mrf.mxu0
      %v4040 = vadd.f32 0.0, %v4039
      %v4041 = vpop.f32.mrf.mxu0
      %v4042 = vadd.f32 0.0, %v4041
      %4043 = vmatprep.mubr.bf16.mxu0 0
      %4044 = vmatmul.mubr.bf16.gmra.mxu0 %v3898
      %v4045 = vpop.f32.mrf.mxu0
      %v4046 = vadd.f32 0.0, %v4045
      %v4047 = vpop.f32.mrf.mxu0
      %v4048 = vadd.f32 0.0, %v4047
      %v4049 = vpop.f32.mrf.mxu0
      %v4050 = vadd.f32 0.0, %v4049
      %v4051 = vpop.f32.mrf.mxu0
      %v4052 = vadd.f32 0.0, %v4051
      %4053 = vdwg.mxu0
      %v4054 = vld [vmem:[#allocation3] sm:$0xff]
      %v4055 = vld [vmem:[#allocation3 + $0x8] sm:$0xff]
      %v4056 = vld [vmem:[#allocation3 + $0x10] sm:$0xff]
      %v4057 = vld [vmem:[#allocation3 + $0x18] sm:$0xff]
      %v4058 = vld [vmem:[#allocation3 + $0x20] sm:$0xff]
      %v4059 = vld [vmem:[#allocation3 + $0x28] sm:$0xff]
      %v4060 = vld [vmem:[#allocation3 + $0x30] sm:$0xff]
      %v4061 = vld [vmem:[#allocation3 + $0x38] sm:$0xff]
      %v4062 = vld [vmem:[#allocation3 + $0x40] sm:$0xff]
      %v4063 = vld [vmem:[#allocation3 + $0x48] sm:$0xff]
      %v4064 = vld [vmem:[#allocation3 + $0x50] sm:$0xff]
      %v4065 = vld [vmem:[#allocation3 + $0x58] sm:$0xff]
      %v4066 = vld [vmem:[#allocation3 + $0x60] sm:$0x7f]
      %v4067 = vld [vmem:[#allocation3 + $0x68] sm:$0x7f]
      %v4082 = vrot.slane %v4020, 1
      %v4083 = vrot.slane %v4026, 1
      %v4084 = vsel %vm1633, %v4082, %v4083
      %v4085 = vrot.slane %v4022, 1
      %v4086 = vrot.slane %v4028, 1
      %v4087 = vsel %vm1633, %v4085, %v4086
      %v4088 = vrot.slane %v4030, 1
      %v4089 = vsel %vm1633, %v4083, %v4088
      %v4090 = vrot.slane %v4032, 1
      %v4091 = vsel %vm1633, %v4086, %v4090
      %v4092 = vrot.slane %v4036, 1
      %v4093 = vsel %vm1633, %v4088, %v4092
      %v4094 = vrot.slane %v4038, 1
      %v4095 = vsel %vm1633, %v4090, %v4094
      %v4096 = vrot.slane %v4040, 1
      %v4097 = vsel %vm1633, %v4092, %v4096
      %v4098 = vrot.slane %v4042, 1
      %v4099 = vsel %vm1633, %v4094, %v4098
      %v4100 = vrot.slane %v4046, 1
      %v4101 = vsel %vm1633, %v4096, %v4100
      %v4102 = vrot.slane %v4048, 1
      %v4103 = vsel %vm1633, %v4098, %v4102
      %v4104 = vrot.slane %v4050, 1
      %v4105 = vsel %vm1633, %v4100, %v4104
      %v4106 = vrot.slane %v4052, 1
      %v4107 = vsel %vm1633, %v4102, %v4106
      %v4122 = vadd.f32 %v4054, %v4084
      %v4123 = vadd.f32 %v4055, %v4087
      %v4124 = vadd.f32 %v4056, %v4089
      %v4125 = vadd.f32 %v4057, %v4091
      %v4126 = vadd.f32 %v4058, %v4093
      %v4127 = vadd.f32 %v4059, %v4095
      %v4128 = vadd.f32 %v4060, %v4097
      %v4129 = vadd.f32 %v4061, %v4099
      %v4130 = vadd.f32 %v4062, %v4101
      %v4131 = vadd.f32 %v4063, %v4103
      %v4132 = vadd.f32 %v4064, %v4105
      %v4133 = vadd.f32 %v4065, %v4107
      %v4134 = vadd.f32 %v4066, %v4104
      %v4135 = vadd.f32 %v4067, %v4106
      %4136 = vst [vmem:[#allocation3] sm:$0xff] %v4122
      %4137 = vst [vmem:[#allocation3 + $0x8] sm:$0xff] %v4123
      %4138 = vst [vmem:[#allocation3 + $0x10] sm:$0xff] %v4124
      %4139 = vst [vmem:[#allocation3 + $0x18] sm:$0xff] %v4125
      %4140 = vst [vmem:[#allocation3 + $0x20] sm:$0xff] %v4126
      %4141 = vst [vmem:[#allocation3 + $0x28] sm:$0xff] %v4127
      %4142 = vst [vmem:[#allocation3 + $0x30] sm:$0xff] %v4128
      %4143 = vst [vmem:[#allocation3 + $0x38] sm:$0xff] %v4129
      %4144 = vst [vmem:[#allocation3 + $0x40] sm:$0xff] %v4130
      %4145 = vst [vmem:[#allocation3 + $0x48] sm:$0xff] %v4131
      %4146 = vst [vmem:[#allocation3 + $0x50] sm:$0xff] %v4132
      %4147 = vst [vmem:[#allocation3 + $0x58] sm:$0xff] %v4133
      %4148 = vst [vmem:[#allocation3 + $0x60] sm:$0x7f] %v4134
      %4149 = vst [vmem:[#allocation3 + $0x68] sm:$0x7f] %v4135
      %v4150 = vld [vmem:[#allocation2 + $0x20] sm:$0xf]
      %v4151 = vld [vmem:[#allocation2 + $0x24] sm:$0xf]
      %v4152 = vld [vmem:[#allocation2 + $0x28] sm:$0xf]
      %v4153 = vld [vmem:[#allocation2 + $0x2c] sm:$0xf]
      %v4154 = vld [vmem:[#allocation2 + $0x30] sm:$0xf]
      %v4155 = vld [vmem:[#allocation2 + $0x34] sm:$0xf]
      %v4156 = vld [vmem:[#allocation2 + $0x38] sm:$0xf]
      %v4157 = vld [vmem:[#allocation2 + $0x3c] sm:$0xf]
      %s4158 = scalar_lea.vmem %s4, 1536
      %v4159 = vld [vmem:[%s4158] sm:$0xff]
      %v4160 = vld [vmem:[%s4158 + $0x8] sm:$0xff]
      %v4161 = vld [vmem:[%s4158 + $0x10] sm:$0xff]
      %v4162 = vld [vmem:[%s4158 + $0x18] sm:$0xff]
      %v4163 = vld [vmem:[%s4158 + $0x20] sm:$0xff]
      %v4164 = vld [vmem:[%s4158 + $0x28] sm:$0xff]
      %v4165 = vld [vmem:[%s4158 + $0x30] sm:$0xff]
      %v4166 = vld [vmem:[%s4158 + $0x38] sm:$0xff]
      %v4167 = vld [vmem:[%s4158 + $0x40] sm:$0xff]
      %v4168 = vld [vmem:[%s4158 + $0x48] sm:$0xff]
      %v4169 = vld [vmem:[%s4158 + $0x50] sm:$0xff]
      %v4170 = vld [vmem:[%s4158 + $0x58] sm:$0xff]
      %v4171 = vld [vmem:[%s4158 + $0x60] sm:$0xff]
      %v4172 = vld [vmem:[%s4158 + $0x68] sm:$0xff]
      %v4173 = vld [vmem:[%s4158 + $0x70] sm:$0xff]
      %v4174 = vld [vmem:[%s4158 + $0x78] sm:$0xff]
      %v4183 = vunpack.c.l.b16 %v4150
      %v4184 = vunpack.c.l.b16 %v4151
      %v4185 = vunpack.c.l.b16 %v4152
      %v4186 = vunpack.c.l.b16 %v4153
      %v4187 = vunpack.c.l.b16 %v4154
      %v4188 = vunpack.c.l.b16 %v4155
      %v4189 = vunpack.c.l.b16 %v4156
      %v4190 = vunpack.c.l.b16 %v4157
      %v4191 = vpack.c.b16 %v4184, %v4183
      %v4192 = vpack.c.b16 %v4186, %v4185
      %v4193 = vpack.c.b16 %v4188, %v4187
      %v4194 = vpack.c.b16 %v4190, %v4189
      %v4215 = vunpack.c.l.b16 %v4159
      %v4216 = vunpack.c.h.b16 %v4159
      %v4217 = vunpack.c.l.b16 %v4160
      %v4218 = vunpack.c.h.b16 %v4160
      %v4219 = vunpack.c.l.b16 %v4161
      %v4220 = vunpack.c.h.b16 %v4161
      %v4221 = vunpack.c.l.b16 %v4162
      %v4222 = vunpack.c.h.b16 %v4162
      %v4223 = vunpack.c.l.b16 %v4163
      %v4224 = vunpack.c.h.b16 %v4163
      %v4225 = vunpack.c.l.b16 %v4164
      %v4226 = vunpack.c.h.b16 %v4164
      %v4227 = vunpack.c.l.b16 %v4165
      %v4228 = vunpack.c.h.b16 %v4165
      %v4229 = vunpack.c.l.b16 %v4166
      %v4230 = vunpack.c.h.b16 %v4166
      %v4231 = vunpack.c.l.b16 %v4167
      %v4232 = vunpack.c.h.b16 %v4167
      %v4233 = vunpack.c.l.b16 %v4168
      %v4234 = vunpack.c.h.b16 %v4168
      %v4235 = vunpack.c.l.b16 %v4169
      %v4236 = vunpack.c.h.b16 %v4169
      %v4237 = vunpack.c.l.b16 %v4170
      %v4238 = vunpack.c.h.b16 %v4170
      %v4239 = vunpack.c.l.b16 %v4171
      %v4240 = vunpack.c.h.b16 %v4171
      %v4241 = vunpack.c.l.b16 %v4172
      %v4242 = vunpack.c.h.b16 %v4172
      %v4243 = vunpack.c.l.b16 %v4173
      %v4244 = vunpack.c.h.b16 %v4173
      %v4245 = vunpack.c.l.b16 %v4174
      %v4246 = vunpack.c.h.b16 %v4174
      %v4247 = vpack.c.b16 %v4217, %v4215
      %v4248 = vpack.c.b16 %v4218, %v4216
      %v4249 = vpack.c.b16 %v4221, %v4219
      %v4250 = vpack.c.b16 %v4222, %v4220
      %v4251 = vpack.c.b16 %v4225, %v4223
      %v4252 = vpack.c.b16 %v4226, %v4224
      %v4253 = vpack.c.b16 %v4229, %v4227
      %v4254 = vpack.c.b16 %v4230, %v4228
      %v4255 = vpack.c.b16 %v4233, %v4231
      %v4256 = vpack.c.b16 %v4234, %v4232
      %v4257 = vpack.c.b16 %v4237, %v4235
      %v4258 = vpack.c.b16 %v4238, %v4236
      %v4259 = vpack.c.b16 %v4241, %v4239
      %v4260 = vpack.c.b16 %v4242, %v4240
      %v4261 = vpack.c.b16 %v4245, %v4243
      %v4262 = vpack.c.b16 %v4246, %v4244
      %4279 = vmatprep.subr.bf16.mxu0 %v4262
      %4280 = vmatpush1.bf16.msra.mxu0 %v4261
      %4281 = vmatprep.subr.bf16.mxu0 %v4260
      %4282 = vmatpush1.bf16.msra.mxu0 %v4259
      %4283 = vmatprep.subr.bf16.mxu0 %v4258
      %4284 = vmatpush1.bf16.msra.mxu0 %v4257
      %4285 = vmatprep.subr.bf16.mxu0 %v4256
      %4286 = vmatpush1.bf16.msra.mxu0 %v4255
      %4287 = vmatprep.subr.bf16.mxu0 %v4254
      %4288 = vmatpush1.bf16.msra.mxu0 %v4253
      %4289 = vmatprep.subr.bf16.mxu0 %v4252
      %4290 = vmatpush1.bf16.msra.mxu0 %v4251
      %4291 = vmatprep.subr.bf16.mxu0 %v4250
      %4292 = vmatpush1.bf16.msra.mxu0 %v4249
      %4293 = vmatprep.subr.bf16.mxu0 %v4248
      %4294 = vmatpush1.bf16.msra.mxu0 %v4247
      %4295 = vmatprep.subr.bf16.mxu0 0
      %4296 = vmatpush2.bf16.msra.mxu0 0
      %4297 = vmatprep.subr.bf16.mxu0 0
      %4298 = vmatpush2.bf16.msra.mxu0 0
      %4299 = vmatprep.subr.bf16.mxu0 0
      %4300 = vmatpush2.bf16.msra.mxu0 0
      %4301 = vmatprep.subr.bf16.mxu0 0
      %4302 = vmatpush2.bf16.msra.mxu0 0
      %4303 = vmatprep.subr.bf16.mxu0 0
      %4304 = vmatpush2.bf16.msra.mxu0 0
      %4305 = vmatprep.subr.bf16.mxu0 0
      %4306 = vmatpush2.bf16.msra.mxu0 0
      %4307 = vmatprep.subr.bf16.mxu0 0
      %4308 = vmatpush2.bf16.msra.mxu0 0
      %4309 = vmatprep.subr.bf16.mxu0 0
      %4310 = vmatpush2.bf16.msra.mxu0 0
      %4311 = vmatprep.mubr.bf16.mxu0 0
      %4312 = vmatmul.mubr.bf16.gmra.mxu0 %v4191
      %v4313 = vpop.f32.mrf.mxu0
      %v4314 = vpop.f32.mrf.mxu0
      %v4315 = vpop.f32.mrf.mxu0
      %v4316 = vadd.f32 0.0, %v4315
      %v4317 = vpop.f32.mrf.mxu0
      %v4318 = vadd.f32 0.0, %v4317
      %4319 = vmatprep.mubr.bf16.mxu0 0
      %4320 = vmatmul.mubr.bf16.gmra.mxu0 %v4192
      %v4321 = vpop.f32.mrf.mxu0
      %v4322 = vadd.f32 0.0, %v4321
      %v4323 = vpop.f32.mrf.mxu0
      %v4324 = vadd.f32 0.0, %v4323
      %v4325 = vpop.f32.mrf.mxu0
      %v4326 = vadd.f32 0.0, %v4325
      %v4327 = vpop.f32.mrf.mxu0
      %v4328 = vadd.f32 0.0, %v4327
      %4329 = vmatprep.mubr.bf16.mxu0 0
      %4330 = vmatmul.mubr.bf16.gmra.mxu0 %v4193
      %v4331 = vpop.f32.mrf.mxu0
      %v4332 = vadd.f32 0.0, %v4331
      %v4333 = vpop.f32.mrf.mxu0
      %v4334 = vadd.f32 0.0, %v4333
      %v4335 = vpop.f32.mrf.mxu0
      %v4336 = vadd.f32 0.0, %v4335
      %v4337 = vpop.f32.mrf.mxu0
      %v4338 = vadd.f32 0.0, %v4337
      %4339 = vmatprep.mubr.bf16.mxu0 0
      %4340 = vmatmul.mubr.bf16.gmra.mxu0 %v4194
      %v4341 = vpop.f32.mrf.mxu0
      %v4342 = vadd.f32 0.0, %v4341
      %v4343 = vpop.f32.mrf.mxu0
      %v4344 = vadd.f32 0.0, %v4343
      %v4345 = vpop.f32.mrf.mxu0
      %v4346 = vadd.f32 0.0, %v4345
      %v4347 = vpop.f32.mrf.mxu0
      %v4348 = vadd.f32 0.0, %v4347
      %4349 = vdwg.mxu0
      %v4350 = vld [vmem:[#allocation3] sm:$0xff]
      %v4351 = vld [vmem:[#allocation3 + $0x8] sm:$0xff]
      %v4352 = vld [vmem:[#allocation3 + $0x10] sm:$0xff]
      %v4353 = vld [vmem:[#allocation3 + $0x18] sm:$0xff]
      %v4354 = vld [vmem:[#allocation3 + $0x20] sm:$0xff]
      %v4355 = vld [vmem:[#allocation3 + $0x28] sm:$0xff]
      %v4356 = vld [vmem:[#allocation3 + $0x30] sm:$0xff]
      %v4357 = vld [vmem:[#allocation3 + $0x38] sm:$0xff]
      %v4358 = vld [vmem:[#allocation3 + $0x40] sm:$0xff]
      %v4359 = vld [vmem:[#allocation3 + $0x48] sm:$0xff]
      %v4360 = vld [vmem:[#allocation3 + $0x50] sm:$0xff]
      %v4361 = vld [vmem:[#allocation3 + $0x58] sm:$0xff]
      %v4362 = vld [vmem:[#allocation3 + $0x60] sm:$0x7f]
      %v4363 = vld [vmem:[#allocation3 + $0x68] sm:$0x7f]
      %v4364 = vadd.f32 %v4350, %v4316
      %v4365 = vadd.f32 %v4351, %v4318
      %v4366 = vadd.f32 %v4352, %v4322
      %v4367 = vadd.f32 %v4353, %v4324
      %v4368 = vadd.f32 %v4354, %v4326
      %v4369 = vadd.f32 %v4355, %v4328
      %v4370 = vadd.f32 %v4356, %v4332
      %v4371 = vadd.f32 %v4357, %v4334
      %v4372 = vadd.f32 %v4358, %v4336
      %v4373 = vadd.f32 %v4359, %v4338
      %v4374 = vadd.f32 %v4360, %v4342
      %v4375 = vadd.f32 %v4361, %v4344
      %v4376 = vadd.f32 %v4362, %v4346
      %v4377 = vadd.f32 %v4363, %v4348
      %4378 = vst [vmem:[#allocation3] sm:$0xff] %v4364
      %4379 = vst [vmem:[#allocation3 + $0x8] sm:$0xff] %v4365
      %4380 = vst [vmem:[#allocation3 + $0x10] sm:$0xff] %v4366
      %4381 = vst [vmem:[#allocation3 + $0x18] sm:$0xff] %v4367
      %4382 = vst [vmem:[#allocation3 + $0x20] sm:$0xff] %v4368
      %4383 = vst [vmem:[#allocation3 + $0x28] sm:$0xff] %v4369
      %4384 = vst [vmem:[#allocation3 + $0x30] sm:$0xff] %v4370
      %4385 = vst [vmem:[#allocation3 + $0x38] sm:$0xff] %v4371
      %4386 = vst [vmem:[#allocation3 + $0x40] sm:$0xff] %v4372
      %4387 = vst [vmem:[#allocation3 + $0x48] sm:$0xff] %v4373
      %4388 = vst [vmem:[#allocation3 + $0x50] sm:$0xff] %v4374
      %4389 = vst [vmem:[#allocation3 + $0x58] sm:$0xff] %v4375
      %4390 = vst [vmem:[#allocation3 + $0x60] sm:$0x7f] %v4376
      %4391 = vst [vmem:[#allocation3 + $0x68] sm:$0x7f] %v4377
      %v4392 = vld [vmem:[#allocation2] sm:$0xf]
      %v4393 = vld [vmem:[#allocation2 + $0x4] sm:$0xf]
      %v4394 = vld [vmem:[#allocation2 + $0x8] sm:$0xf]
      %v4395 = vld [vmem:[#allocation2 + $0xc] sm:$0xf]
      %v4396 = vld [vmem:[#allocation2 + $0x10] sm:$0xf]
      %v4397 = vld [vmem:[#allocation2 + $0x14] sm:$0xf]
      %v4398 = vld [vmem:[#allocation2 + $0x18] sm:$0xf]
      %v4399 = vld [vmem:[#allocation2 + $0x1c] sm:$0xf]
      %s4400 = scalar_lea.vmem %s4, 1664
      %v4401 = vld [vmem:[%s4400] sm:$0xff]
      %v4402 = vld [vmem:[%s4400 + $0x8] sm:$0xff]
      %v4403 = vld [vmem:[%s4400 + $0x10] sm:$0xff]
      %v4404 = vld [vmem:[%s4400 + $0x18] sm:$0xff]
      %v4405 = vld [vmem:[%s4400 + $0x20] sm:$0xff]
      %v4406 = vld [vmem:[%s4400 + $0x28] sm:$0xff]
      %v4407 = vld [vmem:[%s4400 + $0x30] sm:$0xff]
      %v4408 = vld [vmem:[%s4400 + $0x38] sm:$0xff]
      %v4409 = vld [vmem:[%s4400 + $0x40] sm:$0xff]
      %v4410 = vld [vmem:[%s4400 + $0x48] sm:$0xff]
      %v4411 = vld [vmem:[%s4400 + $0x50] sm:$0xff]
      %v4412 = vld [vmem:[%s4400 + $0x58] sm:$0xff]
      %v4413 = vld [vmem:[%s4400 + $0x60] sm:$0xff]
      %v4414 = vld [vmem:[%s4400 + $0x68] sm:$0xff]
      %v4415 = vld [vmem:[%s4400 + $0x70] sm:$0xff]
      %v4416 = vld [vmem:[%s4400 + $0x78] sm:$0xff]
      %v4425 = vunpack.c.l.b16 %v4392
      %v4426 = vunpack.c.l.b16 %v4393
      %v4427 = vunpack.c.l.b16 %v4394
      %v4428 = vunpack.c.l.b16 %v4395
      %v4429 = vunpack.c.l.b16 %v4396
      %v4430 = vunpack.c.l.b16 %v4397
      %v4431 = vunpack.c.l.b16 %v4398
      %v4432 = vunpack.c.l.b16 %v4399
      %v4433 = vpack.c.b16 %v4426, %v4425
      %v4434 = vpack.c.b16 %v4428, %v4427
      %v4435 = vpack.c.b16 %v4430, %v4429
      %v4436 = vpack.c.b16 %v4432, %v4431
      %v4457 = vunpack.c.l.b16 %v4401
      %v4458 = vunpack.c.h.b16 %v4401
      %v4459 = vunpack.c.l.b16 %v4402
      %v4460 = vunpack.c.h.b16 %v4402
      %v4461 = vunpack.c.l.b16 %v4403
      %v4462 = vunpack.c.h.b16 %v4403
      %v4463 = vunpack.c.l.b16 %v4404
      %v4464 = vunpack.c.h.b16 %v4404
      %v4465 = vunpack.c.l.b16 %v4405
      %v4466 = vunpack.c.h.b16 %v4405
      %v4467 = vunpack.c.l.b16 %v4406
      %v4468 = vunpack.c.h.b16 %v4406
      %v4469 = vunpack.c.l.b16 %v4407
      %v4470 = vunpack.c.h.b16 %v4407
      %v4471 = vunpack.c.l.b16 %v4408
      %v4472 = vunpack.c.h.b16 %v4408
      %v4473 = vunpack.c.l.b16 %v4409
      %v4474 = vunpack.c.h.b16 %v4409
      %v4475 = vunpack.c.l.b16 %v4410
      %v4476 = vunpack.c.h.b16 %v4410
      %v4477 = vunpack.c.l.b16 %v4411
      %v4478 = vunpack.c.h.b16 %v4411
      %v4479 = vunpack.c.l.b16 %v4412
      %v4480 = vunpack.c.h.b16 %v4412
      %v4481 = vunpack.c.l.b16 %v4413
      %v4482 = vunpack.c.h.b16 %v4413
      %v4483 = vunpack.c.l.b16 %v4414
      %v4484 = vunpack.c.h.b16 %v4414
      %v4485 = vunpack.c.l.b16 %v4415
      %v4486 = vunpack.c.h.b16 %v4415
      %v4487 = vunpack.c.l.b16 %v4416
      %v4488 = vunpack.c.h.b16 %v4416
      %v4489 = vpack.c.b16 %v4459, %v4457
      %v4490 = vpack.c.b16 %v4460, %v4458
      %v4491 = vpack.c.b16 %v4463, %v4461
      %v4492 = vpack.c.b16 %v4464, %v4462
      %v4493 = vpack.c.b16 %v4467, %v4465
      %v4494 = vpack.c.b16 %v4468, %v4466
      %v4495 = vpack.c.b16 %v4471, %v4469
      %v4496 = vpack.c.b16 %v4472, %v4470
      %v4497 = vpack.c.b16 %v4475, %v4473
      %v4498 = vpack.c.b16 %v4476, %v4474
      %v4499 = vpack.c.b16 %v4479, %v4477
      %v4500 = vpack.c.b16 %v4480, %v4478
      %v4501 = vpack.c.b16 %v4483, %v4481
      %v4502 = vpack.c.b16 %v4484, %v4482
      %v4503 = vpack.c.b16 %v4487, %v4485
      %v4504 = vpack.c.b16 %v4488, %v4486
      %4521 = vmatprep.subr.bf16.mxu0 %v4504
      %4522 = vmatpush1.bf16.msra.mxu0 %v4503
      %4523 = vmatprep.subr.bf16.mxu0 %v4502
      %4524 = vmatpush1.bf16.msra.mxu0 %v4501
      %4525 = vmatprep.subr.bf16.mxu0 %v4500
      %4526 = vmatpush1.bf16.msra.mxu0 %v4499
      %4527 = vmatprep.subr.bf16.mxu0 %v4498
      %4528 = vmatpush1.bf16.msra.mxu0 %v4497
      %4529 = vmatprep.subr.bf16.mxu0 %v4496
      %4530 = vmatpush1.bf16.msra.mxu0 %v4495
      %4531 = vmatprep.subr.bf16.mxu0 %v4494
      %4532 = vmatpush1.bf16.msra.mxu0 %v4493
      %4533 = vmatprep.subr.bf16.mxu0 %v4492
      %4534 = vmatpush1.bf16.msra.mxu0 %v4491
      %4535 = vmatprep.subr.bf16.mxu0 %v4490
      %4536 = vmatpush1.bf16.msra.mxu0 %v4489
      %4537 = vmatprep.subr.bf16.mxu0 0
      %4538 = vmatpush2.bf16.msra.mxu0 0
      %4539 = vmatprep.subr.bf16.mxu0 0
      %4540 = vmatpush2.bf16.msra.mxu0 0
      %4541 = vmatprep.subr.bf16.mxu0 0
      %4542 = vmatpush2.bf16.msra.mxu0 0
      %4543 = vmatprep.subr.bf16.mxu0 0
      %4544 = vmatpush2.bf16.msra.mxu0 0
      %4545 = vmatprep.subr.bf16.mxu0 0
      %4546 = vmatpush2.bf16.msra.mxu0 0
      %4547 = vmatprep.subr.bf16.mxu0 0
      %4548 = vmatpush2.bf16.msra.mxu0 0
      %4549 = vmatprep.subr.bf16.mxu0 0
      %4550 = vmatpush2.bf16.msra.mxu0 0
      %4551 = vmatprep.subr.bf16.mxu0 0
      %4552 = vmatpush2.bf16.msra.mxu0 0
      %4553 = vmatprep.mubr.bf16.mxu0 0
      %4554 = vmatmul.mubr.bf16.gmra.mxu0 %v4433
      %v4555 = vpop.f32.mrf.mxu0
      %v4556 = vpop.f32.mrf.mxu0
      %v4557 = vpop.f32.mrf.mxu0
      %v4558 = vadd.f32 0.0, %v4557
      %v4559 = vpop.f32.mrf.mxu0
      %v4560 = vadd.f32 0.0, %v4559
      %4561 = vmatprep.mubr.bf16.mxu0 0
      %4562 = vmatmul.mubr.bf16.gmra.mxu0 %v4434
      %v4563 = vpop.f32.mrf.mxu0
      %v4564 = vadd.f32 0.0, %v4563
      %v4565 = vpop.f32.mrf.mxu0
      %v4566 = vadd.f32 0.0, %v4565
      %v4567 = vpop.f32.mrf.mxu0
      %v4568 = vadd.f32 0.0, %v4567
      %v4569 = vpop.f32.mrf.mxu0
      %v4570 = vadd.f32 0.0, %v4569
      %4571 = vmatprep.mubr.bf16.mxu0 0
      %4572 = vmatmul.mubr.bf16.gmra.mxu0 %v4435
      %v4573 = vpop.f32.mrf.mxu0
      %v4574 = vadd.f32 0.0, %v4573
      %v4575 = vpop.f32.mrf.mxu0
      %v4576 = vadd.f32 0.0, %v4575
      %v4577 = vpop.f32.mrf.mxu0
      %v4578 = vadd.f32 0.0, %v4577
      %v4579 = vpop.f32.mrf.mxu0
      %v4580 = vadd.f32 0.0, %v4579
      %4581 = vmatprep.mubr.bf16.mxu0 0
      %4582 = vmatmul.mubr.bf16.gmra.mxu0 %v4436
      %v4583 = vpop.f32.mrf.mxu0
      %v4584 = vadd.f32 0.0, %v4583
      %v4585 = vpop.f32.mrf.mxu0
      %v4586 = vadd.f32 0.0, %v4585
      %v4587 = vpop.f32.mrf.mxu0
      %v4588 = vadd.f32 0.0, %v4587
      %v4589 = vpop.f32.mrf.mxu0
      %v4590 = vadd.f32 0.0, %v4589
      %4591 = vdwg.mxu0
      %v4592 = vld [vmem:[#allocation3] sm:$0xff]
      %v4593 = vld [vmem:[#allocation3 + $0x8] sm:$0xff]
      %v4594 = vld [vmem:[#allocation3 + $0x10] sm:$0xff]
      %v4595 = vld [vmem:[#allocation3 + $0x18] sm:$0xff]
      %v4596 = vld [vmem:[#allocation3 + $0x20] sm:$0xff]
      %v4597 = vld [vmem:[#allocation3 + $0x28] sm:$0xff]
      %v4598 = vld [vmem:[#allocation3 + $0x30] sm:$0xff]
      %v4599 = vld [vmem:[#allocation3 + $0x38] sm:$0xff]
      %v4600 = vld [vmem:[#allocation3 + $0x40] sm:$0xff]
      %v4601 = vld [vmem:[#allocation3 + $0x48] sm:$0xff]
      %v4602 = vld [vmem:[#allocation3 + $0x50] sm:$0xff]
      %v4603 = vld [vmem:[#allocation3 + $0x58] sm:$0xff]
      %v4604 = vld [vmem:[#allocation3 + $0x60] sm:$0x7f]
      %v4605 = vld [vmem:[#allocation3 + $0x68] sm:$0x7f]
      %v4606 = vadd.f32 %v4592, %v4558
      %v4607 = vadd.f32 %v4593, %v4560
      %v4608 = vadd.f32 %v4594, %v4564
      %v4609 = vadd.f32 %v4595, %v4566
      %v4610 = vadd.f32 %v4596, %v4568
      %v4611 = vadd.f32 %v4597, %v4570
      %v4612 = vadd.f32 %v4598, %v4574
      %v4613 = vadd.f32 %v4599, %v4576
      %v4614 = vadd.f32 %v4600, %v4578
      %v4615 = vadd.f32 %v4601, %v4580
      %v4616 = vadd.f32 %v4602, %v4584
      %v4617 = vadd.f32 %v4603, %v4586
      %v4618 = vadd.f32 %v4604, %v4588
      %v4619 = vadd.f32 %v4605, %v4590
      %4620 = vst [vmem:[#allocation3] sm:$0xff] %v4606
      %4621 = vst [vmem:[#allocation3 + $0x8] sm:$0xff] %v4607
      %4622 = vst [vmem:[#allocation3 + $0x10] sm:$0xff] %v4608
      %4623 = vst [vmem:[#allocation3 + $0x18] sm:$0xff] %v4609
      %4624 = vst [vmem:[#allocation3 + $0x20] sm:$0xff] %v4610
      %4625 = vst [vmem:[#allocation3 + $0x28] sm:$0xff] %v4611
      %4626 = vst [vmem:[#allocation3 + $0x30] sm:$0xff] %v4612
      %4627 = vst [vmem:[#allocation3 + $0x38] sm:$0xff] %v4613
      %4628 = vst [vmem:[#allocation3 + $0x40] sm:$0xff] %v4614
      %4629 = vst [vmem:[#allocation3 + $0x48] sm:$0xff] %v4615
      %4630 = vst [vmem:[#allocation3 + $0x50] sm:$0xff] %v4616
      %4631 = vst [vmem:[#allocation3 + $0x58] sm:$0xff] %v4617
      %4632 = vst [vmem:[#allocation3 + $0x60] sm:$0x7f] %v4618
      %4633 = vst [vmem:[#allocation3 + $0x68] sm:$0x7f] %v4619
      %v4634 = vld [vmem:[#allocation2 + $0x20] sm:$0xf]
      %v4635 = vld [vmem:[#allocation2 + $0x24] sm:$0xf]
      %v4636 = vld [vmem:[#allocation2 + $0x28] sm:$0xf]
      %v4637 = vld [vmem:[#allocation2 + $0x2c] sm:$0xf]
      %v4638 = vld [vmem:[#allocation2 + $0x30] sm:$0xf]
      %v4639 = vld [vmem:[#allocation2 + $0x34] sm:$0xf]
      %v4640 = vld [vmem:[#allocation2 + $0x38] sm:$0xf]
      %v4641 = vld [vmem:[#allocation2 + $0x3c] sm:$0xf]
      %s4642 = scalar_lea.vmem %s4, 1792
      %v4643 = vld [vmem:[%s4642] sm:$0xff]
      %v4644 = vld [vmem:[%s4642 + $0x8] sm:$0xff]
      %v4645 = vld [vmem:[%s4642 + $0x10] sm:$0xff]
      %v4646 = vld [vmem:[%s4642 + $0x18] sm:$0xff]
      %v4647 = vld [vmem:[%s4642 + $0x20] sm:$0xff]
      %v4648 = vld [vmem:[%s4642 + $0x28] sm:$0xff]
      %v4649 = vld [vmem:[%s4642 + $0x30] sm:$0xff]
      %v4650 = vld [vmem:[%s4642 + $0x38] sm:$0xff]
      %v4651 = vld [vmem:[%s4642 + $0x40] sm:$0xff]
      %v4652 = vld [vmem:[%s4642 + $0x48] sm:$0xff]
      %v4653 = vld [vmem:[%s4642 + $0x50] sm:$0xff]
      %v4654 = vld [vmem:[%s4642 + $0x58] sm:$0xff]
      %v4655 = vld [vmem:[%s4642 + $0x60] sm:$0xff]
      %v4656 = vld [vmem:[%s4642 + $0x68] sm:$0xff]
      %v4657 = vld [vmem:[%s4642 + $0x70] sm:$0xff]
      %v4658 = vld [vmem:[%s4642 + $0x78] sm:$0xff]
      %v4667 = vunpack.c.l.b16 %v4634
      %v4668 = vunpack.c.l.b16 %v4635
      %v4669 = vunpack.c.l.b16 %v4636
      %v4670 = vunpack.c.l.b16 %v4637
      %v4671 = vunpack.c.l.b16 %v4638
      %v4672 = vunpack.c.l.b16 %v4639
      %v4673 = vunpack.c.l.b16 %v4640
      %v4674 = vunpack.c.l.b16 %v4641
      %v4675 = vpack.c.b16 %v4668, %v4667
      %v4676 = vpack.c.b16 %v4670, %v4669
      %v4677 = vpack.c.b16 %v4672, %v4671
      %v4678 = vpack.c.b16 %v4674, %v4673
      %v4699 = vunpack.c.l.b16 %v4643
      %v4700 = vunpack.c.h.b16 %v4643
      %v4701 = vunpack.c.l.b16 %v4644
      %v4702 = vunpack.c.h.b16 %v4644
      %v4703 = vunpack.c.l.b16 %v4645
      %v4704 = vunpack.c.h.b16 %v4645
      %v4705 = vunpack.c.l.b16 %v4646
      %v4706 = vunpack.c.h.b16 %v4646
      %v4707 = vunpack.c.l.b16 %v4647
      %v4708 = vunpack.c.h.b16 %v4647
      %v4709 = vunpack.c.l.b16 %v4648
      %v4710 = vunpack.c.h.b16 %v4648
      %v4711 = vunpack.c.l.b16 %v4649
      %v4712 = vunpack.c.h.b16 %v4649
      %v4713 = vunpack.c.l.b16 %v4650
      %v4714 = vunpack.c.h.b16 %v4650
      %v4715 = vunpack.c.l.b16 %v4651
      %v4716 = vunpack.c.h.b16 %v4651
      %v4717 = vunpack.c.l.b16 %v4652
      %v4718 = vunpack.c.h.b16 %v4652
      %v4719 = vunpack.c.l.b16 %v4653
      %v4720 = vunpack.c.h.b16 %v4653
      %v4721 = vunpack.c.l.b16 %v4654
      %v4722 = vunpack.c.h.b16 %v4654
      %v4723 = vunpack.c.l.b16 %v4655
      %v4724 = vunpack.c.h.b16 %v4655
      %v4725 = vunpack.c.l.b16 %v4656
      %v4726 = vunpack.c.h.b16 %v4656
      %v4727 = vunpack.c.l.b16 %v4657
      %v4728 = vunpack.c.h.b16 %v4657
      %v4729 = vunpack.c.l.b16 %v4658
      %v4730 = vunpack.c.h.b16 %v4658
      %v4731 = vpack.c.b16 %v4701, %v4699
      %v4732 = vpack.c.b16 %v4702, %v4700
      %v4733 = vpack.c.b16 %v4705, %v4703
      %v4734 = vpack.c.b16 %v4706, %v4704
      %v4735 = vpack.c.b16 %v4709, %v4707
      %v4736 = vpack.c.b16 %v4710, %v4708
      %v4737 = vpack.c.b16 %v4713, %v4711
      %v4738 = vpack.c.b16 %v4714, %v4712
      %v4739 = vpack.c.b16 %v4717, %v4715
      %v4740 = vpack.c.b16 %v4718, %v4716
      %v4741 = vpack.c.b16 %v4721, %v4719
      %v4742 = vpack.c.b16 %v4722, %v4720
      %v4743 = vpack.c.b16 %v4725, %v4723
      %v4744 = vpack.c.b16 %v4726, %v4724
      %v4745 = vpack.c.b16 %v4729, %v4727
      %v4746 = vpack.c.b16 %v4730, %v4728
      %4763 = vmatprep.subr.bf16.mxu0 %v4746
      %4764 = vmatpush1.bf16.msra.mxu0 %v4745
      %4765 = vmatprep.subr.bf16.mxu0 %v4744
      %4766 = vmatpush1.bf16.msra.mxu0 %v4743
      %4767 = vmatprep.subr.bf16.mxu0 %v4742
      %4768 = vmatpush1.bf16.msra.mxu0 %v4741
      %4769 = vmatprep.subr.bf16.mxu0 %v4740
      %4770 = vmatpush1.bf16.msra.mxu0 %v4739
      %4771 = vmatprep.subr.bf16.mxu0 %v4738
      %4772 = vmatpush1.bf16.msra.mxu0 %v4737
      %4773 = vmatprep.subr.bf16.mxu0 %v4736
      %4774 = vmatpush1.bf16.msra.mxu0 %v4735
      %4775 = vmatprep.subr.bf16.mxu0 %v4734
      %4776 = vmatpush1.bf16.msra.mxu0 %v4733
      %4777 = vmatprep.subr.bf16.mxu0 %v4732
      %4778 = vmatpush1.bf16.msra.mxu0 %v4731
      %4779 = vmatprep.subr.bf16.mxu0 0
      %4780 = vmatpush2.bf16.msra.mxu0 0
      %4781 = vmatprep.subr.bf16.mxu0 0
      %4782 = vmatpush2.bf16.msra.mxu0 0
      %4783 = vmatprep.subr.bf16.mxu0 0
      %4784 = vmatpush2.bf16.msra.mxu0 0
      %4785 = vmatprep.subr.bf16.mxu0 0
      %4786 = vmatpush2.bf16.msra.mxu0 0
      %4787 = vmatprep.subr.bf16.mxu0 0
      %4788 = vmatpush2.bf16.msra.mxu0 0
      %4789 = vmatprep.subr.bf16.mxu0 0
      %4790 = vmatpush2.bf16.msra.mxu0 0
      %4791 = vmatprep.subr.bf16.mxu0 0
      %4792 = vmatpush2.bf16.msra.mxu0 0
      %4793 = vmatprep.subr.bf16.mxu0 0
      %4794 = vmatpush2.bf16.msra.mxu0 0
      %4795 = vmatprep.mubr.bf16.mxu0 0
      %4796 = vmatmul.mubr.bf16.gmra.mxu0 %v4675
      %v4797 = vpop.f32.mrf.mxu0
      %v4798 = vpop.f32.mrf.mxu0
      %v4799 = vpop.f32.mrf.mxu0
      %v4800 = vadd.f32 0.0, %v4799
      %v4801 = vpop.f32.mrf.mxu0
      %v4802 = vadd.f32 0.0, %v4801
      %4803 = vmatprep.mubr.bf16.mxu0 0
      %4804 = vmatmul.mubr.bf16.gmra.mxu0 %v4676
      %v4805 = vpop.f32.mrf.mxu0
      %v4806 = vadd.f32 0.0, %v4805
      %v4807 = vpop.f32.mrf.mxu0
      %v4808 = vadd.f32 0.0, %v4807
      %v4809 = vpop.f32.mrf.mxu0
      %v4810 = vadd.f32 0.0, %v4809
      %v4811 = vpop.f32.mrf.mxu0
      %v4812 = vadd.f32 0.0, %v4811
      %4813 = vmatprep.mubr.bf16.mxu0 0
      %4814 = vmatmul.mubr.bf16.gmra.mxu0 %v4677
      %v4815 = vpop.f32.mrf.mxu0
      %v4816 = vadd.f32 0.0, %v4815
      %v4817 = vpop.f32.mrf.mxu0
      %v4818 = vadd.f32 0.0, %v4817
      %v4819 = vpop.f32.mrf.mxu0
      %v4820 = vadd.f32 0.0, %v4819
      %v4821 = vpop.f32.mrf.mxu0
      %v4822 = vadd.f32 0.0, %v4821
      %4823 = vmatprep.mubr.bf16.mxu0 0
      %4824 = vmatmul.mubr.bf16.gmra.mxu0 %v4678
      %v4825 = vpop.f32.mrf.mxu0
      %v4826 = vadd.f32 0.0, %v4825
      %v4827 = vpop.f32.mrf.mxu0
      %v4828 = vadd.f32 0.0, %v4827
      %v4829 = vpop.f32.mrf.mxu0
      %v4830 = vadd.f32 0.0, %v4829
      %v4831 = vpop.f32.mrf.mxu0
      %v4832 = vadd.f32 0.0, %v4831
      %4833 = vdwg.mxu0
      %v4834 = vld [vmem:[#allocation3] sm:$0xff]
      %v4835 = vld [vmem:[#allocation3 + $0x8] sm:$0xff]
      %v4836 = vld [vmem:[#allocation3 + $0x10] sm:$0xff]
      %v4837 = vld [vmem:[#allocation3 + $0x18] sm:$0xff]
      %v4838 = vld [vmem:[#allocation3 + $0x20] sm:$0xff]
      %v4839 = vld [vmem:[#allocation3 + $0x28] sm:$0xff]
      %v4840 = vld [vmem:[#allocation3 + $0x30] sm:$0xff]
      %v4841 = vld [vmem:[#allocation3 + $0x38] sm:$0xff]
      %v4842 = vld [vmem:[#allocation3 + $0x40] sm:$0xff]
      %v4843 = vld [vmem:[#allocation3 + $0x48] sm:$0xff]
      %v4844 = vld [vmem:[#allocation3 + $0x50] sm:$0xff]
      %v4845 = vld [vmem:[#allocation3 + $0x58] sm:$0xff]
      %v4846 = vld [vmem:[#allocation3 + $0x60] sm:$0x7f]
      %v4847 = vld [vmem:[#allocation3 + $0x68] sm:$0x7f]
      %v4862 = vrot.slane %v4800, 1
      %v4863 = vrot.slane %v4806, 1
      %v4864 = vsel %vm1633, %v4862, %v4863
      %v4865 = vrot.slane %v4802, 1
      %v4866 = vrot.slane %v4808, 1
      %v4867 = vsel %vm1633, %v4865, %v4866
      %v4868 = vrot.slane %v4810, 1
      %v4869 = vsel %vm1633, %v4863, %v4868
      %v4870 = vrot.slane %v4812, 1
      %v4871 = vsel %vm1633, %v4866, %v4870
      %v4872 = vrot.slane %v4816, 1
      %v4873 = vsel %vm1633, %v4868, %v4872
      %v4874 = vrot.slane %v4818, 1
      %v4875 = vsel %vm1633, %v4870, %v4874
      %v4876 = vrot.slane %v4820, 1
      %v4877 = vsel %vm1633, %v4872, %v4876
      %v4878 = vrot.slane %v4822, 1
      %v4879 = vsel %vm1633, %v4874, %v4878
      %v4880 = vrot.slane %v4826, 1
      %v4881 = vsel %vm1633, %v4876, %v4880
      %v4882 = vrot.slane %v4828, 1
      %v4883 = vsel %vm1633, %v4878, %v4882
      %v4884 = vrot.slane %v4830, 1
      %v4885 = vsel %vm1633, %v4880, %v4884
      %v4886 = vrot.slane %v4832, 1
      %v4887 = vsel %vm1633, %v4882, %v4886
      %v4902 = vadd.f32 %v4834, %v4864
      %v4903 = vadd.f32 %v4835, %v4867
      %v4904 = vadd.f32 %v4836, %v4869
      %v4905 = vadd.f32 %v4837, %v4871
      %v4906 = vadd.f32 %v4838, %v4873
      %v4907 = vadd.f32 %v4839, %v4875
      %v4908 = vadd.f32 %v4840, %v4877
      %v4909 = vadd.f32 %v4841, %v4879
      %v4910 = vadd.f32 %v4842, %v4881
      %v4911 = vadd.f32 %v4843, %v4883
      %v4912 = vadd.f32 %v4844, %v4885
      %v4913 = vadd.f32 %v4845, %v4887
      %v4914 = vadd.f32 %v4846, %v4884
      %v4915 = vadd.f32 %v4847, %v4886
      %4916 = vst [vmem:[#allocation3] sm:$0xff] %v4902
      %4917 = vst [vmem:[#allocation3 + $0x8] sm:$0xff] %v4903
      %4918 = vst [vmem:[#allocation3 + $0x10] sm:$0xff] %v4904
      %4919 = vst [vmem:[#allocation3 + $0x18] sm:$0xff] %v4905
      %4920 = vst [vmem:[#allocation3 + $0x20] sm:$0xff] %v4906
      %4921 = vst [vmem:[#allocation3 + $0x28] sm:$0xff] %v4907
      %4922 = vst [vmem:[#allocation3 + $0x30] sm:$0xff] %v4908
      %4923 = vst [vmem:[#allocation3 + $0x38] sm:$0xff] %v4909
      %4924 = vst [vmem:[#allocation3 + $0x40] sm:$0xff] %v4910
      %4925 = vst [vmem:[#allocation3 + $0x48] sm:$0xff] %v4911
      %4926 = vst [vmem:[#allocation3 + $0x50] sm:$0xff] %v4912
      %4927 = vst [vmem:[#allocation3 + $0x58] sm:$0xff] %v4913
      %4928 = vst [vmem:[#allocation3 + $0x60] sm:$0x7f] %v4914
      %4929 = vst [vmem:[#allocation3 + $0x68] sm:$0x7f] %v4915
      %v4930 = vld [vmem:[#allocation2] sm:$0xf]
      %v4931 = vld [vmem:[#allocation2 + $0x4] sm:$0xf]
      %v4932 = vld [vmem:[#allocation2 + $0x8] sm:$0xf]
      %v4933 = vld [vmem:[#allocation2 + $0xc] sm:$0xf]
      %v4934 = vld [vmem:[#allocation2 + $0x10] sm:$0xf]
      %v4935 = vld [vmem:[#allocation2 + $0x14] sm:$0xf]
      %v4936 = vld [vmem:[#allocation2 + $0x18] sm:$0xf]
      %v4937 = vld [vmem:[#allocation2 + $0x1c] sm:$0xf]
      %s4938 = scalar_lea.vmem %s4, 1920
      %v4939 = vld [vmem:[%s4938] sm:$0xff]
      %v4940 = vld [vmem:[%s4938 + $0x8] sm:$0xff]
      %v4941 = vld [vmem:[%s4938 + $0x10] sm:$0xff]
      %v4942 = vld [vmem:[%s4938 + $0x18] sm:$0xff]
      %v4943 = vld [vmem:[%s4938 + $0x20] sm:$0xff]
      %v4944 = vld [vmem:[%s4938 + $0x28] sm:$0xff]
      %v4945 = vld [vmem:[%s4938 + $0x30] sm:$0xff]
      %v4946 = vld [vmem:[%s4938 + $0x38] sm:$0xff]
      %v4947 = vld [vmem:[%s4938 + $0x40] sm:$0xff]
      %v4948 = vld [vmem:[%s4938 + $0x48] sm:$0xff]
      %v4949 = vld [vmem:[%s4938 + $0x50] sm:$0xff]
      %v4950 = vld [vmem:[%s4938 + $0x58] sm:$0xff]
      %v4951 = vld [vmem:[%s4938 + $0x60] sm:$0xff]
      %v4952 = vld [vmem:[%s4938 + $0x68] sm:$0xff]
      %v4953 = vld [vmem:[%s4938 + $0x70] sm:$0xff]
      %v4954 = vld [vmem:[%s4938 + $0x78] sm:$0xff]
      %v4963 = vunpack.c.l.b16 %v4930
      %v4964 = vunpack.c.l.b16 %v4931
      %v4965 = vunpack.c.l.b16 %v4932
      %v4966 = vunpack.c.l.b16 %v4933
      %v4967 = vunpack.c.l.b16 %v4934
      %v4968 = vunpack.c.l.b16 %v4935
      %v4969 = vunpack.c.l.b16 %v4936
      %v4970 = vunpack.c.l.b16 %v4937
      %v4971 = vpack.c.b16 %v4964, %v4963
      %v4972 = vpack.c.b16 %v4966, %v4965
      %v4973 = vpack.c.b16 %v4968, %v4967
      %v4974 = vpack.c.b16 %v4970, %v4969
      %v4995 = vunpack.c.l.b16 %v4939
      %v4996 = vunpack.c.h.b16 %v4939
      %v4997 = vunpack.c.l.b16 %v4940
      %v4998 = vunpack.c.h.b16 %v4940
      %v4999 = vunpack.c.l.b16 %v4941
      %v5000 = vunpack.c.h.b16 %v4941
      %v5001 = vunpack.c.l.b16 %v4942
      %v5002 = vunpack.c.h.b16 %v4942
      %v5003 = vunpack.c.l.b16 %v4943
      %v5004 = vunpack.c.h.b16 %v4943
      %v5005 = vunpack.c.l.b16 %v4944
      %v5006 = vunpack.c.h.b16 %v4944
      %v5007 = vunpack.c.l.b16 %v4945
      %v5008 = vunpack.c.h.b16 %v4945
      %v5009 = vunpack.c.l.b16 %v4946
      %v5010 = vunpack.c.h.b16 %v4946
      %v5011 = vunpack.c.l.b16 %v4947
      %v5012 = vunpack.c.h.b16 %v4947
      %v5013 = vunpack.c.l.b16 %v4948
      %v5014 = vunpack.c.h.b16 %v4948
      %v5015 = vunpack.c.l.b16 %v4949
      %v5016 = vunpack.c.h.b16 %v4949
      %v5017 = vunpack.c.l.b16 %v4950
      %v5018 = vunpack.c.h.b16 %v4950
      %v5019 = vunpack.c.l.b16 %v4951
      %v5020 = vunpack.c.h.b16 %v4951
      %v5021 = vunpack.c.l.b16 %v4952
      %v5022 = vunpack.c.h.b16 %v4952
      %v5023 = vunpack.c.l.b16 %v4953
      %v5024 = vunpack.c.h.b16 %v4953
      %v5025 = vunpack.c.l.b16 %v4954
      %v5026 = vunpack.c.h.b16 %v4954
      %v5027 = vpack.c.b16 %v4997, %v4995
      %v5028 = vpack.c.b16 %v4998, %v4996
      %v5029 = vpack.c.b16 %v5001, %v4999
      %v5030 = vpack.c.b16 %v5002, %v5000
      %v5031 = vpack.c.b16 %v5005, %v5003
      %v5032 = vpack.c.b16 %v5006, %v5004
      %v5033 = vpack.c.b16 %v5009, %v5007
      %v5034 = vpack.c.b16 %v5010, %v5008
      %v5035 = vpack.c.b16 %v5013, %v5011
      %v5036 = vpack.c.b16 %v5014, %v5012
      %v5037 = vpack.c.b16 %v5017, %v5015
      %v5038 = vpack.c.b16 %v5018, %v5016
      %v5039 = vpack.c.b16 %v5021, %v5019
      %v5040 = vpack.c.b16 %v5022, %v5020
      %v5041 = vpack.c.b16 %v5025, %v5023
      %v5042 = vpack.c.b16 %v5026, %v5024
      %5059 = vmatprep.subr.bf16.mxu0 %v5042
      %5060 = vmatpush1.bf16.msra.mxu0 %v5041
      %5061 = vmatprep.subr.bf16.mxu0 %v5040
      %5062 = vmatpush1.bf16.msra.mxu0 %v5039
      %5063 = vmatprep.subr.bf16.mxu0 %v5038
      %5064 = vmatpush1.bf16.msra.mxu0 %v5037
      %5065 = vmatprep.subr.bf16.mxu0 %v5036
      %5066 = vmatpush1.bf16.msra.mxu0 %v5035
      %5067 = vmatprep.subr.bf16.mxu0 %v5034
      %5068 = vmatpush1.bf16.msra.mxu0 %v5033
      %5069 = vmatprep.subr.bf16.mxu0 %v5032
      %5070 = vmatpush1.bf16.msra.mxu0 %v5031
      %5071 = vmatprep.subr.bf16.mxu0 %v5030
      %5072 = vmatpush1.bf16.msra.mxu0 %v5029
      %5073 = vmatprep.subr.bf16.mxu0 %v5028
      %5074 = vmatpush1.bf16.msra.mxu0 %v5027
      %5075 = vmatprep.subr.bf16.mxu0 0
      %5076 = vmatpush2.bf16.msra.mxu0 0
      %5077 = vmatprep.subr.bf16.mxu0 0
      %5078 = vmatpush2.bf16.msra.mxu0 0
      %5079 = vmatprep.subr.bf16.mxu0 0
      %5080 = vmatpush2.bf16.msra.mxu0 0
      %5081 = vmatprep.subr.bf16.mxu0 0
      %5082 = vmatpush2.bf16.msra.mxu0 0
      %5083 = vmatprep.subr.bf16.mxu0 0
      %5084 = vmatpush2.bf16.msra.mxu0 0
      %5085 = vmatprep.subr.bf16.mxu0 0
      %5086 = vmatpush2.bf16.msra.mxu0 0
      %5087 = vmatprep.subr.bf16.mxu0 0
      %5088 = vmatpush2.bf16.msra.mxu0 0
      %5089 = vmatprep.subr.bf16.mxu0 0
      %5090 = vmatpush2.bf16.msra.mxu0 0
      %5091 = vmatprep.mubr.bf16.mxu0 0
      %5092 = vmatmul.mubr.bf16.gmra.mxu0 %v4971
      %v5093 = vpop.f32.mrf.mxu0
      %v5094 = vpop.f32.mrf.mxu0
      %v5095 = vpop.f32.mrf.mxu0
      %v5096 = vadd.f32 0.0, %v5095
      %v5097 = vpop.f32.mrf.mxu0
      %v5098 = vadd.f32 0.0, %v5097
      %5099 = vmatprep.mubr.bf16.mxu0 0
      %5100 = vmatmul.mubr.bf16.gmra.mxu0 %v4972
      %v5101 = vpop.f32.mrf.mxu0
      %v5102 = vadd.f32 0.0, %v5101
      %v5103 = vpop.f32.mrf.mxu0
      %v5104 = vadd.f32 0.0, %v5103
      %v5105 = vpop.f32.mrf.mxu0
      %v5106 = vadd.f32 0.0, %v5105
      %v5107 = vpop.f32.mrf.mxu0
      %v5108 = vadd.f32 0.0, %v5107
      %5109 = vmatprep.mubr.bf16.mxu0 0
      %5110 = vmatmul.mubr.bf16.gmra.mxu0 %v4973
      %v5111 = vpop.f32.mrf.mxu0
      %v5112 = vadd.f32 0.0, %v5111
      %v5113 = vpop.f32.mrf.mxu0
      %v5114 = vadd.f32 0.0, %v5113
      %v5115 = vpop.f32.mrf.mxu0
      %v5116 = vadd.f32 0.0, %v5115
      %v5117 = vpop.f32.mrf.mxu0
      %v5118 = vadd.f32 0.0, %v5117
      %5119 = vmatprep.mubr.bf16.mxu0 0
      %5120 = vmatmul.mubr.bf16.gmra.mxu0 %v4974
      %v5121 = vpop.f32.mrf.mxu0
      %v5122 = vadd.f32 0.0, %v5121
      %v5123 = vpop.f32.mrf.mxu0
      %v5124 = vadd.f32 0.0, %v5123
      %v5125 = vpop.f32.mrf.mxu0
      %v5126 = vadd.f32 0.0, %v5125
      %v5127 = vpop.f32.mrf.mxu0
      %v5128 = vadd.f32 0.0, %v5127
      %5129 = vdwg.mxu0
      %v5130 = vld [vmem:[#allocation3] sm:$0xff]
      %v5131 = vld [vmem:[#allocation3 + $0x8] sm:$0xff]
      %v5132 = vld [vmem:[#allocation3 + $0x10] sm:$0xff]
      %v5133 = vld [vmem:[#allocation3 + $0x18] sm:$0xff]
      %v5134 = vld [vmem:[#allocation3 + $0x20] sm:$0xff]
      %v5135 = vld [vmem:[#allocation3 + $0x28] sm:$0xff]
      %v5136 = vld [vmem:[#allocation3 + $0x30] sm:$0xff]
      %v5137 = vld [vmem:[#allocation3 + $0x38] sm:$0xff]
      %v5138 = vld [vmem:[#allocation3 + $0x40] sm:$0xff]
      %v5139 = vld [vmem:[#allocation3 + $0x48] sm:$0xff]
      %v5140 = vld [vmem:[#allocation3 + $0x50] sm:$0xff]
      %v5141 = vld [vmem:[#allocation3 + $0x58] sm:$0xff]
      %v5142 = vld [vmem:[#allocation3 + $0x60] sm:$0x7f]
      %v5143 = vld [vmem:[#allocation3 + $0x68] sm:$0x7f]
      %v5158 = vrot.slane %v5096, 1
      %v5159 = vrot.slane %v5102, 1
      %v5160 = vsel %vm1633, %v5158, %v5159
      %v5161 = vrot.slane %v5098, 1
      %v5162 = vrot.slane %v5104, 1
      %v5163 = vsel %vm1633, %v5161, %v5162
      %v5164 = vrot.slane %v5106, 1
      %v5165 = vsel %vm1633, %v5159, %v5164
      %v5166 = vrot.slane %v5108, 1
      %v5167 = vsel %vm1633, %v5162, %v5166
      %v5168 = vrot.slane %v5112, 1
      %v5169 = vsel %vm1633, %v5164, %v5168
      %v5170 = vrot.slane %v5114, 1
      %v5171 = vsel %vm1633, %v5166, %v5170
      %v5172 = vrot.slane %v5116, 1
      %v5173 = vsel %vm1633, %v5168, %v5172
      %v5174 = vrot.slane %v5118, 1
      %v5175 = vsel %vm1633, %v5170, %v5174
      %v5176 = vrot.slane %v5122, 1
      %v5177 = vsel %vm1633, %v5172, %v5176
      %v5178 = vrot.slane %v5124, 1
      %v5179 = vsel %vm1633, %v5174, %v5178
      %v5180 = vrot.slane %v5126, 1
      %v5181 = vsel %vm1633, %v5176, %v5180
      %v5182 = vrot.slane %v5128, 1
      %v5183 = vsel %vm1633, %v5178, %v5182
      %v5198 = vadd.f32 %v5130, %v5160
      %v5199 = vadd.f32 %v5131, %v5163
      %v5200 = vadd.f32 %v5132, %v5165
      %v5201 = vadd.f32 %v5133, %v5167
      %v5202 = vadd.f32 %v5134, %v5169
      %v5203 = vadd.f32 %v5135, %v5171
      %v5204 = vadd.f32 %v5136, %v5173
      %v5205 = vadd.f32 %v5137, %v5175
      %v5206 = vadd.f32 %v5138, %v5177
      %v5207 = vadd.f32 %v5139, %v5179
      %v5208 = vadd.f32 %v5140, %v5181
      %v5209 = vadd.f32 %v5141, %v5183
      %v5210 = vadd.f32 %v5142, %v5180
      %v5211 = vadd.f32 %v5143, %v5182
      %5212 = vst [vmem:[#allocation3] sm:$0xff] %v5198
      %5213 = vst [vmem:[#allocation3 + $0x8] sm:$0xff] %v5199
      %5214 = vst [vmem:[#allocation3 + $0x10] sm:$0xff] %v5200
      %5215 = vst [vmem:[#allocation3 + $0x18] sm:$0xff] %v5201
      %5216 = vst [vmem:[#allocation3 + $0x20] sm:$0xff] %v5202
      %5217 = vst [vmem:[#allocation3 + $0x28] sm:$0xff] %v5203
      %5218 = vst [vmem:[#allocation3 + $0x30] sm:$0xff] %v5204
      %5219 = vst [vmem:[#allocation3 + $0x38] sm:$0xff] %v5205
      %5220 = vst [vmem:[#allocation3 + $0x40] sm:$0xff] %v5206
      %5221 = vst [vmem:[#allocation3 + $0x48] sm:$0xff] %v5207
      %5222 = vst [vmem:[#allocation3 + $0x50] sm:$0xff] %v5208
      %5223 = vst [vmem:[#allocation3 + $0x58] sm:$0xff] %v5209
      %5224 = vst [vmem:[#allocation3 + $0x60] sm:$0x7f] %v5210
      %5225 = vst [vmem:[#allocation3 + $0x68] sm:$0x7f] %v5211
      %v5226 = vld [vmem:[#allocation3] sm:$0xff]
      %v5227 = vld [vmem:[#allocation3 + $0x8] sm:$0xff]
      %v5228 = vld [vmem:[#allocation3 + $0x10] sm:$0xff]
      %v5229 = vld [vmem:[#allocation3 + $0x18] sm:$0xff]
      %v5230 = vld [vmem:[#allocation3 + $0x20] sm:$0xff]
      %v5231 = vld [vmem:[#allocation3 + $0x28] sm:$0xff]
      %v5232 = vld [vmem:[#allocation3 + $0x30] sm:$0xff]
      %v5233 = vld [vmem:[#allocation3 + $0x38] sm:$0xff]
      %v5234 = vld [vmem:[#allocation3 + $0x40] sm:$0xff]
      %v5235 = vld [vmem:[#allocation3 + $0x48] sm:$0xff]
      %v5236 = vld [vmem:[#allocation3 + $0x50] sm:$0xff]
      %v5237 = vld [vmem:[#allocation3 + $0x58] sm:$0xff]
      %v5238 = vld [vmem:[#allocation3 + $0x60] sm:$0xff]
      %v5239 = vld [vmem:[#allocation3 + $0x68] sm:$0xff]
      %v5240 = vld [vmem:[#allocation3 + $0x70] sm:$0xff]
      %v5241 = vld [vmem:[#allocation3 + $0x78] sm:$0xff]
      %v5242 = vld [vmem:[%s5] sm:$0x3]
      %v5244 = vlaneseq
      %v5245 = vshrl.u32 %v5244, 7
      %v5246 = vsub.s32 0, %v5245
      %v5247 = vrot.slane %v5242, %v5246
      %v5248 = vlaneseq
      %v5249 = vshrl.u32 %v5248, 7
      %v5250 = vsub.s32 1, %v5249
      %v5251 = vrot.slane %v5242, %v5250
      %v5254 = vadd.f32 %v5226, %v5247
      %v5255 = vadd.f32 %v5227, %v5251
      %v5256 = vadd.f32 %v5228, %v5247
      %v5257 = vadd.f32 %v5229, %v5251
      %v5258 = vadd.f32 %v5230, %v5247
      %v5259 = vadd.f32 %v5231, %v5251
      %v5260 = vadd.f32 %v5232, %v5247
      %v5261 = vadd.f32 %v5233, %v5251
      %v5262 = vadd.f32 %v5234, %v5247
      %v5263 = vadd.f32 %v5235, %v5251
      %v5264 = vadd.f32 %v5236, %v5247
      %v5265 = vadd.f32 %v5237, %v5251
      %v5266 = vadd.f32 %v5238, %v5247
      %v5267 = vadd.f32 %v5239, %v5251
      %v5268 = vadd.f32 %v5240, %v5247
      %v5269 = vadd.f32 %v5241, %v5251
      %vm5270 = vcmp.ge.f32.partialorder %v5254, 0.0
      %vm5271 = vcmp.ge.f32.partialorder %v5255, 0.0
      %vm5272 = vcmp.ge.f32.partialorder %v5256, 0.0
      %vm5273 = vcmp.ge.f32.partialorder %v5257, 0.0
      %vm5274 = vcmp.ge.f32.partialorder %v5258, 0.0
      %vm5275 = vcmp.ge.f32.partialorder %v5259, 0.0
      %vm5276 = vcmp.ge.f32.partialorder %v5260, 0.0
      %vm5277 = vcmp.ge.f32.partialorder %v5261, 0.0
      %vm5278 = vcmp.ge.f32.partialorder %v5262, 0.0
      %vm5279 = vcmp.ge.f32.partialorder %v5263, 0.0
      %vm5280 = vcmp.ge.f32.partialorder %v5264, 0.0
      %vm5281 = vcmp.ge.f32.partialorder %v5265, 0.0
      %vm5282 = vcmp.ge.f32.partialorder %v5266, 0.0
      %vm5283 = vcmp.ge.f32.partialorder %v5267, 0.0
      %vm5284 = vcmp.ge.f32.partialorder %v5268, 0.0
      %vm5285 = vcmp.ge.f32.partialorder %v5269, 0.0
      %v5286 = vmul.f32 %v5254, 0.2
      %v5287 = vmul.f32 %v5255, 0.2
      %v5288 = vmul.f32 %v5256, 0.2
      %v5289 = vmul.f32 %v5257, 0.2
      %v5290 = vmul.f32 %v5258, 0.2
      %v5291 = vmul.f32 %v5259, 0.2
      %v5292 = vmul.f32 %v5260, 0.2
      %v5293 = vmul.f32 %v5261, 0.2
      %v5294 = vmul.f32 %v5262, 0.2
      %v5295 = vmul.f32 %v5263, 0.2
      %v5296 = vmul.f32 %v5264, 0.2
      %v5297 = vmul.f32 %v5265, 0.2
      %v5298 = vmul.f32 %v5266, 0.2
      %v5299 = vmul.f32 %v5267, 0.2
      %v5300 = vmul.f32 %v5268, 0.2
      %v5301 = vmul.f32 %v5269, 0.2
      %v5302 = vsel %vm5270, %v5254, %v5286
      %v5303 = vsel %vm5271, %v5255, %v5287
      %v5304 = vsel %vm5272, %v5256, %v5288
      %v5305 = vsel %vm5273, %v5257, %v5289
      %v5306 = vsel %vm5274, %v5258, %v5290
      %v5307 = vsel %vm5275, %v5259, %v5291
      %v5308 = vsel %vm5276, %v5260, %v5292
      %v5309 = vsel %vm5277, %v5261, %v5293
      %v5310 = vsel %vm5278, %v5262, %v5294
      %v5311 = vsel %vm5279, %v5263, %v5295
      %v5312 = vsel %vm5280, %v5264, %v5296
      %v5313 = vsel %vm5281, %v5265, %v5297
      %v5314 = vsel %vm5282, %v5266, %v5298
      %v5315 = vsel %vm5283, %v5267, %v5299
      %v5316 = vsel %vm5284, %v5268, %v5300
      %v5317 = vsel %vm5285, %v5269, %v5301
      %v5318 = vld [vmem:[%s7] sm:$0xff]
      %v5319 = vld [vmem:[%s7 + $0x8] sm:$0xff]
      %v5320 = vld [vmem:[%s7 + $0x10] sm:$0xff]
      %v5321 = vld [vmem:[%s7 + $0x18] sm:$0xff]
      %v5322 = vld [vmem:[%s7 + $0x20] sm:$0xff]
      %v5323 = vld [vmem:[%s7 + $0x28] sm:$0xff]
      %v5324 = vld [vmem:[%s7 + $0x30] sm:$0xff]
      %v5325 = vld [vmem:[%s7 + $0x38] sm:$0xff]
      %5327 = vset.pattern.permute.xlu0 0
      %5328 = vperm.xlu0 %5327, %v5318
      %v5329 = vpop.permute.xlu0 %5328
      %5332 = vset.pattern.permute.xlu0 0
      %5333 = vperm.xlu0 %5332, %v5319
      %v5334 = vpop.permute.xlu0 %5333
      %5337 = vset.pattern.permute.xlu0 0
      %5338 = vperm.xlu0 %5337, %v5320
      %v5339 = vpop.permute.xlu0 %5338
      %5342 = vset.pattern.permute.xlu0 0
      %5343 = vperm.xlu0 %5342, %v5321
      %v5344 = vpop.permute.xlu0 %5343
      %5347 = vset.pattern.permute.xlu0 0
      %5348 = vperm.xlu0 %5347, %v5322
      %v5349 = vpop.permute.xlu0 %5348
      %5352 = vset.pattern.permute.xlu0 0
      %5353 = vperm.xlu0 %5352, %v5323
      %v5354 = vpop.permute.xlu0 %5353
      %5357 = vset.pattern.permute.xlu0 0
      %5358 = vperm.xlu0 %5357, %v5324
      %v5359 = vpop.permute.xlu0 %5358
      %5362 = vset.pattern.permute.xlu0 0
      %5363 = vperm.xlu0 %5362, %v5325
      %v5364 = vpop.permute.xlu0 %5363
      %v5366 = vmul.f32 %v5302, %v5329
      %v5367 = vmul.f32 %v5303, %v5329
      %v5368 = vmul.f32 %v5304, %v5334
      %v5369 = vmul.f32 %v5305, %v5334
      %v5370 = vmul.f32 %v5306, %v5339
      %v5371 = vmul.f32 %v5307, %v5339
      %v5372 = vmul.f32 %v5308, %v5344
      %v5373 = vmul.f32 %v5309, %v5344
      %v5374 = vmul.f32 %v5310, %v5349
      %v5375 = vmul.f32 %v5311, %v5349
      %v5376 = vmul.f32 %v5312, %v5354
      %v5377 = vmul.f32 %v5313, %v5354
      %v5378 = vmul.f32 %v5314, %v5359
      %v5379 = vmul.f32 %v5315, %v5359
      %v5380 = vmul.f32 %v5316, %v5364
      %v5381 = vmul.f32 %v5317, %v5364
      %v5382 = vadd.f32 %v5366, %v5368
      %v5383 = vadd.f32 %v5382, %v5370
      %v5384 = vadd.f32 %v5383, %v5372
      %v5385 = vadd.f32 %v5384, %v5374
      %v5386 = vadd.f32 %v5385, %v5376
      %v5387 = vadd.f32 %v5386, %v5378
      %v5388 = vadd.f32 %v5387, %v5380
      %v5389 = vrot.slane %v5388, 4
      %v5390 = vadd.f32 %v5388, %v5389
      %v5391 = vrot.slane %v5390, 2
      %v5392 = vadd.f32 %v5390, %v5391
      %v5393 = vrot.slane %v5392, 1
      %v5394 = vadd.f32 %v5392, %v5393
      %v5395 = vadd.f32 %v5367, %v5369
      %v5396 = vadd.f32 %v5395, %v5371
      %v5397 = vadd.f32 %v5396, %v5373
      %v5398 = vadd.f32 %v5397, %v5375
      %v5399 = vadd.f32 %v5398, %v5377
      %v5400 = vadd.f32 %v5399, %v5379
      %v5401 = vadd.f32 %v5400, %v5381
      %v5402 = vrot.slane %v5401, 4
      %v5403 = vadd.f32 %v5401, %v5402
      %v5404 = vrot.slane %v5403, 2
      %v5405 = vadd.f32 %v5403, %v5404
      %v5406 = vrot.slane %v5405, 1
      %v5407 = vadd.f32 %v5405, %v5406
      %v5410 = vcombine.low %v5394, %v5407
      %v5412 = vunpack.c.l.s4 1966171168
      %v5413 = vunpack.c.0.s8 %v5412
      %v5414 = vlaneseq
      %v5415 = vshrl.u32 %v5414, 7
      %v5416 = vsub.s32 %v5413, %v5415
      %v5417 = vrot.slane %v5410, %v5416
      %v5419 = vunpack.c.l.s4 1966171168
      %v5420 = vunpack.c.0.s8 %v5419
      %v5421 = vlaneseq
      %v5422 = vshrl.u32 %v5421, 7
      %v5423 = vsub.s32 %v5420, %v5422
      %v5424 = vrot.slane %v5417, %v5423
      %v5426 = vlaneseq
      %vm5427 = vcmp.ge.s32.totalorder %v5426, 0
      %vm5428 = vcmp.lt.s32.totalorder %v5426, 256
      %vm5429 = vmand %vm5427, %vm5428
      %5430 = vst.msk [vmem:[%s370] sm:$0x3] %vm5429, %v5424
      %v5431 = vmul.f32 %v5366, %v5366
      %v5432 = vmul.f32 %v5367, %v5367
      %v5433 = vmul.f32 %v5368, %v5368
      %v5434 = vmul.f32 %v5369, %v5369
      %v5435 = vmul.f32 %v5370, %v5370
      %v5436 = vmul.f32 %v5371, %v5371
      %v5437 = vmul.f32 %v5372, %v5372
      %v5438 = vmul.f32 %v5373, %v5373
      %v5439 = vmul.f32 %v5374, %v5374
      %v5440 = vmul.f32 %v5375, %v5375
      %v5441 = vmul.f32 %v5376, %v5376
      %v5442 = vmul.f32 %v5377, %v5377
      %v5443 = vmul.f32 %v5378, %v5378
      %v5444 = vmul.f32 %v5379, %v5379
      %v5445 = vmul.f32 %v5380, %v5380
      %v5446 = vmul.f32 %v5381, %v5381
      %v5447 = vadd.f32 %v5431, %v5433
      %v5448 = vadd.f32 %v5447, %v5435
      %v5449 = vadd.f32 %v5448, %v5437
      %v5450 = vadd.f32 %v5449, %v5439
      %v5451 = vadd.f32 %v5450, %v5441
      %v5452 = vadd.f32 %v5451, %v5443
      %v5453 = vadd.f32 %v5452, %v5445
      %v5454 = vrot.slane %v5453, 4
      %v5455 = vadd.f32 %v5453, %v5454
      %v5456 = vrot.slane %v5455, 2
      %v5457 = vadd.f32 %v5455, %v5456
      %v5458 = vrot.slane %v5457, 1
      %v5459 = vadd.f32 %v5457, %v5458
      %v5460 = vadd.f32 %v5432, %v5434
      %v5461 = vadd.f32 %v5460, %v5436
      %v5462 = vadd.f32 %v5461, %v5438
      %v5463 = vadd.f32 %v5462, %v5440
      %v5464 = vadd.f32 %v5463, %v5442
      %v5465 = vadd.f32 %v5464, %v5444
      %v5466 = vadd.f32 %v5465, %v5446
      %v5467 = vrot.slane %v5466, 4
      %v5468 = vadd.f32 %v5466, %v5467
      %v5469 = vrot.slane %v5468, 2
      %v5470 = vadd.f32 %v5468, %v5469
      %v5471 = vrot.slane %v5470, 1
      %v5472 = vadd.f32 %v5470, %v5471
      %v5475 = vcombine.low %v5459, %v5472
      %v5477 = vunpack.c.l.s4 1966171168
      %v5478 = vunpack.c.0.s8 %v5477
      %v5479 = vlaneseq
      %v5480 = vshrl.u32 %v5479, 7
      %v5481 = vsub.s32 %v5478, %v5480
      %v5482 = vrot.slane %v5475, %v5481
      %v5484 = vunpack.c.l.s4 1966171168
      %v5485 = vunpack.c.0.s8 %v5484
      %v5486 = vlaneseq
      %v5487 = vshrl.u32 %v5486, 7
      %v5488 = vsub.s32 %v5485, %v5487
      %v5489 = vrot.slane %v5482, %v5488
      %5491 = vst.msk [vmem:[%s374] sm:$0x3] %vm5429, %v5489
      %v5492 = vld [vmem:[%s6] sm:$0xff]
      %v5493 = vld [vmem:[%s6 + $0x8] sm:$0xff]
      %v5494 = vld [vmem:[%s6 + $0x10] sm:$0xff]
      %v5495 = vld [vmem:[%s6 + $0x18] sm:$0xff]
      %v5496 = vld [vmem:[%s6 + $0x20] sm:$0xff]
      %v5497 = vld [vmem:[%s6 + $0x28] sm:$0xff]
      %v5498 = vld [vmem:[%s6 + $0x30] sm:$0xff]
      %v5499 = vld [vmem:[%s6 + $0x38] sm:$0xff]
      %v5500 = vld [vmem:[%s6 + $0x40] sm:$0xff]
      %v5501 = vld [vmem:[%s6 + $0x48] sm:$0xff]
      %v5502 = vld [vmem:[%s6 + $0x50] sm:$0xff]
      %v5503 = vld [vmem:[%s6 + $0x58] sm:$0xff]
      %v5504 = vld [vmem:[%s6 + $0x60] sm:$0xff]
      %v5505 = vld [vmem:[%s6 + $0x68] sm:$0xff]
      %v5506 = vld [vmem:[%s6 + $0x70] sm:$0xff]
      %v5507 = vld [vmem:[%s6 + $0x78] sm:$0xff]
      %v5508 = vmul.f32 %v5366, %v5492
      %v5509 = vmul.f32 %v5367, %v5493
      %v5510 = vmul.f32 %v5368, %v5494
      %v5511 = vmul.f32 %v5369, %v5495
      %v5512 = vmul.f32 %v5370, %v5496
      %v5513 = vmul.f32 %v5371, %v5497
      %v5514 = vmul.f32 %v5372, %v5498
      %v5515 = vmul.f32 %v5373, %v5499
      %v5516 = vmul.f32 %v5374, %v5500
      %v5517 = vmul.f32 %v5375, %v5501
      %v5518 = vmul.f32 %v5376, %v5502
      %v5519 = vmul.f32 %v5377, %v5503
      %v5520 = vmul.f32 %v5378, %v5504
      %v5521 = vmul.f32 %v5379, %v5505
      %v5522 = vmul.f32 %v5380, %v5506
      %v5523 = vmul.f32 %v5381, %v5507
      %v5524 = vadd.f32 %v5508, %v5510
      %v5525 = vadd.f32 %v5524, %v5512
      %v5526 = vadd.f32 %v5525, %v5514
      %v5527 = vadd.f32 %v5526, %v5516
      %v5528 = vadd.f32 %v5527, %v5518
      %v5529 = vadd.f32 %v5528, %v5520
      %v5530 = vadd.f32 %v5529, %v5522
      %v5531 = vrot.slane %v5530, 4
      %v5532 = vadd.f32 %v5530, %v5531
      %v5533 = vrot.slane %v5532, 2
      %v5534 = vadd.f32 %v5532, %v5533
      %v5535 = vrot.slane %v5534, 1
      %v5536 = vadd.f32 %v5534, %v5535
      %v5537 = vadd.f32 %v5509, %v5511
      %v5538 = vadd.f32 %v5537, %v5513
      %v5539 = vadd.f32 %v5538, %v5515
      %v5540 = vadd.f32 %v5539, %v5517
      %v5541 = vadd.f32 %v5540, %v5519
      %v5542 = vadd.f32 %v5541, %v5521
      %v5543 = vadd.f32 %v5542, %v5523
      %v5544 = vrot.slane %v5543, 4
      %v5545 = vadd.f32 %v5543, %v5544
      %v5546 = vrot.slane %v5545, 2
      %v5547 = vadd.f32 %v5545, %v5546
      %v5548 = vrot.slane %v5547, 1
      %v5549 = vadd.f32 %v5547, %v5548
      %v5552 = vcombine.low %v5536, %v5549
      %v5554 = vunpack.c.l.s4 1966171168
      %v5555 = vunpack.c.0.s8 %v5554
      %v5556 = vlaneseq
      %v5557 = vshrl.u32 %v5556, 7
      %v5558 = vsub.s32 %v5555, %v5557
      %v5559 = vrot.slane %v5552, %v5558
      %v5561 = vunpack.c.l.s4 1966171168
      %v5562 = vunpack.c.0.s8 %v5561
      %v5563 = vlaneseq
      %v5564 = vshrl.u32 %v5563, 7
      %v5565 = vsub.s32 %v5562, %v5564
      %v5566 = vrot.slane %v5559, %v5565
      %5568 = vst.msk [vmem:[%s378] sm:$0x3] %vm5429, %v5566
      %p5569 = scmp.lt.s32.totalorder %s22, 1
      %s5570 = scalar_select %p5569, %s22, 1
      %s5571 = smul.addr %s5570, 2
      %s5572 = scalar_lea.vmem %s8, %s5571
      %p5573 = scmp.lt.s32.totalorder %s22, 1
      %s5574 = scalar_select %p5573, %s22, 1
      %s5575 = smul.addr %s5574, 2
      %s5576 = scalar_lea.vmem %s9, %s5575
      %p5577 = scmp.lt.s32.totalorder %s22, 1
      %s5578 = scalar_select %p5577, %s22, 1
      %s5579 = smul.addr %s5578, 2
      %s5580 = scalar_lea.vmem %s10, %s5579
      // Predicated region
      $region53: #{discriminator_forward.4} parent=51 // pred_check
        %p5581 = pneg %p213
      $region54: #{discriminator_forward.4} parent=51 // pred_check_branch
        %5583 = sbr.rel (%p5581) target = $region56
      $region55: #{discriminator_forward.4} parent=51 // pred_region
        _
      $region56: #{discriminator_forward.4} parent=51 // pred_fallthru
        _
      // Predicated region
      $region57: #{discriminator_forward.4} parent=51 // pred_check
        %p5584 = pneg %p239
      $region58: #{discriminator_forward.4} parent=51 // pred_check_branch
        %5586 = sbr.rel (%p5584) target = $region60
      $region59: #{discriminator_forward.4} parent=51 // pred_region
        _
      $region60: #{discriminator_forward.4} parent=51 // pred_fallthru
        _
      // Predicated region
      $region61: #{discriminator_forward.4} parent=51 // pred_check
        %p5587 = pneg %p265
      $region62: #{discriminator_forward.4} parent=51 // pred_check_branch
        %5589 = sbr.rel (%p5587) target = $region64
      $region63: #{discriminator_forward.4} parent=51 // pred_region
        _
      $region64: #{discriminator_forward.4} parent=51 // pred_fallthru
        _
    $region52: #{discriminator_forward.4} parent=5 // pred_fallthru
      _
    %p5590 = scmp.le.s32.totalorder 2, %s17
    // Predicated region
    $region65: #{discriminator_forward.4} parent=5 // pred_check
      %p5591 = pneg %p5590
    $region66: #{discriminator_forward.4} parent=5 // pred_check_branch
      %5593 = sbr.rel (%p5591) target = $region68
    $region67: #{discriminator_forward.4} parent=5 // pred_region
      %s5594 = ssub.s32 %s17, 2
      // Predicated region
      $region69: #{discriminator_forward.4} parent=67 // pred_check
        %p5595 = pneg %p219
      $region70: #{discriminator_forward.4} parent=67 // pred_check_branch
        %5597 = sbr.rel (%p5595) target = $region72
      $region71: #{discriminator_forward.4} parent=67 // pred_region
        %p5598 = scmp.lt.s32.totalorder %s23, 1
        %s5599 = scalar_select %p5598, %s23, 1
        %s5600 = smul.addr %s5599, 2
        %s5601 = scalar_lea.vmem %s8, %s5600
      $region72: #{discriminator_forward.4} parent=67 // pred_fallthru
        _
      // Predicated region
      $region73: #{discriminator_forward.4} parent=67 // pred_check
        %p5602 = pneg %p245
      $region74: #{discriminator_forward.4} parent=67 // pred_check_branch
        %5604 = sbr.rel (%p5602) target = $region76
      $region75: #{discriminator_forward.4} parent=67 // pred_region
        %p5605 = scmp.lt.s32.totalorder %s23, 1
        %s5606 = scalar_select %p5605, %s23, 1
        %s5607 = smul.addr %s5606, 2
        %s5608 = scalar_lea.vmem %s9, %s5607
      $region76: #{discriminator_forward.4} parent=67 // pred_fallthru
        _
      // Predicated region
      $region77: #{discriminator_forward.4} parent=67 // pred_check
        %p5609 = pneg %p271
      $region78: #{discriminator_forward.4} parent=67 // pred_check_branch
        %5611 = sbr.rel (%p5609) target = $region80
      $region79: #{discriminator_forward.4} parent=67 // pred_region
        %p5612 = scmp.lt.s32.totalorder %s23, 1
        %s5613 = scalar_select %p5612, %s23, 1
        %s5614 = smul.addr %s5613, 2
        %s5615 = scalar_lea.vmem %s10, %s5614
      $region80: #{discriminator_forward.4} parent=67 // pred_fallthru
        _
    $region68: #{discriminator_forward.4} parent=5 // pred_fallthru
      _
  $region6: #{discriminator_forward.4} parent=0 // loop_footer
    %s21 = sadd.s32 1, %s17
  $region7: #{discriminator_forward.4} parent=0 // loop_footer_branch
    %16 = sbr.rel target = $region3
  $region8: #{discriminator_forward.4} parent=0 // loop_exit
    _

</llo_original>
